<compile_context>
chip_gen: v5e
topology: v5e:2x2
jax: 0.10.0
libtpu: 0.0.40
codegen_flags: <defaults>
</compile_context>

<pallas_src>
import functools
import math

import numpy as np
import jax
import jax.numpy as jnp
from jax.experimental import pallas as pl
from jax.experimental.pallas import tpu as pltpu

# ------------------------ config (small, deterministic) ------------------------
PATCH = 14          # ViT-L/14 patch size
IMG = 28            # -> 2x2 = 4 patches, 5 tokens with class token (real: 336)
C_IN = 3
WIDTH = 128         # transformer width == backbone global-feature dim (real: 1024)
HEADS = 4           # real: 16
LAYERS = 2          # real: 24
REDUCT_DIM = 64     # reduction dim (matches PyTorch default reduct_dim=64)
N_TOKENS = (IMG // PATCH) ** 2 + 1
LN_EPS = 1e-5

PATCH_DIM = C_IN * PATCH * PATCH                     # 588
KPAD = 128 * pl.cdiv(PATCH_DIM, 128)                 # 640 -> lane-aligned conv1 K


# --------------------------- in-kernel helper math ------------------------------
def _ln(x, g, b, eps=LN_EPS):
    mu = jnp.mean(x, axis=-1, keepdims=True)
    var = jnp.mean(jnp.square(x - mu), axis=-1, keepdims=True)
    return (x - mu) * jax.lax.rsqrt(var + eps) * g + b


def _quick_gelu(x):                       # CLIP QuickGELU: x * sigmoid(1.702 x)
    return x * jax.nn.sigmoid(1.702 * x)


def _gelu(x):
    # TODO(synk): PyTorch nn.GELU defaults to the exact erf form; tanh approximation used here.
    return jax.nn.gelu(x, approximate=True)


def _matmul(x, w_bf16, b=None):
    # y = x @ w with w in (in, out) layout; bf16 operands, f32 accumulate on the MXU.
    y = jax.lax.dot_general(x.astype(jnp.bfloat16), w_bf16,
                            (((1,), (0,)), ((), ())),
                            preferred_element_type=jnp.float32)
    if b is not None:
        y = y + b
    return y


# ------------------------------ fused forward kernel ----------------------------
def _fused_forward_kernel(
    patches_ref, base_ref, conv1_w_ref,
    ln_pre_g_ref, ln_pre_b_ref, ln_post_g_ref, ln_post_b_ref,
    ln1_g_ref, ln1_b_ref, ln2_g_ref, ln2_b_ref,
    qkv_w_ref, qkv_b_ref, out_proj_w_ref, out_proj_b_ref,
    c_fc_w_ref, c_fc_b_ref, c_proj_w_ref, c_proj_b_ref,
    enc_hw_ref, enc_hb_ref, enc_ow_ref, enc_ob_ref,
    dec_w0_ref, dec_b0_ref, dec_w1_ref, dec_b1_ref, dec_w2_ref, dec_b2_ref,
    glob_ori_ref, glob_recons_ref):
    S = base_ref.shape[0]
    Dh = WIDTH // HEADS
    scale = 1.0 / math.sqrt(Dh)
    bf16 = jnp.bfloat16
    f32 = jnp.float32

    # ---- patch embedding (conv1 stride=kernel, no bias == matmul) + cls/pos base ----
    # Row 0 of the per-image patch block is all-zero -> row 0 of `base` carries
    # class_embedding + pos_emb[0]; rows 1..P carry pos_emb[1:].
    tok = _matmul(patches_ref[0], conv1_w_ref[...]) + base_ref[...]          # (S, WIDTH) f32
    tok = _ln(tok, ln_pre_g_ref[...], ln_pre_b_ref[...])

    # ---------------------------- transformer layers ----------------------------
    for l in range(LAYERS):
        # --- multi-head self-attention (heads batched, no slices / reshapes) ---
        y = _ln(tok, ln1_g_ref[l], ln1_b_ref[l])
        yb = jnp.broadcast_to(y.astype(bf16)[None], (3 * HEADS, S, WIDTH))
        qkv = jax.lax.dot_general(yb, qkv_w_ref[l],
                                  (((2,), (1,)), ((0,), (0,))),
                                  preferred_element_type=f32) + qkv_b_ref[l]  # (3H, S, Dh)
        q = qkv[0:HEADS].astype(bf16)
        k = qkv[HEADS:2 * HEADS].astype(bf16)
        v = qkv[2 * HEADS:3 * HEADS].astype(bf16)

        s = jax.lax.dot_general(q, k, (((2,), (2,)), ((0,), (0,))),
                                preferred_element_type=f32) * scale          # (H, S, S)
        s = s - jnp.max(s, axis=-1, keepdims=True)
        p = jnp.exp(s)
        p = p * pl.reciprocal(jnp.sum(p, axis=-1, keepdims=True), approx=True)
        o = jax.lax.dot_general(p.astype(bf16), v, (((2,), (1,)), ((0,), (0,))),
                                preferred_element_type=f32)                  # (H, S, Dh)
        # per-head output projection, then sum over heads == concat(heads) @ W_out
        part = jax.lax.dot_general(o.astype(bf16), out_proj_w_ref[l],
                                   (((2,), (1,)), ((0,), (0,))),
                                   preferred_element_type=f32)               # (H, S, WIDTH)
        attn = jnp.sum(part, axis=0) + out_proj_b_ref[l]                     # (S, WIDTH)
        tok = tok + attn

        # --- MLP (c_fc -> QuickGELU -> c_proj) ---
        y = _ln(tok, ln2_g_ref[l], ln2_b_ref[l])
        hdn = _quick_gelu(_matmul(y, c_fc_w_ref[l], c_fc_b_ref[l]))
        tok = tok + _matmul(hdn, c_proj_w_ref[l], c_proj_b_ref[l])

    # ---- backbone global feature = ln_post(class token) (row 0, static slice) ----
    glob = _ln(tok[0:1, :], ln_post_g_ref[...], ln_post_b_ref[...])          # (1, WIDTH)

    # ---- encoder: 4 x (Linear + GELU) then Linear -> REDUCT_DIM ----
    h = glob
    for i in range(4):
        h = _gelu(_matmul(h, enc_hw_ref[i], enc_hb_ref[i]))
    reduct = _matmul(h, enc_ow_ref[...], enc_ob_ref[...])                    # (1, REDUCT_DIM)

    # ---- decoder: Linear+GELU, Linear+GELU, Linear ----
    d = _gelu(_matmul(reduct, dec_w0_ref[...], dec_b0_ref[...]))
    d = _gelu(_matmul(d, dec_w1_ref[...], dec_b1_ref[...]))
    recons = _matmul(d, dec_w2_ref[...], dec_b2_ref[...])                    # (1, WIDTH)

    glob_ori_ref[0] = glob
    glob_recons_ref[0] = recons


# ------------------------------- parameters ------------------------------------
def init_params(key):
    # TODO(synk): the real module loads a pretrained CLIP backbone; params are deterministic randoms here.
    # All linear weights are stored pre-transposed to (in, out) layout; the attention
    # projections are additionally pre-split per head (these layouts correspond to simple
    # one-time permutations of the PyTorch (out, in) checkpoints).
    ks = jax.random.split(key, 16)
    Dh = WIDTH // HEADS
    f32 = jnp.float32

    def nrm(k, shape, std=0.02):
        return std * jax.random.normal(k, shape, f32)

    def wbf(k, shape, std=0.02):                     # matmul weights stored in bf16
        return nrm(k, shape, std).astype(jnp.bfloat16)

    conv1_w = jnp.zeros((KPAD, WIDTH), jnp.bfloat16).at[:PATCH_DIM].set(
        wbf(ks[0], (PATCH_DIM, WIDTH)))              # zero rows in the K padding

    params = {
        "conv1_w": conv1_w,                                     # (KPAD, WIDTH)
        "class_emb": nrm(ks[1], (1, WIDTH)),
        "pos_emb": nrm(ks[2], (N_TOKENS, WIDTH)),
        "ln_pre_g": jnp.ones((1, WIDTH), f32), "ln_pre_b": jnp.zeros((1, WIDTH), f32),
        "ln_post_g": jnp.ones((1, WIDTH), f32), "ln_post_b": jnp.zeros((1, WIDTH), f32),
        "ln1_g": jnp.ones((LAYERS, 1, WIDTH), f32), "ln1_b": jnp.zeros((LAYERS, 1, WIDTH), f32),
        "ln2_g": jnp.ones((LAYERS, 1, WIDTH), f32), "ln2_b": jnp.zeros((LAYERS, 1, WIDTH), f32),
        # qkv projection per head: (LAYERS, 3*HEADS, WIDTH, Dh) -- q heads, then k, then v.
        "qkv_w": wbf(ks[3], (LAYERS, 3 * HEADS, WIDTH, Dh)),
        "qkv_b": jnp.zeros((LAYERS, 3 * HEADS, 1, Dh), f32),
        # out projection per head: (LAYERS, HEADS, Dh, WIDTH)
        "out_proj_w": wbf(ks[4], (LAYERS, HEADS, Dh, WIDTH)),
        "out_proj_b": jnp.zeros((LAYERS, 1, WIDTH), f32),
        "c_fc_w": wbf(ks[5], (LAYERS, WIDTH, 4 * WIDTH)),
        "c_fc_b": jnp.zeros((LAYERS, 1, 4 * WIDTH), f32),
        "c_proj_w": wbf(ks[6], (LAYERS, 4 * WIDTH, WIDTH)),
        "c_proj_b": jnp.zeros((LAYERS, 1, WIDTH), f32),
        # encoder: 4 hidden Linear(width,width) + output Linear(width, reduct)
        "enc_hw": wbf(ks[7], (4, WIDTH, WIDTH)),
        "enc_hb": jnp.zeros((4, 1, WIDTH), f32),
        "enc_ow": wbf(ks[8], (WIDTH, REDUCT_DIM)),
        "enc_ob": jnp.zeros((1, REDUCT_DIM), f32),
        # decoder: Linear(reduct,width), Linear(width,width), Linear(width,width)
        "dec_w0": wbf(ks[9], (REDUCT_DIM, WIDTH)), "dec_b0": jnp.zeros((1, WIDTH), f32),
        "dec_w1": wbf(ks[10], (WIDTH, WIDTH)), "dec_b1": jnp.zeros((1, WIDTH), f32),
        "dec_w2": wbf(ks[11], (WIDTH, WIDTH)), "dec_b2": jnp.zeros((1, WIDTH), f32),
    }
    return params


_PARAM_ORDER = [
    "conv1_w",
    "ln_pre_g", "ln_pre_b", "ln_post_g", "ln_post_b",
    "ln1_g", "ln1_b", "ln2_g", "ln2_b",
    "qkv_w", "qkv_b", "out_proj_w", "out_proj_b",
    "c_fc_w", "c_fc_b", "c_proj_w", "c_proj_b",
    "enc_hw", "enc_hb", "enc_ow", "enc_ob",
    "dec_w0", "dec_b0", "dec_w1", "dec_b1", "dec_w2", "dec_b2",
]


# ------------------------------ model forward -----------------------------------
@functools.partial(jax.jit, static_argnames=("split",))
def clipvitl_reduction_forward(params, x, label=None, split="train"):
    """forward(x, label, split) -> (original_glob, x_recons); label/split unused (as in the reference)."""
    B, C, H, W = x.shape
    gh, gw = H // PATCH, W // PATCH
    P = gh * gw
    S = P + 1
    assert S == params["pos_emb"].shape[0]
    Dh = WIDTH // HEADS

    # --- wrapper-side layout plumbing (one-time XLA work, keeps the kernel concat-free) ---
    # Non-overlapping patch extraction (conv1 stride == kernel), zero row 0 per image for
    # the class-token slot, K padded to a lane-aligned 640.
    patches = (x.reshape(B, C, gh, PATCH, gw, PATCH)
                 .transpose(0, 2, 4, 1, 3, 5)
                 .reshape(B, P, PATCH_DIM))
    patches = jnp.pad(patches, ((0, 0), (1, 0), (0, KPAD - PATCH_DIM)))      # (B, S, KPAD)
    # class + positional embedding folded into one additive base (row 0 == cls slot).
    base = jnp.concatenate(
        [params["class_emb"] + params["pos_emb"][:1], params["pos_emb"][1:]], axis=0)  # (S, WIDTH)

    weights = [params[k] for k in _PARAM_ORDER]
    ins = [patches, base] + weights

    def _resident(a):  # whole array resident in VMEM across the batch grid
        return pl.BlockSpec(a.shape, lambda b, _n=a.ndim: (0,) * _n)

    in_specs = ([pl.BlockSpec((1, S, KPAD), lambda b: (b, 0, 0))]
                + [_resident(a) for a in [base] + weights])
    out_specs = (pl.BlockSpec((1, 1, WIDTH), lambda b: (b, 0, 0)),
                 pl.BlockSpec((1, 1, WIDTH), lambda b: (b, 0, 0)))
    out_shape = (jax.ShapeDtypeStruct((B, 1, WIDTH), jnp.float32),
                 jax.ShapeDtypeStruct((B, 1, WIDTH), jnp.float32))

    # --- advisory cost estimate + VMEM budget sized from the resident footprint ---
    per_layer_flops = (2 * S * WIDTH * 3 * WIDTH           # qkv projection
                       + 2 * HEADS * S * S * Dh            # q @ k^T
                       + 2 * HEADS * S * S * Dh            # p @ v
                       + 2 * S * WIDTH * WIDTH             # out projection
                       + 2 * S * WIDTH * 4 * WIDTH         # c_fc
                       + 2 * S * 4 * WIDTH * WIDTH)        # c_proj
    flops = int(B * (2 * S * KPAD * WIDTH + LAYERS * per_layer_flops
                     + 4 * 2 * WIDTH * WIDTH + 2 * WIDTH * REDUCT_DIM
                     + 2 * REDUCT_DIM * WIDTH + 2 * 2 * WIDTH * WIDTH))
    transcendentals = int(B * (LAYERS * (HEADS * S * S + S * 4 * WIDTH) + 6 * WIDTH))
    in_bytes = sum(int(np.prod(a.shape)) * jnp.dtype(a.dtype).itemsize for a in ins)
    out_bytes = 2 * B * WIDTH * 4
    bytes_accessed = int(in_bytes + out_bytes)
    vmem_limit = int(min(100 << 20, max(32 << 20, 4 * bytes_accessed)))

    glob_ori, glob_recons = pl.pallas_call(
        _fused_forward_kernel,
        out_shape=out_shape,
        grid_spec=pltpu.PrefetchScalarGridSpec(
            num_scalar_prefetch=0, grid=(B,),
            in_specs=in_specs, out_specs=out_specs),
        compiler_params=pltpu.CompilerParams(
            dimension_semantics=("parallel",),           # batch across TensorCores on v7x
            vmem_limit_bytes=vmem_limit),
        cost_estimate=pl.CostEstimate(flops=flops, transcendentals=transcendentals,
                                      bytes_accessed=bytes_accessed),
    )(*ins)
    return glob_ori.reshape(B, WIDTH), glob_recons.reshape(B, WIDTH)


# ---------------------------------- main -----------------------------------------
if __name__ == "__main__":
    key = jax.random.PRNGKey(0)
    kp, kx, kl = jax.random.split(key, 3)
    params = init_params(kp)
    x = jax.random.normal(kx, (2, C_IN, IMG, IMG), jnp.float32)
    label = jax.random.randint(kl, (2,), 0, 16, dtype=jnp.int32)

    glob_ori, glob_recons = clipvitl_reduction_forward(params, x, label, split="train")
    jax.block_until_ready(glob_ori)
    jax.block_until_ready(glob_recons)
    assert glob_ori.shape == (2, WIDTH) and glob_recons.shape == (2, WIDTH)
    assert bool(jnp.all(jnp.isfinite(glob_ori))) and bool(jnp.all(jnp.isfinite(glob_recons)))
    print("KERNEL_OK")
</pallas_src>

<mosaic_0001>
module attributes {stable_mosaic.version = 11 : i64} {
  func.func @_fused_forward_kernel(%arg0: i32, %arg1: memref<1x5x640xf32, #tpu.memory_space<vmem>>, %arg2: memref<5x128xf32, #tpu.memory_space<vmem>>, %arg3: memref<640x128xbf16, #tpu.memory_space<vmem>>, %arg4: memref<1x128xf32, #tpu.memory_space<vmem>>, %arg5: memref<1x128xf32, #tpu.memory_space<vmem>>, %arg6: memref<1x128xf32, #tpu.memory_space<vmem>>, %arg7: memref<1x128xf32, #tpu.memory_space<vmem>>, %arg8: memref<2x1x128xf32, #tpu.memory_space<vmem>>, %arg9: memref<2x1x128xf32, #tpu.memory_space<vmem>>, %arg10: memref<2x1x128xf32, #tpu.memory_space<vmem>>, %arg11: memref<2x1x128xf32, #tpu.memory_space<vmem>>, %arg12: memref<2x12x128x32xbf16, #tpu.memory_space<vmem>>, %arg13: memref<2x12x1x32xf32, #tpu.memory_space<vmem>>, %arg14: memref<2x4x32x128xbf16, #tpu.memory_space<vmem>>, %arg15: memref<2x1x128xf32, #tpu.memory_space<vmem>>, %arg16: memref<2x128x512xbf16, #tpu.memory_space<vmem>>, %arg17: memref<2x1x512xf32, #tpu.memory_space<vmem>>, %arg18: memref<2x512x128xbf16, #tpu.memory_space<vmem>>, %arg19: memref<2x1x128xf32, #tpu.memory_space<vmem>>, %arg20: memref<4x128x128xbf16, #tpu.memory_space<vmem>>, %arg21: memref<4x1x128xf32, #tpu.memory_space<vmem>>, %arg22: memref<128x64xbf16, #tpu.memory_space<vmem>>, %arg23: memref<1x64xf32, #tpu.memory_space<vmem>>, %arg24: memref<64x128xbf16, #tpu.memory_space<vmem>>, %arg25: memref<1x128xf32, #tpu.memory_space<vmem>>, %arg26: memref<128x128xbf16, #tpu.memory_space<vmem>>, %arg27: memref<1x128xf32, #tpu.memory_space<vmem>>, %arg28: memref<128x128xbf16, #tpu.memory_space<vmem>>, %arg29: memref<1x128xf32, #tpu.memory_space<vmem>>, %arg30: memref<1x1x128xf32, #tpu.memory_space<vmem>>, %arg31: memref<1x1x128xf32, #tpu.memory_space<vmem>>) attributes {dimension_semantics = [#tpu.dimension_semantics<parallel>], iteration_bounds = array<i64: 2>, scalar_prefetch = 0 : i64, scratch_operands = 0 : i64, tpu.core_type = #tpu.core_type<tc>, window_params = [{transform_indices = @transform_0, window_bounds = array<i64: 1, 5, 640>}, {pipeline_mode = #tpu.pipeline_mode<synchronous>, transform_indices = @transform_1, window_bounds = array<i64: 5, 128>}, {pipeline_mode = #tpu.pipeline_mode<synchronous>, transform_indices = @transform_2, window_bounds = array<i64: 640, 128>}, {pipeline_mode = #tpu.pipeline_mode<synchronous>, transform_indices = @transform_3, window_bounds = array<i64: 1, 128>}, {pipeline_mode = #tpu.pipeline_mode<synchronous>, transform_indices = @transform_4, window_bounds = array<i64: 1, 128>}, {pipeline_mode = #tpu.pipeline_mode<synchronous>, transform_indices = @transform_5, window_bounds = array<i64: 1, 128>}, {pipeline_mode = #tpu.pipeline_mode<synchronous>, transform_indices = @transform_6, window_bounds = array<i64: 1, 128>}, {pipeline_mode = #tpu.pipeline_mode<synchronous>, transform_indices = @transform_7, window_bounds = array<i64: 2, 1, 128>}, {pipeline_mode = #tpu.pipeline_mode<synchronous>, transform_indices = @transform_8, window_bounds = array<i64: 2, 1, 128>}, {pipeline_mode = #tpu.pipeline_mode<synchronous>, transform_indices = @transform_9, window_bounds = array<i64: 2, 1, 128>}, {pipeline_mode = #tpu.pipeline_mode<synchronous>, transform_indices = @transform_10, window_bounds = array<i64: 2, 1, 128>}, {pipeline_mode = #tpu.pipeline_mode<synchronous>, transform_indices = @transform_11, window_bounds = array<i64: 2, 12, 128, 32>}, {pipeline_mode = #tpu.pipeline_mode<synchronous>, transform_indices = @transform_12, window_bounds = array<i64: 2, 12, 1, 32>}, {pipeline_mode = #tpu.pipeline_mode<synchronous>, transform_indices = @transform_13, window_bounds = array<i64: 2, 4, 32, 128>}, {pipeline_mode = #tpu.pipeline_mode<synchronous>, transform_indices = @transform_14, window_bounds = array<i64: 2, 1, 128>}, {pipeline_mode = #tpu.pipeline_mode<synchronous>, transform_indices = @transform_15, window_bounds = array<i64: 2, 128, 512>}, {pipeline_mode = #tpu.pipeline_mode<synchronous>, transform_indices = @transform_16, window_bounds = array<i64: 2, 1, 512>}, {pipeline_mode = #tpu.pipeline_mode<synchronous>, transform_indices = @transform_17, window_bounds = array<i64: 2, 512, 128>}, {pipeline_mode = #tpu.pipeline_mode<synchronous>, transform_indices = @transform_18, window_bounds = array<i64: 2, 1, 128>}, {pipeline_mode = #tpu.pipeline_mode<synchronous>, transform_indices = @transform_19, window_bounds = array<i64: 4, 128, 128>}, {pipeline_mode = #tpu.pipeline_mode<synchronous>, transform_indices = @transform_20, window_bounds = array<i64: 4, 1, 128>}, {pipeline_mode = #tpu.pipeline_mode<synchronous>, transform_indices = @transform_21, window_bounds = array<i64: 128, 64>}, {pipeline_mode = #tpu.pipeline_mode<synchronous>, transform_indices = @transform_22, window_bounds = array<i64: 1, 64>}, {pipeline_mode = #tpu.pipeline_mode<synchronous>, transform_indices = @transform_23, window_bounds = array<i64: 64, 128>}, {pipeline_mode = #tpu.pipeline_mode<synchronous>, transform_indices = @transform_24, window_bounds = array<i64: 1, 128>}, {pipeline_mode = #tpu.pipeline_mode<synchronous>, transform_indices = @transform_25, window_bounds = array<i64: 128, 128>}, {pipeline_mode = #tpu.pipeline_mode<synchronous>, transform_indices = @transform_26, window_bounds = array<i64: 1, 128>}, {pipeline_mode = #tpu.pipeline_mode<synchronous>, transform_indices = @transform_27, window_bounds = array<i64: 128, 128>}, {pipeline_mode = #tpu.pipeline_mode<synchronous>, transform_indices = @transform_28, window_bounds = array<i64: 1, 128>}, {transform_indices = @transform_29, window_bounds = array<i64: 1, 1, 128>}, {transform_indices = @transform_30, window_bounds = array<i64: 1, 1, 128>}]} {
    %c0 = arith.constant 0 : index
    %c0_0 = arith.constant 0 : index
    %c0_1 = arith.constant 0 : index
    %0 = vector.load %arg1[%c0, %c0_0, %c0_1] : memref<1x5x640xf32, #tpu.memory_space<vmem>>, vector<1x5x640xf32>
    %1 = vector.shape_cast %0 : vector<1x5x640xf32> to vector<5x640xf32>
    %c0_2 = arith.constant 0 : index
    %c0_3 = arith.constant 0 : index
    %2 = vector.load %arg3[%c0_2, %c0_3] : memref<640x128xbf16, #tpu.memory_space<vmem>>, vector<640x128xbf16>
    %3 = arith.truncf %1 : vector<5x640xf32> to vector<5x640xbf16>
    %cst = arith.constant dense<0.000000e+00> : vector<5x128xf32>
    %4 = tpu.matmul %3, %2, %cst {dimension_numbers = #tpu.dot_dimension_numbers<[1], [0], [0], [1], [0, 0, 1, 1], [], []>} : vector<5x640xbf16>, vector<640x128xbf16>, vector<5x128xf32> -> vector<5x128xf32>
    %c0_4 = arith.constant 0 : index
    %c0_5 = arith.constant 0 : index
    %5 = vector.load %arg2[%c0_4, %c0_5] : memref<5x128xf32, #tpu.memory_space<vmem>>, vector<5x128xf32>
    %6 = arith.addf %4, %5 : vector<5x128xf32>
    %c0_6 = arith.constant 0 : index
    %c0_7 = arith.constant 0 : index
    %7 = vector.load %arg4[%c0_6, %c0_7] : memref<1x128xf32, #tpu.memory_space<vmem>>, vector<1x128xf32>
    %c0_8 = arith.constant 0 : index
    %c0_9 = arith.constant 0 : index
    %8 = vector.load %arg5[%c0_8, %c0_9] : memref<1x128xf32, #tpu.memory_space<vmem>>, vector<1x128xf32>
    %cst_10 = arith.constant dense<0.000000e+00> : vector<5xf32>
    %9 = vector.multi_reduction <add>, %6, %cst_10 [1] : vector<5x128xf32> to vector<5xf32>
    %10 = vector.shape_cast %9 : vector<5xf32> to vector<5x1xf32>
    %cst_11 = arith.constant 1.280000e+02 : f32
    %11 = vector.broadcast %cst_11 : f32 to vector<5x1xf32>
    %12 = arith.divf %10, %11 : vector<5x1xf32>
    %13 = vector.broadcast %12 : vector<5x1xf32> to vector<5x128xf32>
    %14 = arith.subf %6, %13 : vector<5x128xf32>
    %15 = arith.mulf %14, %14 : vector<5x128xf32>
    %cst_12 = arith.constant dense<0.000000e+00> : vector<5xf32>
    %16 = vector.multi_reduction <add>, %15, %cst_12 [1] : vector<5x128xf32> to vector<5xf32>
    %17 = vector.shape_cast %16 : vector<5xf32> to vector<5x1xf32>
    %cst_13 = arith.constant 1.280000e+02 : f32
    %18 = vector.broadcast %cst_13 : f32 to vector<5x1xf32>
    %19 = arith.divf %17, %18 : vector<5x1xf32>
    %20 = vector.broadcast %12 : vector<5x1xf32> to vector<5x128xf32>
    %21 = arith.subf %6, %20 : vector<5x128xf32>
    %cst_14 = arith.constant 9.99999974E-6 : f32
    %22 = vector.broadcast %cst_14 : f32 to vector<5x1xf32>
    %23 = arith.addf %19, %22 : vector<5x1xf32>
    %24 = math.rsqrt %23 : vector<5x1xf32>
    %25 = vector.broadcast %24 : vector<5x1xf32> to vector<5x128xf32>
    %26 = arith.mulf %21, %25 : vector<5x128xf32>
    %27 = vector.broadcast %7 : vector<1x128xf32> to vector<5x128xf32>
    %28 = arith.mulf %26, %27 : vector<5x128xf32>
    %29 = vector.broadcast %8 : vector<1x128xf32> to vector<5x128xf32>
    %30 = arith.addf %28, %29 : vector<5x128xf32>
    %c0_15 = arith.constant 0 : index
    %c0_16 = arith.constant 0 : index
    %c0_17 = arith.constant 0 : index
    %31 = vector.load %arg8[%c0_15, %c0_16, %c0_17] : memref<2x1x128xf32, #tpu.memory_space<vmem>>, vector<1x1x128xf32>
    %32 = vector.shape_cast %31 : vector<1x1x128xf32> to vector<1x128xf32>
    %c0_18 = arith.constant 0 : index
    %c0_19 = arith.constant 0 : index
    %c0_20 = arith.constant 0 : index
    %33 = vector.load %arg9[%c0_18, %c0_19, %c0_20] : memref<2x1x128xf32, #tpu.memory_space<vmem>>, vector<1x1x128xf32>
    %34 = vector.shape_cast %33 : vector<1x1x128xf32> to vector<1x128xf32>
    %cst_21 = arith.constant dense<0.000000e+00> : vector<5xf32>
    %35 = vector.multi_reduction <add>, %30, %cst_21 [1] : vector<5x128xf32> to vector<5xf32>
    %36 = vector.shape_cast %35 : vector<5xf32> to vector<5x1xf32>
    %cst_22 = arith.constant 1.280000e+02 : f32
    %37 = vector.broadcast %cst_22 : f32 to vector<5x1xf32>
    %38 = arith.divf %36, %37 : vector<5x1xf32>
    %39 = vector.broadcast %38 : vector<5x1xf32> to vector<5x128xf32>
    %40 = arith.subf %30, %39 : vector<5x128xf32>
    %41 = arith.mulf %40, %40 : vector<5x128xf32>
    %cst_23 = arith.constant dense<0.000000e+00> : vector<5xf32>
    %42 = vector.multi_reduction <add>, %41, %cst_23 [1] : vector<5x128xf32> to vector<5xf32>
    %43 = vector.shape_cast %42 : vector<5xf32> to vector<5x1xf32>
    %cst_24 = arith.constant 1.280000e+02 : f32
    %44 = vector.broadcast %cst_24 : f32 to vector<5x1xf32>
    %45 = arith.divf %43, %44 : vector<5x1xf32>
    %46 = vector.broadcast %38 : vector<5x1xf32> to vector<5x128xf32>
    %47 = arith.subf %30, %46 : vector<5x128xf32>
    %cst_25 = arith.constant 9.99999974E-6 : f32
    %48 = vector.broadcast %cst_25 : f32 to vector<5x1xf32>
    %49 = arith.addf %45, %48 : vector<5x1xf32>
    %50 = math.rsqrt %49 : vector<5x1xf32>
    %51 = vector.broadcast %50 : vector<5x1xf32> to vector<5x128xf32>
    %52 = arith.mulf %47, %51 : vector<5x128xf32>
    %53 = vector.broadcast %32 : vector<1x128xf32> to vector<5x128xf32>
    %54 = arith.mulf %52, %53 : vector<5x128xf32>
    %55 = vector.broadcast %34 : vector<1x128xf32> to vector<5x128xf32>
    %56 = arith.addf %54, %55 : vector<5x128xf32>
    %57 = arith.truncf %56 : vector<5x128xf32> to vector<5x128xbf16>
    %58 = vector.shape_cast %57 : vector<5x128xbf16> to vector<1x5x128xbf16>
    %59 = vector.shape_cast %58 : vector<1x5x128xbf16> to vector<1x5x128xbf16>
    %60 = vector.broadcast %59 : vector<1x5x128xbf16> to vector<12x5x128xbf16>
    %c0_26 = arith.constant 0 : index
    %c0_27 = arith.constant 0 : index
    %c0_28 = arith.constant 0 : index
    %c0_29 = arith.constant 0 : index
    %61 = vector.load %arg12[%c0_26, %c0_27, %c0_28, %c0_29] : memref<2x12x128x32xbf16, #tpu.memory_space<vmem>>, vector<1x12x128x32xbf16>
    %62 = vector.shape_cast %61 : vector<1x12x128x32xbf16> to vector<12x128x32xbf16>
    %cst_30 = arith.constant dense<0.000000e+00> : vector<12x5x32xf32>
    %63 = tpu.matmul %60, %62, %cst_30 {dimension_numbers = #tpu.dot_dimension_numbers<[2], [1], [1], [2], [0, 0, 0, 1, 1, 2], [0], [0]>} : vector<12x5x128xbf16>, vector<12x128x32xbf16>, vector<12x5x32xf32> -> vector<12x5x32xf32>
    %c0_31 = arith.constant 0 : index
    %c0_32 = arith.constant 0 : index
    %c0_33 = arith.constant 0 : index
    %c0_34 = arith.constant 0 : index
    %64 = vector.load %arg13[%c0_31, %c0_32, %c0_33, %c0_34] : memref<2x12x1x32xf32, #tpu.memory_space<vmem>>, vector<1x12x1x32xf32>
    %65 = vector.shape_cast %64 : vector<1x12x1x32xf32> to vector<12x1x32xf32>
    %66 = vector.broadcast %65 : vector<12x1x32xf32> to vector<12x5x32xf32>
    %67 = arith.addf %63, %66 : vector<12x5x32xf32>
    %68 = vector.extract_strided_slice %67 {offsets = [0, 0, 0], sizes = [4, 5, 32], strides = [1, 1, 1]} : vector<12x5x32xf32> to vector<4x5x32xf32>
    %69 = arith.truncf %68 : vector<4x5x32xf32> to vector<4x5x32xbf16>
    %70 = vector.extract_strided_slice %67 {offsets = [4, 0, 0], sizes = [4, 5, 32], strides = [1, 1, 1]} : vector<12x5x32xf32> to vector<4x5x32xf32>
    %71 = arith.truncf %70 : vector<4x5x32xf32> to vector<4x5x32xbf16>
    %72 = vector.extract_strided_slice %67 {offsets = [8, 0, 0], sizes = [4, 5, 32], strides = [1, 1, 1]} : vector<12x5x32xf32> to vector<4x5x32xf32>
    %73 = arith.truncf %72 : vector<4x5x32xf32> to vector<4x5x32xbf16>
    %cst_35 = arith.constant dense<0.000000e+00> : vector<4x5x5xf32>
    %74 = tpu.matmul %69, %71, %cst_35 {dimension_numbers = #tpu.dot_dimension_numbers<[2], [2], [1], [1], [0, 0, 0, 1, 1, 1], [0], [0]>} : vector<4x5x32xbf16>, vector<4x5x32xbf16>, vector<4x5x5xf32> -> vector<4x5x5xf32>
    %cst_36 = arith.constant 0.176776692 : f32
    %75 = vector.broadcast %cst_36 : f32 to vector<4x5x5xf32>
    %76 = arith.mulf %74, %75 : vector<4x5x5xf32>
    %cst_37 = arith.constant dense<0xFF800000> : vector<4x5xf32>
    %77 = vector.multi_reduction <maximumf>, %76, %cst_37 [2] : vector<4x5x5xf32> to vector<4x5xf32>
    %78 = vector.shape_cast %77 : vector<4x5xf32> to vector<4x5x1xf32>
    %79 = vector.broadcast %78 : vector<4x5x1xf32> to vector<4x5x5xf32>
    %80 = arith.subf %76, %79 : vector<4x5x5xf32>
    %81 = math.exp %80 : vector<4x5x5xf32>
    %cst_38 = arith.constant dense<0.000000e+00> : vector<4x5xf32>
    %82 = vector.multi_reduction <add>, %81, %cst_38 [2] : vector<4x5x5xf32> to vector<4x5xf32>
    %83 = vector.shape_cast %82 : vector<4x5xf32> to vector<4x5x1xf32>
    %84 = tpu.reciprocal %83 {approx = true} : vector<4x5x1xf32> -> vector<4x5x1xf32>
    %85 = vector.broadcast %84 : vector<4x5x1xf32> to vector<4x5x5xf32>
    %86 = arith.mulf %81, %85 : vector<4x5x5xf32>
    %87 = arith.truncf %86 : vector<4x5x5xf32> to vector<4x5x5xbf16>
    %cst_39 = arith.constant dense<0.000000e+00> : vector<4x5x32xf32>
    %88 = tpu.matmul %87, %73, %cst_39 {dimension_numbers = #tpu.dot_dimension_numbers<[2], [1], [1], [2], [0, 0, 0, 1, 1, 2], [0], [0]>} : vector<4x5x5xbf16>, vector<4x5x32xbf16>, vector<4x5x32xf32> -> vector<4x5x32xf32>
    %89 = arith.truncf %88 : vector<4x5x32xf32> to vector<4x5x32xbf16>
    %c0_40 = arith.constant 0 : index
    %c0_41 = arith.constant 0 : index
    %c0_42 = arith.constant 0 : index
    %c0_43 = arith.constant 0 : index
    %90 = vector.load %arg14[%c0_40, %c0_41, %c0_42, %c0_43] : memref<2x4x32x128xbf16, #tpu.memory_space<vmem>>, vector<1x4x32x128xbf16>
    %91 = vector.shape_cast %90 : vector<1x4x32x128xbf16> to vector<4x32x128xbf16>
    %cst_44 = arith.constant dense<0.000000e+00> : vector<4x5x128xf32>
    %92 = tpu.matmul %89, %91, %cst_44 {dimension_numbers = #tpu.dot_dimension_numbers<[2], [1], [1], [2], [0, 0, 0, 1, 1, 2], [0], [0]>} : vector<4x5x32xbf16>, vector<4x32x128xbf16>, vector<4x5x128xf32> -> vector<4x5x128xf32>
    %cst_45 = arith.constant dense<0.000000e+00> : vector<5x128xf32>
    %93 = vector.multi_reduction <add>, %92, %cst_45 [0] : vector<4x5x128xf32> to vector<5x128xf32>
    %c0_46 = arith.constant 0 : index
    %c0_47 = arith.constant 0 : index
    %c0_48 = arith.constant 0 : index
    %94 = vector.load %arg15[%c0_46, %c0_47, %c0_48] : memref<2x1x128xf32, #tpu.memory_space<vmem>>, vector<1x1x128xf32>
    %95 = vector.shape_cast %94 : vector<1x1x128xf32> to vector<1x128xf32>
    %96 = vector.broadcast %95 : vector<1x128xf32> to vector<5x128xf32>
    %97 = arith.addf %93, %96 : vector<5x128xf32>
    %98 = arith.addf %30, %97 : vector<5x128xf32>
    %c0_49 = arith.constant 0 : index
    %c0_50 = arith.constant 0 : index
    %c0_51 = arith.constant 0 : index
    %99 = vector.load %arg10[%c0_49, %c0_50, %c0_51] : memref<2x1x128xf32, #tpu.memory_space<vmem>>, vector<1x1x128xf32>
    %100 = vector.shape_cast %99 : vector<1x1x128xf32> to vector<1x128xf32>
    %c0_52 = arith.constant 0 : index
    %c0_53 = arith.constant 0 : index
    %c0_54 = arith.constant 0 : index
    %101 = vector.load %arg11[%c0_52, %c0_53, %c0_54] : memref<2x1x128xf32, #tpu.memory_space<vmem>>, vector<1x1x128xf32>
    %102 = vector.shape_cast %101 : vector<1x1x128xf32> to vector<1x128xf32>
    %cst_55 = arith.constant dense<0.000000e+00> : vector<5xf32>
    %103 = vector.multi_reduction <add>, %98, %cst_55 [1] : vector<5x128xf32> to vector<5xf32>
    %104 = vector.shape_cast %103 : vector<5xf32> to vector<5x1xf32>
    %cst_56 = arith.constant 1.280000e+02 : f32
    %105 = vector.broadcast %cst_56 : f32 to vector<5x1xf32>
    %106 = arith.divf %104, %105 : vector<5x1xf32>
    %107 = vector.broadcast %106 : vector<5x1xf32> to vector<5x128xf32>
    %108 = arith.subf %98, %107 : vector<5x128xf32>
    %109 = arith.mulf %108, %108 : vector<5x128xf32>
    %cst_57 = arith.constant dense<0.000000e+00> : vector<5xf32>
    %110 = vector.multi_reduction <add>, %109, %cst_57 [1] : vector<5x128xf32> to vector<5xf32>
    %111 = vector.shape_cast %110 : vector<5xf32> to vector<5x1xf32>
    %cst_58 = arith.constant 1.280000e+02 : f32
    %112 = vector.broadcast %cst_58 : f32 to vector<5x1xf32>
    %113 = arith.divf %111, %112 : vector<5x1xf32>
    %114 = vector.broadcast %106 : vector<5x1xf32> to vector<5x128xf32>
    %115 = arith.subf %98, %114 : vector<5x128xf32>
    %cst_59 = arith.constant 9.99999974E-6 : f32
    %116 = vector.broadcast %cst_59 : f32 to vector<5x1xf32>
    %117 = arith.addf %113, %116 : vector<5x1xf32>
    %118 = math.rsqrt %117 : vector<5x1xf32>
    %119 = vector.broadcast %118 : vector<5x1xf32> to vector<5x128xf32>
    %120 = arith.mulf %115, %119 : vector<5x128xf32>
    %121 = vector.broadcast %100 : vector<1x128xf32> to vector<5x128xf32>
    %122 = arith.mulf %120, %121 : vector<5x128xf32>
    %123 = vector.broadcast %102 : vector<1x128xf32> to vector<5x128xf32>
    %124 = arith.addf %122, %123 : vector<5x128xf32>
    %c0_60 = arith.constant 0 : index
    %c0_61 = arith.constant 0 : index
    %c0_62 = arith.constant 0 : index
    %125 = vector.load %arg16[%c0_60, %c0_61, %c0_62] : memref<2x128x512xbf16, #tpu.memory_space<vmem>>, vector<1x128x512xbf16>
    %126 = vector.shape_cast %125 : vector<1x128x512xbf16> to vector<128x512xbf16>
    %c0_63 = arith.constant 0 : index
    %c0_64 = arith.constant 0 : index
    %c0_65 = arith.constant 0 : index
    %127 = vector.load %arg17[%c0_63, %c0_64, %c0_65] : memref<2x1x512xf32, #tpu.memory_space<vmem>>, vector<1x1x512xf32>
    %128 = vector.shape_cast %127 : vector<1x1x512xf32> to vector<1x512xf32>
    %129 = arith.truncf %124 : vector<5x128xf32> to vector<5x128xbf16>
    %cst_66 = arith.constant dense<0.000000e+00> : vector<5x512xf32>
    %130 = tpu.matmul %129, %126, %cst_66 {dimension_numbers = #tpu.dot_dimension_numbers<[1], [0], [0], [1], [0, 0, 1, 1], [], []>} : vector<5x128xbf16>, vector<128x512xbf16>, vector<5x512xf32> -> vector<5x512xf32>
    %131 = vector.broadcast %128 : vector<1x512xf32> to vector<5x512xf32>
    %132 = arith.addf %130, %131 : vector<5x512xf32>
    %cst_67 = arith.constant 1.702000e+00 : f32
    %133 = vector.broadcast %cst_67 : f32 to vector<5x512xf32>
    %134 = arith.mulf %133, %132 : vector<5x512xf32>
    %135 = arith.negf %134 : vector<5x512xf32>
    %136 = math.exp %135 : vector<5x512xf32>
    %cst_68 = arith.constant 1.000000e+00 : f32
    %137 = vector.broadcast %cst_68 : f32 to vector<5x512xf32>
    %138 = arith.addf %137, %136 : vector<5x512xf32>
    %139 = arith.divf %137, %138 : vector<5x512xf32>
    %140 = arith.mulf %132, %139 : vector<5x512xf32>
    %c0_69 = arith.constant 0 : index
    %c0_70 = arith.constant 0 : index
    %c0_71 = arith.constant 0 : index
    %141 = vector.load %arg18[%c0_69, %c0_70, %c0_71] : memref<2x512x128xbf16, #tpu.memory_space<vmem>>, vector<1x512x128xbf16>
    %142 = vector.shape_cast %141 : vector<1x512x128xbf16> to vector<512x128xbf16>
    %c0_72 = arith.constant 0 : index
    %c0_73 = arith.constant 0 : index
    %c0_74 = arith.constant 0 : index
    %143 = vector.load %arg19[%c0_72, %c0_73, %c0_74] : memref<2x1x128xf32, #tpu.memory_space<vmem>>, vector<1x1x128xf32>
    %144 = vector.shape_cast %143 : vector<1x1x128xf32> to vector<1x128xf32>
    %145 = arith.truncf %140 : vector<5x512xf32> to vector<5x512xbf16>
    %cst_75 = arith.constant dense<0.000000e+00> : vector<5x128xf32>
    %146 = tpu.matmul %145, %142, %cst_75 {dimension_numbers = #tpu.dot_dimension_numbers<[1], [0], [0], [1], [0, 0, 1, 1], [], []>} : vector<5x512xbf16>, vector<512x128xbf16>, vector<5x128xf32> -> vector<5x128xf32>
    %147 = vector.broadcast %144 : vector<1x128xf32> to vector<5x128xf32>
    %148 = arith.addf %146, %147 : vector<5x128xf32>
    %149 = arith.addf %98, %148 : vector<5x128xf32>
    %c1 = arith.constant 1 : index
    %c0_76 = arith.constant 0 : index
    %c0_77 = arith.constant 0 : index
    %150 = vector.load %arg8[%c1, %c0_76, %c0_77] : memref<2x1x128xf32, #tpu.memory_space<vmem>>, vector<1x1x128xf32>
    %151 = vector.shape_cast %150 : vector<1x1x128xf32> to vector<1x128xf32>
    %c1_78 = arith.constant 1 : index
    %c0_79 = arith.constant 0 : index
    %c0_80 = arith.constant 0 : index
    %152 = vector.load %arg9[%c1_78, %c0_79, %c0_80] : memref<2x1x128xf32, #tpu.memory_space<vmem>>, vector<1x1x128xf32>
    %153 = vector.shape_cast %152 : vector<1x1x128xf32> to vector<1x128xf32>
    %cst_81 = arith.constant dense<0.000000e+00> : vector<5xf32>
    %154 = vector.multi_reduction <add>, %149, %cst_81 [1] : vector<5x128xf32> to vector<5xf32>
    %155 = vector.shape_cast %154 : vector<5xf32> to vector<5x1xf32>
    %cst_82 = arith.constant 1.280000e+02 : f32
    %156 = vector.broadcast %cst_82 : f32 to vector<5x1xf32>
    %157 = arith.divf %155, %156 : vector<5x1xf32>
    %158 = vector.broadcast %157 : vector<5x1xf32> to vector<5x128xf32>
    %159 = arith.subf %149, %158 : vector<5x128xf32>
    %160 = arith.mulf %159, %159 : vector<5x128xf32>
    %cst_83 = arith.constant dense<0.000000e+00> : vector<5xf32>
    %161 = vector.multi_reduction <add>, %160, %cst_83 [1] : vector<5x128xf32> to vector<5xf32>
    %162 = vector.shape_cast %161 : vector<5xf32> to vector<5x1xf32>
    %cst_84 = arith.constant 1.280000e+02 : f32
    %163 = vector.broadcast %cst_84 : f32 to vector<5x1xf32>
    %164 = arith.divf %162, %163 : vector<5x1xf32>
    %165 = vector.broadcast %157 : vector<5x1xf32> to vector<5x128xf32>
    %166 = arith.subf %149, %165 : vector<5x128xf32>
    %cst_85 = arith.constant 9.99999974E-6 : f32
    %167 = vector.broadcast %cst_85 : f32 to vector<5x1xf32>
    %168 = arith.addf %164, %167 : vector<5x1xf32>
    %169 = math.rsqrt %168 : vector<5x1xf32>
    %170 = vector.broadcast %169 : vector<5x1xf32> to vector<5x128xf32>
    %171 = arith.mulf %166, %170 : vector<5x128xf32>
    %172 = vector.broadcast %151 : vector<1x128xf32> to vector<5x128xf32>
    %173 = arith.mulf %171, %172 : vector<5x128xf32>
    %174 = vector.broadcast %153 : vector<1x128xf32> to vector<5x128xf32>
    %175 = arith.addf %173, %174 : vector<5x128xf32>
    %176 = arith.truncf %175 : vector<5x128xf32> to vector<5x128xbf16>
    %177 = vector.shape_cast %176 : vector<5x128xbf16> to vector<1x5x128xbf16>
    %178 = vector.shape_cast %177 : vector<1x5x128xbf16> to vector<1x5x128xbf16>
    %179 = vector.broadcast %178 : vector<1x5x128xbf16> to vector<12x5x128xbf16>
    %c1_86 = arith.constant 1 : index
    %c0_87 = arith.constant 0 : index
    %c0_88 = arith.constant 0 : index
    %c0_89 = arith.constant 0 : index
    %180 = vector.load %arg12[%c1_86, %c0_87, %c0_88, %c0_89] : memref<2x12x128x32xbf16, #tpu.memory_space<vmem>>, vector<1x12x128x32xbf16>
    %181 = vector.shape_cast %180 : vector<1x12x128x32xbf16> to vector<12x128x32xbf16>
    %cst_90 = arith.constant dense<0.000000e+00> : vector<12x5x32xf32>
    %182 = tpu.matmul %179, %181, %cst_90 {dimension_numbers = #tpu.dot_dimension_numbers<[2], [1], [1], [2], [0, 0, 0, 1, 1, 2], [0], [0]>} : vector<12x5x128xbf16>, vector<12x128x32xbf16>, vector<12x5x32xf32> -> vector<12x5x32xf32>
    %c1_91 = arith.constant 1 : index
    %c0_92 = arith.constant 0 : index
    %c0_93 = arith.constant 0 : index
    %c0_94 = arith.constant 0 : index
    %183 = vector.load %arg13[%c1_91, %c0_92, %c0_93, %c0_94] : memref<2x12x1x32xf32, #tpu.memory_space<vmem>>, vector<1x12x1x32xf32>
    %184 = vector.shape_cast %183 : vector<1x12x1x32xf32> to vector<12x1x32xf32>
    %185 = vector.broadcast %184 : vector<12x1x32xf32> to vector<12x5x32xf32>
    %186 = arith.addf %182, %185 : vector<12x5x32xf32>
    %187 = vector.extract_strided_slice %186 {offsets = [0, 0, 0], sizes = [4, 5, 32], strides = [1, 1, 1]} : vector<12x5x32xf32> to vector<4x5x32xf32>
    %188 = arith.truncf %187 : vector<4x5x32xf32> to vector<4x5x32xbf16>
    %189 = vector.extract_strided_slice %186 {offsets = [4, 0, 0], sizes = [4, 5, 32], strides = [1, 1, 1]} : vector<12x5x32xf32> to vector<4x5x32xf32>
    %190 = arith.truncf %189 : vector<4x5x32xf32> to vector<4x5x32xbf16>
    %191 = vector.extract_strided_slice %186 {offsets = [8, 0, 0], sizes = [4, 5, 32], strides = [1, 1, 1]} : vector<12x5x32xf32> to vector<4x5x32xf32>
    %192 = arith.truncf %191 : vector<4x5x32xf32> to vector<4x5x32xbf16>
    %cst_95 = arith.constant dense<0.000000e+00> : vector<4x5x5xf32>
    %193 = tpu.matmul %188, %190, %cst_95 {dimension_numbers = #tpu.dot_dimension_numbers<[2], [2], [1], [1], [0, 0, 0, 1, 1, 1], [0], [0]>} : vector<4x5x32xbf16>, vector<4x5x32xbf16>, vector<4x5x5xf32> -> vector<4x5x5xf32>
    %cst_96 = arith.constant 0.176776692 : f32
    %194 = vector.broadcast %cst_96 : f32 to vector<4x5x5xf32>
    %195 = arith.mulf %193, %194 : vector<4x5x5xf32>
    %cst_97 = arith.constant dense<0xFF800000> : vector<4x5xf32>
    %196 = vector.multi_reduction <maximumf>, %195, %cst_97 [2] : vector<4x5x5xf32> to vector<4x5xf32>
    %197 = vector.shape_cast %196 : vector<4x5xf32> to vector<4x5x1xf32>
    %198 = vector.broadcast %197 : vector<4x5x1xf32> to vector<4x5x5xf32>
    %199 = arith.subf %195, %198 : vector<4x5x5xf32>
    %200 = math.exp %199 : vector<4x5x5xf32>
    %cst_98 = arith.constant dense<0.000000e+00> : vector<4x5xf32>
    %201 = vector.multi_reduction <add>, %200, %cst_98 [2] : vector<4x5x5xf32> to vector<4x5xf32>
    %202 = vector.shape_cast %201 : vector<4x5xf32> to vector<4x5x1xf32>
    %203 = tpu.reciprocal %202 {approx = true} : vector<4x5x1xf32> -> vector<4x5x1xf32>
    %204 = vector.broadcast %203 : vector<4x5x1xf32> to vector<4x5x5xf32>
    %205 = arith.mulf %200, %204 : vector<4x5x5xf32>
    %206 = arith.truncf %205 : vector<4x5x5xf32> to vector<4x5x5xbf16>
    %cst_99 = arith.constant dense<0.000000e+00> : vector<4x5x32xf32>
    %207 = tpu.matmul %206, %192, %cst_99 {dimension_numbers = #tpu.dot_dimension_numbers<[2], [1], [1], [2], [0, 0, 0, 1, 1, 2], [0], [0]>} : vector<4x5x5xbf16>, vector<4x5x32xbf16>, vector<4x5x32xf32> -> vector<4x5x32xf32>
    %208 = arith.truncf %207 : vector<4x5x32xf32> to vector<4x5x32xbf16>
    %c1_100 = arith.constant 1 : index
    %c0_101 = arith.constant 0 : index
    %c0_102 = arith.constant 0 : index
    %c0_103 = arith.constant 0 : index
    %209 = vector.load %arg14[%c1_100, %c0_101, %c0_102, %c0_103] : memref<2x4x32x128xbf16, #tpu.memory_space<vmem>>, vector<1x4x32x128xbf16>
    %210 = vector.shape_cast %209 : vector<1x4x32x128xbf16> to vector<4x32x128xbf16>
    %cst_104 = arith.constant dense<0.000000e+00> : vector<4x5x128xf32>
    %211 = tpu.matmul %208, %210, %cst_104 {dimension_numbers = #tpu.dot_dimension_numbers<[2], [1], [1], [2], [0, 0, 0, 1, 1, 2], [0], [0]>} : vector<4x5x32xbf16>, vector<4x32x128xbf16>, vector<4x5x128xf32> -> vector<4x5x128xf32>
    %cst_105 = arith.constant dense<0.000000e+00> : vector<5x128xf32>
    %212 = vector.multi_reduction <add>, %211, %cst_105 [0] : vector<4x5x128xf32> to vector<5x128xf32>
    %c1_106 = arith.constant 1 : index
    %c0_107 = arith.constant 0 : index
    %c0_108 = arith.constant 0 : index
    %213 = vector.load %arg15[%c1_106, %c0_107, %c0_108] : memref<2x1x128xf32, #tpu.memory_space<vmem>>, vector<1x1x128xf32>
    %214 = vector.shape_cast %213 : vector<1x1x128xf32> to vector<1x128xf32>
    %215 = vector.broadcast %214 : vector<1x128xf32> to vector<5x128xf32>
    %216 = arith.addf %212, %215 : vector<5x128xf32>
    %217 = arith.addf %149, %216 : vector<5x128xf32>
    %c1_109 = arith.constant 1 : index
    %c0_110 = arith.constant 0 : index
    %c0_111 = arith.constant 0 : index
    %218 = vector.load %arg10[%c1_109, %c0_110, %c0_111] : memref<2x1x128xf32, #tpu.memory_space<vmem>>, vector<1x1x128xf32>
    %219 = vector.shape_cast %218 : vector<1x1x128xf32> to vector<1x128xf32>
    %c1_112 = arith.constant 1 : index
    %c0_113 = arith.constant 0 : index
    %c0_114 = arith.constant 0 : index
    %220 = vector.load %arg11[%c1_112, %c0_113, %c0_114] : memref<2x1x128xf32, #tpu.memory_space<vmem>>, vector<1x1x128xf32>
    %221 = vector.shape_cast %220 : vector<1x1x128xf32> to vector<1x128xf32>
    %cst_115 = arith.constant dense<0.000000e+00> : vector<5xf32>
    %222 = vector.multi_reduction <add>, %217, %cst_115 [1] : vector<5x128xf32> to vector<5xf32>
    %223 = vector.shape_cast %222 : vector<5xf32> to vector<5x1xf32>
    %cst_116 = arith.constant 1.280000e+02 : f32
    %224 = vector.broadcast %cst_116 : f32 to vector<5x1xf32>
    %225 = arith.divf %223, %224 : vector<5x1xf32>
    %226 = vector.broadcast %225 : vector<5x1xf32> to vector<5x128xf32>
    %227 = arith.subf %217, %226 : vector<5x128xf32>
    %228 = arith.mulf %227, %227 : vector<5x128xf32>
    %cst_117 = arith.constant dense<0.000000e+00> : vector<5xf32>
    %229 = vector.multi_reduction <add>, %228, %cst_117 [1] : vector<5x128xf32> to vector<5xf32>
    %230 = vector.shape_cast %229 : vector<5xf32> to vector<5x1xf32>
    %cst_118 = arith.constant 1.280000e+02 : f32
    %231 = vector.broadcast %cst_118 : f32 to vector<5x1xf32>
    %232 = arith.divf %230, %231 : vector<5x1xf32>
    %233 = vector.broadcast %225 : vector<5x1xf32> to vector<5x128xf32>
    %234 = arith.subf %217, %233 : vector<5x128xf32>
    %cst_119 = arith.constant 9.99999974E-6 : f32
    %235 = vector.broadcast %cst_119 : f32 to vector<5x1xf32>
    %236 = arith.addf %232, %235 : vector<5x1xf32>
    %237 = math.rsqrt %236 : vector<5x1xf32>
    %238 = vector.broadcast %237 : vector<5x1xf32> to vector<5x128xf32>
    %239 = arith.mulf %234, %238 : vector<5x128xf32>
    %240 = vector.broadcast %219 : vector<1x128xf32> to vector<5x128xf32>
    %241 = arith.mulf %239, %240 : vector<5x128xf32>
    %242 = vector.broadcast %221 : vector<1x128xf32> to vector<5x128xf32>
    %243 = arith.addf %241, %242 : vector<5x128xf32>
    %c1_120 = arith.constant 1 : index
    %c0_121 = arith.constant 0 : index
    %c0_122 = arith.constant 0 : index
    %244 = vector.load %arg16[%c1_120, %c0_121, %c0_122] : memref<2x128x512xbf16, #tpu.memory_space<vmem>>, vector<1x128x512xbf16>
    %245 = vector.shape_cast %244 : vector<1x128x512xbf16> to vector<128x512xbf16>
    %c1_123 = arith.constant 1 : index
    %c0_124 = arith.constant 0 : index
    %c0_125 = arith.constant 0 : index
    %246 = vector.load %arg17[%c1_123, %c0_124, %c0_125] : memref<2x1x512xf32, #tpu.memory_space<vmem>>, vector<1x1x512xf32>
    %247 = vector.shape_cast %246 : vector<1x1x512xf32> to vector<1x512xf32>
    %248 = arith.truncf %243 : vector<5x128xf32> to vector<5x128xbf16>
    %cst_126 = arith.constant dense<0.000000e+00> : vector<5x512xf32>
    %249 = tpu.matmul %248, %245, %cst_126 {dimension_numbers = #tpu.dot_dimension_numbers<[1], [0], [0], [1], [0, 0, 1, 1], [], []>} : vector<5x128xbf16>, vector<128x512xbf16>, vector<5x512xf32> -> vector<5x512xf32>
    %250 = vector.broadcast %247 : vector<1x512xf32> to vector<5x512xf32>
    %251 = arith.addf %249, %250 : vector<5x512xf32>
    %cst_127 = arith.constant 1.702000e+00 : f32
    %252 = vector.broadcast %cst_127 : f32 to vector<5x512xf32>
    %253 = arith.mulf %252, %251 : vector<5x512xf32>
    %254 = arith.negf %253 : vector<5x512xf32>
    %255 = math.exp %254 : vector<5x512xf32>
    %cst_128 = arith.constant 1.000000e+00 : f32
    %256 = vector.broadcast %cst_128 : f32 to vector<5x512xf32>
    %257 = arith.addf %256, %255 : vector<5x512xf32>
    %258 = arith.divf %256, %257 : vector<5x512xf32>
    %259 = arith.mulf %251, %258 : vector<5x512xf32>
    %c1_129 = arith.constant 1 : index
    %c0_130 = arith.constant 0 : index
    %c0_131 = arith.constant 0 : index
    %260 = vector.load %arg18[%c1_129, %c0_130, %c0_131] : memref<2x512x128xbf16, #tpu.memory_space<vmem>>, vector<1x512x128xbf16>
    %261 = vector.shape_cast %260 : vector<1x512x128xbf16> to vector<512x128xbf16>
    %c1_132 = arith.constant 1 : index
    %c0_133 = arith.constant 0 : index
    %c0_134 = arith.constant 0 : index
    %262 = vector.load %arg19[%c1_132, %c0_133, %c0_134] : memref<2x1x128xf32, #tpu.memory_space<vmem>>, vector<1x1x128xf32>
    %263 = vector.shape_cast %262 : vector<1x1x128xf32> to vector<1x128xf32>
    %264 = arith.truncf %259 : vector<5x512xf32> to vector<5x512xbf16>
    %cst_135 = arith.constant dense<0.000000e+00> : vector<5x128xf32>
    %265 = tpu.matmul %264, %261, %cst_135 {dimension_numbers = #tpu.dot_dimension_numbers<[1], [0], [0], [1], [0, 0, 1, 1], [], []>} : vector<5x512xbf16>, vector<512x128xbf16>, vector<5x128xf32> -> vector<5x128xf32>
    %266 = vector.broadcast %263 : vector<1x128xf32> to vector<5x128xf32>
    %267 = arith.addf %265, %266 : vector<5x128xf32>
    %268 = arith.addf %217, %267 : vector<5x128xf32>
    %269 = vector.extract_strided_slice %268 {offsets = [0, 0], sizes = [1, 128], strides = [1, 1]} : vector<5x128xf32> to vector<1x128xf32>
    %c0_136 = arith.constant 0 : index
    %c0_137 = arith.constant 0 : index
    %270 = vector.load %arg6[%c0_136, %c0_137] : memref<1x128xf32, #tpu.memory_space<vmem>>, vector<1x128xf32>
    %c0_138 = arith.constant 0 : index
    %c0_139 = arith.constant 0 : index
    %271 = vector.load %arg7[%c0_138, %c0_139] : memref<1x128xf32, #tpu.memory_space<vmem>>, vector<1x128xf32>
    %cst_140 = arith.constant dense<0.000000e+00> : vector<1xf32>
    %272 = vector.multi_reduction <add>, %269, %cst_140 [1] : vector<1x128xf32> to vector<1xf32>
    %273 = vector.shape_cast %272 : vector<1xf32> to vector<1x1xf32>
    %cst_141 = arith.constant 1.280000e+02 : f32
    %274 = vector.broadcast %cst_141 : f32 to vector<1x1xf32>
    %275 = arith.divf %273, %274 : vector<1x1xf32>
    %276 = vector.broadcast %275 : vector<1x1xf32> to vector<1x128xf32>
    %277 = arith.subf %269, %276 : vector<1x128xf32>
    %278 = arith.mulf %277, %277 : vector<1x128xf32>
    %cst_142 = arith.constant dense<0.000000e+00> : vector<1xf32>
    %279 = vector.multi_reduction <add>, %278, %cst_142 [1] : vector<1x128xf32> to vector<1xf32>
    %280 = vector.shape_cast %279 : vector<1xf32> to vector<1x1xf32>
    %cst_143 = arith.constant 1.280000e+02 : f32
    %281 = vector.broadcast %cst_143 : f32 to vector<1x1xf32>
    %282 = arith.divf %280, %281 : vector<1x1xf32>
    %283 = vector.broadcast %275 : vector<1x1xf32> to vector<1x128xf32>
    %284 = arith.subf %269, %283 : vector<1x128xf32>
    %cst_144 = arith.constant 9.99999974E-6 : f32
    %285 = vector.broadcast %cst_144 : f32 to vector<1x1xf32>
    %286 = arith.addf %282, %285 : vector<1x1xf32>
    %287 = math.rsqrt %286 : vector<1x1xf32>
    %288 = vector.broadcast %287 : vector<1x1xf32> to vector<1x128xf32>
    %289 = arith.mulf %284, %288 : vector<1x128xf32>
    %290 = arith.mulf %289, %270 : vector<1x128xf32>
    %291 = arith.addf %290, %271 : vector<1x128xf32>
    %c0_145 = arith.constant 0 : index
    %c0_146 = arith.constant 0 : index
    %c0_147 = arith.constant 0 : index
    %292 = vector.load %arg20[%c0_145, %c0_146, %c0_147] : memref<4x128x128xbf16, #tpu.memory_space<vmem>>, vector<1x128x128xbf16>
    %293 = vector.shape_cast %292 : vector<1x128x128xbf16> to vector<128x128xbf16>
    %c0_148 = arith.constant 0 : index
    %c0_149 = arith.constant 0 : index
    %c0_150 = arith.constant 0 : index
    %294 = vector.load %arg21[%c0_148, %c0_149, %c0_150] : memref<4x1x128xf32, #tpu.memory_space<vmem>>, vector<1x1x128xf32>
    %295 = vector.shape_cast %294 : vector<1x1x128xf32> to vector<1x128xf32>
    %296 = arith.truncf %291 : vector<1x128xf32> to vector<1x128xbf16>
    %cst_151 = arith.constant dense<0.000000e+00> : vector<1x128xf32>
    %297 = tpu.matmul %296, %293, %cst_151 {dimension_numbers = #tpu.dot_dimension_numbers<[1], [0], [0], [1], [0, 0, 1, 1], [], []>} : vector<1x128xbf16>, vector<128x128xbf16>, vector<1x128xf32> -> vector<1x128xf32>
    %298 = arith.addf %297, %295 : vector<1x128xf32>
    %299 = arith.mulf %298, %298 : vector<1x128xf32>
    %300 = arith.mulf %298, %299 : vector<1x128xf32>
    %cst_152 = arith.constant 4.471500e-02 : f32
    %301 = vector.broadcast %cst_152 : f32 to vector<1x128xf32>
    %302 = arith.mulf %301, %300 : vector<1x128xf32>
    %303 = arith.addf %298, %302 : vector<1x128xf32>
    %cst_153 = arith.constant 0.797884583 : f32
    %304 = vector.broadcast %cst_153 : f32 to vector<1x128xf32>
    %305 = arith.mulf %304, %303 : vector<1x128xf32>
    %306 = math.tanh %305 : vector<1x128xf32>
    %cst_154 = arith.constant 1.000000e+00 : f32
    %307 = vector.broadcast %cst_154 : f32 to vector<1x128xf32>
    %308 = arith.addf %307, %306 : vector<1x128xf32>
    %cst_155 = arith.constant 5.000000e-01 : f32
    %309 = vector.broadcast %cst_155 : f32 to vector<1x128xf32>
    %310 = arith.mulf %309, %308 : vector<1x128xf32>
    %311 = arith.mulf %298, %310 : vector<1x128xf32>
    %c1_156 = arith.constant 1 : index
    %c0_157 = arith.constant 0 : index
    %c0_158 = arith.constant 0 : index
    %312 = vector.load %arg20[%c1_156, %c0_157, %c0_158] : memref<4x128x128xbf16, #tpu.memory_space<vmem>>, vector<1x128x128xbf16>
    %313 = vector.shape_cast %312 : vector<1x128x128xbf16> to vector<128x128xbf16>
    %c1_159 = arith.constant 1 : index
    %c0_160 = arith.constant 0 : index
    %c0_161 = arith.constant 0 : index
    %314 = vector.load %arg21[%c1_159, %c0_160, %c0_161] : memref<4x1x128xf32, #tpu.memory_space<vmem>>, vector<1x1x128xf32>
    %315 = vector.shape_cast %314 : vector<1x1x128xf32> to vector<1x128xf32>
    %316 = arith.truncf %311 : vector<1x128xf32> to vector<1x128xbf16>
    %cst_162 = arith.constant dense<0.000000e+00> : vector<1x128xf32>
    %317 = tpu.matmul %316, %313, %cst_162 {dimension_numbers = #tpu.dot_dimension_numbers<[1], [0], [0], [1], [0, 0, 1, 1], [], []>} : vector<1x128xbf16>, vector<128x128xbf16>, vector<1x128xf32> -> vector<1x128xf32>
    %318 = arith.addf %317, %315 : vector<1x128xf32>
    %319 = arith.mulf %318, %318 : vector<1x128xf32>
    %320 = arith.mulf %318, %319 : vector<1x128xf32>
    %cst_163 = arith.constant 4.471500e-02 : f32
    %321 = vector.broadcast %cst_163 : f32 to vector<1x128xf32>
    %322 = arith.mulf %321, %320 : vector<1x128xf32>
    %323 = arith.addf %318, %322 : vector<1x128xf32>
    %cst_164 = arith.constant 0.797884583 : f32
    %324 = vector.broadcast %cst_164 : f32 to vector<1x128xf32>
    %325 = arith.mulf %324, %323 : vector<1x128xf32>
    %326 = math.tanh %325 : vector<1x128xf32>
    %cst_165 = arith.constant 1.000000e+00 : f32
    %327 = vector.broadcast %cst_165 : f32 to vector<1x128xf32>
    %328 = arith.addf %327, %326 : vector<1x128xf32>
    %cst_166 = arith.constant 5.000000e-01 : f32
    %329 = vector.broadcast %cst_166 : f32 to vector<1x128xf32>
    %330 = arith.mulf %329, %328 : vector<1x128xf32>
    %331 = arith.mulf %318, %330 : vector<1x128xf32>
    %c2 = arith.constant 2 : index
    %c0_167 = arith.constant 0 : index
    %c0_168 = arith.constant 0 : index
    %332 = vector.load %arg20[%c2, %c0_167, %c0_168] : memref<4x128x128xbf16, #tpu.memory_space<vmem>>, vector<1x128x128xbf16>
    %333 = vector.shape_cast %332 : vector<1x128x128xbf16> to vector<128x128xbf16>
    %c2_169 = arith.constant 2 : index
    %c0_170 = arith.constant 0 : index
    %c0_171 = arith.constant 0 : index
    %334 = vector.load %arg21[%c2_169, %c0_170, %c0_171] : memref<4x1x128xf32, #tpu.memory_space<vmem>>, vector<1x1x128xf32>
    %335 = vector.shape_cast %334 : vector<1x1x128xf32> to vector<1x128xf32>
    %336 = arith.truncf %331 : vector<1x128xf32> to vector<1x128xbf16>
    %cst_172 = arith.constant dense<0.000000e+00> : vector<1x128xf32>
    %337 = tpu.matmul %336, %333, %cst_172 {dimension_numbers = #tpu.dot_dimension_numbers<[1], [0], [0], [1], [0, 0, 1, 1], [], []>} : vector<1x128xbf16>, vector<128x128xbf16>, vector<1x128xf32> -> vector<1x128xf32>
    %338 = arith.addf %337, %335 : vector<1x128xf32>
    %339 = arith.mulf %338, %338 : vector<1x128xf32>
    %340 = arith.mulf %338, %339 : vector<1x128xf32>
    %cst_173 = arith.constant 4.471500e-02 : f32
    %341 = vector.broadcast %cst_173 : f32 to vector<1x128xf32>
    %342 = arith.mulf %341, %340 : vector<1x128xf32>
    %343 = arith.addf %338, %342 : vector<1x128xf32>
    %cst_174 = arith.constant 0.797884583 : f32
    %344 = vector.broadcast %cst_174 : f32 to vector<1x128xf32>
    %345 = arith.mulf %344, %343 : vector<1x128xf32>
    %346 = math.tanh %345 : vector<1x128xf32>
    %cst_175 = arith.constant 1.000000e+00 : f32
    %347 = vector.broadcast %cst_175 : f32 to vector<1x128xf32>
    %348 = arith.addf %347, %346 : vector<1x128xf32>
    %cst_176 = arith.constant 5.000000e-01 : f32
    %349 = vector.broadcast %cst_176 : f32 to vector<1x128xf32>
    %350 = arith.mulf %349, %348 : vector<1x128xf32>
    %351 = arith.mulf %338, %350 : vector<1x128xf32>
    %c3 = arith.constant 3 : index
    %c0_177 = arith.constant 0 : index
    %c0_178 = arith.constant 0 : index
    %352 = vector.load %arg20[%c3, %c0_177, %c0_178] : memref<4x128x128xbf16, #tpu.memory_space<vmem>>, vector<1x128x128xbf16>
    %353 = vector.shape_cast %352 : vector<1x128x128xbf16> to vector<128x128xbf16>
    %c3_179 = arith.constant 3 : index
    %c0_180 = arith.constant 0 : index
    %c0_181 = arith.constant 0 : index
    %354 = vector.load %arg21[%c3_179, %c0_180, %c0_181] : memref<4x1x128xf32, #tpu.memory_space<vmem>>, vector<1x1x128xf32>
    %355 = vector.shape_cast %354 : vector<1x1x128xf32> to vector<1x128xf32>
    %356 = arith.truncf %351 : vector<1x128xf32> to vector<1x128xbf16>
    %cst_182 = arith.constant dense<0.000000e+00> : vector<1x128xf32>
    %357 = tpu.matmul %356, %353, %cst_182 {dimension_numbers = #tpu.dot_dimension_numbers<[1], [0], [0], [1], [0, 0, 1, 1], [], []>} : vector<1x128xbf16>, vector<128x128xbf16>, vector<1x128xf32> -> vector<1x128xf32>
    %358 = arith.addf %357, %355 : vector<1x128xf32>
    %359 = arith.mulf %358, %358 : vector<1x128xf32>
    %360 = arith.mulf %358, %359 : vector<1x128xf32>
    %cst_183 = arith.constant 4.471500e-02 : f32
    %361 = vector.broadcast %cst_183 : f32 to vector<1x128xf32>
    %362 = arith.mulf %361, %360 : vector<1x128xf32>
    %363 = arith.addf %358, %362 : vector<1x128xf32>
    %cst_184 = arith.constant 0.797884583 : f32
    %364 = vector.broadcast %cst_184 : f32 to vector<1x128xf32>
    %365 = arith.mulf %364, %363 : vector<1x128xf32>
    %366 = math.tanh %365 : vector<1x128xf32>
    %cst_185 = arith.constant 1.000000e+00 : f32
    %367 = vector.broadcast %cst_185 : f32 to vector<1x128xf32>
    %368 = arith.addf %367, %366 : vector<1x128xf32>
    %cst_186 = arith.constant 5.000000e-01 : f32
    %369 = vector.broadcast %cst_186 : f32 to vector<1x128xf32>
    %370 = arith.mulf %369, %368 : vector<1x128xf32>
    %371 = arith.mulf %358, %370 : vector<1x128xf32>
    %c0_187 = arith.constant 0 : index
    %c0_188 = arith.constant 0 : index
    %372 = vector.load %arg22[%c0_187, %c0_188] : memref<128x64xbf16, #tpu.memory_space<vmem>>, vector<128x64xbf16>
    %c0_189 = arith.constant 0 : index
    %c0_190 = arith.constant 0 : index
    %373 = vector.load %arg23[%c0_189, %c0_190] : memref<1x64xf32, #tpu.memory_space<vmem>>, vector<1x64xf32>
    %374 = arith.truncf %371 : vector<1x128xf32> to vector<1x128xbf16>
    %cst_191 = arith.constant dense<0.000000e+00> : vector<1x64xf32>
    %375 = tpu.matmul %374, %372, %cst_191 {dimension_numbers = #tpu.dot_dimension_numbers<[1], [0], [0], [1], [0, 0, 1, 1], [], []>} : vector<1x128xbf16>, vector<128x64xbf16>, vector<1x64xf32> -> vector<1x64xf32>
    %376 = arith.addf %375, %373 : vector<1x64xf32>
    %c0_192 = arith.constant 0 : index
    %c0_193 = arith.constant 0 : index
    %377 = vector.load %arg24[%c0_192, %c0_193] : memref<64x128xbf16, #tpu.memory_space<vmem>>, vector<64x128xbf16>
    %c0_194 = arith.constant 0 : index
    %c0_195 = arith.constant 0 : index
    %378 = vector.load %arg25[%c0_194, %c0_195] : memref<1x128xf32, #tpu.memory_space<vmem>>, vector<1x128xf32>
    %379 = arith.truncf %376 : vector<1x64xf32> to vector<1x64xbf16>
    %cst_196 = arith.constant dense<0.000000e+00> : vector<1x128xf32>
    %380 = tpu.matmul %379, %377, %cst_196 {dimension_numbers = #tpu.dot_dimension_numbers<[1], [0], [0], [1], [0, 0, 1, 1], [], []>} : vector<1x64xbf16>, vector<64x128xbf16>, vector<1x128xf32> -> vector<1x128xf32>
    %381 = arith.addf %380, %378 : vector<1x128xf32>
    %382 = arith.mulf %381, %381 : vector<1x128xf32>
    %383 = arith.mulf %381, %382 : vector<1x128xf32>
    %cst_197 = arith.constant 4.471500e-02 : f32
    %384 = vector.broadcast %cst_197 : f32 to vector<1x128xf32>
    %385 = arith.mulf %384, %383 : vector<1x128xf32>
    %386 = arith.addf %381, %385 : vector<1x128xf32>
    %cst_198 = arith.constant 0.797884583 : f32
    %387 = vector.broadcast %cst_198 : f32 to vector<1x128xf32>
    %388 = arith.mulf %387, %386 : vector<1x128xf32>
    %389 = math.tanh %388 : vector<1x128xf32>
    %cst_199 = arith.constant 1.000000e+00 : f32
    %390 = vector.broadcast %cst_199 : f32 to vector<1x128xf32>
    %391 = arith.addf %390, %389 : vector<1x128xf32>
    %cst_200 = arith.constant 5.000000e-01 : f32
    %392 = vector.broadcast %cst_200 : f32 to vector<1x128xf32>
    %393 = arith.mulf %392, %391 : vector<1x128xf32>
    %394 = arith.mulf %381, %393 : vector<1x128xf32>
    %c0_201 = arith.constant 0 : index
    %c0_202 = arith.constant 0 : index
    %395 = vector.load %arg26[%c0_201, %c0_202] : memref<128x128xbf16, #tpu.memory_space<vmem>>, vector<128x128xbf16>
    %c0_203 = arith.constant 0 : index
    %c0_204 = arith.constant 0 : index
    %396 = vector.load %arg27[%c0_203, %c0_204] : memref<1x128xf32, #tpu.memory_space<vmem>>, vector<1x128xf32>
    %397 = arith.truncf %394 : vector<1x128xf32> to vector<1x128xbf16>
    %cst_205 = arith.constant dense<0.000000e+00> : vector<1x128xf32>
    %398 = tpu.matmul %397, %395, %cst_205 {dimension_numbers = #tpu.dot_dimension_numbers<[1], [0], [0], [1], [0, 0, 1, 1], [], []>} : vector<1x128xbf16>, vector<128x128xbf16>, vector<1x128xf32> -> vector<1x128xf32>
    %399 = arith.addf %398, %396 : vector<1x128xf32>
    %400 = arith.mulf %399, %399 : vector<1x128xf32>
    %401 = arith.mulf %399, %400 : vector<1x128xf32>
    %cst_206 = arith.constant 4.471500e-02 : f32
    %402 = vector.broadcast %cst_206 : f32 to vector<1x128xf32>
    %403 = arith.mulf %402, %401 : vector<1x128xf32>
    %404 = arith.addf %399, %403 : vector<1x128xf32>
    %cst_207 = arith.constant 0.797884583 : f32
    %405 = vector.broadcast %cst_207 : f32 to vector<1x128xf32>
    %406 = arith.mulf %405, %404 : vector<1x128xf32>
    %407 = math.tanh %406 : vector<1x128xf32>
    %cst_208 = arith.constant 1.000000e+00 : f32
    %408 = vector.broadcast %cst_208 : f32 to vector<1x128xf32>
    %409 = arith.addf %408, %407 : vector<1x128xf32>
    %cst_209 = arith.constant 5.000000e-01 : f32
    %410 = vector.broadcast %cst_209 : f32 to vector<1x128xf32>
    %411 = arith.mulf %410, %409 : vector<1x128xf32>
    %412 = arith.mulf %399, %411 : vector<1x128xf32>
    %c0_210 = arith.constant 0 : index
    %c0_211 = arith.constant 0 : index
    %413 = vector.load %arg28[%c0_210, %c0_211] : memref<128x128xbf16, #tpu.memory_space<vmem>>, vector<128x128xbf16>
    %c0_212 = arith.constant 0 : index
    %c0_213 = arith.constant 0 : index
    %414 = vector.load %arg29[%c0_212, %c0_213] : memref<1x128xf32, #tpu.memory_space<vmem>>, vector<1x128xf32>
    %415 = arith.truncf %412 : vector<1x128xf32> to vector<1x128xbf16>
    %cst_214 = arith.constant dense<0.000000e+00> : vector<1x128xf32>
    %416 = tpu.matmul %415, %413, %cst_214 {dimension_numbers = #tpu.dot_dimension_numbers<[1], [0], [0], [1], [0, 0, 1, 1], [], []>} : vector<1x128xbf16>, vector<128x128xbf16>, vector<1x128xf32> -> vector<1x128xf32>
    %417 = arith.addf %416, %414 : vector<1x128xf32>
    %c0_215 = arith.constant 0 : index
    %c0_216 = arith.constant 0 : index
    %c0_217 = arith.constant 0 : index
    %418 = vector.load %arg30[%c0_215, %c0_216, %c0_217] : memref<1x1x128xf32, #tpu.memory_space<vmem>>, vector<1x1x128xf32>
    %419 = vector.shape_cast %418 : vector<1x1x128xf32> to vector<1x128xf32>
    %420 = vector.shape_cast %291 : vector<1x128xf32> to vector<1x1x128xf32>
    tpu.vector_store %arg30[%c0_215, %c0_216, %c0_217], %420 {strides = array<i32>} : memref<1x1x128xf32, #tpu.memory_space<vmem>>, vector<1x1x128xf32>,
    %c0_218 = arith.constant 0 : index
    %c0_219 = arith.constant 0 : index
    %c0_220 = arith.constant 0 : index
    %421 = vector.load %arg31[%c0_218, %c0_219, %c0_220] : memref<1x1x128xf32, #tpu.memory_space<vmem>>, vector<1x1x128xf32>
    %422 = vector.shape_cast %421 : vector<1x1x128xf32> to vector<1x128xf32>
    %423 = vector.shape_cast %417 : vector<1x128xf32> to vector<1x1x128xf32>
    tpu.vector_store %arg31[%c0_218, %c0_219, %c0_220], %423 {strides = array<i32>} : memref<1x1x128xf32, #tpu.memory_space<vmem>>, vector<1x1x128xf32>,
    return
  }
  func.func @transform_0(%arg0: i32) -> (i32, i32, i32) {
    %c0_i32 = arith.constant 0 : i32
    %c0_i32_0 = arith.constant 0 : i32
    %c0_i32_1 = arith.constant 0 : i32
    return %arg0, %c0_i32, %c0_i32_0 : i32, i32, i32
  }
  func.func @transform_1(%arg0: i32) -> (i32, i32) {
    %c0_i32 = arith.constant 0 : i32
    %c0_i32_0 = arith.constant 0 : i32
    %c0_i32_1 = arith.constant 0 : i32
    return %c0_i32, %c0_i32_0 : i32, i32
  }
  func.func @transform_2(%arg0: i32) -> (i32, i32) {
    %c0_i32 = arith.constant 0 : i32
    %c0_i32_0 = arith.constant 0 : i32
    %c0_i32_1 = arith.constant 0 : i32
    return %c0_i32, %c0_i32_0 : i32, i32
  }
  func.func @transform_3(%arg0: i32) -> (i32, i32) {
    %c0_i32 = arith.constant 0 : i32
    %c0_i32_0 = arith.constant 0 : i32
    %c0_i32_1 = arith.constant 0 : i32
    return %c0_i32, %c0_i32_0 : i32, i32
  }
  func.func @transform_4(%arg0: i32) -> (i32, i32) {
    %c0_i32 = arith.constant 0 : i32
    %c0_i32_0 = arith.constant 0 : i32
    %c0_i32_1 = arith.constant 0 : i32
    return %c0_i32, %c0_i32_0 : i32, i32
  }
  func.func @transform_5(%arg0: i32) -> (i32, i32) {
    %c0_i32 = arith.constant 0 : i32
    %c0_i32_0 = arith.constant 0 : i32
    %c0_i32_1 = arith.constant 0 : i32
    return %c0_i32, %c0_i32_0 : i32, i32
  }
  func.func @transform_6(%arg0: i32) -> (i32, i32) {
    %c0_i32 = arith.constant 0 : i32
    %c0_i32_0 = arith.constant 0 : i32
    %c0_i32_1 = arith.constant 0 : i32
    return %c0_i32, %c0_i32_0 : i32, i32
  }
  func.func @transform_7(%arg0: i32) -> (i32, i32, i32) {
    %c0_i32 = arith.constant 0 : i32
    %c0_i32_0 = arith.constant 0 : i32
    %c0_i32_1 = arith.constant 0 : i32
    %c0_i32_2 = arith.constant 0 : i32
    return %c0_i32, %c0_i32_0, %c0_i32_1 : i32, i32, i32
  }
  func.func @transform_8(%arg0: i32) -> (i32, i32, i32) {
    %c0_i32 = arith.constant 0 : i32
    %c0_i32_0 = arith.constant 0 : i32
    %c0_i32_1 = arith.constant 0 : i32
    %c0_i32_2 = arith.constant 0 : i32
    return %c0_i32, %c0_i32_0, %c0_i32_1 : i32, i32, i32
  }
  func.func @transform_9(%arg0: i32) -> (i32, i32, i32) {
    %c0_i32 = arith.constant 0 : i32
    %c0_i32_0 = arith.constant 0 : i32
    %c0_i32_1 = arith.constant 0 : i32
    %c0_i32_2 = arith.constant 0 : i32
    return %c0_i32, %c0_i32_0, %c0_i32_1 : i32, i32, i32
  }
  func.func @transform_10(%arg0: i32) -> (i32, i32, i32) {
    %c0_i32 = arith.constant 0 : i32
    %c0_i32_0 = arith.constant 0 : i32
    %c0_i32_1 = arith.constant 0 : i32
    %c0_i32_2 = arith.constant 0 : i32
    return %c0_i32, %c0_i32_0, %c0_i32_1 : i32, i32, i32
  }
  func.func @transform_11(%arg0: i32) -> (i32, i32, i32, i32) {
    %c0_i32 = arith.constant 0 : i32
    %c0_i32_0 = arith.constant 0 : i32
    %c0_i32_1 = arith.constant 0 : i32
    %c0_i32_2 = arith.constant 0 : i32
    %c0_i32_3 = arith.constant 0 : i32
    return %c0_i32, %c0_i32_0, %c0_i32_1, %c0_i32_2 : i32, i32, i32, i32
  }
  func.func @transform_12(%arg0: i32) -> (i32, i32, i32, i32) {
    %c0_i32 = arith.constant 0 : i32
    %c0_i32_0 = arith.constant 0 : i32
    %c0_i32_1 = arith.constant 0 : i32
    %c0_i32_2 = arith.constant 0 : i32
    %c0_i32_3 = arith.constant 0 : i32
    return %c0_i32, %c0_i32_0, %c0_i32_1, %c0_i32_2 : i32, i32, i32, i32
  }
  func.func @transform_13(%arg0: i32) -> (i32, i32, i32, i32) {
    %c0_i32 = arith.constant 0 : i32
    %c0_i32_0 = arith.constant 0 : i32
    %c0_i32_1 = arith.constant 0 : i32
    %c0_i32_2 = arith.constant 0 : i32
    %c0_i32_3 = arith.constant 0 : i32
    return %c0_i32, %c0_i32_0, %c0_i32_1, %c0_i32_2 : i32, i32, i32, i32
  }
  func.func @transform_14(%arg0: i32) -> (i32, i32, i32) {
    %c0_i32 = arith.constant 0 : i32
    %c0_i32_0 = arith.constant 0 : i32
    %c0_i32_1 = arith.constant 0 : i32
    %c0_i32_2 = arith.constant 0 : i32
    return %c0_i32, %c0_i32_0, %c0_i32_1 : i32, i32, i32
  }
  func.func @transform_15(%arg0: i32) -> (i32, i32, i32) {
    %c0_i32 = arith.constant 0 : i32
    %c0_i32_0 = arith.constant 0 : i32
    %c0_i32_1 = arith.constant 0 : i32
    %c0_i32_2 = arith.constant 0 : i32
    return %c0_i32, %c0_i32_0, %c0_i32_1 : i32, i32, i32
  }
  func.func @transform_16(%arg0: i32) -> (i32, i32, i32) {
    %c0_i32 = arith.constant 0 : i32
    %c0_i32_0 = arith.constant 0 : i32
    %c0_i32_1 = arith.constant 0 : i32
    %c0_i32_2 = arith.constant 0 : i32
    return %c0_i32, %c0_i32_0, %c0_i32_1 : i32, i32, i32
  }
  func.func @transform_17(%arg0: i32) -> (i32, i32, i32) {
    %c0_i32 = arith.constant 0 : i32
    %c0_i32_0 = arith.constant 0 : i32
    %c0_i32_1 = arith.constant 0 : i32
    %c0_i32_2 = arith.constant 0 : i32
    return %c0_i32, %c0_i32_0, %c0_i32_1 : i32, i32, i32
  }
  func.func @transform_18(%arg0: i32) -> (i32, i32, i32) {
    %c0_i32 = arith.constant 0 : i32
    %c0_i32_0 = arith.constant 0 : i32
    %c0_i32_1 = arith.constant 0 : i32
    %c0_i32_2 = arith.constant 0 : i32
    return %c0_i32, %c0_i32_0, %c0_i32_1 : i32, i32, i32
  }
  func.func @transform_19(%arg0: i32) -> (i32, i32, i32) {
    %c0_i32 = arith.constant 0 : i32
    %c0_i32_0 = arith.constant 0 : i32
    %c0_i32_1 = arith.constant 0 : i32
    %c0_i32_2 = arith.constant 0 : i32
    return %c0_i32, %c0_i32_0, %c0_i32_1 : i32, i32, i32
  }
  func.func @transform_20(%arg0: i32) -> (i32, i32, i32) {
    %c0_i32 = arith.constant 0 : i32
    %c0_i32_0 = arith.constant 0 : i32
    %c0_i32_1 = arith.constant 0 : i32
    %c0_i32_2 = arith.constant 0 : i32
    return %c0_i32, %c0_i32_0, %c0_i32_1 : i32, i32, i32
  }
  func.func @transform_21(%arg0: i32) -> (i32, i32) {
    %c0_i32 = arith.constant 0 : i32
    %c0_i32_0 = arith.constant 0 : i32
    %c0_i32_1 = arith.constant 0 : i32
    return %c0_i32, %c0_i32_0 : i32, i32
  }
  func.func @transform_22(%arg0: i32) -> (i32, i32) {
    %c0_i32 = arith.constant 0 : i32
    %c0_i32_0 = arith.constant 0 : i32
    %c0_i32_1 = arith.constant 0 : i32
    return %c0_i32, %c0_i32_0 : i32, i32
  }
  func.func @transform_23(%arg0: i32) -> (i32, i32) {
    %c0_i32 = arith.constant 0 : i32
    %c0_i32_0 = arith.constant 0 : i32
    %c0_i32_1 = arith.constant 0 : i32
    return %c0_i32, %c0_i32_0 : i32, i32
  }
  func.func @transform_24(%arg0: i32) -> (i32, i32) {
    %c0_i32 = arith.constant 0 : i32
    %c0_i32_0 = arith.constant 0 : i32
    %c0_i32_1 = arith.constant 0 : i32
    return %c0_i32, %c0_i32_0 : i32, i32
  }
  func.func @transform_25(%arg0: i32) -> (i32, i32) {
    %c0_i32 = arith.constant 0 : i32
    %c0_i32_0 = arith.constant 0 : i32
    %c0_i32_1 = arith.constant 0 : i32
    return %c0_i32, %c0_i32_0 : i32, i32
  }
  func.func @transform_26(%arg0: i32) -> (i32, i32) {
    %c0_i32 = arith.constant 0 : i32
    %c0_i32_0 = arith.constant 0 : i32
    %c0_i32_1 = arith.constant 0 : i32
    return %c0_i32, %c0_i32_0 : i32, i32
  }
  func.func @transform_27(%arg0: i32) -> (i32, i32) {
    %c0_i32 = arith.constant 0 : i32
    %c0_i32_0 = arith.constant 0 : i32
    %c0_i32_1 = arith.constant 0 : i32
    return %c0_i32, %c0_i32_0 : i32, i32
  }
  func.func @transform_28(%arg0: i32) -> (i32, i32) {
    %c0_i32 = arith.constant 0 : i32
    %c0_i32_0 = arith.constant 0 : i32
    %c0_i32_1 = arith.constant 0 : i32
    return %c0_i32, %c0_i32_0 : i32, i32
  }
  func.func @transform_29(%arg0: i32) -> (i32, i32, i32) {
    %c0_i32 = arith.constant 0 : i32
    %c0_i32_0 = arith.constant 0 : i32
    %c0_i32_1 = arith.constant 0 : i32
    return %arg0, %c0_i32, %c0_i32_0 : i32, i32, i32
  }
  func.func @transform_30(%arg0: i32) -> (i32, i32, i32) {
    %c0_i32 = arith.constant 0 : i32
    %c0_i32_0 = arith.constant 0 : i32
    %c0_i32_1 = arith.constant 0 : i32
    return %arg0, %c0_i32, %c0_i32_0 : i32, i32, i32
  }
}

</mosaic_0001>

<llo_original>
// kernel: clipvitl_reduction_forward.1
$region0: #{clipvitl_reduction_forward.1}
  #allocation0 [shape = 'u32[]', space=smem, size = 0x4, offset = 0x4, fixed_abs, tag = 'smem constant byte address 0x4 - core index']
  #allocation1 [shape = 'u32[72,128]{1,0:T(1,128)}', space=vmem, size = 0x9000, scoped, tag = 'internal scratch']
  %s0 = inlined_call_operand.smem [shape: u32[31], index: -1, kind: input, shape index: {}]
  %s1 = sld [smem:[%s0]]
  %s2 = scalar_lea.smem %s0, 1
  %s3 = sld [smem:[%s2]]
  %s4 = scalar_lea.smem %s0, 2
  %s5 = sld [smem:[%s4]]
  %s6 = scalar_lea.smem %s0, 3
  %s7 = sld [smem:[%s6]]
  %s8 = scalar_lea.smem %s0, 4
  %s9 = sld [smem:[%s8]]
  %s10 = scalar_lea.smem %s0, 5
  %s11 = sld [smem:[%s10]]
  %s12 = scalar_lea.smem %s0, 6
  %s13 = sld [smem:[%s12]]
  %s14 = scalar_lea.smem %s0, 7
  %s15 = sld [smem:[%s14]]
  %s16 = scalar_lea.smem %s0, 8
  %s17 = sld [smem:[%s16]]
  %s18 = scalar_lea.smem %s0, 9
  %s19 = sld [smem:[%s18]]
  %s20 = scalar_lea.smem %s0, 10
  %s21 = sld [smem:[%s20]]
  %s22 = scalar_lea.smem %s0, 11
  %s23 = sld [smem:[%s22]]
  %s24 = scalar_lea.smem %s0, 12
  %s25 = sld [smem:[%s24]]
  %s26 = scalar_lea.smem %s0, 13
  %s27 = sld [smem:[%s26]]
  %s28 = scalar_lea.smem %s0, 14
  %s29 = sld [smem:[%s28]]
  %s30 = scalar_lea.smem %s0, 15
  %s31 = sld [smem:[%s30]]
  %s32 = scalar_lea.smem %s0, 16
  %s33 = sld [smem:[%s32]]
  %s34 = scalar_lea.smem %s0, 17
  %s35 = sld [smem:[%s34]]
  %s36 = scalar_lea.smem %s0, 18
  %s37 = sld [smem:[%s36]]
  %s38 = scalar_lea.smem %s0, 19
  %s39 = sld [smem:[%s38]]
  %s40 = scalar_lea.smem %s0, 20
  %s41 = sld [smem:[%s40]]
  %s42 = scalar_lea.smem %s0, 21
  %s43 = sld [smem:[%s42]]
  %s44 = scalar_lea.smem %s0, 22
  %s45 = sld [smem:[%s44]]
  %s46 = scalar_lea.smem %s0, 23
  %s47 = sld [smem:[%s46]]
  %s48 = scalar_lea.smem %s0, 24
  %s49 = sld [smem:[%s48]]
  %s50 = scalar_lea.smem %s0, 25
  %s51 = sld [smem:[%s50]]
  %s52 = scalar_lea.smem %s0, 26
  %s53 = sld [smem:[%s52]]
  %s54 = scalar_lea.smem %s0, 27
  %s55 = sld [smem:[%s54]]
  %s56 = scalar_lea.smem %s0, 28
  %s57 = sld [smem:[%s56]]
  %s58 = scalar_lea.smem %s0, 29
  %s59 = sld [smem:[%s58]]
  %s60 = scalar_lea.smem %s0, 30
  %s61 = sld [smem:[%s60]]
  %62 = xla_tuple %s59, %s61
  %s63 = sld [smem:[#allocation0]]
  $region157: #{clipvitl_reduction_forward.1} parent=0
    _
  %s65 = ssub.s32 1, %s63
  %s66 = scalar_select 0, %s65, %s63
  $region1: #{clipvitl_reduction_forward.1} parent=0
    #allocation2 [shape = 'u8[1024]{0}', space=vmem, size = 0x400, scoped, tag = 'output window, operand 0']
    #allocation3 [shape = 's32[2]{0}', space=sflag, size = 0x8, scoped, tag = 'scoped memory for clipvitl_reduction_forward.1']
    #allocation4 [shape = 'u8[1024]{0}', space=vmem, size = 0x400, scoped, tag = 'output window, operand 1']
    #allocation5 [shape = 's32[2]{0}', space=sflag, size = 0x8, scoped, tag = 'scoped memory for clipvitl_reduction_forward.1']
    %67 = vsyncpa [#allocation3], 0
    %s68 = scalar_lea.sflag [#allocation3], 1
    %69 = vsyncpa %s68, 0
    %70 = vsyncpa [#allocation5], 0
    %s71 = scalar_lea.sflag [#allocation5], 1
    %72 = vsyncpa %s71, 0
    loop: start=0, step=1, limit=4
    $region2: #{clipvitl_reduction_forward.1} parent=1 // loop_pre_header
      _
    $region3: #{clipvitl_reduction_forward.1} parent=1 // loop_header
      %s74 = sphi 0, %s78
      %p75 = scmp.ge.s32.totalorder %s74, 4
      %s84 = sphi 0, %s86
      %s87 = sphi 0, %s84
      %s88 = sphi 0, %s87
      %s104 = sphi 0, %s88
      %s108 = sphi 0, %s108
      %s110 = sphi 0, %s108
      %s111 = sphi 0, %s110
      %s125 = sphi 0, %s111
      %s129 = sphi 0, %s129
      %s131 = sphi 0, %s129
      %s132 = sphi 0, %s131
      %s146 = sphi 0, %s132
      %s150 = sphi 0, %s150
      %s152 = sphi 0, %s150
      %s153 = sphi 0, %s152
      %s167 = sphi 0, %s153
      %s171 = sphi 0, %s171
      %s173 = sphi 0, %s171
      %s174 = sphi 0, %s173
      %s188 = sphi 0, %s174
      %s192 = sphi 0, %s192
      %s194 = sphi 0, %s192
      %s195 = sphi 0, %s194
      %s209 = sphi 0, %s195
      %s213 = sphi 0, %s213
      %s215 = sphi 0, %s213
      %s216 = sphi 0, %s215
      %s230 = sphi 0, %s216
      %s234 = sphi 0, %s234
      %s236 = sphi 0, %s234
      %s237 = sphi 0, %s236
      %s251 = sphi 0, %s237
      %s255 = sphi 0, %s255
      %s257 = sphi 0, %s255
      %s258 = sphi 0, %s257
      %s272 = sphi 0, %s258
      %s276 = sphi 0, %s276
      %s278 = sphi 0, %s276
      %s279 = sphi 0, %s278
      %s293 = sphi 0, %s279
      %s297 = sphi 0, %s297
      %s299 = sphi 0, %s297
      %s300 = sphi 0, %s299
      %s314 = sphi 0, %s300
      %s318 = sphi 0, %s318
      %s320 = sphi 0, %s318
      %s321 = sphi 0, %s320
      %s335 = sphi 0, %s321
      %s339 = sphi 0, %s339
      %s341 = sphi 0, %s339
      %s342 = sphi 0, %s341
      %s356 = sphi 0, %s342
      %s360 = sphi 0, %s360
      %s362 = sphi 0, %s360
      %s363 = sphi 0, %s362
      %s377 = sphi 0, %s363
      %s381 = sphi 0, %s381
      %s383 = sphi 0, %s381
      %s384 = sphi 0, %s383
      %s398 = sphi 0, %s384
      %s402 = sphi 0, %s402
      %s404 = sphi 0, %s402
      %s405 = sphi 0, %s404
      %s419 = sphi 0, %s405
      %s423 = sphi 0, %s423
      %s425 = sphi 0, %s423
      %s426 = sphi 0, %s425
      %s440 = sphi 0, %s426
      %s444 = sphi 0, %s444
      %s446 = sphi 0, %s444
      %s447 = sphi 0, %s446
      %s461 = sphi 0, %s447
      %s465 = sphi 0, %s465
      %s467 = sphi 0, %s465
      %s468 = sphi 0, %s467
      %s482 = sphi 0, %s468
      %s486 = sphi 0, %s486
      %s488 = sphi 0, %s486
      %s489 = sphi 0, %s488
      %s503 = sphi 0, %s489
      %s507 = sphi 0, %s507
      %s509 = sphi 0, %s507
      %s510 = sphi 0, %s509
      %s524 = sphi 0, %s510
      %s528 = sphi 0, %s528
      %s530 = sphi 0, %s528
      %s531 = sphi 0, %s530
      %s545 = sphi 0, %s531
      %s549 = sphi 0, %s549
      %s551 = sphi 0, %s549
      %s552 = sphi 0, %s551
      %s566 = sphi 0, %s552
      %s570 = sphi 0, %s570
      %s572 = sphi 0, %s570
      %s573 = sphi 0, %s572
      %s587 = sphi 0, %s573
      %s591 = sphi 0, %s591
      %s593 = sphi 0, %s591
      %s594 = sphi 0, %s593
      %s608 = sphi 0, %s594
      %s612 = sphi 0, %s612
      %s614 = sphi 0, %s612
      %s615 = sphi 0, %s614
      %s629 = sphi 0, %s615
      %s633 = sphi 0, %s633
      %s635 = sphi 0, %s633
      %s636 = sphi 0, %s635
      %s650 = sphi 0, %s636
      %s654 = sphi 0, %s654
      %s656 = sphi 0, %s654
      %s657 = sphi 0, %s656
      %s671 = sphi 0, %s657
      %s675 = sphi 0, %s675
      %s677 = sphi 0, %s675
      %s678 = sphi 0, %s677
      %s692 = sphi 0, %s678
      %s698 = sphi 0, %s700
      %s701 = sphi 0, %s698
      %s702 = sphi 0, %s701
      %s718 = sphi 0, %s702
      %s724 = sphi 0, %s726
      %s727 = sphi 0, %s724
      %s728 = sphi 0, %s727
      %s744 = sphi 0, %s728
    $region4: #{clipvitl_reduction_forward.1} parent=1 // loop_header_branch
      %77 = sbr.rel (%p75) target = $region8
    $region5: #{clipvitl_reduction_forward.1} parent=1 // loop_body
      %s79 = ssub.s32 %s74, 1
      %s80 = ssub.s32 %s74, 2
      %s81 = sadd.s32 %s74, 1
      %s82 = ssub.s32 %s74, %s81
      %p83 = scmp.eq.s32.totalorder %s82, 0
      %s85 = sadd.s32 %s84, 1
      %s86 = scalar_select %p83, %s84, %s85
      %p89 = pneg %p83
      %p90 = scmp.eq.s32.totalorder %s74, 1
      %p91 = por %p89, %p90
      %p92 = scmp.ne.s32.totalorder %s84, %s87
      %p93 = scmp.eq.s32.totalorder %s74, 0
      %p94 = por %p92, %p93
      %p95 = scmp.ne.s32.totalorder %s84, %s87
      %p96 = scmp.eq.s32.totalorder %s79, 1
      %p97 = por %p95, %p96
      %p98 = scmp.ne.s32.totalorder %s87, %s88
      %p99 = scmp.eq.s32.totalorder %s79, 0
      %p100 = por %p98, %p99
      %p101 = scmp.ne.s32.totalorder %s87, %s88
      %p102 = scmp.eq.s32.totalorder %s80, 1
      %p103 = por %p101, %p102
      %p105 = scmp.ne.s32.totalorder %s88, %s104
      %p106 = scmp.eq.s32.totalorder %s80, 0
      %p107 = por %p105, %p106
      %s109 = sadd.s32 %s108, 1
      %p112 = scmp.eq.s32.totalorder %s74, 1
      %p113 = scmp.ne.s32.totalorder %s108, %s110
      %p114 = scmp.eq.s32.totalorder %s74, 0
      %p115 = por %p113, %p114
      %p116 = scmp.ne.s32.totalorder %s108, %s110
      %p117 = scmp.eq.s32.totalorder %s79, 1
      %p118 = por %p116, %p117
      %p119 = scmp.ne.s32.totalorder %s110, %s111
      %p120 = scmp.eq.s32.totalorder %s79, 0
      %p121 = por %p119, %p120
      %p122 = scmp.ne.s32.totalorder %s110, %s111
      %p123 = scmp.eq.s32.totalorder %s80, 1
      %p124 = por %p122, %p123
      %p126 = scmp.ne.s32.totalorder %s111, %s125
      %p127 = scmp.eq.s32.totalorder %s80, 0
      %p128 = por %p126, %p127
      %s130 = sadd.s32 %s129, 1
      %p133 = scmp.eq.s32.totalorder %s74, 1
      %p134 = scmp.ne.s32.totalorder %s129, %s131
      %p135 = scmp.eq.s32.totalorder %s74, 0
      %p136 = por %p134, %p135
      %p137 = scmp.ne.s32.totalorder %s129, %s131
      %p138 = scmp.eq.s32.totalorder %s79, 1
      %p139 = por %p137, %p138
      %p140 = scmp.ne.s32.totalorder %s131, %s132
      %p141 = scmp.eq.s32.totalorder %s79, 0
      %p142 = por %p140, %p141
      %p143 = scmp.ne.s32.totalorder %s131, %s132
      %p144 = scmp.eq.s32.totalorder %s80, 1
      %p145 = por %p143, %p144
      %p147 = scmp.ne.s32.totalorder %s132, %s146
      %p148 = scmp.eq.s32.totalorder %s80, 0
      %p149 = por %p147, %p148
      %s151 = sadd.s32 %s150, 1
      %p154 = scmp.eq.s32.totalorder %s74, 1
      %p155 = scmp.ne.s32.totalorder %s150, %s152
      %p156 = scmp.eq.s32.totalorder %s74, 0
      %p157 = por %p155, %p156
      %p158 = scmp.ne.s32.totalorder %s150, %s152
      %p159 = scmp.eq.s32.totalorder %s79, 1
      %p160 = por %p158, %p159
      %p161 = scmp.ne.s32.totalorder %s152, %s153
      %p162 = scmp.eq.s32.totalorder %s79, 0
      %p163 = por %p161, %p162
      %p164 = scmp.ne.s32.totalorder %s152, %s153
      %p165 = scmp.eq.s32.totalorder %s80, 1
      %p166 = por %p164, %p165
      %p168 = scmp.ne.s32.totalorder %s153, %s167
      %p169 = scmp.eq.s32.totalorder %s80, 0
      %p170 = por %p168, %p169
      %s172 = sadd.s32 %s171, 1
      %p175 = scmp.eq.s32.totalorder %s74, 1
      %p176 = scmp.ne.s32.totalorder %s171, %s173
      %p177 = scmp.eq.s32.totalorder %s74, 0
      %p178 = por %p176, %p177
      %p179 = scmp.ne.s32.totalorder %s171, %s173
      %p180 = scmp.eq.s32.totalorder %s79, 1
      %p181 = por %p179, %p180
      %p182 = scmp.ne.s32.totalorder %s173, %s174
      %p183 = scmp.eq.s32.totalorder %s79, 0
      %p184 = por %p182, %p183
      %p185 = scmp.ne.s32.totalorder %s173, %s174
      %p186 = scmp.eq.s32.totalorder %s80, 1
      %p187 = por %p185, %p186
      %p189 = scmp.ne.s32.totalorder %s174, %s188
      %p190 = scmp.eq.s32.totalorder %s80, 0
      %p191 = por %p189, %p190
      %s193 = sadd.s32 %s192, 1
      %p196 = scmp.eq.s32.totalorder %s74, 1
      %p197 = scmp.ne.s32.totalorder %s192, %s194
      %p198 = scmp.eq.s32.totalorder %s74, 0
      %p199 = por %p197, %p198
      %p200 = scmp.ne.s32.totalorder %s192, %s194
      %p201 = scmp.eq.s32.totalorder %s79, 1
      %p202 = por %p200, %p201
      %p203 = scmp.ne.s32.totalorder %s194, %s195
      %p204 = scmp.eq.s32.totalorder %s79, 0
      %p205 = por %p203, %p204
      %p206 = scmp.ne.s32.totalorder %s194, %s195
      %p207 = scmp.eq.s32.totalorder %s80, 1
      %p208 = por %p206, %p207
      %p210 = scmp.ne.s32.totalorder %s195, %s209
      %p211 = scmp.eq.s32.totalorder %s80, 0
      %p212 = por %p210, %p211
      %s214 = sadd.s32 %s213, 1
      %p217 = scmp.eq.s32.totalorder %s74, 1
      %p218 = scmp.ne.s32.totalorder %s213, %s215
      %p219 = scmp.eq.s32.totalorder %s74, 0
      %p220 = por %p218, %p219
      %p221 = scmp.ne.s32.totalorder %s213, %s215
      %p222 = scmp.eq.s32.totalorder %s79, 1
      %p223 = por %p221, %p222
      %p224 = scmp.ne.s32.totalorder %s215, %s216
      %p225 = scmp.eq.s32.totalorder %s79, 0
      %p226 = por %p224, %p225
      %p227 = scmp.ne.s32.totalorder %s215, %s216
      %p228 = scmp.eq.s32.totalorder %s80, 1
      %p229 = por %p227, %p228
      %p231 = scmp.ne.s32.totalorder %s216, %s230
      %p232 = scmp.eq.s32.totalorder %s80, 0
      %p233 = por %p231, %p232
      %s235 = sadd.s32 %s234, 1
      %p238 = scmp.eq.s32.totalorder %s74, 1
      %p239 = scmp.ne.s32.totalorder %s234, %s236
      %p240 = scmp.eq.s32.totalorder %s74, 0
      %p241 = por %p239, %p240
      %p242 = scmp.ne.s32.totalorder %s234, %s236
      %p243 = scmp.eq.s32.totalorder %s79, 1
      %p244 = por %p242, %p243
      %p245 = scmp.ne.s32.totalorder %s236, %s237
      %p246 = scmp.eq.s32.totalorder %s79, 0
      %p247 = por %p245, %p246
      %p248 = scmp.ne.s32.totalorder %s236, %s237
      %p249 = scmp.eq.s32.totalorder %s80, 1
      %p250 = por %p248, %p249
      %p252 = scmp.ne.s32.totalorder %s237, %s251
      %p253 = scmp.eq.s32.totalorder %s80, 0
      %p254 = por %p252, %p253
      %s256 = sadd.s32 %s255, 1
      %p259 = scmp.eq.s32.totalorder %s74, 1
      %p260 = scmp.ne.s32.totalorder %s255, %s257
      %p261 = scmp.eq.s32.totalorder %s74, 0
      %p262 = por %p260, %p261
      %p263 = scmp.ne.s32.totalorder %s255, %s257
      %p264 = scmp.eq.s32.totalorder %s79, 1
      %p265 = por %p263, %p264
      %p266 = scmp.ne.s32.totalorder %s257, %s258
      %p267 = scmp.eq.s32.totalorder %s79, 0
      %p268 = por %p266, %p267
      %p269 = scmp.ne.s32.totalorder %s257, %s258
      %p270 = scmp.eq.s32.totalorder %s80, 1
      %p271 = por %p269, %p270
      %p273 = scmp.ne.s32.totalorder %s258, %s272
      %p274 = scmp.eq.s32.totalorder %s80, 0
      %p275 = por %p273, %p274
      %s277 = sadd.s32 %s276, 1
      %p280 = scmp.eq.s32.totalorder %s74, 1
      %p281 = scmp.ne.s32.totalorder %s276, %s278
      %p282 = scmp.eq.s32.totalorder %s74, 0
      %p283 = por %p281, %p282
      %p284 = scmp.ne.s32.totalorder %s276, %s278
      %p285 = scmp.eq.s32.totalorder %s79, 1
      %p286 = por %p284, %p285
      %p287 = scmp.ne.s32.totalorder %s278, %s279
      %p288 = scmp.eq.s32.totalorder %s79, 0
      %p289 = por %p287, %p288
      %p290 = scmp.ne.s32.totalorder %s278, %s279
      %p291 = scmp.eq.s32.totalorder %s80, 1
      %p292 = por %p290, %p291
      %p294 = scmp.ne.s32.totalorder %s279, %s293
      %p295 = scmp.eq.s32.totalorder %s80, 0
      %p296 = por %p294, %p295
      %s298 = sadd.s32 %s297, 1
      %p301 = scmp.eq.s32.totalorder %s74, 1
      %p302 = scmp.ne.s32.totalorder %s297, %s299
      %p303 = scmp.eq.s32.totalorder %s74, 0
      %p304 = por %p302, %p303
      %p305 = scmp.ne.s32.totalorder %s297, %s299
      %p306 = scmp.eq.s32.totalorder %s79, 1
      %p307 = por %p305, %p306
      %p308 = scmp.ne.s32.totalorder %s299, %s300
      %p309 = scmp.eq.s32.totalorder %s79, 0
      %p310 = por %p308, %p309
      %p311 = scmp.ne.s32.totalorder %s299, %s300
      %p312 = scmp.eq.s32.totalorder %s80, 1
      %p313 = por %p311, %p312
      %p315 = scmp.ne.s32.totalorder %s300, %s314
      %p316 = scmp.eq.s32.totalorder %s80, 0
      %p317 = por %p315, %p316
      %s319 = sadd.s32 %s318, 1
      %p322 = scmp.eq.s32.totalorder %s74, 1
      %p323 = scmp.ne.s32.totalorder %s318, %s320
      %p324 = scmp.eq.s32.totalorder %s74, 0
      %p325 = por %p323, %p324
      %p326 = scmp.ne.s32.totalorder %s318, %s320
      %p327 = scmp.eq.s32.totalorder %s79, 1
      %p328 = por %p326, %p327
      %p329 = scmp.ne.s32.totalorder %s320, %s321
      %p330 = scmp.eq.s32.totalorder %s79, 0
      %p331 = por %p329, %p330
      %p332 = scmp.ne.s32.totalorder %s320, %s321
      %p333 = scmp.eq.s32.totalorder %s80, 1
      %p334 = por %p332, %p333
      %p336 = scmp.ne.s32.totalorder %s321, %s335
      %p337 = scmp.eq.s32.totalorder %s80, 0
      %p338 = por %p336, %p337
      %s340 = sadd.s32 %s339, 1
      %p343 = scmp.eq.s32.totalorder %s74, 1
      %p344 = scmp.ne.s32.totalorder %s339, %s341
      %p345 = scmp.eq.s32.totalorder %s74, 0
      %p346 = por %p344, %p345
      %p347 = scmp.ne.s32.totalorder %s339, %s341
      %p348 = scmp.eq.s32.totalorder %s79, 1
      %p349 = por %p347, %p348
      %p350 = scmp.ne.s32.totalorder %s341, %s342
      %p351 = scmp.eq.s32.totalorder %s79, 0
      %p352 = por %p350, %p351
      %p353 = scmp.ne.s32.totalorder %s341, %s342
      %p354 = scmp.eq.s32.totalorder %s80, 1
      %p355 = por %p353, %p354
      %p357 = scmp.ne.s32.totalorder %s342, %s356
      %p358 = scmp.eq.s32.totalorder %s80, 0
      %p359 = por %p357, %p358
      %s361 = sadd.s32 %s360, 1
      %p364 = scmp.eq.s32.totalorder %s74, 1
      %p365 = scmp.ne.s32.totalorder %s360, %s362
      %p366 = scmp.eq.s32.totalorder %s74, 0
      %p367 = por %p365, %p366
      %p368 = scmp.ne.s32.totalorder %s360, %s362
      %p369 = scmp.eq.s32.totalorder %s79, 1
      %p370 = por %p368, %p369
      %p371 = scmp.ne.s32.totalorder %s362, %s363
      %p372 = scmp.eq.s32.totalorder %s79, 0
      %p373 = por %p371, %p372
      %p374 = scmp.ne.s32.totalorder %s362, %s363
      %p375 = scmp.eq.s32.totalorder %s80, 1
      %p376 = por %p374, %p375
      %p378 = scmp.ne.s32.totalorder %s363, %s377
      %p379 = scmp.eq.s32.totalorder %s80, 0
      %p380 = por %p378, %p379
      %s382 = sadd.s32 %s381, 1
      %p385 = scmp.eq.s32.totalorder %s74, 1
      %p386 = scmp.ne.s32.totalorder %s381, %s383
      %p387 = scmp.eq.s32.totalorder %s74, 0
      %p388 = por %p386, %p387
      %p389 = scmp.ne.s32.totalorder %s381, %s383
      %p390 = scmp.eq.s32.totalorder %s79, 1
      %p391 = por %p389, %p390
      %p392 = scmp.ne.s32.totalorder %s383, %s384
      %p393 = scmp.eq.s32.totalorder %s79, 0
      %p394 = por %p392, %p393
      %p395 = scmp.ne.s32.totalorder %s383, %s384
      %p396 = scmp.eq.s32.totalorder %s80, 1
      %p397 = por %p395, %p396
      %p399 = scmp.ne.s32.totalorder %s384, %s398
      %p400 = scmp.eq.s32.totalorder %s80, 0
      %p401 = por %p399, %p400
      %s403 = sadd.s32 %s402, 1
      %p406 = scmp.eq.s32.totalorder %s74, 1
      %p407 = scmp.ne.s32.totalorder %s402, %s404
      %p408 = scmp.eq.s32.totalorder %s74, 0
      %p409 = por %p407, %p408
      %p410 = scmp.ne.s32.totalorder %s402, %s404
      %p411 = scmp.eq.s32.totalorder %s79, 1
      %p412 = por %p410, %p411
      %p413 = scmp.ne.s32.totalorder %s404, %s405
      %p414 = scmp.eq.s32.totalorder %s79, 0
      %p415 = por %p413, %p414
      %p416 = scmp.ne.s32.totalorder %s404, %s405
      %p417 = scmp.eq.s32.totalorder %s80, 1
      %p418 = por %p416, %p417
      %p420 = scmp.ne.s32.totalorder %s405, %s419
      %p421 = scmp.eq.s32.totalorder %s80, 0
      %p422 = por %p420, %p421
      %s424 = sadd.s32 %s423, 1
      %p427 = scmp.eq.s32.totalorder %s74, 1
      %p428 = scmp.ne.s32.totalorder %s423, %s425
      %p429 = scmp.eq.s32.totalorder %s74, 0
      %p430 = por %p428, %p429
      %p431 = scmp.ne.s32.totalorder %s423, %s425
      %p432 = scmp.eq.s32.totalorder %s79, 1
      %p433 = por %p431, %p432
      %p434 = scmp.ne.s32.totalorder %s425, %s426
      %p435 = scmp.eq.s32.totalorder %s79, 0
      %p436 = por %p434, %p435
      %p437 = scmp.ne.s32.totalorder %s425, %s426
      %p438 = scmp.eq.s32.totalorder %s80, 1
      %p439 = por %p437, %p438
      %p441 = scmp.ne.s32.totalorder %s426, %s440
      %p442 = scmp.eq.s32.totalorder %s80, 0
      %p443 = por %p441, %p442
      %s445 = sadd.s32 %s444, 1
      %p448 = scmp.eq.s32.totalorder %s74, 1
      %p449 = scmp.ne.s32.totalorder %s444, %s446
      %p450 = scmp.eq.s32.totalorder %s74, 0
      %p451 = por %p449, %p450
      %p452 = scmp.ne.s32.totalorder %s444, %s446
      %p453 = scmp.eq.s32.totalorder %s79, 1
      %p454 = por %p452, %p453
      %p455 = scmp.ne.s32.totalorder %s446, %s447
      %p456 = scmp.eq.s32.totalorder %s79, 0
      %p457 = por %p455, %p456
      %p458 = scmp.ne.s32.totalorder %s446, %s447
      %p459 = scmp.eq.s32.totalorder %s80, 1
      %p460 = por %p458, %p459
      %p462 = scmp.ne.s32.totalorder %s447, %s461
      %p463 = scmp.eq.s32.totalorder %s80, 0
      %p464 = por %p462, %p463
      %s466 = sadd.s32 %s465, 1
      %p469 = scmp.eq.s32.totalorder %s74, 1
      %p470 = scmp.ne.s32.totalorder %s465, %s467
      %p471 = scmp.eq.s32.totalorder %s74, 0
      %p472 = por %p470, %p471
      %p473 = scmp.ne.s32.totalorder %s465, %s467
      %p474 = scmp.eq.s32.totalorder %s79, 1
      %p475 = por %p473, %p474
      %p476 = scmp.ne.s32.totalorder %s467, %s468
      %p477 = scmp.eq.s32.totalorder %s79, 0
      %p478 = por %p476, %p477
      %p479 = scmp.ne.s32.totalorder %s467, %s468
      %p480 = scmp.eq.s32.totalorder %s80, 1
      %p481 = por %p479, %p480
      %p483 = scmp.ne.s32.totalorder %s468, %s482
      %p484 = scmp.eq.s32.totalorder %s80, 0
      %p485 = por %p483, %p484
      %s487 = sadd.s32 %s486, 1
      %p490 = scmp.eq.s32.totalorder %s74, 1
      %p491 = scmp.ne.s32.totalorder %s486, %s488
      %p492 = scmp.eq.s32.totalorder %s74, 0
      %p493 = por %p491, %p492
      %p494 = scmp.ne.s32.totalorder %s486, %s488
      %p495 = scmp.eq.s32.totalorder %s79, 1
      %p496 = por %p494, %p495
      %p497 = scmp.ne.s32.totalorder %s488, %s489
      %p498 = scmp.eq.s32.totalorder %s79, 0
      %p499 = por %p497, %p498
      %p500 = scmp.ne.s32.totalorder %s488, %s489
      %p501 = scmp.eq.s32.totalorder %s80, 1
      %p502 = por %p500, %p501
      %p504 = scmp.ne.s32.totalorder %s489, %s503
      %p505 = scmp.eq.s32.totalorder %s80, 0
      %p506 = por %p504, %p505
      %s508 = sadd.s32 %s507, 1
      %p511 = scmp.eq.s32.totalorder %s74, 1
      %p512 = scmp.ne.s32.totalorder %s507, %s509
      %p513 = scmp.eq.s32.totalorder %s74, 0
      %p514 = por %p512, %p513
      %p515 = scmp.ne.s32.totalorder %s507, %s509
      %p516 = scmp.eq.s32.totalorder %s79, 1
      %p517 = por %p515, %p516
      %p518 = scmp.ne.s32.totalorder %s509, %s510
      %p519 = scmp.eq.s32.totalorder %s79, 0
      %p520 = por %p518, %p519
      %p521 = scmp.ne.s32.totalorder %s509, %s510
      %p522 = scmp.eq.s32.totalorder %s80, 1
      %p523 = por %p521, %p522
      %p525 = scmp.ne.s32.totalorder %s510, %s524
      %p526 = scmp.eq.s32.totalorder %s80, 0
      %p527 = por %p525, %p526
      %s529 = sadd.s32 %s528, 1
      %p532 = scmp.eq.s32.totalorder %s74, 1
      %p533 = scmp.ne.s32.totalorder %s528, %s530
      %p534 = scmp.eq.s32.totalorder %s74, 0
      %p535 = por %p533, %p534
      %p536 = scmp.ne.s32.totalorder %s528, %s530
      %p537 = scmp.eq.s32.totalorder %s79, 1
      %p538 = por %p536, %p537
      %p539 = scmp.ne.s32.totalorder %s530, %s531
      %p540 = scmp.eq.s32.totalorder %s79, 0
      %p541 = por %p539, %p540
      %p542 = scmp.ne.s32.totalorder %s530, %s531
      %p543 = scmp.eq.s32.totalorder %s80, 1
      %p544 = por %p542, %p543
      %p546 = scmp.ne.s32.totalorder %s531, %s545
      %p547 = scmp.eq.s32.totalorder %s80, 0
      %p548 = por %p546, %p547
      %s550 = sadd.s32 %s549, 1
      %p553 = scmp.eq.s32.totalorder %s74, 1
      %p554 = scmp.ne.s32.totalorder %s549, %s551
      %p555 = scmp.eq.s32.totalorder %s74, 0
      %p556 = por %p554, %p555
      %p557 = scmp.ne.s32.totalorder %s549, %s551
      %p558 = scmp.eq.s32.totalorder %s79, 1
      %p559 = por %p557, %p558
      %p560 = scmp.ne.s32.totalorder %s551, %s552
      %p561 = scmp.eq.s32.totalorder %s79, 0
      %p562 = por %p560, %p561
      %p563 = scmp.ne.s32.totalorder %s551, %s552
      %p564 = scmp.eq.s32.totalorder %s80, 1
      %p565 = por %p563, %p564
      %p567 = scmp.ne.s32.totalorder %s552, %s566
      %p568 = scmp.eq.s32.totalorder %s80, 0
      %p569 = por %p567, %p568
      %s571 = sadd.s32 %s570, 1
      %p574 = scmp.eq.s32.totalorder %s74, 1
      %p575 = scmp.ne.s32.totalorder %s570, %s572
      %p576 = scmp.eq.s32.totalorder %s74, 0
      %p577 = por %p575, %p576
      %p578 = scmp.ne.s32.totalorder %s570, %s572
      %p579 = scmp.eq.s32.totalorder %s79, 1
      %p580 = por %p578, %p579
      %p581 = scmp.ne.s32.totalorder %s572, %s573
      %p582 = scmp.eq.s32.totalorder %s79, 0
      %p583 = por %p581, %p582
      %p584 = scmp.ne.s32.totalorder %s572, %s573
      %p585 = scmp.eq.s32.totalorder %s80, 1
      %p586 = por %p584, %p585
      %p588 = scmp.ne.s32.totalorder %s573, %s587
      %p589 = scmp.eq.s32.totalorder %s80, 0
      %p590 = por %p588, %p589
      %s592 = sadd.s32 %s591, 1
      %p595 = scmp.eq.s32.totalorder %s74, 1
      %p596 = scmp.ne.s32.totalorder %s591, %s593
      %p597 = scmp.eq.s32.totalorder %s74, 0
      %p598 = por %p596, %p597
      %p599 = scmp.ne.s32.totalorder %s591, %s593
      %p600 = scmp.eq.s32.totalorder %s79, 1
      %p601 = por %p599, %p600
      %p602 = scmp.ne.s32.totalorder %s593, %s594
      %p603 = scmp.eq.s32.totalorder %s79, 0
      %p604 = por %p602, %p603
      %p605 = scmp.ne.s32.totalorder %s593, %s594
      %p606 = scmp.eq.s32.totalorder %s80, 1
      %p607 = por %p605, %p606
      %p609 = scmp.ne.s32.totalorder %s594, %s608
      %p610 = scmp.eq.s32.totalorder %s80, 0
      %p611 = por %p609, %p610
      %s613 = sadd.s32 %s612, 1
      %p616 = scmp.eq.s32.totalorder %s74, 1
      %p617 = scmp.ne.s32.totalorder %s612, %s614
      %p618 = scmp.eq.s32.totalorder %s74, 0
      %p619 = por %p617, %p618
      %p620 = scmp.ne.s32.totalorder %s612, %s614
      %p621 = scmp.eq.s32.totalorder %s79, 1
      %p622 = por %p620, %p621
      %p623 = scmp.ne.s32.totalorder %s614, %s615
      %p624 = scmp.eq.s32.totalorder %s79, 0
      %p625 = por %p623, %p624
      %p626 = scmp.ne.s32.totalorder %s614, %s615
      %p627 = scmp.eq.s32.totalorder %s80, 1
      %p628 = por %p626, %p627
      %p630 = scmp.ne.s32.totalorder %s615, %s629
      %p631 = scmp.eq.s32.totalorder %s80, 0
      %p632 = por %p630, %p631
      %s634 = sadd.s32 %s633, 1
      %p637 = scmp.eq.s32.totalorder %s74, 1
      %p638 = scmp.ne.s32.totalorder %s633, %s635
      %p639 = scmp.eq.s32.totalorder %s74, 0
      %p640 = por %p638, %p639
      %p641 = scmp.ne.s32.totalorder %s633, %s635
      %p642 = scmp.eq.s32.totalorder %s79, 1
      %p643 = por %p641, %p642
      %p644 = scmp.ne.s32.totalorder %s635, %s636
      %p645 = scmp.eq.s32.totalorder %s79, 0
      %p646 = por %p644, %p645
      %p647 = scmp.ne.s32.totalorder %s635, %s636
      %p648 = scmp.eq.s32.totalorder %s80, 1
      %p649 = por %p647, %p648
      %p651 = scmp.ne.s32.totalorder %s636, %s650
      %p652 = scmp.eq.s32.totalorder %s80, 0
      %p653 = por %p651, %p652
      %s655 = sadd.s32 %s654, 1
      %p658 = scmp.eq.s32.totalorder %s74, 1
      %p659 = scmp.ne.s32.totalorder %s654, %s656
      %p660 = scmp.eq.s32.totalorder %s74, 0
      %p661 = por %p659, %p660
      %p662 = scmp.ne.s32.totalorder %s654, %s656
      %p663 = scmp.eq.s32.totalorder %s79, 1
      %p664 = por %p662, %p663
      %p665 = scmp.ne.s32.totalorder %s656, %s657
      %p666 = scmp.eq.s32.totalorder %s79, 0
      %p667 = por %p665, %p666
      %p668 = scmp.ne.s32.totalorder %s656, %s657
      %p669 = scmp.eq.s32.totalorder %s80, 1
      %p670 = por %p668, %p669
      %p672 = scmp.ne.s32.totalorder %s657, %s671
      %p673 = scmp.eq.s32.totalorder %s80, 0
      %p674 = por %p672, %p673
      %s676 = sadd.s32 %s675, 1
      %p679 = scmp.eq.s32.totalorder %s74, 1
      %p680 = scmp.ne.s32.totalorder %s675, %s677
      %p681 = scmp.eq.s32.totalorder %s74, 0
      %p682 = por %p680, %p681
      %p683 = scmp.ne.s32.totalorder %s675, %s677
      %p684 = scmp.eq.s32.totalorder %s79, 1
      %p685 = por %p683, %p684
      %p686 = scmp.ne.s32.totalorder %s677, %s678
      %p687 = scmp.eq.s32.totalorder %s79, 0
      %p688 = por %p686, %p687
      %p689 = scmp.ne.s32.totalorder %s677, %s678
      %p690 = scmp.eq.s32.totalorder %s80, 1
      %p691 = por %p689, %p690
      %p693 = scmp.ne.s32.totalorder %s678, %s692
      %p694 = scmp.eq.s32.totalorder %s80, 0
      %p695 = por %p693, %p694
      %s696 = ssub.s32 %s74, %s81
      %p697 = scmp.eq.s32.totalorder %s696, 0
      %s699 = sadd.s32 %s698, 1
      %s700 = scalar_select %p697, %s698, %s699
      %p703 = pneg %p697
      %p704 = scmp.eq.s32.totalorder %s74, 1
      %p705 = por %p703, %p704
      %p706 = scmp.ne.s32.totalorder %s698, %s701
      %p707 = scmp.eq.s32.totalorder %s74, 0
      %p708 = por %p706, %p707
      %p709 = scmp.ne.s32.totalorder %s698, %s701
      %p710 = scmp.eq.s32.totalorder %s79, 1
      %p711 = por %p709, %p710
      %p712 = scmp.ne.s32.totalorder %s701, %s702
      %p713 = scmp.eq.s32.totalorder %s79, 0
      %p714 = por %p712, %p713
      %p715 = scmp.ne.s32.totalorder %s701, %s702
      %p716 = scmp.eq.s32.totalorder %s80, 1
      %p717 = por %p715, %p716
      %p719 = scmp.ne.s32.totalorder %s702, %s718
      %p720 = scmp.eq.s32.totalorder %s80, 0
      %p721 = por %p719, %p720
      %s722 = ssub.s32 %s74, %s81
      %p723 = scmp.eq.s32.totalorder %s722, 0
      %s725 = sadd.s32 %s724, 1
      %s726 = scalar_select %p723, %s724, %s725
      %p729 = pneg %p723
      %p730 = scmp.eq.s32.totalorder %s74, 1
      %p731 = por %p729, %p730
      %p732 = scmp.ne.s32.totalorder %s724, %s727
      %p733 = scmp.eq.s32.totalorder %s74, 0
      %p734 = por %p732, %p733
      %p735 = scmp.ne.s32.totalorder %s724, %s727
      %p736 = scmp.eq.s32.totalorder %s79, 1
      %p737 = por %p735, %p736
      %p738 = scmp.ne.s32.totalorder %s727, %s728
      %p739 = scmp.eq.s32.totalorder %s79, 0
      %p740 = por %p738, %p739
      %p741 = scmp.ne.s32.totalorder %s727, %s728
      %p742 = scmp.eq.s32.totalorder %s80, 1
      %p743 = por %p741, %p742
      %p745 = scmp.ne.s32.totalorder %s728, %s744
      %p746 = scmp.eq.s32.totalorder %s80, 0
      %p747 = por %p745, %p746
      %p748 = scmp.le.s32.totalorder 1, %s74
      %p749 = scmp.lt.s32.totalorder %s74, 3
      %p750 = pnand %p748, %p749
      %p751 = pneg %p750
      // Predicated region
      $region9: #{clipvitl_reduction_forward.1} parent=5 // pred_check
        _
      $region10: #{clipvitl_reduction_forward.1} parent=5 // pred_check_branch
        %753 = sbr.rel (%p750) target = $region12
      $region11: #{clipvitl_reduction_forward.1} parent=5 // pred_region
        %s754 = ssub.s32 %s74, 1
        // Predicated region
        $region13: #{clipvitl_reduction_forward.1} parent=11 // pred_check
          %p755 = pneg %p121
        $region14: #{clipvitl_reduction_forward.1} parent=11 // pred_check_branch
          %757 = sbr.rel (%p755) target = $region16
        $region15: #{clipvitl_reduction_forward.1} parent=11 // pred_region
          _
        $region16: #{clipvitl_reduction_forward.1} parent=11 // pred_fallthru
          _
        // Predicated region
        $region17: #{clipvitl_reduction_forward.1} parent=11 // pred_check
          %p758 = pneg %p142
        $region18: #{clipvitl_reduction_forward.1} parent=11 // pred_check_branch
          %760 = sbr.rel (%p758) target = $region20
        $region19: #{clipvitl_reduction_forward.1} parent=11 // pred_region
          _
        $region20: #{clipvitl_reduction_forward.1} parent=11 // pred_fallthru
          _
        // Predicated region
        $region21: #{clipvitl_reduction_forward.1} parent=11 // pred_check
          %p761 = pneg %p163
        $region22: #{clipvitl_reduction_forward.1} parent=11 // pred_check_branch
          %763 = sbr.rel (%p761) target = $region24
        $region23: #{clipvitl_reduction_forward.1} parent=11 // pred_region
          _
        $region24: #{clipvitl_reduction_forward.1} parent=11 // pred_fallthru
          _
        // Predicated region
        $region25: #{clipvitl_reduction_forward.1} parent=11 // pred_check
          %p764 = pneg %p184
        $region26: #{clipvitl_reduction_forward.1} parent=11 // pred_check_branch
          %766 = sbr.rel (%p764) target = $region28
        $region27: #{clipvitl_reduction_forward.1} parent=11 // pred_region
          _
        $region28: #{clipvitl_reduction_forward.1} parent=11 // pred_fallthru
          _
        // Predicated region
        $region29: #{clipvitl_reduction_forward.1} parent=11 // pred_check
          %p767 = pneg %p205
        $region30: #{clipvitl_reduction_forward.1} parent=11 // pred_check_branch
          %769 = sbr.rel (%p767) target = $region32
        $region31: #{clipvitl_reduction_forward.1} parent=11 // pred_region
          _
        $region32: #{clipvitl_reduction_forward.1} parent=11 // pred_fallthru
          _
        // Predicated region
        $region33: #{clipvitl_reduction_forward.1} parent=11 // pred_check
          %p770 = pneg %p226
        $region34: #{clipvitl_reduction_forward.1} parent=11 // pred_check_branch
          %772 = sbr.rel (%p770) target = $region36
        $region35: #{clipvitl_reduction_forward.1} parent=11 // pred_region
          _
        $region36: #{clipvitl_reduction_forward.1} parent=11 // pred_fallthru
          _
        // Predicated region
        $region37: #{clipvitl_reduction_forward.1} parent=11 // pred_check
          %p773 = pneg %p247
        $region38: #{clipvitl_reduction_forward.1} parent=11 // pred_check_branch
          %775 = sbr.rel (%p773) target = $region40
        $region39: #{clipvitl_reduction_forward.1} parent=11 // pred_region
          _
        $region40: #{clipvitl_reduction_forward.1} parent=11 // pred_fallthru
          _
        // Predicated region
        $region41: #{clipvitl_reduction_forward.1} parent=11 // pred_check
          %p776 = pneg %p268
        $region42: #{clipvitl_reduction_forward.1} parent=11 // pred_check_branch
          %778 = sbr.rel (%p776) target = $region44
        $region43: #{clipvitl_reduction_forward.1} parent=11 // pred_region
          _
        $region44: #{clipvitl_reduction_forward.1} parent=11 // pred_fallthru
          _
        // Predicated region
        $region45: #{clipvitl_reduction_forward.1} parent=11 // pred_check
          %p779 = pneg %p289
        $region46: #{clipvitl_reduction_forward.1} parent=11 // pred_check_branch
          %781 = sbr.rel (%p779) target = $region48
        $region47: #{clipvitl_reduction_forward.1} parent=11 // pred_region
          _
        $region48: #{clipvitl_reduction_forward.1} parent=11 // pred_fallthru
          _
        // Predicated region
        $region49: #{clipvitl_reduction_forward.1} parent=11 // pred_check
          %p782 = pneg %p310
        $region50: #{clipvitl_reduction_forward.1} parent=11 // pred_check_branch
          %784 = sbr.rel (%p782) target = $region52
        $region51: #{clipvitl_reduction_forward.1} parent=11 // pred_region
          _
        $region52: #{clipvitl_reduction_forward.1} parent=11 // pred_fallthru
          _
        // Predicated region
        $region53: #{clipvitl_reduction_forward.1} parent=11 // pred_check
          %p785 = pneg %p331
        $region54: #{clipvitl_reduction_forward.1} parent=11 // pred_check_branch
          %787 = sbr.rel (%p785) target = $region56
        $region55: #{clipvitl_reduction_forward.1} parent=11 // pred_region
          _
        $region56: #{clipvitl_reduction_forward.1} parent=11 // pred_fallthru
          _
        // Predicated region
        $region57: #{clipvitl_reduction_forward.1} parent=11 // pred_check
          %p788 = pneg %p352
        $region58: #{clipvitl_reduction_forward.1} parent=11 // pred_check_branch
          %790 = sbr.rel (%p788) target = $region60
        $region59: #{clipvitl_reduction_forward.1} parent=11 // pred_region
          _
        $region60: #{clipvitl_reduction_forward.1} parent=11 // pred_fallthru
          _
        // Predicated region
        $region61: #{clipvitl_reduction_forward.1} parent=11 // pred_check
          %p791 = pneg %p373
        $region62: #{clipvitl_reduction_forward.1} parent=11 // pred_check_branch
          %793 = sbr.rel (%p791) target = $region64
        $region63: #{clipvitl_reduction_forward.1} parent=11 // pred_region
          _
        $region64: #{clipvitl_reduction_forward.1} parent=11 // pred_fallthru
          _
        // Predicated region
        $region65: #{clipvitl_reduction_forward.1} parent=11 // pred_check
          %p794 = pneg %p394
        $region66: #{clipvitl_reduction_forward.1} parent=11 // pred_check_branch
          %796 = sbr.rel (%p794) target = $region68
        $region67: #{clipvitl_reduction_forward.1} parent=11 // pred_region
          _
        $region68: #{clipvitl_reduction_forward.1} parent=11 // pred_fallthru
          _
        // Predicated region
        $region69: #{clipvitl_reduction_forward.1} parent=11 // pred_check
          %p797 = pneg %p415
        $region70: #{clipvitl_reduction_forward.1} parent=11 // pred_check_branch
          %799 = sbr.rel (%p797) target = $region72
        $region71: #{clipvitl_reduction_forward.1} parent=11 // pred_region
          _
        $region72: #{clipvitl_reduction_forward.1} parent=11 // pred_fallthru
          _
        // Predicated region
        $region73: #{clipvitl_reduction_forward.1} parent=11 // pred_check
          %p800 = pneg %p436
        $region74: #{clipvitl_reduction_forward.1} parent=11 // pred_check_branch
          %802 = sbr.rel (%p800) target = $region76
        $region75: #{clipvitl_reduction_forward.1} parent=11 // pred_region
          _
        $region76: #{clipvitl_reduction_forward.1} parent=11 // pred_fallthru
          _
        // Predicated region
        $region77: #{clipvitl_reduction_forward.1} parent=11 // pred_check
          %p803 = pneg %p457
        $region78: #{clipvitl_reduction_forward.1} parent=11 // pred_check_branch
          %805 = sbr.rel (%p803) target = $region80
        $region79: #{clipvitl_reduction_forward.1} parent=11 // pred_region
          _
        $region80: #{clipvitl_reduction_forward.1} parent=11 // pred_fallthru
          _
        // Predicated region
        $region81: #{clipvitl_reduction_forward.1} parent=11 // pred_check
          %p806 = pneg %p478
        $region82: #{clipvitl_reduction_forward.1} parent=11 // pred_check_branch
          %808 = sbr.rel (%p806) target = $region84
        $region83: #{clipvitl_reduction_forward.1} parent=11 // pred_region
          _
        $region84: #{clipvitl_reduction_forward.1} parent=11 // pred_fallthru
          _
        // Predicated region
        $region85: #{clipvitl_reduction_forward.1} parent=11 // pred_check
          %p809 = pneg %p499
        $region86: #{clipvitl_reduction_forward.1} parent=11 // pred_check_branch
          %811 = sbr.rel (%p809) target = $region88
        $region87: #{clipvitl_reduction_forward.1} parent=11 // pred_region
          _
        $region88: #{clipvitl_reduction_forward.1} parent=11 // pred_fallthru
          _
        // Predicated region
        $region89: #{clipvitl_reduction_forward.1} parent=11 // pred_check
          %p812 = pneg %p520
        $region90: #{clipvitl_reduction_forward.1} parent=11 // pred_check_branch
          %814 = sbr.rel (%p812) target = $region92
        $region91: #{clipvitl_reduction_forward.1} parent=11 // pred_region
          _
        $region92: #{clipvitl_reduction_forward.1} parent=11 // pred_fallthru
          _
        // Predicated region
        $region93: #{clipvitl_reduction_forward.1} parent=11 // pred_check
          %p815 = pneg %p541
        $region94: #{clipvitl_reduction_forward.1} parent=11 // pred_check_branch
          %817 = sbr.rel (%p815) target = $region96
        $region95: #{clipvitl_reduction_forward.1} parent=11 // pred_region
          _
        $region96: #{clipvitl_reduction_forward.1} parent=11 // pred_fallthru
          _
        // Predicated region
        $region97: #{clipvitl_reduction_forward.1} parent=11 // pred_check
          %p818 = pneg %p562
        $region98: #{clipvitl_reduction_forward.1} parent=11 // pred_check_branch
          %820 = sbr.rel (%p818) target = $region100
        $region99: #{clipvitl_reduction_forward.1} parent=11 // pred_region
          _
        $region100: #{clipvitl_reduction_forward.1} parent=11 // pred_fallthru
          _
        // Predicated region
        $region101: #{clipvitl_reduction_forward.1} parent=11 // pred_check
          %p821 = pneg %p583
        $region102: #{clipvitl_reduction_forward.1} parent=11 // pred_check_branch
          %823 = sbr.rel (%p821) target = $region104
        $region103: #{clipvitl_reduction_forward.1} parent=11 // pred_region
          _
        $region104: #{clipvitl_reduction_forward.1} parent=11 // pred_fallthru
          _
        // Predicated region
        $region105: #{clipvitl_reduction_forward.1} parent=11 // pred_check
          %p824 = pneg %p604
        $region106: #{clipvitl_reduction_forward.1} parent=11 // pred_check_branch
          %826 = sbr.rel (%p824) target = $region108
        $region107: #{clipvitl_reduction_forward.1} parent=11 // pred_region
          _
        $region108: #{clipvitl_reduction_forward.1} parent=11 // pred_fallthru
          _
        // Predicated region
        $region109: #{clipvitl_reduction_forward.1} parent=11 // pred_check
          %p827 = pneg %p625
        $region110: #{clipvitl_reduction_forward.1} parent=11 // pred_check_branch
          %829 = sbr.rel (%p827) target = $region112
        $region111: #{clipvitl_reduction_forward.1} parent=11 // pred_region
          _
        $region112: #{clipvitl_reduction_forward.1} parent=11 // pred_fallthru
          _
        // Predicated region
        $region113: #{clipvitl_reduction_forward.1} parent=11 // pred_check
          %p830 = pneg %p646
        $region114: #{clipvitl_reduction_forward.1} parent=11 // pred_check_branch
          %832 = sbr.rel (%p830) target = $region116
        $region115: #{clipvitl_reduction_forward.1} parent=11 // pred_region
          _
        $region116: #{clipvitl_reduction_forward.1} parent=11 // pred_fallthru
          _
        // Predicated region
        $region117: #{clipvitl_reduction_forward.1} parent=11 // pred_check
          %p833 = pneg %p667
        $region118: #{clipvitl_reduction_forward.1} parent=11 // pred_check_branch
          %835 = sbr.rel (%p833) target = $region120
        $region119: #{clipvitl_reduction_forward.1} parent=11 // pred_region
          _
        $region120: #{clipvitl_reduction_forward.1} parent=11 // pred_fallthru
          _
        // Predicated region
        $region121: #{clipvitl_reduction_forward.1} parent=11 // pred_check
          %p836 = pneg %p688
        $region122: #{clipvitl_reduction_forward.1} parent=11 // pred_check_branch
          %838 = sbr.rel (%p836) target = $region124
        $region123: #{clipvitl_reduction_forward.1} parent=11 // pred_region
          _
        $region124: #{clipvitl_reduction_forward.1} parent=11 // pred_fallthru
          _
      $region12: #{clipvitl_reduction_forward.1} parent=5 // pred_fallthru
        _
      %p839 = scmp.lt.s32.totalorder %s74, 2
      // Predicated region
      $region125: #{clipvitl_reduction_forward.1} parent=5 // pred_check
        %p840 = pneg %p839
      $region126: #{clipvitl_reduction_forward.1} parent=5 // pred_check_branch
        %842 = sbr.rel (%p840) target = $region128
      $region127: #{clipvitl_reduction_forward.1} parent=5 // pred_region
        // Predicated region
        $region129: #{clipvitl_reduction_forward.1} parent=127 // pred_check
          %p843 = pneg %p94
        $region130: #{clipvitl_reduction_forward.1} parent=127 // pred_check_branch
          %845 = sbr.rel (%p843) target = $region132
        $region131: #{clipvitl_reduction_forward.1} parent=127 // pred_region
          %p846 = scmp.lt.s32.totalorder %s74, 1
          %s847 = scalar_select %p846, %s74, 1
          %s848 = smul.addr %s847, 5
          %s849 = smul.addr %s848, 8
          %s850 = scalar_lea.vmem %s1, %s849
        $region132: #{clipvitl_reduction_forward.1} parent=127 // pred_fallthru
          _
      $region128: #{clipvitl_reduction_forward.1} parent=5 // pred_fallthru
        _
      %p851 = scmp.le.s32.totalorder 1, %s74
      %p852 = scmp.lt.s32.totalorder %s74, 3
      %p853 = pnand %p851, %p852
      %p854 = pneg %p853
      // Predicated region
      $region133: #{clipvitl_reduction_forward.1} parent=5 // pred_check
        _
      $region134: #{clipvitl_reduction_forward.1} parent=5 // pred_check_branch
        %856 = sbr.rel (%p853) target = $region136
      $region135: #{clipvitl_reduction_forward.1} parent=5 // pred_region
        %s857 = ssub.s32 %s74, 1
        %p858 = scmp.lt.s32.totalorder %s79, 1
        %s859 = scalar_select %p858, %s79, 1
        %s860 = smul.addr %s859, 5
        %s861 = smul.addr %s860, 8
        %s862 = scalar_lea.vmem %s1, %s861
        %p863 = pneg %p100
        %p864 = pneg %p97
        %p865 = pneg %p121
        %p866 = pneg %p118
        %p867 = pneg %p142
        %p868 = pneg %p139
        %p869 = pneg %p163
        %p870 = pneg %p160
        %p871 = pneg %p184
        %p872 = pneg %p181
        %p873 = pneg %p205
        %p874 = pneg %p202
        %p875 = pneg %p226
        %p876 = pneg %p223
        %p877 = pneg %p247
        %p878 = pneg %p244
        %p879 = pneg %p268
        %p880 = pneg %p265
        %p881 = pneg %p289
        %p882 = pneg %p286
        %p883 = pneg %p310
        %p884 = pneg %p307
        %p885 = pneg %p331
        %p886 = pneg %p328
        %p887 = pneg %p352
        %p888 = pneg %p349
        %p889 = pneg %p373
        %p890 = pneg %p370
        %p891 = pneg %p394
        %p892 = pneg %p391
        %p893 = pneg %p415
        %p894 = pneg %p412
        %p895 = pneg %p436
        %p896 = pneg %p433
        %p897 = pneg %p457
        %p898 = pneg %p454
        %p899 = pneg %p478
        %p900 = pneg %p475
        %p901 = pneg %p499
        %p902 = pneg %p496
        %p903 = pneg %p520
        %p904 = pneg %p517
        %p905 = pneg %p541
        %p906 = pneg %p538
        %p907 = pneg %p562
        %p908 = pneg %p559
        %p909 = pneg %p583
        %p910 = pneg %p580
        %p911 = pneg %p604
        %p912 = pneg %p601
        %p913 = pneg %p625
        %p914 = pneg %p622
        %p915 = pneg %p646
        %p916 = pneg %p643
        %p917 = pneg %p667
        %p918 = pneg %p664
        %p919 = pneg %p688
        %p920 = pneg %p685
        %p921 = pneg %p714
        %p922 = pneg %p711
        %s923 = sand.u32 %s701, 1
        %s924 = scalar_lea.sflag [#allocation3], %s923
        %s925 = sand.u32 %s701, 1
        %s926 = scalar_lea.vmem [#allocation2], %s925
        %p927 = pneg %p740
        %p928 = pneg %p737
        %s929 = sand.u32 %s727, 1
        %s930 = scalar_lea.sflag [#allocation5], %s929
        %s931 = sand.u32 %s727, 1
        %s932 = scalar_lea.vmem [#allocation4], %s931
        %p933 = scmp.lt.s32.totalorder %s79, 1
        %s934 = scalar_select %p933, %s79, 1
        %s935 = smul.addr %s934, 5
        %s936 = smul.addr %s935, 8
        %s937 = scalar_lea.vmem %s1, %s936
        %v939 = vld [vmem:[%s937] sm:$0x1f]
        %v940 = vld [vmem:[%s937 + $0x8] sm:$0x1f]
        %v941 = vld [vmem:[%s937 + $0x10] sm:$0x1f]
        %v942 = vld [vmem:[%s937 + $0x18] sm:$0x1f]
        %v943 = vld [vmem:[%s937 + $0x20] sm:$0x1f]
        %v944 = vld [vmem:[%s5] sm:$0xf]
        %v945 = vld [vmem:[%s5 + $0x4] sm:$0xf]
        %v946 = vld [vmem:[%s5 + $0x8] sm:$0xf]
        %v947 = vld [vmem:[%s5 + $0xc] sm:$0xf]
        %v948 = vld [vmem:[%s5 + $0x10] sm:$0xf]
        %v949 = vld [vmem:[%s5 + $0x14] sm:$0xf]
        %v950 = vld [vmem:[%s5 + $0x18] sm:$0xf]
        %v951 = vld [vmem:[%s5 + $0x1c] sm:$0xf]
        %v952 = vld [vmem:[%s5 + $0x20] sm:$0xf]
        %v953 = vld [vmem:[%s5 + $0x24] sm:$0xf]
        %v954 = vld [vmem:[%s5 + $0x28] sm:$0xf]
        %v955 = vld [vmem:[%s5 + $0x2c] sm:$0xf]
        %v956 = vld [vmem:[%s5 + $0x30] sm:$0xf]
        %v957 = vld [vmem:[%s5 + $0x34] sm:$0xf]
        %v958 = vld [vmem:[%s5 + $0x38] sm:$0xf]
        %v959 = vld [vmem:[%s5 + $0x3c] sm:$0xf]
        %v960 = vld [vmem:[%s5 + $0x40] sm:$0xf]
        %v961 = vld [vmem:[%s5 + $0x44] sm:$0xf]
        %v962 = vld [vmem:[%s5 + $0x48] sm:$0xf]
        %v963 = vld [vmem:[%s5 + $0x4c] sm:$0xf]
        %v964 = vld [vmem:[%s5 + $0x50] sm:$0xf]
        %v965 = vld [vmem:[%s5 + $0x54] sm:$0xf]
        %v966 = vld [vmem:[%s5 + $0x58] sm:$0xf]
        %v967 = vld [vmem:[%s5 + $0x5c] sm:$0xf]
        %v968 = vld [vmem:[%s5 + $0x60] sm:$0xf]
        %v969 = vld [vmem:[%s5 + $0x64] sm:$0xf]
        %v970 = vld [vmem:[%s5 + $0x68] sm:$0xf]
        %v971 = vld [vmem:[%s5 + $0x6c] sm:$0xf]
        %v972 = vld [vmem:[%s5 + $0x70] sm:$0xf]
        %v973 = vld [vmem:[%s5 + $0x74] sm:$0xf]
        %v974 = vld [vmem:[%s5 + $0x78] sm:$0xf]
        %v975 = vld [vmem:[%s5 + $0x7c] sm:$0xf]
        %v976 = vld [vmem:[%s5 + $0x80] sm:$0xf]
        %v977 = vld [vmem:[%s5 + $0x84] sm:$0xf]
        %v978 = vld [vmem:[%s5 + $0x88] sm:$0xf]
        %v979 = vld [vmem:[%s5 + $0x8c] sm:$0xf]
        %v980 = vld [vmem:[%s5 + $0x90] sm:$0xf]
        %v981 = vld [vmem:[%s5 + $0x94] sm:$0xf]
        %v982 = vld [vmem:[%s5 + $0x98] sm:$0xf]
        %v983 = vld [vmem:[%s5 + $0x9c] sm:$0xf]
        %v984 = vld [vmem:[%s5 + $0xa0] sm:$0xf]
        %v985 = vld [vmem:[%s5 + $0xa4] sm:$0xf]
        %v986 = vld [vmem:[%s5 + $0xa8] sm:$0xf]
        %v987 = vld [vmem:[%s5 + $0xac] sm:$0xf]
        %v988 = vld [vmem:[%s5 + $0xb0] sm:$0xf]
        %v989 = vld [vmem:[%s5 + $0xb4] sm:$0xf]
        %v990 = vld [vmem:[%s5 + $0xb8] sm:$0xf]
        %v991 = vld [vmem:[%s5 + $0xbc] sm:$0xf]
        %v992 = vld [vmem:[%s5 + $0xc0] sm:$0xf]
        %v993 = vld [vmem:[%s5 + $0xc4] sm:$0xf]
        %v994 = vld [vmem:[%s5 + $0xc8] sm:$0xf]
        %v995 = vld [vmem:[%s5 + $0xcc] sm:$0xf]
        %v996 = vld [vmem:[%s5 + $0xd0] sm:$0xf]
        %v997 = vld [vmem:[%s5 + $0xd4] sm:$0xf]
        %v998 = vld [vmem:[%s5 + $0xd8] sm:$0xf]
        %v999 = vld [vmem:[%s5 + $0xdc] sm:$0xf]
        %v1000 = vld [vmem:[%s5 + $0xe0] sm:$0xf]
        %v1001 = vld [vmem:[%s5 + $0xe4] sm:$0xf]
        %v1002 = vld [vmem:[%s5 + $0xe8] sm:$0xf]
        %v1003 = vld [vmem:[%s5 + $0xec] sm:$0xf]
        %v1004 = vld [vmem:[%s5 + $0xf0] sm:$0xf]
        %v1005 = vld [vmem:[%s5 + $0xf4] sm:$0xf]
        %v1006 = vld [vmem:[%s5 + $0xf8] sm:$0xf]
        %v1007 = vld [vmem:[%s5 + $0xfc] sm:$0xf]
        %v1008 = vld [vmem:[%s5 + $0x100] sm:$0xf]
        %v1009 = vld [vmem:[%s5 + $0x104] sm:$0xf]
        %v1010 = vld [vmem:[%s5 + $0x108] sm:$0xf]
        %v1011 = vld [vmem:[%s5 + $0x10c] sm:$0xf]
        %v1012 = vld [vmem:[%s5 + $0x110] sm:$0xf]
        %v1013 = vld [vmem:[%s5 + $0x114] sm:$0xf]
        %v1014 = vld [vmem:[%s5 + $0x118] sm:$0xf]
        %v1015 = vld [vmem:[%s5 + $0x11c] sm:$0xf]
        %v1016 = vld [vmem:[%s5 + $0x120] sm:$0xf]
        %v1017 = vld [vmem:[%s5 + $0x124] sm:$0xf]
        %v1018 = vld [vmem:[%s5 + $0x128] sm:$0xf]
        %v1019 = vld [vmem:[%s5 + $0x12c] sm:$0xf]
        %v1020 = vld [vmem:[%s5 + $0x130] sm:$0xf]
        %v1021 = vld [vmem:[%s5 + $0x134] sm:$0xf]
        %v1022 = vld [vmem:[%s5 + $0x138] sm:$0xf]
        %v1023 = vld [vmem:[%s5 + $0x13c] sm:$0xf]
        %v1024 = vpack.c.bf16 %v939, %v939
        %v1025 = vpack.c.bf16 %v940, %v940
        %v1026 = vpack.c.bf16 %v941, %v941
        %v1027 = vpack.c.bf16 %v942, %v942
        %v1028 = vpack.c.bf16 %v943, %v943
        %v1029 = vld [vmem:[%s3] sm:$0x1f]
        %v1110 = vunpack.c.l.b16 %v944
        %v1111 = vunpack.c.l.b16 %v945
        %v1112 = vunpack.c.l.b16 %v946
        %v1113 = vunpack.c.l.b16 %v947
        %v1114 = vunpack.c.l.b16 %v948
        %v1115 = vunpack.c.l.b16 %v949
        %v1116 = vunpack.c.l.b16 %v950
        %v1117 = vunpack.c.l.b16 %v951
        %v1118 = vunpack.c.l.b16 %v952
        %v1119 = vunpack.c.l.b16 %v953
        %v1120 = vunpack.c.l.b16 %v954
        %v1121 = vunpack.c.l.b16 %v955
        %v1122 = vunpack.c.l.b16 %v956
        %v1123 = vunpack.c.l.b16 %v957
        %v1124 = vunpack.c.l.b16 %v958
        %v1125 = vunpack.c.l.b16 %v959
        %v1126 = vunpack.c.l.b16 %v960
        %v1127 = vunpack.c.l.b16 %v961
        %v1128 = vunpack.c.l.b16 %v962
        %v1129 = vunpack.c.l.b16 %v963
        %v1130 = vunpack.c.l.b16 %v964
        %v1131 = vunpack.c.l.b16 %v965
        %v1132 = vunpack.c.l.b16 %v966
        %v1133 = vunpack.c.l.b16 %v967
        %v1134 = vunpack.c.l.b16 %v968
        %v1135 = vunpack.c.l.b16 %v969
        %v1136 = vunpack.c.l.b16 %v970
        %v1137 = vunpack.c.l.b16 %v971
        %v1138 = vunpack.c.l.b16 %v972
        %v1139 = vunpack.c.l.b16 %v973
        %v1140 = vunpack.c.l.b16 %v974
        %v1141 = vunpack.c.l.b16 %v975
        %v1142 = vunpack.c.l.b16 %v976
        %v1143 = vunpack.c.l.b16 %v977
        %v1144 = vunpack.c.l.b16 %v978
        %v1145 = vunpack.c.l.b16 %v979
        %v1146 = vunpack.c.l.b16 %v980
        %v1147 = vunpack.c.l.b16 %v981
        %v1148 = vunpack.c.l.b16 %v982
        %v1149 = vunpack.c.l.b16 %v983
        %v1150 = vunpack.c.l.b16 %v984
        %v1151 = vunpack.c.l.b16 %v985
        %v1152 = vunpack.c.l.b16 %v986
        %v1153 = vunpack.c.l.b16 %v987
        %v1154 = vunpack.c.l.b16 %v988
        %v1155 = vunpack.c.l.b16 %v989
        %v1156 = vunpack.c.l.b16 %v990
        %v1157 = vunpack.c.l.b16 %v991
        %v1158 = vunpack.c.l.b16 %v992
        %v1159 = vunpack.c.l.b16 %v993
        %v1160 = vunpack.c.l.b16 %v994
        %v1161 = vunpack.c.l.b16 %v995
        %v1162 = vunpack.c.l.b16 %v996
        %v1163 = vunpack.c.l.b16 %v997
        %v1164 = vunpack.c.l.b16 %v998
        %v1165 = vunpack.c.l.b16 %v999
        %v1166 = vunpack.c.l.b16 %v1000
        %v1167 = vunpack.c.l.b16 %v1001
        %v1168 = vunpack.c.l.b16 %v1002
        %v1169 = vunpack.c.l.b16 %v1003
        %v1170 = vunpack.c.l.b16 %v1004
        %v1171 = vunpack.c.l.b16 %v1005
        %v1172 = vunpack.c.l.b16 %v1006
        %v1173 = vunpack.c.l.b16 %v1007
        %v1174 = vunpack.c.l.b16 %v1008
        %v1175 = vunpack.c.l.b16 %v1009
        %v1176 = vunpack.c.l.b16 %v1010
        %v1177 = vunpack.c.l.b16 %v1011
        %v1178 = vunpack.c.l.b16 %v1012
        %v1179 = vunpack.c.l.b16 %v1013
        %v1180 = vunpack.c.l.b16 %v1014
        %v1181 = vunpack.c.l.b16 %v1015
        %v1182 = vunpack.c.l.b16 %v1016
        %v1183 = vunpack.c.l.b16 %v1017
        %v1184 = vunpack.c.l.b16 %v1018
        %v1185 = vunpack.c.l.b16 %v1019
        %v1186 = vunpack.c.l.b16 %v1020
        %v1187 = vunpack.c.l.b16 %v1021
        %v1188 = vunpack.c.l.b16 %v1022
        %v1189 = vunpack.c.l.b16 %v1023
        %v1190 = vpack.c.b16 %v1111, %v1110
        %v1191 = vpack.c.b16 %v1113, %v1112
        %v1192 = vpack.c.b16 %v1115, %v1114
        %v1193 = vpack.c.b16 %v1117, %v1116
        %v1194 = vpack.c.b16 %v1119, %v1118
        %v1195 = vpack.c.b16 %v1121, %v1120
        %v1196 = vpack.c.b16 %v1123, %v1122
        %v1197 = vpack.c.b16 %v1125, %v1124
        %v1198 = vpack.c.b16 %v1127, %v1126
        %v1199 = vpack.c.b16 %v1129, %v1128
        %v1200 = vpack.c.b16 %v1131, %v1130
        %v1201 = vpack.c.b16 %v1133, %v1132
        %v1202 = vpack.c.b16 %v1135, %v1134
        %v1203 = vpack.c.b16 %v1137, %v1136
        %v1204 = vpack.c.b16 %v1139, %v1138
        %v1205 = vpack.c.b16 %v1141, %v1140
        %v1206 = vpack.c.b16 %v1143, %v1142
        %v1207 = vpack.c.b16 %v1145, %v1144
        %v1208 = vpack.c.b16 %v1147, %v1146
        %v1209 = vpack.c.b16 %v1149, %v1148
        %v1210 = vpack.c.b16 %v1151, %v1150
        %v1211 = vpack.c.b16 %v1153, %v1152
        %v1212 = vpack.c.b16 %v1155, %v1154
        %v1213 = vpack.c.b16 %v1157, %v1156
        %v1214 = vpack.c.b16 %v1159, %v1158
        %v1215 = vpack.c.b16 %v1161, %v1160
        %v1216 = vpack.c.b16 %v1163, %v1162
        %v1217 = vpack.c.b16 %v1165, %v1164
        %v1218 = vpack.c.b16 %v1167, %v1166
        %v1219 = vpack.c.b16 %v1169, %v1168
        %v1220 = vpack.c.b16 %v1171, %v1170
        %v1221 = vpack.c.b16 %v1173, %v1172
        %v1222 = vpack.c.b16 %v1175, %v1174
        %v1223 = vpack.c.b16 %v1177, %v1176
        %v1224 = vpack.c.b16 %v1179, %v1178
        %v1225 = vpack.c.b16 %v1181, %v1180
        %v1226 = vpack.c.b16 %v1183, %v1182
        %v1227 = vpack.c.b16 %v1185, %v1184
        %v1228 = vpack.c.b16 %v1187, %v1186
        %v1229 = vpack.c.b16 %v1189, %v1188
        %1270 = vmatpush.bf16.msra.mxu0 %v1197
        %1271 = vmatpush.bf16.msra.mxu0 %v1196
        %1272 = vmatpush.bf16.msra.mxu0 %v1195
        %1273 = vmatpush.bf16.msra.mxu0 %v1194
        %1274 = vmatpush.bf16.msra.mxu0 %v1193
        %1275 = vmatpush.bf16.msra.mxu0 %v1192
        %1276 = vmatpush.bf16.msra.mxu0 %v1191
        %1277 = vmatpush.bf16.msra.mxu0 %v1190
        %1278 = vmatmul.bf16.gmra.mxu0 %v1024
        %v1279 = vpop.f32.mrf.mxu0
        %v1280 = vadd.f32 %v1029, %v1279
        %v1281 = vpop.f32.mrf.mxu0
        %1282 = vdwg.mxu0
        %1283 = vmatpush.bf16.msra.mxu0 %v1205
        %1284 = vmatpush.bf16.msra.mxu0 %v1204
        %1285 = vmatpush.bf16.msra.mxu0 %v1203
        %1286 = vmatpush.bf16.msra.mxu0 %v1202
        %1287 = vmatpush.bf16.msra.mxu0 %v1201
        %1288 = vmatpush.bf16.msra.mxu0 %v1200
        %1289 = vmatpush.bf16.msra.mxu0 %v1199
        %1290 = vmatpush.bf16.msra.mxu0 %v1198
        %1291 = vmatmul.bf16.gmra.mxu0 %v1025
        %v1292 = vpop.f32.mrf.mxu0
        %v1293 = vadd.f32 %v1280, %v1292
        %v1294 = vpop.f32.mrf.mxu0
        %1295 = vdwg.mxu0
        %1296 = vmatpush.bf16.msra.mxu0 %v1213
        %1297 = vmatpush.bf16.msra.mxu0 %v1212
        %1298 = vmatpush.bf16.msra.mxu0 %v1211
        %1299 = vmatpush.bf16.msra.mxu0 %v1210
        %1300 = vmatpush.bf16.msra.mxu0 %v1209
        %1301 = vmatpush.bf16.msra.mxu0 %v1208
        %1302 = vmatpush.bf16.msra.mxu0 %v1207
        %1303 = vmatpush.bf16.msra.mxu0 %v1206
        %1304 = vmatmul.bf16.gmra.mxu0 %v1026
        %v1305 = vpop.f32.mrf.mxu0
        %v1306 = vadd.f32 %v1293, %v1305
        %v1307 = vpop.f32.mrf.mxu0
        %1308 = vdwg.mxu0
        %1309 = vmatpush.bf16.msra.mxu0 %v1221
        %1310 = vmatpush.bf16.msra.mxu0 %v1220
        %1311 = vmatpush.bf16.msra.mxu0 %v1219
        %1312 = vmatpush.bf16.msra.mxu0 %v1218
        %1313 = vmatpush.bf16.msra.mxu0 %v1217
        %1314 = vmatpush.bf16.msra.mxu0 %v1216
        %1315 = vmatpush.bf16.msra.mxu0 %v1215
        %1316 = vmatpush.bf16.msra.mxu0 %v1214
        %1317 = vmatmul.bf16.gmra.mxu0 %v1027
        %v1318 = vpop.f32.mrf.mxu0
        %v1319 = vadd.f32 %v1306, %v1318
        %v1320 = vpop.f32.mrf.mxu0
        %1321 = vdwg.mxu0
        %1322 = vmatpush.bf16.msra.mxu0 %v1229
        %1323 = vmatpush.bf16.msra.mxu0 %v1228
        %1324 = vmatpush.bf16.msra.mxu0 %v1227
        %1325 = vmatpush.bf16.msra.mxu0 %v1226
        %1326 = vmatpush.bf16.msra.mxu0 %v1225
        %1327 = vmatpush.bf16.msra.mxu0 %v1224
        %1328 = vmatpush.bf16.msra.mxu0 %v1223
        %1329 = vmatpush.bf16.msra.mxu0 %v1222
        %1330 = vmatmul.bf16.gmra.mxu0 %v1028
        %v1331 = vpop.f32.mrf.mxu0
        %v1332 = vadd.f32 %v1319, %v1331
        %v1333 = vpop.f32.mrf.mxu0
        %1334 = vdwg.mxu0
        %v1335 = vld [vmem:[%s7] sm:$0x1]
        %v1336 = vld [vmem:[%s9] sm:$0x1]
        %vm1337 = vcmask 1044480
        %v1338 = vsel %vm1337, %v1332, 0.0
        %1339 = vadd.xlane.f32.xlu0 %v1338
        %v1340 = vpop.xlane.xlu0 %1339
        %v1341 = vrcp.pop 128.0
        %v1342 = vmul.f32 128.0, %v1341
        %v1343 = vsub.f32 1.0, %v1342
        %v1344 = vmul.f32 %v1341, %v1343
        %v1345 = vadd.f32 %v1341, %v1344
        %vm1346 = vweird.f32 %v1341
        %v1347 = vsel %vm1346, %v1341, %v1345
        %v1348 = vmul.f32 %v1340, %v1347
        %v1349 = vsub.f32 %v1332, %v1348
        %v1350 = vmul.f32 %v1349, %v1349
        %v1351 = vsel %vm1337, %v1350, 0.0
        %1352 = vadd.xlane.f32.xlu0 %v1351
        %v1353 = vpop.xlane.xlu0 %1352
        %v1354 = vmul.f32 %v1353, %v1347
        %v1355 = vadd.f32 %v1354, 1e-05
        %v1356 = vrsqrt.pop %v1355
        %v1357 = vmul.f32 %v1356, %v1355
        %v1358 = vmul.f32 %v1357, %v1356
        %v1359 = vmul.f32 0.5, %v1358
        %v1360 = vsub.f32 1.5, %v1359
        %v1361 = vmul.f32 %v1356, %v1360
        %vm1362 = vweird.f32 %v1355
        %vm1363 = vweird.f32 %v1356
        %vm1364 = vmor %vm1362, %vm1363
        %v1365 = vsel %vm1364, %v1356, %v1361
        %v1366 = vmul.f32 %v1349, %v1365
        %v1368 = vperm.slane %v1335, 0
        %v1370 = vmul.f32 %v1366, %v1368
        %v1372 = vperm.slane %v1336, 0
        %v1374 = vadd.f32 %v1370, %v1372
        %v1375 = vld [vmem:[%s15] sm:$0x1]
        %v1376 = vld [vmem:[%s17] sm:$0x1]
        %v1377 = vsel %vm1337, %v1374, 0.0
        %1378 = vadd.xlane.f32.xlu0 %v1377
        %v1379 = vpop.xlane.xlu0 %1378
        %v1380 = vmul.f32 %v1379, %v1347
        %v1381 = vsub.f32 %v1374, %v1380
        %v1382 = vmul.f32 %v1381, %v1381
        %v1383 = vsel %vm1337, %v1382, 0.0
        %1384 = vadd.xlane.f32.xlu0 %v1383
        %v1385 = vpop.xlane.xlu0 %1384
        %v1386 = vmul.f32 %v1385, %v1347
        %v1387 = vadd.f32 %v1386, 1e-05
        %v1388 = vrsqrt.pop %v1387
        %v1389 = vmul.f32 %v1388, %v1387
        %v1390 = vmul.f32 %v1389, %v1388
        %v1391 = vmul.f32 0.5, %v1390
        %v1392 = vsub.f32 1.5, %v1391
        %v1393 = vmul.f32 %v1388, %v1392
        %vm1394 = vweird.f32 %v1387
        %vm1395 = vweird.f32 %v1388
        %vm1396 = vmor %vm1394, %vm1395
        %v1397 = vsel %vm1396, %v1388, %v1393
        %v1398 = vmul.f32 %v1381, %v1397
        %v1400 = vperm.slane %v1375, 0
        %v1402 = vmul.f32 %v1398, %v1400
        %v1404 = vperm.slane %v1376, 0
        %v1406 = vadd.f32 %v1402, %v1404
        %v1407 = vpack.c.bf16 %v1406, %v1406
        %v1408 = vld [vmem:[%s23] sm:$0xf]
        %v1409 = vld [vmem:[%s23 + $0x4] sm:$0xf]
        %v1410 = vld [vmem:[%s23 + $0x8] sm:$0xf]
        %v1411 = vld [vmem:[%s23 + $0xc] sm:$0xf]
        %v1412 = vld [vmem:[%s23 + $0x10] sm:$0xf]
        %v1413 = vld [vmem:[%s23 + $0x14] sm:$0xf]
        %v1414 = vld [vmem:[%s23 + $0x18] sm:$0xf]
        %v1415 = vld [vmem:[%s23 + $0x1c] sm:$0xf]
        %v1416 = vld [vmem:[%s23 + $0x20] sm:$0xf]
        %v1417 = vld [vmem:[%s23 + $0x24] sm:$0xf]
        %v1418 = vld [vmem:[%s23 + $0x28] sm:$0xf]
        %v1419 = vld [vmem:[%s23 + $0x2c] sm:$0xf]
        %v1420 = vld [vmem:[%s23 + $0x30] sm:$0xf]
        %v1421 = vld [vmem:[%s23 + $0x34] sm:$0xf]
        %v1422 = vld [vmem:[%s23 + $0x38] sm:$0xf]
        %v1423 = vld [vmem:[%s23 + $0x3c] sm:$0xf]
        %v1424 = vld [vmem:[%s23 + $0x40] sm:$0xf]
        %v1425 = vld [vmem:[%s23 + $0x44] sm:$0xf]
        %v1426 = vld [vmem:[%s23 + $0x48] sm:$0xf]
        %v1427 = vld [vmem:[%s23 + $0x4c] sm:$0xf]
        %v1428 = vld [vmem:[%s23 + $0x50] sm:$0xf]
        %v1429 = vld [vmem:[%s23 + $0x54] sm:$0xf]
        %v1430 = vld [vmem:[%s23 + $0x58] sm:$0xf]
        %v1431 = vld [vmem:[%s23 + $0x5c] sm:$0xf]
        %v1432 = vld [vmem:[%s23 + $0x60] sm:$0xf]
        %v1433 = vld [vmem:[%s23 + $0x64] sm:$0xf]
        %v1434 = vld [vmem:[%s23 + $0x68] sm:$0xf]
        %v1435 = vld [vmem:[%s23 + $0x6c] sm:$0xf]
        %v1436 = vld [vmem:[%s23 + $0x70] sm:$0xf]
        %v1437 = vld [vmem:[%s23 + $0x74] sm:$0xf]
        %v1438 = vld [vmem:[%s23 + $0x78] sm:$0xf]
        %v1439 = vld [vmem:[%s23 + $0x7c] sm:$0xf]
        %v1440 = vld [vmem:[%s23 + $0x80] sm:$0xf]
        %v1441 = vld [vmem:[%s23 + $0x84] sm:$0xf]
        %v1442 = vld [vmem:[%s23 + $0x88] sm:$0xf]
        %v1443 = vld [vmem:[%s23 + $0x8c] sm:$0xf]
        %v1444 = vld [vmem:[%s23 + $0x90] sm:$0xf]
        %v1445 = vld [vmem:[%s23 + $0x94] sm:$0xf]
        %v1446 = vld [vmem:[%s23 + $0x98] sm:$0xf]
        %v1447 = vld [vmem:[%s23 + $0x9c] sm:$0xf]
        %v1448 = vld [vmem:[%s23 + $0xa0] sm:$0xf]
        %v1449 = vld [vmem:[%s23 + $0xa4] sm:$0xf]
        %v1450 = vld [vmem:[%s23 + $0xa8] sm:$0xf]
        %v1451 = vld [vmem:[%s23 + $0xac] sm:$0xf]
        %v1452 = vld [vmem:[%s23 + $0xb0] sm:$0xf]
        %v1453 = vld [vmem:[%s23 + $0xb4] sm:$0xf]
        %v1454 = vld [vmem:[%s23 + $0xb8] sm:$0xf]
        %v1455 = vld [vmem:[%s23 + $0xbc] sm:$0xf]
        %v1456 = vld [vmem:[%s23 + $0xc0] sm:$0xf]
        %v1457 = vld [vmem:[%s23 + $0xc4] sm:$0xf]
        %v1458 = vld [vmem:[%s23 + $0xc8] sm:$0xf]
        %v1459 = vld [vmem:[%s23 + $0xcc] sm:$0xf]
        %v1460 = vld [vmem:[%s23 + $0xd0] sm:$0xf]
        %v1461 = vld [vmem:[%s23 + $0xd4] sm:$0xf]
        %v1462 = vld [vmem:[%s23 + $0xd8] sm:$0xf]
        %v1463 = vld [vmem:[%s23 + $0xdc] sm:$0xf]
        %v1464 = vld [vmem:[%s23 + $0xe0] sm:$0xf]
        %v1465 = vld [vmem:[%s23 + $0xe4] sm:$0xf]
        %v1466 = vld [vmem:[%s23 + $0xe8] sm:$0xf]
        %v1467 = vld [vmem:[%s23 + $0xec] sm:$0xf]
        %v1468 = vld [vmem:[%s23 + $0xf0] sm:$0xf]
        %v1469 = vld [vmem:[%s23 + $0xf4] sm:$0xf]
        %v1470 = vld [vmem:[%s23 + $0xf8] sm:$0xf]
        %v1471 = vld [vmem:[%s23 + $0xfc] sm:$0xf]
        %v1472 = vld [vmem:[%s23 + $0x100] sm:$0xf]
        %v1473 = vld [vmem:[%s23 + $0x104] sm:$0xf]
        %v1474 = vld [vmem:[%s23 + $0x108] sm:$0xf]
        %v1475 = vld [vmem:[%s23 + $0x10c] sm:$0xf]
        %v1476 = vld [vmem:[%s23 + $0x110] sm:$0xf]
        %v1477 = vld [vmem:[%s23 + $0x114] sm:$0xf]
        %v1478 = vld [vmem:[%s23 + $0x118] sm:$0xf]
        %v1479 = vld [vmem:[%s23 + $0x11c] sm:$0xf]
        %v1480 = vld [vmem:[%s23 + $0x120] sm:$0xf]
        %v1481 = vld [vmem:[%s23 + $0x124] sm:$0xf]
        %v1482 = vld [vmem:[%s23 + $0x128] sm:$0xf]
        %v1483 = vld [vmem:[%s23 + $0x12c] sm:$0xf]
        %v1484 = vld [vmem:[%s23 + $0x130] sm:$0xf]
        %v1485 = vld [vmem:[%s23 + $0x134] sm:$0xf]
        %v1486 = vld [vmem:[%s23 + $0x138] sm:$0xf]
        %v1487 = vld [vmem:[%s23 + $0x13c] sm:$0xf]
        %v1488 = vld [vmem:[%s23 + $0x140] sm:$0xf]
        %v1489 = vld [vmem:[%s23 + $0x144] sm:$0xf]
        %v1490 = vld [vmem:[%s23 + $0x148] sm:$0xf]
        %v1491 = vld [vmem:[%s23 + $0x14c] sm:$0xf]
        %v1492 = vld [vmem:[%s23 + $0x150] sm:$0xf]
        %v1493 = vld [vmem:[%s23 + $0x154] sm:$0xf]
        %v1494 = vld [vmem:[%s23 + $0x158] sm:$0xf]
        %v1495 = vld [vmem:[%s23 + $0x15c] sm:$0xf]
        %v1496 = vld [vmem:[%s23 + $0x160] sm:$0xf]
        %v1497 = vld [vmem:[%s23 + $0x164] sm:$0xf]
        %v1498 = vld [vmem:[%s23 + $0x168] sm:$0xf]
        %v1499 = vld [vmem:[%s23 + $0x16c] sm:$0xf]
        %v1500 = vld [vmem:[%s23 + $0x170] sm:$0xf]
        %v1501 = vld [vmem:[%s23 + $0x174] sm:$0xf]
        %v1502 = vld [vmem:[%s23 + $0x178] sm:$0xf]
        %v1503 = vld [vmem:[%s23 + $0x17c] sm:$0xf]
        %v1504 = vld [vmem:[%s23 + $0x180] sm:$0xf]
        %v1505 = vld [vmem:[%s23 + $0x184] sm:$0xf]
        %v1506 = vld [vmem:[%s23 + $0x188] sm:$0xf]
        %v1507 = vld [vmem:[%s23 + $0x18c] sm:$0xf]
        %v1508 = vld [vmem:[%s23 + $0x190] sm:$0xf]
        %v1509 = vld [vmem:[%s23 + $0x194] sm:$0xf]
        %v1510 = vld [vmem:[%s23 + $0x198] sm:$0xf]
        %v1511 = vld [vmem:[%s23 + $0x19c] sm:$0xf]
        %v1512 = vld [vmem:[%s23 + $0x1a0] sm:$0xf]
        %v1513 = vld [vmem:[%s23 + $0x1a4] sm:$0xf]
        %v1514 = vld [vmem:[%s23 + $0x1a8] sm:$0xf]
        %v1515 = vld [vmem:[%s23 + $0x1ac] sm:$0xf]
        %v1516 = vld [vmem:[%s23 + $0x1b0] sm:$0xf]
        %v1517 = vld [vmem:[%s23 + $0x1b4] sm:$0xf]
        %v1518 = vld [vmem:[%s23 + $0x1b8] sm:$0xf]
        %v1519 = vld [vmem:[%s23 + $0x1bc] sm:$0xf]
        %v1520 = vld [vmem:[%s23 + $0x1c0] sm:$0xf]
        %v1521 = vld [vmem:[%s23 + $0x1c4] sm:$0xf]
        %v1522 = vld [vmem:[%s23 + $0x1c8] sm:$0xf]
        %v1523 = vld [vmem:[%s23 + $0x1cc] sm:$0xf]
        %v1524 = vld [vmem:[%s23 + $0x1d0] sm:$0xf]
        %v1525 = vld [vmem:[%s23 + $0x1d4] sm:$0xf]
        %v1526 = vld [vmem:[%s23 + $0x1d8] sm:$0xf]
        %v1527 = vld [vmem:[%s23 + $0x1dc] sm:$0xf]
        %v1528 = vld [vmem:[%s23 + $0x1e0] sm:$0xf]
        %v1529 = vld [vmem:[%s23 + $0x1e4] sm:$0xf]
        %v1530 = vld [vmem:[%s23 + $0x1e8] sm:$0xf]
        %v1531 = vld [vmem:[%s23 + $0x1ec] sm:$0xf]
        %v1532 = vld [vmem:[%s23 + $0x1f0] sm:$0xf]
        %v1533 = vld [vmem:[%s23 + $0x1f4] sm:$0xf]
        %v1534 = vld [vmem:[%s23 + $0x1f8] sm:$0xf]
        %v1535 = vld [vmem:[%s23 + $0x1fc] sm:$0xf]
        %v1536 = vld [vmem:[%s23 + $0x200] sm:$0xf]
        %v1537 = vld [vmem:[%s23 + $0x204] sm:$0xf]
        %v1538 = vld [vmem:[%s23 + $0x208] sm:$0xf]
        %v1539 = vld [vmem:[%s23 + $0x20c] sm:$0xf]
        %v1540 = vld [vmem:[%s23 + $0x210] sm:$0xf]
        %v1541 = vld [vmem:[%s23 + $0x214] sm:$0xf]
        %v1542 = vld [vmem:[%s23 + $0x218] sm:$0xf]
        %v1543 = vld [vmem:[%s23 + $0x21c] sm:$0xf]
        %v1544 = vld [vmem:[%s23 + $0x220] sm:$0xf]
        %v1545 = vld [vmem:[%s23 + $0x224] sm:$0xf]
        %v1546 = vld [vmem:[%s23 + $0x228] sm:$0xf]
        %v1547 = vld [vmem:[%s23 + $0x22c] sm:$0xf]
        %v1548 = vld [vmem:[%s23 + $0x230] sm:$0xf]
        %v1549 = vld [vmem:[%s23 + $0x234] sm:$0xf]
        %v1550 = vld [vmem:[%s23 + $0x238] sm:$0xf]
        %v1551 = vld [vmem:[%s23 + $0x23c] sm:$0xf]
        %v1552 = vld [vmem:[%s23 + $0x240] sm:$0xf]
        %v1553 = vld [vmem:[%s23 + $0x244] sm:$0xf]
        %v1554 = vld [vmem:[%s23 + $0x248] sm:$0xf]
        %v1555 = vld [vmem:[%s23 + $0x24c] sm:$0xf]
        %v1556 = vld [vmem:[%s23 + $0x250] sm:$0xf]
        %v1557 = vld [vmem:[%s23 + $0x254] sm:$0xf]
        %v1558 = vld [vmem:[%s23 + $0x258] sm:$0xf]
        %v1559 = vld [vmem:[%s23 + $0x25c] sm:$0xf]
        %v1560 = vld [vmem:[%s23 + $0x260] sm:$0xf]
        %v1561 = vld [vmem:[%s23 + $0x264] sm:$0xf]
        %v1562 = vld [vmem:[%s23 + $0x268] sm:$0xf]
        %v1563 = vld [vmem:[%s23 + $0x26c] sm:$0xf]
        %v1564 = vld [vmem:[%s23 + $0x270] sm:$0xf]
        %v1565 = vld [vmem:[%s23 + $0x274] sm:$0xf]
        %v1566 = vld [vmem:[%s23 + $0x278] sm:$0xf]
        %v1567 = vld [vmem:[%s23 + $0x27c] sm:$0xf]
        %v1568 = vld [vmem:[%s23 + $0x280] sm:$0xf]
        %v1569 = vld [vmem:[%s23 + $0x284] sm:$0xf]
        %v1570 = vld [vmem:[%s23 + $0x288] sm:$0xf]
        %v1571 = vld [vmem:[%s23 + $0x28c] sm:$0xf]
        %v1572 = vld [vmem:[%s23 + $0x290] sm:$0xf]
        %v1573 = vld [vmem:[%s23 + $0x294] sm:$0xf]
        %v1574 = vld [vmem:[%s23 + $0x298] sm:$0xf]
        %v1575 = vld [vmem:[%s23 + $0x29c] sm:$0xf]
        %v1576 = vld [vmem:[%s23 + $0x2a0] sm:$0xf]
        %v1577 = vld [vmem:[%s23 + $0x2a4] sm:$0xf]
        %v1578 = vld [vmem:[%s23 + $0x2a8] sm:$0xf]
        %v1579 = vld [vmem:[%s23 + $0x2ac] sm:$0xf]
        %v1580 = vld [vmem:[%s23 + $0x2b0] sm:$0xf]
        %v1581 = vld [vmem:[%s23 + $0x2b4] sm:$0xf]
        %v1582 = vld [vmem:[%s23 + $0x2b8] sm:$0xf]
        %v1583 = vld [vmem:[%s23 + $0x2bc] sm:$0xf]
        %v1584 = vld [vmem:[%s23 + $0x2c0] sm:$0xf]
        %v1585 = vld [vmem:[%s23 + $0x2c4] sm:$0xf]
        %v1586 = vld [vmem:[%s23 + $0x2c8] sm:$0xf]
        %v1587 = vld [vmem:[%s23 + $0x2cc] sm:$0xf]
        %v1588 = vld [vmem:[%s23 + $0x2d0] sm:$0xf]
        %v1589 = vld [vmem:[%s23 + $0x2d4] sm:$0xf]
        %v1590 = vld [vmem:[%s23 + $0x2d8] sm:$0xf]
        %v1591 = vld [vmem:[%s23 + $0x2dc] sm:$0xf]
        %v1592 = vld [vmem:[%s23 + $0x2e0] sm:$0xf]
        %v1593 = vld [vmem:[%s23 + $0x2e4] sm:$0xf]
        %v1594 = vld [vmem:[%s23 + $0x2e8] sm:$0xf]
        %v1595 = vld [vmem:[%s23 + $0x2ec] sm:$0xf]
        %v1596 = vld [vmem:[%s23 + $0x2f0] sm:$0xf]
        %v1597 = vld [vmem:[%s23 + $0x2f4] sm:$0xf]
        %v1598 = vld [vmem:[%s23 + $0x2f8] sm:$0xf]
        %v1599 = vld [vmem:[%s23 + $0x2fc] sm:$0xf]
        %v1600 = vld [vmem:[%s25] sm:$0x1]
        %v1601 = vld [vmem:[%s25 + $0x1] sm:$0x1]
        %v1602 = vld [vmem:[%s25 + $0x2] sm:$0x1]
        %v1603 = vld [vmem:[%s25 + $0x3] sm:$0x1]
        %v1604 = vld [vmem:[%s25 + $0x4] sm:$0x1]
        %v1605 = vld [vmem:[%s25 + $0x5] sm:$0x1]
        %v1606 = vld [vmem:[%s25 + $0x6] sm:$0x1]
        %v1607 = vld [vmem:[%s25 + $0x7] sm:$0x1]
        %v1608 = vld [vmem:[%s25 + $0x8] sm:$0x1]
        %v1609 = vld [vmem:[%s25 + $0x9] sm:$0x1]
        %v1610 = vld [vmem:[%s25 + $0xa] sm:$0x1]
        %v1611 = vld [vmem:[%s25 + $0xb] sm:$0x1]
        %v1624 = vperm.slane %v1600, 0
        %v1625 = vperm.slane %v1601, 0
        %v1626 = vperm.slane %v1602, 0
        %v1627 = vperm.slane %v1603, 0
        %v1628 = vperm.slane %v1604, 0
        %v1629 = vperm.slane %v1605, 0
        %v1630 = vperm.slane %v1606, 0
        %v1631 = vperm.slane %v1607, 0
        %v1632 = vperm.slane %v1608, 0
        %v1633 = vperm.slane %v1609, 0
        %v1634 = vperm.slane %v1610, 0
        %v1635 = vperm.slane %v1611, 0
        %v1664 = vunpack.c.l.b16 %v1408
        %v1665 = vunpack.c.l.b16 %v1409
        %v1666 = vunpack.c.l.b16 %v1410
        %v1667 = vunpack.c.l.b16 %v1411
        %v1668 = vunpack.c.l.b16 %v1412
        %v1669 = vunpack.c.l.b16 %v1413
        %v1670 = vunpack.c.l.b16 %v1414
        %v1671 = vunpack.c.l.b16 %v1415
        %v1672 = vunpack.c.l.b16 %v1416
        %v1673 = vunpack.c.l.b16 %v1417
        %v1674 = vunpack.c.l.b16 %v1418
        %v1675 = vunpack.c.l.b16 %v1419
        %v1676 = vunpack.c.l.b16 %v1420
        %v1677 = vunpack.c.l.b16 %v1421
        %v1678 = vunpack.c.l.b16 %v1422
        %v1679 = vunpack.c.l.b16 %v1423
        %v1680 = vpack.c.b16 %v1665, %v1664
        %v1681 = vpack.c.b16 %v1667, %v1666
        %v1682 = vpack.c.b16 %v1669, %v1668
        %v1683 = vpack.c.b16 %v1671, %v1670
        %v1684 = vpack.c.b16 %v1673, %v1672
        %v1685 = vpack.c.b16 %v1675, %v1674
        %v1686 = vpack.c.b16 %v1677, %v1676
        %v1687 = vpack.c.b16 %v1679, %v1678
        %1696 = vmatpush.bf16.msra.mxu0 %v1687
        %1697 = vmatpush.bf16.msra.mxu0 %v1686
        %1698 = vmatpush.bf16.msra.mxu0 %v1685
        %1699 = vmatpush.bf16.msra.mxu0 %v1684
        %1700 = vmatpush.bf16.msra.mxu0 %v1683
        %1701 = vmatpush.bf16.msra.mxu0 %v1682
        %1702 = vmatpush.bf16.msra.mxu0 %v1681
        %1703 = vmatpush.bf16.msra.mxu0 %v1680
        %1704 = vmatmul.bf16.gmra.mxu0 %v1407
        %v1705 = vpop.f32.mrf.mxu0
        %v1706 = vadd.f32 %v1624, %v1705
        %v1707 = vpop.f32.mrf.mxu0
        %1708 = vdwg.mxu0
        %v1725 = vunpack.c.l.b16 %v1424
        %v1726 = vunpack.c.l.b16 %v1425
        %v1727 = vunpack.c.l.b16 %v1426
        %v1728 = vunpack.c.l.b16 %v1427
        %v1729 = vunpack.c.l.b16 %v1428
        %v1730 = vunpack.c.l.b16 %v1429
        %v1731 = vunpack.c.l.b16 %v1430
        %v1732 = vunpack.c.l.b16 %v1431
        %v1733 = vunpack.c.l.b16 %v1432
        %v1734 = vunpack.c.l.b16 %v1433
        %v1735 = vunpack.c.l.b16 %v1434
        %v1736 = vunpack.c.l.b16 %v1435
        %v1737 = vunpack.c.l.b16 %v1436
        %v1738 = vunpack.c.l.b16 %v1437
        %v1739 = vunpack.c.l.b16 %v1438
        %v1740 = vunpack.c.l.b16 %v1439
        %v1741 = vpack.c.b16 %v1726, %v1725
        %v1742 = vpack.c.b16 %v1728, %v1727
        %v1743 = vpack.c.b16 %v1730, %v1729
        %v1744 = vpack.c.b16 %v1732, %v1731
        %v1745 = vpack.c.b16 %v1734, %v1733
        %v1746 = vpack.c.b16 %v1736, %v1735
        %v1747 = vpack.c.b16 %v1738, %v1737
        %v1748 = vpack.c.b16 %v1740, %v1739
        %1757 = vmatpush.bf16.msra.mxu0 %v1748
        %1758 = vmatpush.bf16.msra.mxu0 %v1747
        %1759 = vmatpush.bf16.msra.mxu0 %v1746
        %1760 = vmatpush.bf16.msra.mxu0 %v1745
        %1761 = vmatpush.bf16.msra.mxu0 %v1744
        %1762 = vmatpush.bf16.msra.mxu0 %v1743
        %1763 = vmatpush.bf16.msra.mxu0 %v1742
        %1764 = vmatpush.bf16.msra.mxu0 %v1741
        %1765 = vmatmul.bf16.gmra.mxu0 %v1407
        %v1766 = vpop.f32.mrf.mxu0
        %v1767 = vadd.f32 %v1625, %v1766
        %v1768 = vpop.f32.mrf.mxu0
        %1769 = vdwg.mxu0
        %v1786 = vunpack.c.l.b16 %v1440
        %v1787 = vunpack.c.l.b16 %v1441
        %v1788 = vunpack.c.l.b16 %v1442
        %v1789 = vunpack.c.l.b16 %v1443
        %v1790 = vunpack.c.l.b16 %v1444
        %v1791 = vunpack.c.l.b16 %v1445
        %v1792 = vunpack.c.l.b16 %v1446
        %v1793 = vunpack.c.l.b16 %v1447
        %v1794 = vunpack.c.l.b16 %v1448
        %v1795 = vunpack.c.l.b16 %v1449
        %v1796 = vunpack.c.l.b16 %v1450
        %v1797 = vunpack.c.l.b16 %v1451
        %v1798 = vunpack.c.l.b16 %v1452
        %v1799 = vunpack.c.l.b16 %v1453
        %v1800 = vunpack.c.l.b16 %v1454
        %v1801 = vunpack.c.l.b16 %v1455
        %v1802 = vpack.c.b16 %v1787, %v1786
        %v1803 = vpack.c.b16 %v1789, %v1788
        %v1804 = vpack.c.b16 %v1791, %v1790
        %v1805 = vpack.c.b16 %v1793, %v1792
        %v1806 = vpack.c.b16 %v1795, %v1794
        %v1807 = vpack.c.b16 %v1797, %v1796
        %v1808 = vpack.c.b16 %v1799, %v1798
        %v1809 = vpack.c.b16 %v1801, %v1800
        %1818 = vmatpush.bf16.msra.mxu0 %v1809
        %1819 = vmatpush.bf16.msra.mxu0 %v1808
        %1820 = vmatpush.bf16.msra.mxu0 %v1807
        %1821 = vmatpush.bf16.msra.mxu0 %v1806
        %1822 = vmatpush.bf16.msra.mxu0 %v1805
        %1823 = vmatpush.bf16.msra.mxu0 %v1804
        %1824 = vmatpush.bf16.msra.mxu0 %v1803
        %1825 = vmatpush.bf16.msra.mxu0 %v1802
        %1826 = vmatmul.bf16.gmra.mxu0 %v1407
        %v1827 = vpop.f32.mrf.mxu0
        %v1828 = vadd.f32 %v1626, %v1827
        %v1829 = vpop.f32.mrf.mxu0
        %1830 = vdwg.mxu0
        %v1847 = vunpack.c.l.b16 %v1456
        %v1848 = vunpack.c.l.b16 %v1457
        %v1849 = vunpack.c.l.b16 %v1458
        %v1850 = vunpack.c.l.b16 %v1459
        %v1851 = vunpack.c.l.b16 %v1460
        %v1852 = vunpack.c.l.b16 %v1461
        %v1853 = vunpack.c.l.b16 %v1462
        %v1854 = vunpack.c.l.b16 %v1463
        %v1855 = vunpack.c.l.b16 %v1464
        %v1856 = vunpack.c.l.b16 %v1465
        %v1857 = vunpack.c.l.b16 %v1466
        %v1858 = vunpack.c.l.b16 %v1467
        %v1859 = vunpack.c.l.b16 %v1468
        %v1860 = vunpack.c.l.b16 %v1469
        %v1861 = vunpack.c.l.b16 %v1470
        %v1862 = vunpack.c.l.b16 %v1471
        %v1863 = vpack.c.b16 %v1848, %v1847
        %v1864 = vpack.c.b16 %v1850, %v1849
        %v1865 = vpack.c.b16 %v1852, %v1851
        %v1866 = vpack.c.b16 %v1854, %v1853
        %v1867 = vpack.c.b16 %v1856, %v1855
        %v1868 = vpack.c.b16 %v1858, %v1857
        %v1869 = vpack.c.b16 %v1860, %v1859
        %v1870 = vpack.c.b16 %v1862, %v1861
        %1879 = vmatpush.bf16.msra.mxu0 %v1870
        %1880 = vmatpush.bf16.msra.mxu0 %v1869
        %1881 = vmatpush.bf16.msra.mxu0 %v1868
        %1882 = vmatpush.bf16.msra.mxu0 %v1867
        %1883 = vmatpush.bf16.msra.mxu0 %v1866
        %1884 = vmatpush.bf16.msra.mxu0 %v1865
        %1885 = vmatpush.bf16.msra.mxu0 %v1864
        %1886 = vmatpush.bf16.msra.mxu0 %v1863
        %1887 = vmatmul.bf16.gmra.mxu0 %v1407
        %v1888 = vpop.f32.mrf.mxu0
        %v1889 = vadd.f32 %v1627, %v1888
        %v1890 = vpop.f32.mrf.mxu0
        %1891 = vdwg.mxu0
        %v1908 = vunpack.c.l.b16 %v1472
        %v1909 = vunpack.c.l.b16 %v1473
        %v1910 = vunpack.c.l.b16 %v1474
        %v1911 = vunpack.c.l.b16 %v1475
        %v1912 = vunpack.c.l.b16 %v1476
        %v1913 = vunpack.c.l.b16 %v1477
        %v1914 = vunpack.c.l.b16 %v1478
        %v1915 = vunpack.c.l.b16 %v1479
        %v1916 = vunpack.c.l.b16 %v1480
        %v1917 = vunpack.c.l.b16 %v1481
        %v1918 = vunpack.c.l.b16 %v1482
        %v1919 = vunpack.c.l.b16 %v1483
        %v1920 = vunpack.c.l.b16 %v1484
        %v1921 = vunpack.c.l.b16 %v1485
        %v1922 = vunpack.c.l.b16 %v1486
        %v1923 = vunpack.c.l.b16 %v1487
        %v1924 = vpack.c.b16 %v1909, %v1908
        %v1925 = vpack.c.b16 %v1911, %v1910
        %v1926 = vpack.c.b16 %v1913, %v1912
        %v1927 = vpack.c.b16 %v1915, %v1914
        %v1928 = vpack.c.b16 %v1917, %v1916
        %v1929 = vpack.c.b16 %v1919, %v1918
        %v1930 = vpack.c.b16 %v1921, %v1920
        %v1931 = vpack.c.b16 %v1923, %v1922
        %1940 = vmatpush.bf16.msra.mxu0 %v1931
        %1941 = vmatpush.bf16.msra.mxu0 %v1930
        %1942 = vmatpush.bf16.msra.mxu0 %v1929
        %1943 = vmatpush.bf16.msra.mxu0 %v1928
        %1944 = vmatpush.bf16.msra.mxu0 %v1927
        %1945 = vmatpush.bf16.msra.mxu0 %v1926
        %1946 = vmatpush.bf16.msra.mxu0 %v1925
        %1947 = vmatpush.bf16.msra.mxu0 %v1924
        %1948 = vmatmul.bf16.gmra.mxu0 %v1407
        %v1949 = vpop.f32.mrf.mxu0
        %v1950 = vadd.f32 %v1628, %v1949
        %v1951 = vpop.f32.mrf.mxu0
        %1952 = vdwg.mxu0
        %v1969 = vunpack.c.l.b16 %v1488
        %v1970 = vunpack.c.l.b16 %v1489
        %v1971 = vunpack.c.l.b16 %v1490
        %v1972 = vunpack.c.l.b16 %v1491
        %v1973 = vunpack.c.l.b16 %v1492
        %v1974 = vunpack.c.l.b16 %v1493
        %v1975 = vunpack.c.l.b16 %v1494
        %v1976 = vunpack.c.l.b16 %v1495
        %v1977 = vunpack.c.l.b16 %v1496
        %v1978 = vunpack.c.l.b16 %v1497
        %v1979 = vunpack.c.l.b16 %v1498
        %v1980 = vunpack.c.l.b16 %v1499
        %v1981 = vunpack.c.l.b16 %v1500
        %v1982 = vunpack.c.l.b16 %v1501
        %v1983 = vunpack.c.l.b16 %v1502
        %v1984 = vunpack.c.l.b16 %v1503
        %v1985 = vpack.c.b16 %v1970, %v1969
        %v1986 = vpack.c.b16 %v1972, %v1971
        %v1987 = vpack.c.b16 %v1974, %v1973
        %v1988 = vpack.c.b16 %v1976, %v1975
        %v1989 = vpack.c.b16 %v1978, %v1977
        %v1990 = vpack.c.b16 %v1980, %v1979
        %v1991 = vpack.c.b16 %v1982, %v1981
        %v1992 = vpack.c.b16 %v1984, %v1983
        %2001 = vmatpush.bf16.msra.mxu0 %v1992
        %2002 = vmatpush.bf16.msra.mxu0 %v1991
        %2003 = vmatpush.bf16.msra.mxu0 %v1990
        %2004 = vmatpush.bf16.msra.mxu0 %v1989
        %2005 = vmatpush.bf16.msra.mxu0 %v1988
        %2006 = vmatpush.bf16.msra.mxu0 %v1987
        %2007 = vmatpush.bf16.msra.mxu0 %v1986
        %2008 = vmatpush.bf16.msra.mxu0 %v1985
        %2009 = vmatmul.bf16.gmra.mxu0 %v1407
        %v2010 = vpop.f32.mrf.mxu0
        %v2011 = vadd.f32 %v1629, %v2010
        %v2012 = vpop.f32.mrf.mxu0
        %2013 = vdwg.mxu0
        %v2030 = vunpack.c.l.b16 %v1504
        %v2031 = vunpack.c.l.b16 %v1505
        %v2032 = vunpack.c.l.b16 %v1506
        %v2033 = vunpack.c.l.b16 %v1507
        %v2034 = vunpack.c.l.b16 %v1508
        %v2035 = vunpack.c.l.b16 %v1509
        %v2036 = vunpack.c.l.b16 %v1510
        %v2037 = vunpack.c.l.b16 %v1511
        %v2038 = vunpack.c.l.b16 %v1512
        %v2039 = vunpack.c.l.b16 %v1513
        %v2040 = vunpack.c.l.b16 %v1514
        %v2041 = vunpack.c.l.b16 %v1515
        %v2042 = vunpack.c.l.b16 %v1516
        %v2043 = vunpack.c.l.b16 %v1517
        %v2044 = vunpack.c.l.b16 %v1518
        %v2045 = vunpack.c.l.b16 %v1519
        %v2046 = vpack.c.b16 %v2031, %v2030
        %v2047 = vpack.c.b16 %v2033, %v2032
        %v2048 = vpack.c.b16 %v2035, %v2034
        %v2049 = vpack.c.b16 %v2037, %v2036
        %v2050 = vpack.c.b16 %v2039, %v2038
        %v2051 = vpack.c.b16 %v2041, %v2040
        %v2052 = vpack.c.b16 %v2043, %v2042
        %v2053 = vpack.c.b16 %v2045, %v2044
        %2062 = vmatpush.bf16.msra.mxu0 %v2053
        %2063 = vmatpush.bf16.msra.mxu0 %v2052
        %2064 = vmatpush.bf16.msra.mxu0 %v2051
        %2065 = vmatpush.bf16.msra.mxu0 %v2050
        %2066 = vmatpush.bf16.msra.mxu0 %v2049
        %2067 = vmatpush.bf16.msra.mxu0 %v2048
        %2068 = vmatpush.bf16.msra.mxu0 %v2047
        %2069 = vmatpush.bf16.msra.mxu0 %v2046
        %2070 = vmatmul.bf16.gmra.mxu0 %v1407
        %v2071 = vpop.f32.mrf.mxu0
        %v2072 = vadd.f32 %v1630, %v2071
        %v2073 = vpop.f32.mrf.mxu0
        %2074 = vdwg.mxu0
        %v2091 = vunpack.c.l.b16 %v1520
        %v2092 = vunpack.c.l.b16 %v1521
        %v2093 = vunpack.c.l.b16 %v1522
        %v2094 = vunpack.c.l.b16 %v1523
        %v2095 = vunpack.c.l.b16 %v1524
        %v2096 = vunpack.c.l.b16 %v1525
        %v2097 = vunpack.c.l.b16 %v1526
        %v2098 = vunpack.c.l.b16 %v1527
        %v2099 = vunpack.c.l.b16 %v1528
        %v2100 = vunpack.c.l.b16 %v1529
        %v2101 = vunpack.c.l.b16 %v1530
        %v2102 = vunpack.c.l.b16 %v1531
        %v2103 = vunpack.c.l.b16 %v1532
        %v2104 = vunpack.c.l.b16 %v1533
        %v2105 = vunpack.c.l.b16 %v1534
        %v2106 = vunpack.c.l.b16 %v1535
        %v2107 = vpack.c.b16 %v2092, %v2091
        %v2108 = vpack.c.b16 %v2094, %v2093
        %v2109 = vpack.c.b16 %v2096, %v2095
        %v2110 = vpack.c.b16 %v2098, %v2097
        %v2111 = vpack.c.b16 %v2100, %v2099
        %v2112 = vpack.c.b16 %v2102, %v2101
        %v2113 = vpack.c.b16 %v2104, %v2103
        %v2114 = vpack.c.b16 %v2106, %v2105
        %2123 = vmatpush.bf16.msra.mxu0 %v2114
        %2124 = vmatpush.bf16.msra.mxu0 %v2113
        %2125 = vmatpush.bf16.msra.mxu0 %v2112
        %2126 = vmatpush.bf16.msra.mxu0 %v2111
        %2127 = vmatpush.bf16.msra.mxu0 %v2110
        %2128 = vmatpush.bf16.msra.mxu0 %v2109
        %2129 = vmatpush.bf16.msra.mxu0 %v2108
        %2130 = vmatpush.bf16.msra.mxu0 %v2107
        %2131 = vmatmul.bf16.gmra.mxu0 %v1407
        %v2132 = vpop.f32.mrf.mxu0
        %v2133 = vadd.f32 %v1631, %v2132
        %v2134 = vpop.f32.mrf.mxu0
        %2135 = vdwg.mxu0
        %v2152 = vunpack.c.l.b16 %v1536
        %v2153 = vunpack.c.l.b16 %v1537
        %v2154 = vunpack.c.l.b16 %v1538
        %v2155 = vunpack.c.l.b16 %v1539
        %v2156 = vunpack.c.l.b16 %v1540
        %v2157 = vunpack.c.l.b16 %v1541
        %v2158 = vunpack.c.l.b16 %v1542
        %v2159 = vunpack.c.l.b16 %v1543
        %v2160 = vunpack.c.l.b16 %v1544
        %v2161 = vunpack.c.l.b16 %v1545
        %v2162 = vunpack.c.l.b16 %v1546
        %v2163 = vunpack.c.l.b16 %v1547
        %v2164 = vunpack.c.l.b16 %v1548
        %v2165 = vunpack.c.l.b16 %v1549
        %v2166 = vunpack.c.l.b16 %v1550
        %v2167 = vunpack.c.l.b16 %v1551
        %v2168 = vpack.c.b16 %v2153, %v2152
        %v2169 = vpack.c.b16 %v2155, %v2154
        %v2170 = vpack.c.b16 %v2157, %v2156
        %v2171 = vpack.c.b16 %v2159, %v2158
        %v2172 = vpack.c.b16 %v2161, %v2160
        %v2173 = vpack.c.b16 %v2163, %v2162
        %v2174 = vpack.c.b16 %v2165, %v2164
        %v2175 = vpack.c.b16 %v2167, %v2166
        %2184 = vmatpush.bf16.msra.mxu0 %v2175
        %2185 = vmatpush.bf16.msra.mxu0 %v2174
        %2186 = vmatpush.bf16.msra.mxu0 %v2173
        %2187 = vmatpush.bf16.msra.mxu0 %v2172
        %2188 = vmatpush.bf16.msra.mxu0 %v2171
        %2189 = vmatpush.bf16.msra.mxu0 %v2170
        %2190 = vmatpush.bf16.msra.mxu0 %v2169
        %2191 = vmatpush.bf16.msra.mxu0 %v2168
        %2192 = vmatmul.bf16.gmra.mxu0 %v1407
        %v2193 = vpop.f32.mrf.mxu0
        %v2194 = vadd.f32 %v1632, %v2193
        %v2195 = vpop.f32.mrf.mxu0
        %2196 = vdwg.mxu0
        %v2213 = vunpack.c.l.b16 %v1552
        %v2214 = vunpack.c.l.b16 %v1553
        %v2215 = vunpack.c.l.b16 %v1554
        %v2216 = vunpack.c.l.b16 %v1555
        %v2217 = vunpack.c.l.b16 %v1556
        %v2218 = vunpack.c.l.b16 %v1557
        %v2219 = vunpack.c.l.b16 %v1558
        %v2220 = vunpack.c.l.b16 %v1559
        %v2221 = vunpack.c.l.b16 %v1560
        %v2222 = vunpack.c.l.b16 %v1561
        %v2223 = vunpack.c.l.b16 %v1562
        %v2224 = vunpack.c.l.b16 %v1563
        %v2225 = vunpack.c.l.b16 %v1564
        %v2226 = vunpack.c.l.b16 %v1565
        %v2227 = vunpack.c.l.b16 %v1566
        %v2228 = vunpack.c.l.b16 %v1567
        %v2229 = vpack.c.b16 %v2214, %v2213
        %v2230 = vpack.c.b16 %v2216, %v2215
        %v2231 = vpack.c.b16 %v2218, %v2217
        %v2232 = vpack.c.b16 %v2220, %v2219
        %v2233 = vpack.c.b16 %v2222, %v2221
        %v2234 = vpack.c.b16 %v2224, %v2223
        %v2235 = vpack.c.b16 %v2226, %v2225
        %v2236 = vpack.c.b16 %v2228, %v2227
        %2245 = vmatpush.bf16.msra.mxu0 %v2236
        %2246 = vmatpush.bf16.msra.mxu0 %v2235
        %2247 = vmatpush.bf16.msra.mxu0 %v2234
        %2248 = vmatpush.bf16.msra.mxu0 %v2233
        %2249 = vmatpush.bf16.msra.mxu0 %v2232
        %2250 = vmatpush.bf16.msra.mxu0 %v2231
        %2251 = vmatpush.bf16.msra.mxu0 %v2230
        %2252 = vmatpush.bf16.msra.mxu0 %v2229
        %2253 = vmatmul.bf16.gmra.mxu0 %v1407
        %v2254 = vpop.f32.mrf.mxu0
        %v2255 = vadd.f32 %v1633, %v2254
        %v2256 = vpop.f32.mrf.mxu0
        %2257 = vdwg.mxu0
        %v2274 = vunpack.c.l.b16 %v1568
        %v2275 = vunpack.c.l.b16 %v1569
        %v2276 = vunpack.c.l.b16 %v1570
        %v2277 = vunpack.c.l.b16 %v1571
        %v2278 = vunpack.c.l.b16 %v1572
        %v2279 = vunpack.c.l.b16 %v1573
        %v2280 = vunpack.c.l.b16 %v1574
        %v2281 = vunpack.c.l.b16 %v1575
        %v2282 = vunpack.c.l.b16 %v1576
        %v2283 = vunpack.c.l.b16 %v1577
        %v2284 = vunpack.c.l.b16 %v1578
        %v2285 = vunpack.c.l.b16 %v1579
        %v2286 = vunpack.c.l.b16 %v1580
        %v2287 = vunpack.c.l.b16 %v1581
        %v2288 = vunpack.c.l.b16 %v1582
        %v2289 = vunpack.c.l.b16 %v1583
        %v2290 = vpack.c.b16 %v2275, %v2274
        %v2291 = vpack.c.b16 %v2277, %v2276
        %v2292 = vpack.c.b16 %v2279, %v2278
        %v2293 = vpack.c.b16 %v2281, %v2280
        %v2294 = vpack.c.b16 %v2283, %v2282
        %v2295 = vpack.c.b16 %v2285, %v2284
        %v2296 = vpack.c.b16 %v2287, %v2286
        %v2297 = vpack.c.b16 %v2289, %v2288
        %2306 = vmatpush.bf16.msra.mxu0 %v2297
        %2307 = vmatpush.bf16.msra.mxu0 %v2296
        %2308 = vmatpush.bf16.msra.mxu0 %v2295
        %2309 = vmatpush.bf16.msra.mxu0 %v2294
        %2310 = vmatpush.bf16.msra.mxu0 %v2293
        %2311 = vmatpush.bf16.msra.mxu0 %v2292
        %2312 = vmatpush.bf16.msra.mxu0 %v2291
        %2313 = vmatpush.bf16.msra.mxu0 %v2290
        %2314 = vmatmul.bf16.gmra.mxu0 %v1407
        %v2315 = vpop.f32.mrf.mxu0
        %v2316 = vadd.f32 %v1634, %v2315
        %v2317 = vpop.f32.mrf.mxu0
        %2318 = vdwg.mxu0
        %v2335 = vunpack.c.l.b16 %v1584
        %v2336 = vunpack.c.l.b16 %v1585
        %v2337 = vunpack.c.l.b16 %v1586
        %v2338 = vunpack.c.l.b16 %v1587
        %v2339 = vunpack.c.l.b16 %v1588
        %v2340 = vunpack.c.l.b16 %v1589
        %v2341 = vunpack.c.l.b16 %v1590
        %v2342 = vunpack.c.l.b16 %v1591
        %v2343 = vunpack.c.l.b16 %v1592
        %v2344 = vunpack.c.l.b16 %v1593
        %v2345 = vunpack.c.l.b16 %v1594
        %v2346 = vunpack.c.l.b16 %v1595
        %v2347 = vunpack.c.l.b16 %v1596
        %v2348 = vunpack.c.l.b16 %v1597
        %v2349 = vunpack.c.l.b16 %v1598
        %v2350 = vunpack.c.l.b16 %v1599
        %v2351 = vpack.c.b16 %v2336, %v2335
        %v2352 = vpack.c.b16 %v2338, %v2337
        %v2353 = vpack.c.b16 %v2340, %v2339
        %v2354 = vpack.c.b16 %v2342, %v2341
        %v2355 = vpack.c.b16 %v2344, %v2343
        %v2356 = vpack.c.b16 %v2346, %v2345
        %v2357 = vpack.c.b16 %v2348, %v2347
        %v2358 = vpack.c.b16 %v2350, %v2349
        %2367 = vmatpush.bf16.msra.mxu0 %v2358
        %2368 = vmatpush.bf16.msra.mxu0 %v2357
        %2369 = vmatpush.bf16.msra.mxu0 %v2356
        %2370 = vmatpush.bf16.msra.mxu0 %v2355
        %2371 = vmatpush.bf16.msra.mxu0 %v2354
        %2372 = vmatpush.bf16.msra.mxu0 %v2353
        %2373 = vmatpush.bf16.msra.mxu0 %v2352
        %2374 = vmatpush.bf16.msra.mxu0 %v2351
        %2375 = vmatmul.bf16.gmra.mxu0 %v1407
        %v2376 = vpop.f32.mrf.mxu0
        %v2377 = vadd.f32 %v1635, %v2376
        %v2378 = vpop.f32.mrf.mxu0
        %2379 = vdwg.mxu0
        %v2380 = vpack.c.bf16 %v1706, %v1706
        %v2381 = vpack.c.bf16 %v1767, %v1767
        %v2382 = vpack.c.bf16 %v1828, %v1828
        %v2383 = vpack.c.bf16 %v1889, %v1889
        %v2384 = vpack.c.bf16 %v1950, %v1950
        %v2385 = vpack.c.bf16 %v2011, %v2011
        %v2386 = vpack.c.bf16 %v2072, %v2072
        %v2387 = vpack.c.bf16 %v2133, %v2133
        %v2388 = vpack.c.bf16 %v2194, %v2194
        %v2389 = vpack.c.bf16 %v2255, %v2255
        %v2390 = vpack.c.bf16 %v2316, %v2316
        %v2391 = vpack.c.bf16 %v2377, %v2377
        %vm2392 = vcmask 261120
        %v2394 = vsel %vm2392, %v2380, 0
        %v2397 = vsel %vm2392, %v2384, 0
        %2399 = vmatpush.bf16.xpose.msra.mxu0 0
        %2400 = vmatpush.bf16.xpose.msra.mxu0 0
        %2401 = vmatpush.bf16.xpose.msra.mxu0 0
        %2402 = vmatpush.bf16.xpose.msra.mxu0 0
        %2403 = vmatpush.bf16.xpose.msra.mxu0 0
        %2404 = vmatpush.bf16.xpose.msra.mxu0 0
        %2405 = vmatpush.bf16.xpose.msra.mxu0 0
        %2406 = vmatpush.bf16.xpose.msra.mxu0 %v2397
        %2407 = vmatmul.bf16.gmra.mxu0 %v2394
        %v2408 = vpop.f32.mrf.mxu0
        %v2409 = vadd.f32 0.0, %v2408
        %v2410 = vpop.f32.mrf.mxu0
        %2411 = vdwg.mxu0
        %v2413 = vsel %vm2392, %v2381, 0
        %v2416 = vsel %vm2392, %v2385, 0
        %2418 = vmatpush.bf16.xpose.msra.mxu0 0
        %2419 = vmatpush.bf16.xpose.msra.mxu0 0
        %2420 = vmatpush.bf16.xpose.msra.mxu0 0
        %2421 = vmatpush.bf16.xpose.msra.mxu0 0
        %2422 = vmatpush.bf16.xpose.msra.mxu0 0
        %2423 = vmatpush.bf16.xpose.msra.mxu0 0
        %2424 = vmatpush.bf16.xpose.msra.mxu0 0
        %2425 = vmatpush.bf16.xpose.msra.mxu0 %v2416
        %2426 = vmatmul.bf16.gmra.mxu0 %v2413
        %v2427 = vpop.f32.mrf.mxu0
        %v2428 = vadd.f32 0.0, %v2427
        %v2429 = vpop.f32.mrf.mxu0
        %2430 = vdwg.mxu0
        %v2432 = vsel %vm2392, %v2382, 0
        %v2435 = vsel %vm2392, %v2386, 0
        %2437 = vmatpush.bf16.xpose.msra.mxu0 0
        %2438 = vmatpush.bf16.xpose.msra.mxu0 0
        %2439 = vmatpush.bf16.xpose.msra.mxu0 0
        %2440 = vmatpush.bf16.xpose.msra.mxu0 0
        %2441 = vmatpush.bf16.xpose.msra.mxu0 0
        %2442 = vmatpush.bf16.xpose.msra.mxu0 0
        %2443 = vmatpush.bf16.xpose.msra.mxu0 0
        %2444 = vmatpush.bf16.xpose.msra.mxu0 %v2435
        %2445 = vmatmul.bf16.gmra.mxu0 %v2432
        %v2446 = vpop.f32.mrf.mxu0
        %v2447 = vadd.f32 0.0, %v2446
        %v2448 = vpop.f32.mrf.mxu0
        %2449 = vdwg.mxu0
        %v2451 = vsel %vm2392, %v2383, 0
        %v2454 = vsel %vm2392, %v2387, 0
        %2456 = vmatpush.bf16.xpose.msra.mxu0 0
        %2457 = vmatpush.bf16.xpose.msra.mxu0 0
        %2458 = vmatpush.bf16.xpose.msra.mxu0 0
        %2459 = vmatpush.bf16.xpose.msra.mxu0 0
        %2460 = vmatpush.bf16.xpose.msra.mxu0 0
        %2461 = vmatpush.bf16.xpose.msra.mxu0 0
        %2462 = vmatpush.bf16.xpose.msra.mxu0 0
        %2463 = vmatpush.bf16.xpose.msra.mxu0 %v2454
        %2464 = vmatmul.bf16.gmra.mxu0 %v2451
        %v2465 = vpop.f32.mrf.mxu0
        %v2466 = vadd.f32 0.0, %v2465
        %v2467 = vpop.f32.mrf.mxu0
        %2468 = vdwg.mxu0
        %v2469 = vmul.f32 %v2409, 0.17677669
        %v2470 = vmul.f32 %v2428, 0.17677669
        %v2471 = vmul.f32 %v2447, 0.17677669
        %v2472 = vmul.f32 %v2466, 0.17677669
        %vm2473 = vcmask 36864
        %v2474 = vsel %vm2473, %v2469, -inf
        %2475 = vmax.xlane.f32.xlu0 %v2474
        %v2476 = vpop.xlane.xlu0 %2475
        %v2477 = vsel %vm2473, %v2470, -inf
        %2478 = vmax.xlane.f32.xlu0 %v2477
        %v2479 = vpop.xlane.xlu0 %2478
        %v2480 = vsel %vm2473, %v2471, -inf
        %2481 = vmax.xlane.f32.xlu0 %v2480
        %v2482 = vpop.xlane.xlu0 %2481
        %v2483 = vsel %vm2473, %v2472, -inf
        %2484 = vmax.xlane.f32.xlu0 %v2483
        %v2485 = vpop.xlane.xlu0 %2484
        %v2486 = vsub.f32 %v2469, %v2476
        %v2487 = vsub.f32 %v2470, %v2479
        %v2488 = vsub.f32 %v2471, %v2482
        %v2489 = vsub.f32 %v2472, %v2485
        %v2490 = vmul.f32 %v2486, 1.442695
        %v2491 = vpow.pop %v2490
        %v2492 = vmul.f32 %v2487, 1.442695
        %v2493 = vpow.pop %v2492
        %v2494 = vmul.f32 %v2488, 1.442695
        %v2495 = vpow.pop %v2494
        %v2496 = vmul.f32 %v2489, 1.442695
        %v2497 = vpow.pop %v2496
        %v2498 = vsel %vm2473, %v2491, 0.0
        %2499 = vadd.xlane.f32.xlu0 %v2498
        %v2500 = vpop.xlane.xlu0 %2499
        %v2501 = vsel %vm2473, %v2493, 0.0
        %2502 = vadd.xlane.f32.xlu0 %v2501
        %v2503 = vpop.xlane.xlu0 %2502
        %v2504 = vsel %vm2473, %v2495, 0.0
        %2505 = vadd.xlane.f32.xlu0 %v2504
        %v2506 = vpop.xlane.xlu0 %2505
        %v2507 = vsel %vm2473, %v2497, 0.0
        %2508 = vadd.xlane.f32.xlu0 %v2507
        %v2509 = vpop.xlane.xlu0 %2508
        %v2510 = vrcp.pop %v2500
        %v2511 = vrcp.pop %v2503
        %v2512 = vrcp.pop %v2506
        %v2513 = vrcp.pop %v2509
        %v2514 = vmul.f32 %v2491, %v2510
        %v2515 = vmul.f32 %v2493, %v2511
        %v2516 = vmul.f32 %v2495, %v2512
        %v2517 = vmul.f32 %v2497, %v2513
        %v2518 = vpack.c.bf16 %v2514, %v2514
        %v2519 = vpack.c.bf16 %v2515, %v2515
        %v2520 = vpack.c.bf16 %v2516, %v2516
        %v2521 = vpack.c.bf16 %v2517, %v2517
        %vm2522 = vcmask 39936
        %v2524 = vsel %vm2522, %v2518, 0
        %vm2526 = vcmask 1041408
        %vm2527 = vcmask 1042432
        %v2528 = vsel %vm2526, 4294967295, 65535
        %v2529 = vsel %vm2527, %v2528, 0
        %v2531 = vand.u32 %v2388, %v2529
        %2533 = vmatpush.bf16.msra.mxu0 0
        %2534 = vmatpush.bf16.msra.mxu0 0
        %2535 = vmatpush.bf16.msra.mxu0 0
        %2536 = vmatpush.bf16.msra.mxu0 0
        %2537 = vmatpush.bf16.msra.mxu0 0
        %2538 = vmatpush.bf16.msra.mxu0 0
        %2539 = vmatpush.bf16.msra.mxu0 0
        %2540 = vmatpush.bf16.msra.mxu0 %v2531
        %2541 = vmatmul.bf16.gmra.mxu0 %v2524
        %v2542 = vpop.f32.mrf.mxu0
        %v2543 = vadd.f32 0.0, %v2542
        %v2544 = vpop.f32.mrf.mxu0
        %2545 = vdwg.mxu0
        %v2547 = vsel %vm2522, %v2519, 0
        %v2550 = vand.u32 %v2389, %v2529
        %2552 = vmatpush.bf16.msra.mxu0 0
        %2553 = vmatpush.bf16.msra.mxu0 0
        %2554 = vmatpush.bf16.msra.mxu0 0
        %2555 = vmatpush.bf16.msra.mxu0 0
        %2556 = vmatpush.bf16.msra.mxu0 0
        %2557 = vmatpush.bf16.msra.mxu0 0
        %2558 = vmatpush.bf16.msra.mxu0 0
        %2559 = vmatpush.bf16.msra.mxu0 %v2550
        %2560 = vmatmul.bf16.gmra.mxu0 %v2547
        %v2561 = vpop.f32.mrf.mxu0
        %v2562 = vadd.f32 0.0, %v2561
        %v2563 = vpop.f32.mrf.mxu0
        %2564 = vdwg.mxu0
        %v2566 = vsel %vm2522, %v2520, 0
        %v2569 = vand.u32 %v2390, %v2529
        %2571 = vmatpush.bf16.msra.mxu0 0
        %2572 = vmatpush.bf16.msra.mxu0 0
        %2573 = vmatpush.bf16.msra.mxu0 0
        %2574 = vmatpush.bf16.msra.mxu0 0
        %2575 = vmatpush.bf16.msra.mxu0 0
        %2576 = vmatpush.bf16.msra.mxu0 0
        %2577 = vmatpush.bf16.msra.mxu0 0
        %2578 = vmatpush.bf16.msra.mxu0 %v2569
        %2579 = vmatmul.bf16.gmra.mxu0 %v2566
        %v2580 = vpop.f32.mrf.mxu0
        %v2581 = vadd.f32 0.0, %v2580
        %v2582 = vpop.f32.mrf.mxu0
        %2583 = vdwg.mxu0
        %v2585 = vsel %vm2522, %v2521, 0
        %v2588 = vand.u32 %v2391, %v2529
        %2590 = vmatpush.bf16.msra.mxu0 0
        %2591 = vmatpush.bf16.msra.mxu0 0
        %2592 = vmatpush.bf16.msra.mxu0 0
        %2593 = vmatpush.bf16.msra.mxu0 0
        %2594 = vmatpush.bf16.msra.mxu0 0
        %2595 = vmatpush.bf16.msra.mxu0 0
        %2596 = vmatpush.bf16.msra.mxu0 0
        %2597 = vmatpush.bf16.msra.mxu0 %v2588
        %2598 = vmatmul.bf16.gmra.mxu0 %v2585
        %v2599 = vpop.f32.mrf.mxu0
        %v2600 = vadd.f32 0.0, %v2599
        %v2601 = vpop.f32.mrf.mxu0
        %2602 = vdwg.mxu0
        %v2603 = vpack.c.bf16 %v2543, %v2543
        %v2604 = vpack.c.bf16 %v2562, %v2562
        %v2605 = vpack.c.bf16 %v2581, %v2581
        %v2606 = vpack.c.bf16 %v2600, %v2600
        %v2607 = vld [vmem:[%s27] sm:$0xf]
        %v2608 = vld [vmem:[%s27 + $0x4] sm:$0xf]
        %v2609 = vld [vmem:[%s27 + $0x8] sm:$0xf]
        %v2610 = vld [vmem:[%s27 + $0xc] sm:$0xf]
        %v2611 = vld [vmem:[%s27 + $0x10] sm:$0xf]
        %v2612 = vld [vmem:[%s27 + $0x14] sm:$0xf]
        %v2613 = vld [vmem:[%s27 + $0x18] sm:$0xf]
        %v2614 = vld [vmem:[%s27 + $0x1c] sm:$0xf]
        %v2615 = vld [vmem:[%s27 + $0x20] sm:$0xf]
        %v2616 = vld [vmem:[%s27 + $0x24] sm:$0xf]
        %v2617 = vld [vmem:[%s27 + $0x28] sm:$0xf]
        %v2618 = vld [vmem:[%s27 + $0x2c] sm:$0xf]
        %v2619 = vld [vmem:[%s27 + $0x30] sm:$0xf]
        %v2620 = vld [vmem:[%s27 + $0x34] sm:$0xf]
        %v2621 = vld [vmem:[%s27 + $0x38] sm:$0xf]
        %v2622 = vld [vmem:[%s27 + $0x3c] sm:$0xf]
        %v2627 = vunpack.c.l.b16 %v2607
        %v2628 = vunpack.c.l.b16 %v2608
        %v2629 = vunpack.c.l.b16 %v2609
        %v2630 = vunpack.c.l.b16 %v2610
        %v2631 = vpack.c.b16 %v2628, %v2627
        %v2632 = vpack.c.b16 %v2630, %v2629
        %v2636 = vsel %vm2392, %v2603, 0
        %2638 = vmatpush.bf16.msra.mxu0 0
        %2639 = vmatpush.bf16.msra.mxu0 0
        %2640 = vmatpush.bf16.msra.mxu0 0
        %2641 = vmatpush.bf16.msra.mxu0 0
        %2642 = vmatpush.bf16.msra.mxu0 0
        %2643 = vmatpush.bf16.msra.mxu0 0
        %2644 = vmatpush.bf16.msra.mxu0 %v2632
        %2645 = vmatpush.bf16.msra.mxu0 %v2631
        %2646 = vmatmul.bf16.gmra.mxu0 %v2636
        %v2647 = vpop.f32.mrf.mxu0
        %v2648 = vadd.f32 0.0, %v2647
        %v2649 = vpop.f32.mrf.mxu0
        %2650 = vdwg.mxu0
        %v2655 = vunpack.c.l.b16 %v2611
        %v2656 = vunpack.c.l.b16 %v2612
        %v2657 = vunpack.c.l.b16 %v2613
        %v2658 = vunpack.c.l.b16 %v2614
        %v2659 = vpack.c.b16 %v2656, %v2655
        %v2660 = vpack.c.b16 %v2658, %v2657
        %v2664 = vsel %vm2392, %v2604, 0
        %2666 = vmatpush.bf16.msra.mxu0 0
        %2667 = vmatpush.bf16.msra.mxu0 0
        %2668 = vmatpush.bf16.msra.mxu0 0
        %2669 = vmatpush.bf16.msra.mxu0 0
        %2670 = vmatpush.bf16.msra.mxu0 0
        %2671 = vmatpush.bf16.msra.mxu0 0
        %2672 = vmatpush.bf16.msra.mxu0 %v2660
        %2673 = vmatpush.bf16.msra.mxu0 %v2659
        %2674 = vmatmul.bf16.gmra.mxu0 %v2664
        %v2675 = vpop.f32.mrf.mxu0
        %v2676 = vadd.f32 0.0, %v2675
        %v2677 = vpop.f32.mrf.mxu0
        %2678 = vdwg.mxu0
        %v2683 = vunpack.c.l.b16 %v2615
        %v2684 = vunpack.c.l.b16 %v2616
        %v2685 = vunpack.c.l.b16 %v2617
        %v2686 = vunpack.c.l.b16 %v2618
        %v2687 = vpack.c.b16 %v2684, %v2683
        %v2688 = vpack.c.b16 %v2686, %v2685
        %v2692 = vsel %vm2392, %v2605, 0
        %2694 = vmatpush.bf16.msra.mxu0 0
        %2695 = vmatpush.bf16.msra.mxu0 0
        %2696 = vmatpush.bf16.msra.mxu0 0
        %2697 = vmatpush.bf16.msra.mxu0 0
        %2698 = vmatpush.bf16.msra.mxu0 0
        %2699 = vmatpush.bf16.msra.mxu0 0
        %2700 = vmatpush.bf16.msra.mxu0 %v2688
        %2701 = vmatpush.bf16.msra.mxu0 %v2687
        %2702 = vmatmul.bf16.gmra.mxu0 %v2692
        %v2703 = vpop.f32.mrf.mxu0
        %v2704 = vadd.f32 0.0, %v2703
        %v2705 = vpop.f32.mrf.mxu0
        %2706 = vdwg.mxu0
        %v2711 = vunpack.c.l.b16 %v2619
        %v2712 = vunpack.c.l.b16 %v2620
        %v2713 = vunpack.c.l.b16 %v2621
        %v2714 = vunpack.c.l.b16 %v2622
        %v2715 = vpack.c.b16 %v2712, %v2711
        %v2716 = vpack.c.b16 %v2714, %v2713
        %v2720 = vsel %vm2392, %v2606, 0
        %2722 = vmatpush.bf16.msra.mxu0 0
        %2723 = vmatpush.bf16.msra.mxu0 0
        %2724 = vmatpush.bf16.msra.mxu0 0
        %2725 = vmatpush.bf16.msra.mxu0 0
        %2726 = vmatpush.bf16.msra.mxu0 0
        %2727 = vmatpush.bf16.msra.mxu0 0
        %2728 = vmatpush.bf16.msra.mxu0 %v2716
        %2729 = vmatpush.bf16.msra.mxu0 %v2715
        %2730 = vmatmul.bf16.gmra.mxu0 %v2720
        %v2731 = vpop.f32.mrf.mxu0
        %v2732 = vadd.f32 0.0, %v2731
        %v2733 = vpop.f32.mrf.mxu0
        %2734 = vdwg.mxu0
        %v2735 = vsel %vm1337, %v2648, 0.0
        %v2736 = vsel %vm1337, %v2676, 0.0
        %v2737 = vadd.f32 %v2735, %v2736
        %v2738 = vsel %vm1337, %v2704, 0.0
        %v2739 = vadd.f32 %v2737, %v2738
        %v2740 = vsel %vm1337, %v2732, 0.0
        %v2741 = vadd.f32 %v2739, %v2740
        %v2742 = vld [vmem:[%s29] sm:$0x1]
        %v2744 = vperm.slane %v2742, 0
        %v2746 = vadd.f32 %v2741, %v2744
        %v2747 = vadd.f32 %v1374, %v2746
        %v2748 = vld [vmem:[%s19] sm:$0x1]
        %v2749 = vld [vmem:[%s21] sm:$0x1]
        %v2750 = vsel %vm1337, %v2747, 0.0
        %2751 = vadd.xlane.f32.xlu0 %v2750
        %v2752 = vpop.xlane.xlu0 %2751
        %v2753 = vmul.f32 %v2752, %v1347
        %v2754 = vsub.f32 %v2747, %v2753
        %v2755 = vmul.f32 %v2754, %v2754
        %v2756 = vsel %vm1337, %v2755, 0.0
        %2757 = vadd.xlane.f32.xlu0 %v2756
        %v2758 = vpop.xlane.xlu0 %2757
        %v2759 = vmul.f32 %v2758, %v1347
        %v2760 = vadd.f32 %v2759, 1e-05
        %v2761 = vrsqrt.pop %v2760
        %v2762 = vmul.f32 %v2761, %v2760
        %v2763 = vmul.f32 %v2762, %v2761
        %v2764 = vmul.f32 0.5, %v2763
        %v2765 = vsub.f32 1.5, %v2764
        %v2766 = vmul.f32 %v2761, %v2765
        %vm2767 = vweird.f32 %v2760
        %vm2768 = vweird.f32 %v2761
        %vm2769 = vmor %vm2767, %vm2768
        %v2770 = vsel %vm2769, %v2761, %v2766
        %v2771 = vmul.f32 %v2754, %v2770
        %v2773 = vperm.slane %v2748, 0
        %v2775 = vmul.f32 %v2771, %v2773
        %v2777 = vperm.slane %v2749, 0
        %v2779 = vadd.f32 %v2775, %v2777
        %v2780 = vld [vmem:[%s31] sm:$0xff]
        %v2781 = vld [vmem:[%s31 + $0x8] sm:$0xff]
        %v2782 = vld [vmem:[%s31 + $0x10] sm:$0xff]
        %v2783 = vld [vmem:[%s31 + $0x18] sm:$0xff]
        %v2784 = vld [vmem:[%s31 + $0x20] sm:$0xff]
        %v2785 = vld [vmem:[%s31 + $0x28] sm:$0xff]
        %v2786 = vld [vmem:[%s31 + $0x30] sm:$0xff]
        %v2787 = vld [vmem:[%s31 + $0x38] sm:$0xff]
        %v2788 = vld [vmem:[%s31 + $0x40] sm:$0xff]
        %v2789 = vld [vmem:[%s31 + $0x48] sm:$0xff]
        %v2790 = vld [vmem:[%s31 + $0x50] sm:$0xff]
        %v2791 = vld [vmem:[%s31 + $0x58] sm:$0xff]
        %v2792 = vld [vmem:[%s31 + $0x60] sm:$0xff]
        %v2793 = vld [vmem:[%s31 + $0x68] sm:$0xff]
        %v2794 = vld [vmem:[%s31 + $0x70] sm:$0xff]
        %v2795 = vld [vmem:[%s31 + $0x78] sm:$0xff]
        %v2796 = vld [vmem:[%s31 + $0x80] sm:$0xff]
        %v2797 = vld [vmem:[%s31 + $0x88] sm:$0xff]
        %v2798 = vld [vmem:[%s31 + $0x90] sm:$0xff]
        %v2799 = vld [vmem:[%s31 + $0x98] sm:$0xff]
        %v2800 = vld [vmem:[%s31 + $0xa0] sm:$0xff]
        %v2801 = vld [vmem:[%s31 + $0xa8] sm:$0xff]
        %v2802 = vld [vmem:[%s31 + $0xb0] sm:$0xff]
        %v2803 = vld [vmem:[%s31 + $0xb8] sm:$0xff]
        %v2804 = vld [vmem:[%s31 + $0xc0] sm:$0xff]
        %v2805 = vld [vmem:[%s31 + $0xc8] sm:$0xff]
        %v2806 = vld [vmem:[%s31 + $0xd0] sm:$0xff]
        %v2807 = vld [vmem:[%s31 + $0xd8] sm:$0xff]
        %v2808 = vld [vmem:[%s31 + $0xe0] sm:$0xff]
        %v2809 = vld [vmem:[%s31 + $0xe8] sm:$0xff]
        %v2810 = vld [vmem:[%s31 + $0xf0] sm:$0xff]
        %v2811 = vld [vmem:[%s31 + $0xf8] sm:$0xff]
        %v2812 = vld [vmem:[%s33] sm:$0xf]
        %v2813 = vpack.c.bf16 %v2779, %v2779
        %v2815 = vperm.slane %v2812, 0
        %v2816 = vperm.slane %v2812, 1
        %v2817 = vperm.slane %v2812, 2
        %v2818 = vperm.slane %v2812, 3
        %v2855 = vunpack.c.l.b16 %v2780
        %v2856 = vunpack.c.h.b16 %v2780
        %v2857 = vunpack.c.l.b16 %v2781
        %v2858 = vunpack.c.h.b16 %v2781
        %v2859 = vunpack.c.l.b16 %v2782
        %v2860 = vunpack.c.h.b16 %v2782
        %v2861 = vunpack.c.l.b16 %v2783
        %v2862 = vunpack.c.h.b16 %v2783
        %v2863 = vunpack.c.l.b16 %v2784
        %v2864 = vunpack.c.h.b16 %v2784
        %v2865 = vunpack.c.l.b16 %v2785
        %v2866 = vunpack.c.h.b16 %v2785
        %v2867 = vunpack.c.l.b16 %v2786
        %v2868 = vunpack.c.h.b16 %v2786
        %v2869 = vunpack.c.l.b16 %v2787
        %v2870 = vunpack.c.h.b16 %v2787
        %v2871 = vunpack.c.l.b16 %v2788
        %v2872 = vunpack.c.h.b16 %v2788
        %v2873 = vunpack.c.l.b16 %v2789
        %v2874 = vunpack.c.h.b16 %v2789
        %v2875 = vunpack.c.l.b16 %v2790
        %v2876 = vunpack.c.h.b16 %v2790
        %v2877 = vunpack.c.l.b16 %v2791
        %v2878 = vunpack.c.h.b16 %v2791
        %v2879 = vunpack.c.l.b16 %v2792
        %v2880 = vunpack.c.h.b16 %v2792
        %v2881 = vunpack.c.l.b16 %v2793
        %v2882 = vunpack.c.h.b16 %v2793
        %v2883 = vunpack.c.l.b16 %v2794
        %v2884 = vunpack.c.h.b16 %v2794
        %v2885 = vunpack.c.l.b16 %v2795
        %v2886 = vunpack.c.h.b16 %v2795
        %v2887 = vunpack.c.l.b16 %v2796
        %v2888 = vunpack.c.h.b16 %v2796
        %v2889 = vunpack.c.l.b16 %v2797
        %v2890 = vunpack.c.h.b16 %v2797
        %v2891 = vunpack.c.l.b16 %v2798
        %v2892 = vunpack.c.h.b16 %v2798
        %v2893 = vunpack.c.l.b16 %v2799
        %v2894 = vunpack.c.h.b16 %v2799
        %v2895 = vunpack.c.l.b16 %v2800
        %v2896 = vunpack.c.h.b16 %v2800
        %v2897 = vunpack.c.l.b16 %v2801
        %v2898 = vunpack.c.h.b16 %v2801
        %v2899 = vunpack.c.l.b16 %v2802
        %v2900 = vunpack.c.h.b16 %v2802
        %v2901 = vunpack.c.l.b16 %v2803
        %v2902 = vunpack.c.h.b16 %v2803
        %v2903 = vunpack.c.l.b16 %v2804
        %v2904 = vunpack.c.h.b16 %v2804
        %v2905 = vunpack.c.l.b16 %v2805
        %v2906 = vunpack.c.h.b16 %v2805
        %v2907 = vunpack.c.l.b16 %v2806
        %v2908 = vunpack.c.h.b16 %v2806
        %v2909 = vunpack.c.l.b16 %v2807
        %v2910 = vunpack.c.h.b16 %v2807
        %v2911 = vunpack.c.l.b16 %v2808
        %v2912 = vunpack.c.h.b16 %v2808
        %v2913 = vunpack.c.l.b16 %v2809
        %v2914 = vunpack.c.h.b16 %v2809
        %v2915 = vunpack.c.l.b16 %v2810
        %v2916 = vunpack.c.h.b16 %v2810
        %v2917 = vunpack.c.l.b16 %v2811
        %v2918 = vunpack.c.h.b16 %v2811
        %v2919 = vpack.c.b16 %v2859, %v2855
        %v2920 = vpack.c.b16 %v2860, %v2856
        %v2921 = vpack.c.b16 %v2861, %v2857
        %v2922 = vpack.c.b16 %v2862, %v2858
        %v2923 = vpack.c.b16 %v2867, %v2863
        %v2924 = vpack.c.b16 %v2868, %v2864
        %v2925 = vpack.c.b16 %v2869, %v2865
        %v2926 = vpack.c.b16 %v2870, %v2866
        %v2927 = vpack.c.b16 %v2875, %v2871
        %v2928 = vpack.c.b16 %v2876, %v2872
        %v2929 = vpack.c.b16 %v2877, %v2873
        %v2930 = vpack.c.b16 %v2878, %v2874
        %v2931 = vpack.c.b16 %v2883, %v2879
        %v2932 = vpack.c.b16 %v2884, %v2880
        %v2933 = vpack.c.b16 %v2885, %v2881
        %v2934 = vpack.c.b16 %v2886, %v2882
        %v2935 = vpack.c.b16 %v2891, %v2887
        %v2936 = vpack.c.b16 %v2892, %v2888
        %v2937 = vpack.c.b16 %v2893, %v2889
        %v2938 = vpack.c.b16 %v2894, %v2890
        %v2939 = vpack.c.b16 %v2899, %v2895
        %v2940 = vpack.c.b16 %v2900, %v2896
        %v2941 = vpack.c.b16 %v2901, %v2897
        %v2942 = vpack.c.b16 %v2902, %v2898
        %v2943 = vpack.c.b16 %v2907, %v2903
        %v2944 = vpack.c.b16 %v2908, %v2904
        %v2945 = vpack.c.b16 %v2909, %v2905
        %v2946 = vpack.c.b16 %v2910, %v2906
        %v2947 = vpack.c.b16 %v2915, %v2911
        %v2948 = vpack.c.b16 %v2916, %v2912
        %v2949 = vpack.c.b16 %v2917, %v2913
        %v2950 = vpack.c.b16 %v2918, %v2914
        %2983 = vmatpush.bf16.msra.mxu0 %v2947
        %2984 = vmatpush.bf16.msra.mxu0 %v2943
        %2985 = vmatpush.bf16.msra.mxu0 %v2939
        %2986 = vmatpush.bf16.msra.mxu0 %v2935
        %2987 = vmatpush.bf16.msra.mxu0 %v2931
        %2988 = vmatpush.bf16.msra.mxu0 %v2927
        %2989 = vmatpush.bf16.msra.mxu0 %v2923
        %2990 = vmatpush.bf16.msra.mxu0 %v2919
        %2991 = vmatmul.bf16.gmra.mxu0 %v2813
        %v2992 = vpop.f32.mrf.mxu0
        %v2993 = vadd.f32 %v2815, %v2992
        %v2994 = vpop.f32.mrf.mxu0
        %2995 = vdwg.mxu0
        %2996 = vmatpush.bf16.msra.mxu0 %v2948
        %2997 = vmatpush.bf16.msra.mxu0 %v2944
        %2998 = vmatpush.bf16.msra.mxu0 %v2940
        %2999 = vmatpush.bf16.msra.mxu0 %v2936
        %3000 = vmatpush.bf16.msra.mxu0 %v2932
        %3001 = vmatpush.bf16.msra.mxu0 %v2928
        %3002 = vmatpush.bf16.msra.mxu0 %v2924
        %3003 = vmatpush.bf16.msra.mxu0 %v2920
        %3004 = vmatmul.bf16.gmra.mxu0 %v2813
        %v3005 = vpop.f32.mrf.mxu0
        %v3006 = vadd.f32 %v2816, %v3005
        %v3007 = vpop.f32.mrf.mxu0
        %3008 = vdwg.mxu0
        %3009 = vmatpush.bf16.msra.mxu0 %v2949
        %3010 = vmatpush.bf16.msra.mxu0 %v2945
        %3011 = vmatpush.bf16.msra.mxu0 %v2941
        %3012 = vmatpush.bf16.msra.mxu0 %v2937
        %3013 = vmatpush.bf16.msra.mxu0 %v2933
        %3014 = vmatpush.bf16.msra.mxu0 %v2929
        %3015 = vmatpush.bf16.msra.mxu0 %v2925
        %3016 = vmatpush.bf16.msra.mxu0 %v2921
        %3017 = vmatmul.bf16.gmra.mxu0 %v2813
        %v3018 = vpop.f32.mrf.mxu0
        %v3019 = vadd.f32 %v2817, %v3018
        %v3020 = vpop.f32.mrf.mxu0
        %3021 = vdwg.mxu0
        %3022 = vmatpush.bf16.msra.mxu0 %v2950
        %3023 = vmatpush.bf16.msra.mxu0 %v2946
        %3024 = vmatpush.bf16.msra.mxu0 %v2942
        %3025 = vmatpush.bf16.msra.mxu0 %v2938
        %3026 = vmatpush.bf16.msra.mxu0 %v2934
        %3027 = vmatpush.bf16.msra.mxu0 %v2930
        %3028 = vmatpush.bf16.msra.mxu0 %v2926
        %3029 = vmatpush.bf16.msra.mxu0 %v2922
        %3030 = vmatmul.bf16.gmra.mxu0 %v2813
        %v3031 = vpop.f32.mrf.mxu0
        %v3032 = vadd.f32 %v2818, %v3031
        %v3033 = vpop.f32.mrf.mxu0
        %3034 = vdwg.mxu0
        %v3035 = vmul.f32 %v2993, 1.702
        %v3036 = vmul.f32 %v3006, 1.702
        %v3037 = vmul.f32 %v3019, 1.702
        %v3038 = vmul.f32 %v3032, 1.702
        %v3039 = vxor.u32 %v3035, 2147483648
        %v3040 = vxor.u32 %v3036, 2147483648
        %v3041 = vxor.u32 %v3037, 2147483648
        %v3042 = vxor.u32 %v3038, 2147483648
        %v3043 = vmul.f32 %v3039, 1.442695
        %v3044 = vpow.pop %v3043
        %v3045 = vmul.f32 %v3040, 1.442695
        %v3046 = vpow.pop %v3045
        %v3047 = vmul.f32 %v3041, 1.442695
        %v3048 = vpow.pop %v3047
        %v3049 = vmul.f32 %v3042, 1.442695
        %v3050 = vpow.pop %v3049
        %v3051 = vadd.f32 %v3044, 1.0
        %v3052 = vadd.f32 %v3046, 1.0
        %v3053 = vadd.f32 %v3048, 1.0
        %v3054 = vadd.f32 %v3050, 1.0
        %v3055 = vrcp.pop %v3051
        %v3056 = vmul.f32 %v3051, %v3055
        %v3057 = vsub.f32 1.0, %v3056
        %v3058 = vmul.f32 %v3055, %v3057
        %v3059 = vadd.f32 %v3055, %v3058
        %vm3060 = vweird.f32 %v3051
        %vm3061 = vweird.f32 %v3055
        %vm3062 = vmor %vm3060, %vm3061
        %v3063 = vsel %vm3062, %v3055, %v3059
        %v3064 = vand.u32 2147483647, %v3051
        %vm3065 = vcmp.eq.f32.partialorder %v3064, 8.507059e+37
        %v3066 = vand.u32 %v3051, 2147483648
        %v3067 = vor.u32 1.1754944e-38, %v3066
        %v3068 = vsel %vm3065, %v3067, %v3063
        %v3069 = vmul.f32 1.0, %v3068
        %v3070 = vrcp.pop %v3052
        %v3071 = vmul.f32 %v3052, %v3070
        %v3072 = vsub.f32 1.0, %v3071
        %v3073 = vmul.f32 %v3070, %v3072
        %v3074 = vadd.f32 %v3070, %v3073
        %vm3075 = vweird.f32 %v3052
        %vm3076 = vweird.f32 %v3070
        %vm3077 = vmor %vm3075, %vm3076
        %v3078 = vsel %vm3077, %v3070, %v3074
        %v3079 = vand.u32 2147483647, %v3052
        %vm3080 = vcmp.eq.f32.partialorder %v3079, 8.507059e+37
        %v3081 = vand.u32 %v3052, 2147483648
        %v3082 = vor.u32 1.1754944e-38, %v3081
        %v3083 = vsel %vm3080, %v3082, %v3078
        %v3084 = vmul.f32 1.0, %v3083
        %v3085 = vrcp.pop %v3053
        %v3086 = vmul.f32 %v3053, %v3085
        %v3087 = vsub.f32 1.0, %v3086
        %v3088 = vmul.f32 %v3085, %v3087
        %v3089 = vadd.f32 %v3085, %v3088
        %vm3090 = vweird.f32 %v3053
        %vm3091 = vweird.f32 %v3085
        %vm3092 = vmor %vm3090, %vm3091
        %v3093 = vsel %vm3092, %v3085, %v3089
        %v3094 = vand.u32 2147483647, %v3053
        %vm3095 = vcmp.eq.f32.partialorder %v3094, 8.507059e+37
        %v3096 = vand.u32 %v3053, 2147483648
        %v3097 = vor.u32 1.1754944e-38, %v3096
        %v3098 = vsel %vm3095, %v3097, %v3093
        %v3099 = vmul.f32 1.0, %v3098
        %v3100 = vrcp.pop %v3054
        %v3101 = vmul.f32 %v3054, %v3100
        %v3102 = vsub.f32 1.0, %v3101
        %v3103 = vmul.f32 %v3100, %v3102
        %v3104 = vadd.f32 %v3100, %v3103
        %vm3105 = vweird.f32 %v3054
        %vm3106 = vweird.f32 %v3100
        %vm3107 = vmor %vm3105, %vm3106
        %v3108 = vsel %vm3107, %v3100, %v3104
        %v3109 = vand.u32 2147483647, %v3054
        %vm3110 = vcmp.eq.f32.partialorder %v3109, 8.507059e+37
        %v3111 = vand.u32 %v3054, 2147483648
        %v3112 = vor.u32 1.1754944e-38, %v3111
        %v3113 = vsel %vm3110, %v3112, %v3108
        %v3114 = vmul.f32 1.0, %v3113
        %v3115 = vmul.f32 %v2993, %v3069
        %v3116 = vmul.f32 %v3006, %v3084
        %v3117 = vmul.f32 %v3019, %v3099
        %v3118 = vmul.f32 %v3032, %v3114
        %v3119 = vld [vmem:[%s35] sm:$0xf]
        %v3120 = vld [vmem:[%s35 + $0x4] sm:$0xf]
        %v3121 = vld [vmem:[%s35 + $0x8] sm:$0xf]
        %v3122 = vld [vmem:[%s35 + $0xc] sm:$0xf]
        %v3123 = vld [vmem:[%s35 + $0x10] sm:$0xf]
        %v3124 = vld [vmem:[%s35 + $0x14] sm:$0xf]
        %v3125 = vld [vmem:[%s35 + $0x18] sm:$0xf]
        %v3126 = vld [vmem:[%s35 + $0x1c] sm:$0xf]
        %v3127 = vld [vmem:[%s35 + $0x20] sm:$0xf]
        %v3128 = vld [vmem:[%s35 + $0x24] sm:$0xf]
        %v3129 = vld [vmem:[%s35 + $0x28] sm:$0xf]
        %v3130 = vld [vmem:[%s35 + $0x2c] sm:$0xf]
        %v3131 = vld [vmem:[%s35 + $0x30] sm:$0xf]
        %v3132 = vld [vmem:[%s35 + $0x34] sm:$0xf]
        %v3133 = vld [vmem:[%s35 + $0x38] sm:$0xf]
        %v3134 = vld [vmem:[%s35 + $0x3c] sm:$0xf]
        %v3135 = vld [vmem:[%s35 + $0x40] sm:$0xf]
        %v3136 = vld [vmem:[%s35 + $0x44] sm:$0xf]
        %v3137 = vld [vmem:[%s35 + $0x48] sm:$0xf]
        %v3138 = vld [vmem:[%s35 + $0x4c] sm:$0xf]
        %v3139 = vld [vmem:[%s35 + $0x50] sm:$0xf]
        %v3140 = vld [vmem:[%s35 + $0x54] sm:$0xf]
        %v3141 = vld [vmem:[%s35 + $0x58] sm:$0xf]
        %v3142 = vld [vmem:[%s35 + $0x5c] sm:$0xf]
        %v3143 = vld [vmem:[%s35 + $0x60] sm:$0xf]
        %v3144 = vld [vmem:[%s35 + $0x64] sm:$0xf]
        %v3145 = vld [vmem:[%s35 + $0x68] sm:$0xf]
        %v3146 = vld [vmem:[%s35 + $0x6c] sm:$0xf]
        %v3147 = vld [vmem:[%s35 + $0x70] sm:$0xf]
        %v3148 = vld [vmem:[%s35 + $0x74] sm:$0xf]
        %v3149 = vld [vmem:[%s35 + $0x78] sm:$0xf]
        %v3150 = vld [vmem:[%s35 + $0x7c] sm:$0xf]
        %v3151 = vld [vmem:[%s35 + $0x80] sm:$0xf]
        %v3152 = vld [vmem:[%s35 + $0x84] sm:$0xf]
        %v3153 = vld [vmem:[%s35 + $0x88] sm:$0xf]
        %v3154 = vld [vmem:[%s35 + $0x8c] sm:$0xf]
        %v3155 = vld [vmem:[%s35 + $0x90] sm:$0xf]
        %v3156 = vld [vmem:[%s35 + $0x94] sm:$0xf]
        %v3157 = vld [vmem:[%s35 + $0x98] sm:$0xf]
        %v3158 = vld [vmem:[%s35 + $0x9c] sm:$0xf]
        %v3159 = vld [vmem:[%s35 + $0xa0] sm:$0xf]
        %v3160 = vld [vmem:[%s35 + $0xa4] sm:$0xf]
        %v3161 = vld [vmem:[%s35 + $0xa8] sm:$0xf]
        %v3162 = vld [vmem:[%s35 + $0xac] sm:$0xf]
        %v3163 = vld [vmem:[%s35 + $0xb0] sm:$0xf]
        %v3164 = vld [vmem:[%s35 + $0xb4] sm:$0xf]
        %v3165 = vld [vmem:[%s35 + $0xb8] sm:$0xf]
        %v3166 = vld [vmem:[%s35 + $0xbc] sm:$0xf]
        %v3167 = vld [vmem:[%s35 + $0xc0] sm:$0xf]
        %v3168 = vld [vmem:[%s35 + $0xc4] sm:$0xf]
        %v3169 = vld [vmem:[%s35 + $0xc8] sm:$0xf]
        %v3170 = vld [vmem:[%s35 + $0xcc] sm:$0xf]
        %v3171 = vld [vmem:[%s35 + $0xd0] sm:$0xf]
        %v3172 = vld [vmem:[%s35 + $0xd4] sm:$0xf]
        %v3173 = vld [vmem:[%s35 + $0xd8] sm:$0xf]
        %v3174 = vld [vmem:[%s35 + $0xdc] sm:$0xf]
        %v3175 = vld [vmem:[%s35 + $0xe0] sm:$0xf]
        %v3176 = vld [vmem:[%s35 + $0xe4] sm:$0xf]
        %v3177 = vld [vmem:[%s35 + $0xe8] sm:$0xf]
        %v3178 = vld [vmem:[%s35 + $0xec] sm:$0xf]
        %v3179 = vld [vmem:[%s35 + $0xf0] sm:$0xf]
        %v3180 = vld [vmem:[%s35 + $0xf4] sm:$0xf]
        %v3181 = vld [vmem:[%s35 + $0xf8] sm:$0xf]
        %v3182 = vld [vmem:[%s35 + $0xfc] sm:$0xf]
        %v3183 = vld [vmem:[%s37] sm:$0x1]
        %v3184 = vpack.c.bf16 %v3115, %v3115
        %v3185 = vpack.c.bf16 %v3116, %v3116
        %v3186 = vpack.c.bf16 %v3117, %v3117
        %v3187 = vpack.c.bf16 %v3118, %v3118
        %v3189 = vperm.slane %v3183, 0
        %v3255 = vunpack.c.l.b16 %v3119
        %v3256 = vunpack.c.l.b16 %v3120
        %v3257 = vunpack.c.l.b16 %v3121
        %v3258 = vunpack.c.l.b16 %v3122
        %v3259 = vunpack.c.l.b16 %v3123
        %v3260 = vunpack.c.l.b16 %v3124
        %v3261 = vunpack.c.l.b16 %v3125
        %v3262 = vunpack.c.l.b16 %v3126
        %v3263 = vunpack.c.l.b16 %v3127
        %v3264 = vunpack.c.l.b16 %v3128
        %v3265 = vunpack.c.l.b16 %v3129
        %v3266 = vunpack.c.l.b16 %v3130
        %v3267 = vunpack.c.l.b16 %v3131
        %v3268 = vunpack.c.l.b16 %v3132
        %v3269 = vunpack.c.l.b16 %v3133
        %v3270 = vunpack.c.l.b16 %v3134
        %v3271 = vunpack.c.l.b16 %v3135
        %v3272 = vunpack.c.l.b16 %v3136
        %v3273 = vunpack.c.l.b16 %v3137
        %v3274 = vunpack.c.l.b16 %v3138
        %v3275 = vunpack.c.l.b16 %v3139
        %v3276 = vunpack.c.l.b16 %v3140
        %v3277 = vunpack.c.l.b16 %v3141
        %v3278 = vunpack.c.l.b16 %v3142
        %v3279 = vunpack.c.l.b16 %v3143
        %v3280 = vunpack.c.l.b16 %v3144
        %v3281 = vunpack.c.l.b16 %v3145
        %v3282 = vunpack.c.l.b16 %v3146
        %v3283 = vunpack.c.l.b16 %v3147
        %v3284 = vunpack.c.l.b16 %v3148
        %v3285 = vunpack.c.l.b16 %v3149
        %v3286 = vunpack.c.l.b16 %v3150
        %v3287 = vunpack.c.l.b16 %v3151
        %v3288 = vunpack.c.l.b16 %v3152
        %v3289 = vunpack.c.l.b16 %v3153
        %v3290 = vunpack.c.l.b16 %v3154
        %v3291 = vunpack.c.l.b16 %v3155
        %v3292 = vunpack.c.l.b16 %v3156
        %v3293 = vunpack.c.l.b16 %v3157
        %v3294 = vunpack.c.l.b16 %v3158
        %v3295 = vunpack.c.l.b16 %v3159
        %v3296 = vunpack.c.l.b16 %v3160
        %v3297 = vunpack.c.l.b16 %v3161
        %v3298 = vunpack.c.l.b16 %v3162
        %v3299 = vunpack.c.l.b16 %v3163
        %v3300 = vunpack.c.l.b16 %v3164
        %v3301 = vunpack.c.l.b16 %v3165
        %v3302 = vunpack.c.l.b16 %v3166
        %v3303 = vunpack.c.l.b16 %v3167
        %v3304 = vunpack.c.l.b16 %v3168
        %v3305 = vunpack.c.l.b16 %v3169
        %v3306 = vunpack.c.l.b16 %v3170
        %v3307 = vunpack.c.l.b16 %v3171
        %v3308 = vunpack.c.l.b16 %v3172
        %v3309 = vunpack.c.l.b16 %v3173
        %v3310 = vunpack.c.l.b16 %v3174
        %v3311 = vunpack.c.l.b16 %v3175
        %v3312 = vunpack.c.l.b16 %v3176
        %v3313 = vunpack.c.l.b16 %v3177
        %v3314 = vunpack.c.l.b16 %v3178
        %v3315 = vunpack.c.l.b16 %v3179
        %v3316 = vunpack.c.l.b16 %v3180
        %v3317 = vunpack.c.l.b16 %v3181
        %v3318 = vunpack.c.l.b16 %v3182
        %v3319 = vpack.c.b16 %v3256, %v3255
        %v3320 = vpack.c.b16 %v3258, %v3257
        %v3321 = vpack.c.b16 %v3260, %v3259
        %v3322 = vpack.c.b16 %v3262, %v3261
        %v3323 = vpack.c.b16 %v3264, %v3263
        %v3324 = vpack.c.b16 %v3266, %v3265
        %v3325 = vpack.c.b16 %v3268, %v3267
        %v3326 = vpack.c.b16 %v3270, %v3269
        %v3327 = vpack.c.b16 %v3272, %v3271
        %v3328 = vpack.c.b16 %v3274, %v3273
        %v3329 = vpack.c.b16 %v3276, %v3275
        %v3330 = vpack.c.b16 %v3278, %v3277
        %v3331 = vpack.c.b16 %v3280, %v3279
        %v3332 = vpack.c.b16 %v3282, %v3281
        %v3333 = vpack.c.b16 %v3284, %v3283
        %v3334 = vpack.c.b16 %v3286, %v3285
        %v3335 = vpack.c.b16 %v3288, %v3287
        %v3336 = vpack.c.b16 %v3290, %v3289
        %v3337 = vpack.c.b16 %v3292, %v3291
        %v3338 = vpack.c.b16 %v3294, %v3293
        %v3339 = vpack.c.b16 %v3296, %v3295
        %v3340 = vpack.c.b16 %v3298, %v3297
        %v3341 = vpack.c.b16 %v3300, %v3299
        %v3342 = vpack.c.b16 %v3302, %v3301
        %v3343 = vpack.c.b16 %v3304, %v3303
        %v3344 = vpack.c.b16 %v3306, %v3305
        %v3345 = vpack.c.b16 %v3308, %v3307
        %v3346 = vpack.c.b16 %v3310, %v3309
        %v3347 = vpack.c.b16 %v3312, %v3311
        %v3348 = vpack.c.b16 %v3314, %v3313
        %v3349 = vpack.c.b16 %v3316, %v3315
        %v3350 = vpack.c.b16 %v3318, %v3317
        %3383 = vmatpush.bf16.msra.mxu0 %v3326
        %3384 = vmatpush.bf16.msra.mxu0 %v3325
        %3385 = vmatpush.bf16.msra.mxu0 %v3324
        %3386 = vmatpush.bf16.msra.mxu0 %v3323
        %3387 = vmatpush.bf16.msra.mxu0 %v3322
        %3388 = vmatpush.bf16.msra.mxu0 %v3321
        %3389 = vmatpush.bf16.msra.mxu0 %v3320
        %3390 = vmatpush.bf16.msra.mxu0 %v3319
        %3391 = vmatmul.bf16.gmra.mxu0 %v3184
        %v3392 = vpop.f32.mrf.mxu0
        %v3393 = vadd.f32 %v3189, %v3392
        %v3394 = vpop.f32.mrf.mxu0
        %3395 = vdwg.mxu0
        %3396 = vmatpush.bf16.msra.mxu0 %v3334
        %3397 = vmatpush.bf16.msra.mxu0 %v3333
        %3398 = vmatpush.bf16.msra.mxu0 %v3332
        %3399 = vmatpush.bf16.msra.mxu0 %v3331
        %3400 = vmatpush.bf16.msra.mxu0 %v3330
        %3401 = vmatpush.bf16.msra.mxu0 %v3329
        %3402 = vmatpush.bf16.msra.mxu0 %v3328
        %3403 = vmatpush.bf16.msra.mxu0 %v3327
        %3404 = vmatmul.bf16.gmra.mxu0 %v3185
        %v3405 = vpop.f32.mrf.mxu0
        %v3406 = vadd.f32 %v3393, %v3405
        %v3407 = vpop.f32.mrf.mxu0
        %3408 = vdwg.mxu0
        %3409 = vmatpush.bf16.msra.mxu0 %v3342
        %3410 = vmatpush.bf16.msra.mxu0 %v3341
        %3411 = vmatpush.bf16.msra.mxu0 %v3340
        %3412 = vmatpush.bf16.msra.mxu0 %v3339
        %3413 = vmatpush.bf16.msra.mxu0 %v3338
        %3414 = vmatpush.bf16.msra.mxu0 %v3337
        %3415 = vmatpush.bf16.msra.mxu0 %v3336
        %3416 = vmatpush.bf16.msra.mxu0 %v3335
        %3417 = vmatmul.bf16.gmra.mxu0 %v3186
        %v3418 = vpop.f32.mrf.mxu0
        %v3419 = vadd.f32 %v3406, %v3418
        %v3420 = vpop.f32.mrf.mxu0
        %3421 = vdwg.mxu0
        %3422 = vmatpush.bf16.msra.mxu0 %v3350
        %3423 = vmatpush.bf16.msra.mxu0 %v3349
        %3424 = vmatpush.bf16.msra.mxu0 %v3348
        %3425 = vmatpush.bf16.msra.mxu0 %v3347
        %3426 = vmatpush.bf16.msra.mxu0 %v3346
        %3427 = vmatpush.bf16.msra.mxu0 %v3345
        %3428 = vmatpush.bf16.msra.mxu0 %v3344
        %3429 = vmatpush.bf16.msra.mxu0 %v3343
        %3430 = vmatmul.bf16.gmra.mxu0 %v3187
        %v3431 = vpop.f32.mrf.mxu0
        %v3432 = vadd.f32 %v3419, %v3431
        %v3433 = vpop.f32.mrf.mxu0
        %3434 = vdwg.mxu0
        %v3435 = vadd.f32 %v2747, %v3432
        %s3436 = scalar_lea.vmem %s15, 1
        %v3437 = vld [vmem:[%s3436] sm:$0x1]
        %s3438 = scalar_lea.vmem %s17, 1
        %v3439 = vld [vmem:[%s3438] sm:$0x1]
        %v3440 = vsel %vm1337, %v3435, 0.0
        %3441 = vadd.xlane.f32.xlu0 %v3440
        %v3442 = vpop.xlane.xlu0 %3441
        %v3443 = vmul.f32 %v3442, %v1347
        %v3444 = vsub.f32 %v3435, %v3443
        %v3445 = vmul.f32 %v3444, %v3444
        %v3446 = vsel %vm1337, %v3445, 0.0
        %3447 = vadd.xlane.f32.xlu0 %v3446
        %v3448 = vpop.xlane.xlu0 %3447
        %v3449 = vmul.f32 %v3448, %v1347
        %v3450 = vadd.f32 %v3449, 1e-05
        %v3451 = vrsqrt.pop %v3450
        %v3452 = vmul.f32 %v3451, %v3450
        %v3453 = vmul.f32 %v3452, %v3451
        %v3454 = vmul.f32 0.5, %v3453
        %v3455 = vsub.f32 1.5, %v3454
        %v3456 = vmul.f32 %v3451, %v3455
        %vm3457 = vweird.f32 %v3450
        %vm3458 = vweird.f32 %v3451
        %vm3459 = vmor %vm3457, %vm3458
        %v3460 = vsel %vm3459, %v3451, %v3456
        %v3461 = vmul.f32 %v3444, %v3460
        %v3463 = vperm.slane %v3437, 0
        %v3465 = vmul.f32 %v3461, %v3463
        %v3467 = vperm.slane %v3439, 0
        %v3469 = vadd.f32 %v3465, %v3467
        %v3470 = vpack.c.bf16 %v3469, %v3469
        %s3471 = scalar_lea.vmem %s23, 768
        %v3472 = vld [vmem:[%s3471] sm:$0xf]
        %v3473 = vld [vmem:[%s3471 + $0x4] sm:$0xf]
        %v3474 = vld [vmem:[%s3471 + $0x8] sm:$0xf]
        %v3475 = vld [vmem:[%s3471 + $0xc] sm:$0xf]
        %v3476 = vld [vmem:[%s3471 + $0x10] sm:$0xf]
        %v3477 = vld [vmem:[%s3471 + $0x14] sm:$0xf]
        %v3478 = vld [vmem:[%s3471 + $0x18] sm:$0xf]
        %v3479 = vld [vmem:[%s3471 + $0x1c] sm:$0xf]
        %v3480 = vld [vmem:[%s3471 + $0x20] sm:$0xf]
        %v3481 = vld [vmem:[%s3471 + $0x24] sm:$0xf]
        %v3482 = vld [vmem:[%s3471 + $0x28] sm:$0xf]
        %v3483 = vld [vmem:[%s3471 + $0x2c] sm:$0xf]
        %v3484 = vld [vmem:[%s3471 + $0x30] sm:$0xf]
        %v3485 = vld [vmem:[%s3471 + $0x34] sm:$0xf]
        %v3486 = vld [vmem:[%s3471 + $0x38] sm:$0xf]
        %v3487 = vld [vmem:[%s3471 + $0x3c] sm:$0xf]
        %v3488 = vld [vmem:[%s3471 + $0x40] sm:$0xf]
        %v3489 = vld [vmem:[%s3471 + $0x44] sm:$0xf]
        %v3490 = vld [vmem:[%s3471 + $0x48] sm:$0xf]
        %v3491 = vld [vmem:[%s3471 + $0x4c] sm:$0xf]
        %v3492 = vld [vmem:[%s3471 + $0x50] sm:$0xf]
        %v3493 = vld [vmem:[%s3471 + $0x54] sm:$0xf]
        %v3494 = vld [vmem:[%s3471 + $0x58] sm:$0xf]
        %v3495 = vld [vmem:[%s3471 + $0x5c] sm:$0xf]
        %v3496 = vld [vmem:[%s3471 + $0x60] sm:$0xf]
        %v3497 = vld [vmem:[%s3471 + $0x64] sm:$0xf]
        %v3498 = vld [vmem:[%s3471 + $0x68] sm:$0xf]
        %v3499 = vld [vmem:[%s3471 + $0x6c] sm:$0xf]
        %v3500 = vld [vmem:[%s3471 + $0x70] sm:$0xf]
        %v3501 = vld [vmem:[%s3471 + $0x74] sm:$0xf]
        %v3502 = vld [vmem:[%s3471 + $0x78] sm:$0xf]
        %v3503 = vld [vmem:[%s3471 + $0x7c] sm:$0xf]
        %v3504 = vld [vmem:[%s3471 + $0x80] sm:$0xf]
        %v3505 = vld [vmem:[%s3471 + $0x84] sm:$0xf]
        %v3506 = vld [vmem:[%s3471 + $0x88] sm:$0xf]
        %v3507 = vld [vmem:[%s3471 + $0x8c] sm:$0xf]
        %v3508 = vld [vmem:[%s3471 + $0x90] sm:$0xf]
        %v3509 = vld [vmem:[%s3471 + $0x94] sm:$0xf]
        %v3510 = vld [vmem:[%s3471 + $0x98] sm:$0xf]
        %v3511 = vld [vmem:[%s3471 + $0x9c] sm:$0xf]
        %v3512 = vld [vmem:[%s3471 + $0xa0] sm:$0xf]
        %v3513 = vld [vmem:[%s3471 + $0xa4] sm:$0xf]
        %v3514 = vld [vmem:[%s3471 + $0xa8] sm:$0xf]
        %v3515 = vld [vmem:[%s3471 + $0xac] sm:$0xf]
        %v3516 = vld [vmem:[%s3471 + $0xb0] sm:$0xf]
        %v3517 = vld [vmem:[%s3471 + $0xb4] sm:$0xf]
        %v3518 = vld [vmem:[%s3471 + $0xb8] sm:$0xf]
        %v3519 = vld [vmem:[%s3471 + $0xbc] sm:$0xf]
        %v3520 = vld [vmem:[%s3471 + $0xc0] sm:$0xf]
        %v3521 = vld [vmem:[%s3471 + $0xc4] sm:$0xf]
        %v3522 = vld [vmem:[%s3471 + $0xc8] sm:$0xf]
        %v3523 = vld [vmem:[%s3471 + $0xcc] sm:$0xf]
        %v3524 = vld [vmem:[%s3471 + $0xd0] sm:$0xf]
        %v3525 = vld [vmem:[%s3471 + $0xd4] sm:$0xf]
        %v3526 = vld [vmem:[%s3471 + $0xd8] sm:$0xf]
        %v3527 = vld [vmem:[%s3471 + $0xdc] sm:$0xf]
        %v3528 = vld [vmem:[%s3471 + $0xe0] sm:$0xf]
        %v3529 = vld [vmem:[%s3471 + $0xe4] sm:$0xf]
        %v3530 = vld [vmem:[%s3471 + $0xe8] sm:$0xf]
        %v3531 = vld [vmem:[%s3471 + $0xec] sm:$0xf]
        %v3532 = vld [vmem:[%s3471 + $0xf0] sm:$0xf]
        %v3533 = vld [vmem:[%s3471 + $0xf4] sm:$0xf]
        %v3534 = vld [vmem:[%s3471 + $0xf8] sm:$0xf]
        %v3535 = vld [vmem:[%s3471 + $0xfc] sm:$0xf]
        %v3536 = vld [vmem:[%s3471 + $0x100] sm:$0xf]
        %v3537 = vld [vmem:[%s3471 + $0x104] sm:$0xf]
        %v3538 = vld [vmem:[%s3471 + $0x108] sm:$0xf]
        %v3539 = vld [vmem:[%s3471 + $0x10c] sm:$0xf]
        %v3540 = vld [vmem:[%s3471 + $0x110] sm:$0xf]
        %v3541 = vld [vmem:[%s3471 + $0x114] sm:$0xf]
        %v3542 = vld [vmem:[%s3471 + $0x118] sm:$0xf]
        %v3543 = vld [vmem:[%s3471 + $0x11c] sm:$0xf]
        %v3544 = vld [vmem:[%s3471 + $0x120] sm:$0xf]
        %v3545 = vld [vmem:[%s3471 + $0x124] sm:$0xf]
        %v3546 = vld [vmem:[%s3471 + $0x128] sm:$0xf]
        %v3547 = vld [vmem:[%s3471 + $0x12c] sm:$0xf]
        %v3548 = vld [vmem:[%s3471 + $0x130] sm:$0xf]
        %v3549 = vld [vmem:[%s3471 + $0x134] sm:$0xf]
        %v3550 = vld [vmem:[%s3471 + $0x138] sm:$0xf]
        %v3551 = vld [vmem:[%s3471 + $0x13c] sm:$0xf]
        %v3552 = vld [vmem:[%s3471 + $0x140] sm:$0xf]
        %v3553 = vld [vmem:[%s3471 + $0x144] sm:$0xf]
        %v3554 = vld [vmem:[%s3471 + $0x148] sm:$0xf]
        %v3555 = vld [vmem:[%s3471 + $0x14c] sm:$0xf]
        %v3556 = vld [vmem:[%s3471 + $0x150] sm:$0xf]
        %v3557 = vld [vmem:[%s3471 + $0x154] sm:$0xf]
        %v3558 = vld [vmem:[%s3471 + $0x158] sm:$0xf]
        %v3559 = vld [vmem:[%s3471 + $0x15c] sm:$0xf]
        %v3560 = vld [vmem:[%s3471 + $0x160] sm:$0xf]
        %v3561 = vld [vmem:[%s3471 + $0x164] sm:$0xf]
        %v3562 = vld [vmem:[%s3471 + $0x168] sm:$0xf]
        %v3563 = vld [vmem:[%s3471 + $0x16c] sm:$0xf]
        %v3564 = vld [vmem:[%s3471 + $0x170] sm:$0xf]
        %v3565 = vld [vmem:[%s3471 + $0x174] sm:$0xf]
        %v3566 = vld [vmem:[%s3471 + $0x178] sm:$0xf]
        %v3567 = vld [vmem:[%s3471 + $0x17c] sm:$0xf]
        %v3568 = vld [vmem:[%s3471 + $0x180] sm:$0xf]
        %v3569 = vld [vmem:[%s3471 + $0x184] sm:$0xf]
        %v3570 = vld [vmem:[%s3471 + $0x188] sm:$0xf]
        %v3571 = vld [vmem:[%s3471 + $0x18c] sm:$0xf]
        %v3572 = vld [vmem:[%s3471 + $0x190] sm:$0xf]
        %v3573 = vld [vmem:[%s3471 + $0x194] sm:$0xf]
        %v3574 = vld [vmem:[%s3471 + $0x198] sm:$0xf]
        %v3575 = vld [vmem:[%s3471 + $0x19c] sm:$0xf]
        %v3576 = vld [vmem:[%s3471 + $0x1a0] sm:$0xf]
        %v3577 = vld [vmem:[%s3471 + $0x1a4] sm:$0xf]
        %v3578 = vld [vmem:[%s3471 + $0x1a8] sm:$0xf]
        %v3579 = vld [vmem:[%s3471 + $0x1ac] sm:$0xf]
        %v3580 = vld [vmem:[%s3471 + $0x1b0] sm:$0xf]
        %v3581 = vld [vmem:[%s3471 + $0x1b4] sm:$0xf]
        %v3582 = vld [vmem:[%s3471 + $0x1b8] sm:$0xf]
        %v3583 = vld [vmem:[%s3471 + $0x1bc] sm:$0xf]
        %v3584 = vld [vmem:[%s3471 + $0x1c0] sm:$0xf]
        %v3585 = vld [vmem:[%s3471 + $0x1c4] sm:$0xf]
        %v3586 = vld [vmem:[%s3471 + $0x1c8] sm:$0xf]
        %v3587 = vld [vmem:[%s3471 + $0x1cc] sm:$0xf]
        %v3588 = vld [vmem:[%s3471 + $0x1d0] sm:$0xf]
        %v3589 = vld [vmem:[%s3471 + $0x1d4] sm:$0xf]
        %v3590 = vld [vmem:[%s3471 + $0x1d8] sm:$0xf]
        %v3591 = vld [vmem:[%s3471 + $0x1dc] sm:$0xf]
        %v3592 = vld [vmem:[%s3471 + $0x1e0] sm:$0xf]
        %v3593 = vld [vmem:[%s3471 + $0x1e4] sm:$0xf]
        %v3594 = vld [vmem:[%s3471 + $0x1e8] sm:$0xf]
        %v3595 = vld [vmem:[%s3471 + $0x1ec] sm:$0xf]
        %v3596 = vld [vmem:[%s3471 + $0x1f0] sm:$0xf]
        %v3597 = vld [vmem:[%s3471 + $0x1f4] sm:$0xf]
        %v3598 = vld [vmem:[%s3471 + $0x1f8] sm:$0xf]
        %v3599 = vld [vmem:[%s3471 + $0x1fc] sm:$0xf]
        %v3600 = vld [vmem:[%s3471 + $0x200] sm:$0xf]
        %v3601 = vld [vmem:[%s3471 + $0x204] sm:$0xf]
        %v3602 = vld [vmem:[%s3471 + $0x208] sm:$0xf]
        %v3603 = vld [vmem:[%s3471 + $0x20c] sm:$0xf]
        %v3604 = vld [vmem:[%s3471 + $0x210] sm:$0xf]
        %v3605 = vld [vmem:[%s3471 + $0x214] sm:$0xf]
        %v3606 = vld [vmem:[%s3471 + $0x218] sm:$0xf]
        %v3607 = vld [vmem:[%s3471 + $0x21c] sm:$0xf]
        %v3608 = vld [vmem:[%s3471 + $0x220] sm:$0xf]
        %v3609 = vld [vmem:[%s3471 + $0x224] sm:$0xf]
        %v3610 = vld [vmem:[%s3471 + $0x228] sm:$0xf]
        %v3611 = vld [vmem:[%s3471 + $0x22c] sm:$0xf]
        %v3612 = vld [vmem:[%s3471 + $0x230] sm:$0xf]
        %v3613 = vld [vmem:[%s3471 + $0x234] sm:$0xf]
        %v3614 = vld [vmem:[%s3471 + $0x238] sm:$0xf]
        %v3615 = vld [vmem:[%s3471 + $0x23c] sm:$0xf]
        %v3616 = vld [vmem:[%s3471 + $0x240] sm:$0xf]
        %v3617 = vld [vmem:[%s3471 + $0x244] sm:$0xf]
        %v3618 = vld [vmem:[%s3471 + $0x248] sm:$0xf]
        %v3619 = vld [vmem:[%s3471 + $0x24c] sm:$0xf]
        %v3620 = vld [vmem:[%s3471 + $0x250] sm:$0xf]
        %v3621 = vld [vmem:[%s3471 + $0x254] sm:$0xf]
        %v3622 = vld [vmem:[%s3471 + $0x258] sm:$0xf]
        %v3623 = vld [vmem:[%s3471 + $0x25c] sm:$0xf]
        %v3624 = vld [vmem:[%s3471 + $0x260] sm:$0xf]
        %v3625 = vld [vmem:[%s3471 + $0x264] sm:$0xf]
        %v3626 = vld [vmem:[%s3471 + $0x268] sm:$0xf]
        %v3627 = vld [vmem:[%s3471 + $0x26c] sm:$0xf]
        %v3628 = vld [vmem:[%s3471 + $0x270] sm:$0xf]
        %v3629 = vld [vmem:[%s3471 + $0x274] sm:$0xf]
        %v3630 = vld [vmem:[%s3471 + $0x278] sm:$0xf]
        %v3631 = vld [vmem:[%s3471 + $0x27c] sm:$0xf]
        %v3632 = vld [vmem:[%s3471 + $0x280] sm:$0xf]
        %v3633 = vld [vmem:[%s3471 + $0x284] sm:$0xf]
        %v3634 = vld [vmem:[%s3471 + $0x288] sm:$0xf]
        %v3635 = vld [vmem:[%s3471 + $0x28c] sm:$0xf]
        %v3636 = vld [vmem:[%s3471 + $0x290] sm:$0xf]
        %v3637 = vld [vmem:[%s3471 + $0x294] sm:$0xf]
        %v3638 = vld [vmem:[%s3471 + $0x298] sm:$0xf]
        %v3639 = vld [vmem:[%s3471 + $0x29c] sm:$0xf]
        %v3640 = vld [vmem:[%s3471 + $0x2a0] sm:$0xf]
        %v3641 = vld [vmem:[%s3471 + $0x2a4] sm:$0xf]
        %v3642 = vld [vmem:[%s3471 + $0x2a8] sm:$0xf]
        %v3643 = vld [vmem:[%s3471 + $0x2ac] sm:$0xf]
        %v3644 = vld [vmem:[%s3471 + $0x2b0] sm:$0xf]
        %v3645 = vld [vmem:[%s3471 + $0x2b4] sm:$0xf]
        %v3646 = vld [vmem:[%s3471 + $0x2b8] sm:$0xf]
        %v3647 = vld [vmem:[%s3471 + $0x2bc] sm:$0xf]
        %v3648 = vld [vmem:[%s3471 + $0x2c0] sm:$0xf]
        %v3649 = vld [vmem:[%s3471 + $0x2c4] sm:$0xf]
        %v3650 = vld [vmem:[%s3471 + $0x2c8] sm:$0xf]
        %v3651 = vld [vmem:[%s3471 + $0x2cc] sm:$0xf]
        %v3652 = vld [vmem:[%s3471 + $0x2d0] sm:$0xf]
        %v3653 = vld [vmem:[%s3471 + $0x2d4] sm:$0xf]
        %v3654 = vld [vmem:[%s3471 + $0x2d8] sm:$0xf]
        %v3655 = vld [vmem:[%s3471 + $0x2dc] sm:$0xf]
        %v3656 = vld [vmem:[%s3471 + $0x2e0] sm:$0xf]
        %v3657 = vld [vmem:[%s3471 + $0x2e4] sm:$0xf]
        %v3658 = vld [vmem:[%s3471 + $0x2e8] sm:$0xf]
        %v3659 = vld [vmem:[%s3471 + $0x2ec] sm:$0xf]
        %v3660 = vld [vmem:[%s3471 + $0x2f0] sm:$0xf]
        %v3661 = vld [vmem:[%s3471 + $0x2f4] sm:$0xf]
        %v3662 = vld [vmem:[%s3471 + $0x2f8] sm:$0xf]
        %v3663 = vld [vmem:[%s3471 + $0x2fc] sm:$0xf]
        %s3664 = scalar_lea.vmem %s25, 12
        %v3665 = vld [vmem:[%s3664] sm:$0x1]
        %v3666 = vld [vmem:[%s3664 + $0x1] sm:$0x1]
        %v3667 = vld [vmem:[%s3664 + $0x2] sm:$0x1]
        %v3668 = vld [vmem:[%s3664 + $0x3] sm:$0x1]
        %v3669 = vld [vmem:[%s3664 + $0x4] sm:$0x1]
        %v3670 = vld [vmem:[%s3664 + $0x5] sm:$0x1]
        %v3671 = vld [vmem:[%s3664 + $0x6] sm:$0x1]
        %v3672 = vld [vmem:[%s3664 + $0x7] sm:$0x1]
        %v3673 = vld [vmem:[%s3664 + $0x8] sm:$0x1]
        %v3674 = vld [vmem:[%s3664 + $0x9] sm:$0x1]
        %v3675 = vld [vmem:[%s3664 + $0xa] sm:$0x1]
        %v3676 = vld [vmem:[%s3664 + $0xb] sm:$0x1]
        %v3689 = vperm.slane %v3665, 0
        %v3690 = vperm.slane %v3666, 0
        %v3691 = vperm.slane %v3667, 0
        %v3692 = vperm.slane %v3668, 0
        %v3693 = vperm.slane %v3669, 0
        %v3694 = vperm.slane %v3670, 0
        %v3695 = vperm.slane %v3671, 0
        %v3696 = vperm.slane %v3672, 0
        %v3697 = vperm.slane %v3673, 0
        %v3698 = vperm.slane %v3674, 0
        %v3699 = vperm.slane %v3675, 0
        %v3700 = vperm.slane %v3676, 0
        %v3729 = vunpack.c.l.b16 %v3472
        %v3730 = vunpack.c.l.b16 %v3473
        %v3731 = vunpack.c.l.b16 %v3474
        %v3732 = vunpack.c.l.b16 %v3475
        %v3733 = vunpack.c.l.b16 %v3476
        %v3734 = vunpack.c.l.b16 %v3477
        %v3735 = vunpack.c.l.b16 %v3478
        %v3736 = vunpack.c.l.b16 %v3479
        %v3737 = vunpack.c.l.b16 %v3480
        %v3738 = vunpack.c.l.b16 %v3481
        %v3739 = vunpack.c.l.b16 %v3482
        %v3740 = vunpack.c.l.b16 %v3483
        %v3741 = vunpack.c.l.b16 %v3484
        %v3742 = vunpack.c.l.b16 %v3485
        %v3743 = vunpack.c.l.b16 %v3486
        %v3744 = vunpack.c.l.b16 %v3487
        %v3745 = vpack.c.b16 %v3730, %v3729
        %v3746 = vpack.c.b16 %v3732, %v3731
        %v3747 = vpack.c.b16 %v3734, %v3733
        %v3748 = vpack.c.b16 %v3736, %v3735
        %v3749 = vpack.c.b16 %v3738, %v3737
        %v3750 = vpack.c.b16 %v3740, %v3739
        %v3751 = vpack.c.b16 %v3742, %v3741
        %v3752 = vpack.c.b16 %v3744, %v3743
        %3761 = vmatpush.bf16.msra.mxu0 %v3752
        %3762 = vmatpush.bf16.msra.mxu0 %v3751
        %3763 = vmatpush.bf16.msra.mxu0 %v3750
        %3764 = vmatpush.bf16.msra.mxu0 %v3749
        %3765 = vmatpush.bf16.msra.mxu0 %v3748
        %3766 = vmatpush.bf16.msra.mxu0 %v3747
        %3767 = vmatpush.bf16.msra.mxu0 %v3746
        %3768 = vmatpush.bf16.msra.mxu0 %v3745
        %3769 = vmatmul.bf16.gmra.mxu0 %v3470
        %v3770 = vpop.f32.mrf.mxu0
        %v3771 = vadd.f32 %v3689, %v3770
        %v3772 = vpop.f32.mrf.mxu0
        %3773 = vdwg.mxu0
        %v3790 = vunpack.c.l.b16 %v3488
        %v3791 = vunpack.c.l.b16 %v3489
        %v3792 = vunpack.c.l.b16 %v3490
        %v3793 = vunpack.c.l.b16 %v3491
        %v3794 = vunpack.c.l.b16 %v3492
        %v3795 = vunpack.c.l.b16 %v3493
        %v3796 = vunpack.c.l.b16 %v3494
        %v3797 = vunpack.c.l.b16 %v3495
        %v3798 = vunpack.c.l.b16 %v3496
        %v3799 = vunpack.c.l.b16 %v3497
        %v3800 = vunpack.c.l.b16 %v3498
        %v3801 = vunpack.c.l.b16 %v3499
        %v3802 = vunpack.c.l.b16 %v3500
        %v3803 = vunpack.c.l.b16 %v3501
        %v3804 = vunpack.c.l.b16 %v3502
        %v3805 = vunpack.c.l.b16 %v3503
        %v3806 = vpack.c.b16 %v3791, %v3790
        %v3807 = vpack.c.b16 %v3793, %v3792
        %v3808 = vpack.c.b16 %v3795, %v3794
        %v3809 = vpack.c.b16 %v3797, %v3796
        %v3810 = vpack.c.b16 %v3799, %v3798
        %v3811 = vpack.c.b16 %v3801, %v3800
        %v3812 = vpack.c.b16 %v3803, %v3802
        %v3813 = vpack.c.b16 %v3805, %v3804
        %3822 = vmatpush.bf16.msra.mxu0 %v3813
        %3823 = vmatpush.bf16.msra.mxu0 %v3812
        %3824 = vmatpush.bf16.msra.mxu0 %v3811
        %3825 = vmatpush.bf16.msra.mxu0 %v3810
        %3826 = vmatpush.bf16.msra.mxu0 %v3809
        %3827 = vmatpush.bf16.msra.mxu0 %v3808
        %3828 = vmatpush.bf16.msra.mxu0 %v3807
        %3829 = vmatpush.bf16.msra.mxu0 %v3806
        %3830 = vmatmul.bf16.gmra.mxu0 %v3470
        %v3831 = vpop.f32.mrf.mxu0
        %v3832 = vadd.f32 %v3690, %v3831
        %v3833 = vpop.f32.mrf.mxu0
        %3834 = vdwg.mxu0
        %v3851 = vunpack.c.l.b16 %v3504
        %v3852 = vunpack.c.l.b16 %v3505
        %v3853 = vunpack.c.l.b16 %v3506
        %v3854 = vunpack.c.l.b16 %v3507
        %v3855 = vunpack.c.l.b16 %v3508
        %v3856 = vunpack.c.l.b16 %v3509
        %v3857 = vunpack.c.l.b16 %v3510
        %v3858 = vunpack.c.l.b16 %v3511
        %v3859 = vunpack.c.l.b16 %v3512
        %v3860 = vunpack.c.l.b16 %v3513
        %v3861 = vunpack.c.l.b16 %v3514
        %v3862 = vunpack.c.l.b16 %v3515
        %v3863 = vunpack.c.l.b16 %v3516
        %v3864 = vunpack.c.l.b16 %v3517
        %v3865 = vunpack.c.l.b16 %v3518
        %v3866 = vunpack.c.l.b16 %v3519
        %v3867 = vpack.c.b16 %v3852, %v3851
        %v3868 = vpack.c.b16 %v3854, %v3853
        %v3869 = vpack.c.b16 %v3856, %v3855
        %v3870 = vpack.c.b16 %v3858, %v3857
        %v3871 = vpack.c.b16 %v3860, %v3859
        %v3872 = vpack.c.b16 %v3862, %v3861
        %v3873 = vpack.c.b16 %v3864, %v3863
        %v3874 = vpack.c.b16 %v3866, %v3865
        %3883 = vmatpush.bf16.msra.mxu0 %v3874
        %3884 = vmatpush.bf16.msra.mxu0 %v3873
        %3885 = vmatpush.bf16.msra.mxu0 %v3872
        %3886 = vmatpush.bf16.msra.mxu0 %v3871
        %3887 = vmatpush.bf16.msra.mxu0 %v3870
        %3888 = vmatpush.bf16.msra.mxu0 %v3869
        %3889 = vmatpush.bf16.msra.mxu0 %v3868
        %3890 = vmatpush.bf16.msra.mxu0 %v3867
        %3891 = vmatmul.bf16.gmra.mxu0 %v3470
        %v3892 = vpop.f32.mrf.mxu0
        %v3893 = vadd.f32 %v3691, %v3892
        %v3894 = vpop.f32.mrf.mxu0
        %3895 = vdwg.mxu0
        %v3912 = vunpack.c.l.b16 %v3520
        %v3913 = vunpack.c.l.b16 %v3521
        %v3914 = vunpack.c.l.b16 %v3522
        %v3915 = vunpack.c.l.b16 %v3523
        %v3916 = vunpack.c.l.b16 %v3524
        %v3917 = vunpack.c.l.b16 %v3525
        %v3918 = vunpack.c.l.b16 %v3526
        %v3919 = vunpack.c.l.b16 %v3527
        %v3920 = vunpack.c.l.b16 %v3528
        %v3921 = vunpack.c.l.b16 %v3529
        %v3922 = vunpack.c.l.b16 %v3530
        %v3923 = vunpack.c.l.b16 %v3531
        %v3924 = vunpack.c.l.b16 %v3532
        %v3925 = vunpack.c.l.b16 %v3533
        %v3926 = vunpack.c.l.b16 %v3534
        %v3927 = vunpack.c.l.b16 %v3535
        %v3928 = vpack.c.b16 %v3913, %v3912
        %v3929 = vpack.c.b16 %v3915, %v3914
        %v3930 = vpack.c.b16 %v3917, %v3916
        %v3931 = vpack.c.b16 %v3919, %v3918
        %v3932 = vpack.c.b16 %v3921, %v3920
        %v3933 = vpack.c.b16 %v3923, %v3922
        %v3934 = vpack.c.b16 %v3925, %v3924
        %v3935 = vpack.c.b16 %v3927, %v3926
        %3944 = vmatpush.bf16.msra.mxu0 %v3935
        %3945 = vmatpush.bf16.msra.mxu0 %v3934
        %3946 = vmatpush.bf16.msra.mxu0 %v3933
        %3947 = vmatpush.bf16.msra.mxu0 %v3932
        %3948 = vmatpush.bf16.msra.mxu0 %v3931
        %3949 = vmatpush.bf16.msra.mxu0 %v3930
        %3950 = vmatpush.bf16.msra.mxu0 %v3929
        %3951 = vmatpush.bf16.msra.mxu0 %v3928
        %3952 = vmatmul.bf16.gmra.mxu0 %v3470
        %v3953 = vpop.f32.mrf.mxu0
        %v3954 = vadd.f32 %v3692, %v3953
        %v3955 = vpop.f32.mrf.mxu0
        %3956 = vdwg.mxu0
        %v3973 = vunpack.c.l.b16 %v3536
        %v3974 = vunpack.c.l.b16 %v3537
        %v3975 = vunpack.c.l.b16 %v3538
        %v3976 = vunpack.c.l.b16 %v3539
        %v3977 = vunpack.c.l.b16 %v3540
        %v3978 = vunpack.c.l.b16 %v3541
        %v3979 = vunpack.c.l.b16 %v3542
        %v3980 = vunpack.c.l.b16 %v3543
        %v3981 = vunpack.c.l.b16 %v3544
        %v3982 = vunpack.c.l.b16 %v3545
        %v3983 = vunpack.c.l.b16 %v3546
        %v3984 = vunpack.c.l.b16 %v3547
        %v3985 = vunpack.c.l.b16 %v3548
        %v3986 = vunpack.c.l.b16 %v3549
        %v3987 = vunpack.c.l.b16 %v3550
        %v3988 = vunpack.c.l.b16 %v3551
        %v3989 = vpack.c.b16 %v3974, %v3973
        %v3990 = vpack.c.b16 %v3976, %v3975
        %v3991 = vpack.c.b16 %v3978, %v3977
        %v3992 = vpack.c.b16 %v3980, %v3979
        %v3993 = vpack.c.b16 %v3982, %v3981
        %v3994 = vpack.c.b16 %v3984, %v3983
        %v3995 = vpack.c.b16 %v3986, %v3985
        %v3996 = vpack.c.b16 %v3988, %v3987
        %4005 = vmatpush.bf16.msra.mxu0 %v3996
        %4006 = vmatpush.bf16.msra.mxu0 %v3995
        %4007 = vmatpush.bf16.msra.mxu0 %v3994
        %4008 = vmatpush.bf16.msra.mxu0 %v3993
        %4009 = vmatpush.bf16.msra.mxu0 %v3992
        %4010 = vmatpush.bf16.msra.mxu0 %v3991
        %4011 = vmatpush.bf16.msra.mxu0 %v3990
        %4012 = vmatpush.bf16.msra.mxu0 %v3989
        %4013 = vmatmul.bf16.gmra.mxu0 %v3470
        %v4014 = vpop.f32.mrf.mxu0
        %v4015 = vadd.f32 %v3693, %v4014
        %v4016 = vpop.f32.mrf.mxu0
        %4017 = vdwg.mxu0
        %v4034 = vunpack.c.l.b16 %v3552
        %v4035 = vunpack.c.l.b16 %v3553
        %v4036 = vunpack.c.l.b16 %v3554
        %v4037 = vunpack.c.l.b16 %v3555
        %v4038 = vunpack.c.l.b16 %v3556
        %v4039 = vunpack.c.l.b16 %v3557
        %v4040 = vunpack.c.l.b16 %v3558
        %v4041 = vunpack.c.l.b16 %v3559
        %v4042 = vunpack.c.l.b16 %v3560
        %v4043 = vunpack.c.l.b16 %v3561
        %v4044 = vunpack.c.l.b16 %v3562
        %v4045 = vunpack.c.l.b16 %v3563
        %v4046 = vunpack.c.l.b16 %v3564
        %v4047 = vunpack.c.l.b16 %v3565
        %v4048 = vunpack.c.l.b16 %v3566
        %v4049 = vunpack.c.l.b16 %v3567
        %v4050 = vpack.c.b16 %v4035, %v4034
        %v4051 = vpack.c.b16 %v4037, %v4036
        %v4052 = vpack.c.b16 %v4039, %v4038
        %v4053 = vpack.c.b16 %v4041, %v4040
        %v4054 = vpack.c.b16 %v4043, %v4042
        %v4055 = vpack.c.b16 %v4045, %v4044
        %v4056 = vpack.c.b16 %v4047, %v4046
        %v4057 = vpack.c.b16 %v4049, %v4048
        %4066 = vmatpush.bf16.msra.mxu0 %v4057
        %4067 = vmatpush.bf16.msra.mxu0 %v4056
        %4068 = vmatpush.bf16.msra.mxu0 %v4055
        %4069 = vmatpush.bf16.msra.mxu0 %v4054
        %4070 = vmatpush.bf16.msra.mxu0 %v4053
        %4071 = vmatpush.bf16.msra.mxu0 %v4052
        %4072 = vmatpush.bf16.msra.mxu0 %v4051
        %4073 = vmatpush.bf16.msra.mxu0 %v4050
        %4074 = vmatmul.bf16.gmra.mxu0 %v3470
        %v4075 = vpop.f32.mrf.mxu0
        %v4076 = vadd.f32 %v3694, %v4075
        %v4077 = vpop.f32.mrf.mxu0
        %4078 = vdwg.mxu0
        %v4095 = vunpack.c.l.b16 %v3568
        %v4096 = vunpack.c.l.b16 %v3569
        %v4097 = vunpack.c.l.b16 %v3570
        %v4098 = vunpack.c.l.b16 %v3571
        %v4099 = vunpack.c.l.b16 %v3572
        %v4100 = vunpack.c.l.b16 %v3573
        %v4101 = vunpack.c.l.b16 %v3574
        %v4102 = vunpack.c.l.b16 %v3575
        %v4103 = vunpack.c.l.b16 %v3576
        %v4104 = vunpack.c.l.b16 %v3577
        %v4105 = vunpack.c.l.b16 %v3578
        %v4106 = vunpack.c.l.b16 %v3579
        %v4107 = vunpack.c.l.b16 %v3580
        %v4108 = vunpack.c.l.b16 %v3581
        %v4109 = vunpack.c.l.b16 %v3582
        %v4110 = vunpack.c.l.b16 %v3583
        %v4111 = vpack.c.b16 %v4096, %v4095
        %v4112 = vpack.c.b16 %v4098, %v4097
        %v4113 = vpack.c.b16 %v4100, %v4099
        %v4114 = vpack.c.b16 %v4102, %v4101
        %v4115 = vpack.c.b16 %v4104, %v4103
        %v4116 = vpack.c.b16 %v4106, %v4105
        %v4117 = vpack.c.b16 %v4108, %v4107
        %v4118 = vpack.c.b16 %v4110, %v4109
        %4127 = vmatpush.bf16.msra.mxu0 %v4118
        %4128 = vmatpush.bf16.msra.mxu0 %v4117
        %4129 = vmatpush.bf16.msra.mxu0 %v4116
        %4130 = vmatpush.bf16.msra.mxu0 %v4115
        %4131 = vmatpush.bf16.msra.mxu0 %v4114
        %4132 = vmatpush.bf16.msra.mxu0 %v4113
        %4133 = vmatpush.bf16.msra.mxu0 %v4112
        %4134 = vmatpush.bf16.msra.mxu0 %v4111
        %4135 = vmatmul.bf16.gmra.mxu0 %v3470
        %v4136 = vpop.f32.mrf.mxu0
        %v4137 = vadd.f32 %v3695, %v4136
        %v4138 = vpop.f32.mrf.mxu0
        %4139 = vdwg.mxu0
        %v4156 = vunpack.c.l.b16 %v3584
        %v4157 = vunpack.c.l.b16 %v3585
        %v4158 = vunpack.c.l.b16 %v3586
        %v4159 = vunpack.c.l.b16 %v3587
        %v4160 = vunpack.c.l.b16 %v3588
        %v4161 = vunpack.c.l.b16 %v3589
        %v4162 = vunpack.c.l.b16 %v3590
        %v4163 = vunpack.c.l.b16 %v3591
        %v4164 = vunpack.c.l.b16 %v3592
        %v4165 = vunpack.c.l.b16 %v3593
        %v4166 = vunpack.c.l.b16 %v3594
        %v4167 = vunpack.c.l.b16 %v3595
        %v4168 = vunpack.c.l.b16 %v3596
        %v4169 = vunpack.c.l.b16 %v3597
        %v4170 = vunpack.c.l.b16 %v3598
        %v4171 = vunpack.c.l.b16 %v3599
        %v4172 = vpack.c.b16 %v4157, %v4156
        %v4173 = vpack.c.b16 %v4159, %v4158
        %v4174 = vpack.c.b16 %v4161, %v4160
        %v4175 = vpack.c.b16 %v4163, %v4162
        %v4176 = vpack.c.b16 %v4165, %v4164
        %v4177 = vpack.c.b16 %v4167, %v4166
        %v4178 = vpack.c.b16 %v4169, %v4168
        %v4179 = vpack.c.b16 %v4171, %v4170
        %4188 = vmatpush.bf16.msra.mxu0 %v4179
        %4189 = vmatpush.bf16.msra.mxu0 %v4178
        %4190 = vmatpush.bf16.msra.mxu0 %v4177
        %4191 = vmatpush.bf16.msra.mxu0 %v4176
        %4192 = vmatpush.bf16.msra.mxu0 %v4175
        %4193 = vmatpush.bf16.msra.mxu0 %v4174
        %4194 = vmatpush.bf16.msra.mxu0 %v4173
        %4195 = vmatpush.bf16.msra.mxu0 %v4172
        %4196 = vmatmul.bf16.gmra.mxu0 %v3470
        %v4197 = vpop.f32.mrf.mxu0
        %v4198 = vadd.f32 %v3696, %v4197
        %v4199 = vpop.f32.mrf.mxu0
        %4200 = vdwg.mxu0
        %v4217 = vunpack.c.l.b16 %v3600
        %v4218 = vunpack.c.l.b16 %v3601
        %v4219 = vunpack.c.l.b16 %v3602
        %v4220 = vunpack.c.l.b16 %v3603
        %v4221 = vunpack.c.l.b16 %v3604
        %v4222 = vunpack.c.l.b16 %v3605
        %v4223 = vunpack.c.l.b16 %v3606
        %v4224 = vunpack.c.l.b16 %v3607
        %v4225 = vunpack.c.l.b16 %v3608
        %v4226 = vunpack.c.l.b16 %v3609
        %v4227 = vunpack.c.l.b16 %v3610
        %v4228 = vunpack.c.l.b16 %v3611
        %v4229 = vunpack.c.l.b16 %v3612
        %v4230 = vunpack.c.l.b16 %v3613
        %v4231 = vunpack.c.l.b16 %v3614
        %v4232 = vunpack.c.l.b16 %v3615
        %v4233 = vpack.c.b16 %v4218, %v4217
        %v4234 = vpack.c.b16 %v4220, %v4219
        %v4235 = vpack.c.b16 %v4222, %v4221
        %v4236 = vpack.c.b16 %v4224, %v4223
        %v4237 = vpack.c.b16 %v4226, %v4225
        %v4238 = vpack.c.b16 %v4228, %v4227
        %v4239 = vpack.c.b16 %v4230, %v4229
        %v4240 = vpack.c.b16 %v4232, %v4231
        %4249 = vmatpush.bf16.msra.mxu0 %v4240
        %4250 = vmatpush.bf16.msra.mxu0 %v4239
        %4251 = vmatpush.bf16.msra.mxu0 %v4238
        %4252 = vmatpush.bf16.msra.mxu0 %v4237
        %4253 = vmatpush.bf16.msra.mxu0 %v4236
        %4254 = vmatpush.bf16.msra.mxu0 %v4235
        %4255 = vmatpush.bf16.msra.mxu0 %v4234
        %4256 = vmatpush.bf16.msra.mxu0 %v4233
        %4257 = vmatmul.bf16.gmra.mxu0 %v3470
        %v4258 = vpop.f32.mrf.mxu0
        %v4259 = vadd.f32 %v3697, %v4258
        %v4260 = vpop.f32.mrf.mxu0
        %4261 = vdwg.mxu0
        %v4278 = vunpack.c.l.b16 %v3616
        %v4279 = vunpack.c.l.b16 %v3617
        %v4280 = vunpack.c.l.b16 %v3618
        %v4281 = vunpack.c.l.b16 %v3619
        %v4282 = vunpack.c.l.b16 %v3620
        %v4283 = vunpack.c.l.b16 %v3621
        %v4284 = vunpack.c.l.b16 %v3622
        %v4285 = vunpack.c.l.b16 %v3623
        %v4286 = vunpack.c.l.b16 %v3624
        %v4287 = vunpack.c.l.b16 %v3625
        %v4288 = vunpack.c.l.b16 %v3626
        %v4289 = vunpack.c.l.b16 %v3627
        %v4290 = vunpack.c.l.b16 %v3628
        %v4291 = vunpack.c.l.b16 %v3629
        %v4292 = vunpack.c.l.b16 %v3630
        %v4293 = vunpack.c.l.b16 %v3631
        %v4294 = vpack.c.b16 %v4279, %v4278
        %v4295 = vpack.c.b16 %v4281, %v4280
        %v4296 = vpack.c.b16 %v4283, %v4282
        %v4297 = vpack.c.b16 %v4285, %v4284
        %v4298 = vpack.c.b16 %v4287, %v4286
        %v4299 = vpack.c.b16 %v4289, %v4288
        %v4300 = vpack.c.b16 %v4291, %v4290
        %v4301 = vpack.c.b16 %v4293, %v4292
        %4310 = vmatpush.bf16.msra.mxu0 %v4301
        %4311 = vmatpush.bf16.msra.mxu0 %v4300
        %4312 = vmatpush.bf16.msra.mxu0 %v4299
        %4313 = vmatpush.bf16.msra.mxu0 %v4298
        %4314 = vmatpush.bf16.msra.mxu0 %v4297
        %4315 = vmatpush.bf16.msra.mxu0 %v4296
        %4316 = vmatpush.bf16.msra.mxu0 %v4295
        %4317 = vmatpush.bf16.msra.mxu0 %v4294
        %4318 = vmatmul.bf16.gmra.mxu0 %v3470
        %v4319 = vpop.f32.mrf.mxu0
        %v4320 = vadd.f32 %v3698, %v4319
        %v4321 = vpop.f32.mrf.mxu0
        %4322 = vdwg.mxu0
        %v4339 = vunpack.c.l.b16 %v3632
        %v4340 = vunpack.c.l.b16 %v3633
        %v4341 = vunpack.c.l.b16 %v3634
        %v4342 = vunpack.c.l.b16 %v3635
        %v4343 = vunpack.c.l.b16 %v3636
        %v4344 = vunpack.c.l.b16 %v3637
        %v4345 = vunpack.c.l.b16 %v3638
        %v4346 = vunpack.c.l.b16 %v3639
        %v4347 = vunpack.c.l.b16 %v3640
        %v4348 = vunpack.c.l.b16 %v3641
        %v4349 = vunpack.c.l.b16 %v3642
        %v4350 = vunpack.c.l.b16 %v3643
        %v4351 = vunpack.c.l.b16 %v3644
        %v4352 = vunpack.c.l.b16 %v3645
        %v4353 = vunpack.c.l.b16 %v3646
        %v4354 = vunpack.c.l.b16 %v3647
        %v4355 = vpack.c.b16 %v4340, %v4339
        %v4356 = vpack.c.b16 %v4342, %v4341
        %v4357 = vpack.c.b16 %v4344, %v4343
        %v4358 = vpack.c.b16 %v4346, %v4345
        %v4359 = vpack.c.b16 %v4348, %v4347
        %v4360 = vpack.c.b16 %v4350, %v4349
        %v4361 = vpack.c.b16 %v4352, %v4351
        %v4362 = vpack.c.b16 %v4354, %v4353
        %4371 = vmatpush.bf16.msra.mxu0 %v4362
        %4372 = vmatpush.bf16.msra.mxu0 %v4361
        %4373 = vmatpush.bf16.msra.mxu0 %v4360
        %4374 = vmatpush.bf16.msra.mxu0 %v4359
        %4375 = vmatpush.bf16.msra.mxu0 %v4358
        %4376 = vmatpush.bf16.msra.mxu0 %v4357
        %4377 = vmatpush.bf16.msra.mxu0 %v4356
        %4378 = vmatpush.bf16.msra.mxu0 %v4355
        %4379 = vmatmul.bf16.gmra.mxu0 %v3470
        %v4380 = vpop.f32.mrf.mxu0
        %v4381 = vadd.f32 %v3699, %v4380
        %v4382 = vpop.f32.mrf.mxu0
        %4383 = vdwg.mxu0
        %v4400 = vunpack.c.l.b16 %v3648
        %v4401 = vunpack.c.l.b16 %v3649
        %v4402 = vunpack.c.l.b16 %v3650
        %v4403 = vunpack.c.l.b16 %v3651
        %v4404 = vunpack.c.l.b16 %v3652
        %v4405 = vunpack.c.l.b16 %v3653
        %v4406 = vunpack.c.l.b16 %v3654
        %v4407 = vunpack.c.l.b16 %v3655
        %v4408 = vunpack.c.l.b16 %v3656
        %v4409 = vunpack.c.l.b16 %v3657
        %v4410 = vunpack.c.l.b16 %v3658
        %v4411 = vunpack.c.l.b16 %v3659
        %v4412 = vunpack.c.l.b16 %v3660
        %v4413 = vunpack.c.l.b16 %v3661
        %v4414 = vunpack.c.l.b16 %v3662
        %v4415 = vunpack.c.l.b16 %v3663
        %v4416 = vpack.c.b16 %v4401, %v4400
        %v4417 = vpack.c.b16 %v4403, %v4402
        %v4418 = vpack.c.b16 %v4405, %v4404
        %v4419 = vpack.c.b16 %v4407, %v4406
        %v4420 = vpack.c.b16 %v4409, %v4408
        %v4421 = vpack.c.b16 %v4411, %v4410
        %v4422 = vpack.c.b16 %v4413, %v4412
        %v4423 = vpack.c.b16 %v4415, %v4414
        %4432 = vmatpush.bf16.msra.mxu0 %v4423
        %4433 = vmatpush.bf16.msra.mxu0 %v4422
        %4434 = vmatpush.bf16.msra.mxu0 %v4421
        %4435 = vmatpush.bf16.msra.mxu0 %v4420
        %4436 = vmatpush.bf16.msra.mxu0 %v4419
        %4437 = vmatpush.bf16.msra.mxu0 %v4418
        %4438 = vmatpush.bf16.msra.mxu0 %v4417
        %4439 = vmatpush.bf16.msra.mxu0 %v4416
        %4440 = vmatmul.bf16.gmra.mxu0 %v3470
        %v4441 = vpop.f32.mrf.mxu0
        %v4442 = vadd.f32 %v3700, %v4441
        %v4443 = vpop.f32.mrf.mxu0
        %4444 = vdwg.mxu0
        %v4445 = vpack.c.bf16 %v3771, %v3771
        %v4446 = vpack.c.bf16 %v3832, %v3832
        %v4447 = vpack.c.bf16 %v3893, %v3893
        %v4448 = vpack.c.bf16 %v3954, %v3954
        %v4449 = vpack.c.bf16 %v4015, %v4015
        %v4450 = vpack.c.bf16 %v4076, %v4076
        %v4451 = vpack.c.bf16 %v4137, %v4137
        %v4452 = vpack.c.bf16 %v4198, %v4198
        %v4453 = vpack.c.bf16 %v4259, %v4259
        %v4454 = vpack.c.bf16 %v4320, %v4320
        %v4455 = vpack.c.bf16 %v4381, %v4381
        %v4456 = vpack.c.bf16 %v4442, %v4442
        %v4458 = vsel %vm2392, %v4445, 0
        %v4461 = vsel %vm2392, %v4449, 0
        %4463 = vmatpush.bf16.xpose.msra.mxu0 0
        %4464 = vmatpush.bf16.xpose.msra.mxu0 0
        %4465 = vmatpush.bf16.xpose.msra.mxu0 0
        %4466 = vmatpush.bf16.xpose.msra.mxu0 0
        %4467 = vmatpush.bf16.xpose.msra.mxu0 0
        %4468 = vmatpush.bf16.xpose.msra.mxu0 0
        %4469 = vmatpush.bf16.xpose.msra.mxu0 0
        %4470 = vmatpush.bf16.xpose.msra.mxu0 %v4461
        %4471 = vmatmul.bf16.gmra.mxu0 %v4458
        %v4472 = vpop.f32.mrf.mxu0
        %v4473 = vadd.f32 0.0, %v4472
        %v4474 = vpop.f32.mrf.mxu0
        %4475 = vdwg.mxu0
        %v4477 = vsel %vm2392, %v4446, 0
        %v4480 = vsel %vm2392, %v4450, 0
        %4482 = vmatpush.bf16.xpose.msra.mxu0 0
        %4483 = vmatpush.bf16.xpose.msra.mxu0 0
        %4484 = vmatpush.bf16.xpose.msra.mxu0 0
        %4485 = vmatpush.bf16.xpose.msra.mxu0 0
        %4486 = vmatpush.bf16.xpose.msra.mxu0 0
        %4487 = vmatpush.bf16.xpose.msra.mxu0 0
        %4488 = vmatpush.bf16.xpose.msra.mxu0 0
        %4489 = vmatpush.bf16.xpose.msra.mxu0 %v4480
        %4490 = vmatmul.bf16.gmra.mxu0 %v4477
        %v4491 = vpop.f32.mrf.mxu0
        %v4492 = vadd.f32 0.0, %v4491
        %v4493 = vpop.f32.mrf.mxu0
        %4494 = vdwg.mxu0
        %v4496 = vsel %vm2392, %v4447, 0
        %v4499 = vsel %vm2392, %v4451, 0
        %4501 = vmatpush.bf16.xpose.msra.mxu0 0
        %4502 = vmatpush.bf16.xpose.msra.mxu0 0
        %4503 = vmatpush.bf16.xpose.msra.mxu0 0
        %4504 = vmatpush.bf16.xpose.msra.mxu0 0
        %4505 = vmatpush.bf16.xpose.msra.mxu0 0
        %4506 = vmatpush.bf16.xpose.msra.mxu0 0
        %4507 = vmatpush.bf16.xpose.msra.mxu0 0
        %4508 = vmatpush.bf16.xpose.msra.mxu0 %v4499
        %4509 = vmatmul.bf16.gmra.mxu0 %v4496
        %v4510 = vpop.f32.mrf.mxu0
        %v4511 = vadd.f32 0.0, %v4510
        %v4512 = vpop.f32.mrf.mxu0
        %4513 = vdwg.mxu0
        %v4515 = vsel %vm2392, %v4448, 0
        %v4518 = vsel %vm2392, %v4452, 0
        %4520 = vmatpush.bf16.xpose.msra.mxu0 0
        %4521 = vmatpush.bf16.xpose.msra.mxu0 0
        %4522 = vmatpush.bf16.xpose.msra.mxu0 0
        %4523 = vmatpush.bf16.xpose.msra.mxu0 0
        %4524 = vmatpush.bf16.xpose.msra.mxu0 0
        %4525 = vmatpush.bf16.xpose.msra.mxu0 0
        %4526 = vmatpush.bf16.xpose.msra.mxu0 0
        %4527 = vmatpush.bf16.xpose.msra.mxu0 %v4518
        %4528 = vmatmul.bf16.gmra.mxu0 %v4515
        %v4529 = vpop.f32.mrf.mxu0
        %v4530 = vadd.f32 0.0, %v4529
        %v4531 = vpop.f32.mrf.mxu0
        %4532 = vdwg.mxu0
        %v4533 = vmul.f32 %v4473, 0.17677669
        %v4534 = vmul.f32 %v4492, 0.17677669
        %v4535 = vmul.f32 %v4511, 0.17677669
        %v4536 = vmul.f32 %v4530, 0.17677669
        %v4537 = vsel %vm2473, %v4533, -inf
        %4538 = vmax.xlane.f32.xlu0 %v4537
        %v4539 = vpop.xlane.xlu0 %4538
        %v4540 = vsel %vm2473, %v4534, -inf
        %4541 = vmax.xlane.f32.xlu0 %v4540
        %v4542 = vpop.xlane.xlu0 %4541
        %v4543 = vsel %vm2473, %v4535, -inf
        %4544 = vmax.xlane.f32.xlu0 %v4543
        %v4545 = vpop.xlane.xlu0 %4544
        %v4546 = vsel %vm2473, %v4536, -inf
        %4547 = vmax.xlane.f32.xlu0 %v4546
        %v4548 = vpop.xlane.xlu0 %4547
        %v4549 = vsub.f32 %v4533, %v4539
        %v4550 = vsub.f32 %v4534, %v4542
        %v4551 = vsub.f32 %v4535, %v4545
        %v4552 = vsub.f32 %v4536, %v4548
        %v4553 = vmul.f32 %v4549, 1.442695
        %v4554 = vpow.pop %v4553
        %v4555 = vmul.f32 %v4550, 1.442695
        %v4556 = vpow.pop %v4555
        %v4557 = vmul.f32 %v4551, 1.442695
        %v4558 = vpow.pop %v4557
        %v4559 = vmul.f32 %v4552, 1.442695
        %v4560 = vpow.pop %v4559
        %v4561 = vsel %vm2473, %v4554, 0.0
        %4562 = vadd.xlane.f32.xlu0 %v4561
        %v4563 = vpop.xlane.xlu0 %4562
        %v4564 = vsel %vm2473, %v4556, 0.0
        %4565 = vadd.xlane.f32.xlu0 %v4564
        %v4566 = vpop.xlane.xlu0 %4565
        %v4567 = vsel %vm2473, %v4558, 0.0
        %4568 = vadd.xlane.f32.xlu0 %v4567
        %v4569 = vpop.xlane.xlu0 %4568
        %v4570 = vsel %vm2473, %v4560, 0.0
        %4571 = vadd.xlane.f32.xlu0 %v4570
        %v4572 = vpop.xlane.xlu0 %4571
        %v4573 = vrcp.pop %v4563
        %v4574 = vrcp.pop %v4566
        %v4575 = vrcp.pop %v4569
        %v4576 = vrcp.pop %v4572
        %v4577 = vmul.f32 %v4554, %v4573
        %v4578 = vmul.f32 %v4556, %v4574
        %v4579 = vmul.f32 %v4558, %v4575
        %v4580 = vmul.f32 %v4560, %v4576
        %v4581 = vpack.c.bf16 %v4577, %v4577
        %v4582 = vpack.c.bf16 %v4578, %v4578
        %v4583 = vpack.c.bf16 %v4579, %v4579
        %v4584 = vpack.c.bf16 %v4580, %v4580
        %v4586 = vsel %vm2522, %v4581, 0
        %v4589 = vand.u32 %v4453, %v2529
        %4591 = vmatpush.bf16.msra.mxu0 0
        %4592 = vmatpush.bf16.msra.mxu0 0
        %4593 = vmatpush.bf16.msra.mxu0 0
        %4594 = vmatpush.bf16.msra.mxu0 0
        %4595 = vmatpush.bf16.msra.mxu0 0
        %4596 = vmatpush.bf16.msra.mxu0 0
        %4597 = vmatpush.bf16.msra.mxu0 0
        %4598 = vmatpush.bf16.msra.mxu0 %v4589
        %4599 = vmatmul.bf16.gmra.mxu0 %v4586
        %v4600 = vpop.f32.mrf.mxu0
        %v4601 = vadd.f32 0.0, %v4600
        %v4602 = vpop.f32.mrf.mxu0
        %4603 = vdwg.mxu0
        %v4605 = vsel %vm2522, %v4582, 0
        %v4608 = vand.u32 %v4454, %v2529
        %4610 = vmatpush.bf16.msra.mxu0 0
        %4611 = vmatpush.bf16.msra.mxu0 0
        %4612 = vmatpush.bf16.msra.mxu0 0
        %4613 = vmatpush.bf16.msra.mxu0 0
        %4614 = vmatpush.bf16.msra.mxu0 0
        %4615 = vmatpush.bf16.msra.mxu0 0
        %4616 = vmatpush.bf16.msra.mxu0 0
        %4617 = vmatpush.bf16.msra.mxu0 %v4608
        %4618 = vmatmul.bf16.gmra.mxu0 %v4605
        %v4619 = vpop.f32.mrf.mxu0
        %v4620 = vadd.f32 0.0, %v4619
        %v4621 = vpop.f32.mrf.mxu0
        %4622 = vdwg.mxu0
        %v4624 = vsel %vm2522, %v4583, 0
        %v4627 = vand.u32 %v4455, %v2529
        %4629 = vmatpush.bf16.msra.mxu0 0
        %4630 = vmatpush.bf16.msra.mxu0 0
        %4631 = vmatpush.bf16.msra.mxu0 0
        %4632 = vmatpush.bf16.msra.mxu0 0
        %4633 = vmatpush.bf16.msra.mxu0 0
        %4634 = vmatpush.bf16.msra.mxu0 0
        %4635 = vmatpush.bf16.msra.mxu0 0
        %4636 = vmatpush.bf16.msra.mxu0 %v4627
        %4637 = vmatmul.bf16.gmra.mxu0 %v4624
        %v4638 = vpop.f32.mrf.mxu0
        %v4639 = vadd.f32 0.0, %v4638
        %v4640 = vpop.f32.mrf.mxu0
        %4641 = vdwg.mxu0
        %v4643 = vsel %vm2522, %v4584, 0
        %v4646 = vand.u32 %v4456, %v2529
        %4648 = vmatpush.bf16.msra.mxu0 0
        %4649 = vmatpush.bf16.msra.mxu0 0
        %4650 = vmatpush.bf16.msra.mxu0 0
        %4651 = vmatpush.bf16.msra.mxu0 0
        %4652 = vmatpush.bf16.msra.mxu0 0
        %4653 = vmatpush.bf16.msra.mxu0 0
        %4654 = vmatpush.bf16.msra.mxu0 0
        %4655 = vmatpush.bf16.msra.mxu0 %v4646
        %4656 = vmatmul.bf16.gmra.mxu0 %v4643
        %v4657 = vpop.f32.mrf.mxu0
        %v4658 = vadd.f32 0.0, %v4657
        %v4659 = vpop.f32.mrf.mxu0
        %4660 = vdwg.mxu0
        %v4661 = vpack.c.bf16 %v4601, %v4601
        %v4662 = vpack.c.bf16 %v4620, %v4620
        %v4663 = vpack.c.bf16 %v4639, %v4639
        %v4664 = vpack.c.bf16 %v4658, %v4658
        %s4665 = scalar_lea.vmem %s27, 64
        %v4666 = vld [vmem:[%s4665] sm:$0xf]
        %v4667 = vld [vmem:[%s4665 + $0x4] sm:$0xf]
        %v4668 = vld [vmem:[%s4665 + $0x8] sm:$0xf]
        %v4669 = vld [vmem:[%s4665 + $0xc] sm:$0xf]
        %v4670 = vld [vmem:[%s4665 + $0x10] sm:$0xf]
        %v4671 = vld [vmem:[%s4665 + $0x14] sm:$0xf]
        %v4672 = vld [vmem:[%s4665 + $0x18] sm:$0xf]
        %v4673 = vld [vmem:[%s4665 + $0x1c] sm:$0xf]
        %v4674 = vld [vmem:[%s4665 + $0x20] sm:$0xf]
        %v4675 = vld [vmem:[%s4665 + $0x24] sm:$0xf]
        %v4676 = vld [vmem:[%s4665 + $0x28] sm:$0xf]
        %v4677 = vld [vmem:[%s4665 + $0x2c] sm:$0xf]
        %v4678 = vld [vmem:[%s4665 + $0x30] sm:$0xf]
        %v4679 = vld [vmem:[%s4665 + $0x34] sm:$0xf]
        %v4680 = vld [vmem:[%s4665 + $0x38] sm:$0xf]
        %v4681 = vld [vmem:[%s4665 + $0x3c] sm:$0xf]
        %v4686 = vunpack.c.l.b16 %v4666
        %v4687 = vunpack.c.l.b16 %v4667
        %v4688 = vunpack.c.l.b16 %v4668
        %v4689 = vunpack.c.l.b16 %v4669
        %v4690 = vpack.c.b16 %v4687, %v4686
        %v4691 = vpack.c.b16 %v4689, %v4688
        %v4695 = vsel %vm2392, %v4661, 0
        %4697 = vmatpush.bf16.msra.mxu0 0
        %4698 = vmatpush.bf16.msra.mxu0 0
        %4699 = vmatpush.bf16.msra.mxu0 0
        %4700 = vmatpush.bf16.msra.mxu0 0
        %4701 = vmatpush.bf16.msra.mxu0 0
        %4702 = vmatpush.bf16.msra.mxu0 0
        %4703 = vmatpush.bf16.msra.mxu0 %v4691
        %4704 = vmatpush.bf16.msra.mxu0 %v4690
        %4705 = vmatmul.bf16.gmra.mxu0 %v4695
        %v4706 = vpop.f32.mrf.mxu0
        %v4707 = vadd.f32 0.0, %v4706
        %v4708 = vpop.f32.mrf.mxu0
        %4709 = vdwg.mxu0
        %v4714 = vunpack.c.l.b16 %v4670
        %v4715 = vunpack.c.l.b16 %v4671
        %v4716 = vunpack.c.l.b16 %v4672
        %v4717 = vunpack.c.l.b16 %v4673
        %v4718 = vpack.c.b16 %v4715, %v4714
        %v4719 = vpack.c.b16 %v4717, %v4716
        %v4723 = vsel %vm2392, %v4662, 0
        %4725 = vmatpush.bf16.msra.mxu0 0
        %4726 = vmatpush.bf16.msra.mxu0 0
        %4727 = vmatpush.bf16.msra.mxu0 0
        %4728 = vmatpush.bf16.msra.mxu0 0
        %4729 = vmatpush.bf16.msra.mxu0 0
        %4730 = vmatpush.bf16.msra.mxu0 0
        %4731 = vmatpush.bf16.msra.mxu0 %v4719
        %4732 = vmatpush.bf16.msra.mxu0 %v4718
        %4733 = vmatmul.bf16.gmra.mxu0 %v4723
        %v4734 = vpop.f32.mrf.mxu0
        %v4735 = vadd.f32 0.0, %v4734
        %v4736 = vpop.f32.mrf.mxu0
        %4737 = vdwg.mxu0
        %v4742 = vunpack.c.l.b16 %v4674
        %v4743 = vunpack.c.l.b16 %v4675
        %v4744 = vunpack.c.l.b16 %v4676
        %v4745 = vunpack.c.l.b16 %v4677
        %v4746 = vpack.c.b16 %v4743, %v4742
        %v4747 = vpack.c.b16 %v4745, %v4744
        %v4751 = vsel %vm2392, %v4663, 0
        %4753 = vmatpush.bf16.msra.mxu0 0
        %4754 = vmatpush.bf16.msra.mxu0 0
        %4755 = vmatpush.bf16.msra.mxu0 0
        %4756 = vmatpush.bf16.msra.mxu0 0
        %4757 = vmatpush.bf16.msra.mxu0 0
        %4758 = vmatpush.bf16.msra.mxu0 0
        %4759 = vmatpush.bf16.msra.mxu0 %v4747
        %4760 = vmatpush.bf16.msra.mxu0 %v4746
        %4761 = vmatmul.bf16.gmra.mxu0 %v4751
        %v4762 = vpop.f32.mrf.mxu0
        %v4763 = vadd.f32 0.0, %v4762
        %v4764 = vpop.f32.mrf.mxu0
        %4765 = vdwg.mxu0
        %v4770 = vunpack.c.l.b16 %v4678
        %v4771 = vunpack.c.l.b16 %v4679
        %v4772 = vunpack.c.l.b16 %v4680
        %v4773 = vunpack.c.l.b16 %v4681
        %v4774 = vpack.c.b16 %v4771, %v4770
        %v4775 = vpack.c.b16 %v4773, %v4772
        %v4779 = vsel %vm2392, %v4664, 0
        %4781 = vmatpush.bf16.msra.mxu0 0
        %4782 = vmatpush.bf16.msra.mxu0 0
        %4783 = vmatpush.bf16.msra.mxu0 0
        %4784 = vmatpush.bf16.msra.mxu0 0
        %4785 = vmatpush.bf16.msra.mxu0 0
        %4786 = vmatpush.bf16.msra.mxu0 0
        %4787 = vmatpush.bf16.msra.mxu0 %v4775
        %4788 = vmatpush.bf16.msra.mxu0 %v4774
        %4789 = vmatmul.bf16.gmra.mxu0 %v4779
        %v4790 = vpop.f32.mrf.mxu0
        %v4791 = vadd.f32 0.0, %v4790
        %v4792 = vpop.f32.mrf.mxu0
        %4793 = vdwg.mxu0
        %v4794 = vsel %vm1337, %v4707, 0.0
        %v4795 = vsel %vm1337, %v4735, 0.0
        %v4796 = vadd.f32 %v4794, %v4795
        %v4797 = vsel %vm1337, %v4763, 0.0
        %v4798 = vadd.f32 %v4796, %v4797
        %v4799 = vsel %vm1337, %v4791, 0.0
        %v4800 = vadd.f32 %v4798, %v4799
        %s4801 = scalar_lea.vmem %s29, 1
        %v4802 = vld [vmem:[%s4801] sm:$0x1]
        %v4804 = vperm.slane %v4802, 0
        %v4806 = vadd.f32 %v4800, %v4804
        %v4807 = vadd.f32 %v3435, %v4806
        %s4808 = scalar_lea.vmem %s19, 1
        %v4809 = vld [vmem:[%s4808] sm:$0x1]
        %s4810 = scalar_lea.vmem %s21, 1
        %v4811 = vld [vmem:[%s4810] sm:$0x1]
        %v4812 = vsel %vm1337, %v4807, 0.0
        %4813 = vadd.xlane.f32.xlu0 %v4812
        %v4814 = vpop.xlane.xlu0 %4813
        %v4815 = vmul.f32 %v4814, %v1347
        %v4816 = vsub.f32 %v4807, %v4815
        %v4817 = vmul.f32 %v4816, %v4816
        %v4818 = vsel %vm1337, %v4817, 0.0
        %4819 = vadd.xlane.f32.xlu0 %v4818
        %v4820 = vpop.xlane.xlu0 %4819
        %v4821 = vmul.f32 %v4820, %v1347
        %v4822 = vadd.f32 %v4821, 1e-05
        %v4823 = vrsqrt.pop %v4822
        %v4824 = vmul.f32 %v4823, %v4822
        %v4825 = vmul.f32 %v4824, %v4823
        %v4826 = vmul.f32 0.5, %v4825
        %v4827 = vsub.f32 1.5, %v4826
        %v4828 = vmul.f32 %v4823, %v4827
        %vm4829 = vweird.f32 %v4822
        %vm4830 = vweird.f32 %v4823
        %vm4831 = vmor %vm4829, %vm4830
        %v4832 = vsel %vm4831, %v4823, %v4828
        %v4833 = vmul.f32 %v4816, %v4832
        %v4835 = vperm.slane %v4809, 0
        %v4837 = vmul.f32 %v4833, %v4835
        %v4839 = vperm.slane %v4811, 0
        %v4841 = vadd.f32 %v4837, %v4839
        %s4842 = scalar_lea.vmem %s31, 256
        %v4843 = vld [vmem:[%s4842] sm:$0xff]
        %v4844 = vld [vmem:[%s4842 + $0x8] sm:$0xff]
        %v4845 = vld [vmem:[%s4842 + $0x10] sm:$0xff]
        %v4846 = vld [vmem:[%s4842 + $0x18] sm:$0xff]
        %v4847 = vld [vmem:[%s4842 + $0x20] sm:$0xff]
        %v4848 = vld [vmem:[%s4842 + $0x28] sm:$0xff]
        %v4849 = vld [vmem:[%s4842 + $0x30] sm:$0xff]
        %v4850 = vld [vmem:[%s4842 + $0x38] sm:$0xff]
        %v4851 = vld [vmem:[%s4842 + $0x40] sm:$0xff]
        %v4852 = vld [vmem:[%s4842 + $0x48] sm:$0xff]
        %v4853 = vld [vmem:[%s4842 + $0x50] sm:$0xff]
        %v4854 = vld [vmem:[%s4842 + $0x58] sm:$0xff]
        %v4855 = vld [vmem:[%s4842 + $0x60] sm:$0xff]
        %v4856 = vld [vmem:[%s4842 + $0x68] sm:$0xff]
        %v4857 = vld [vmem:[%s4842 + $0x70] sm:$0xff]
        %v4858 = vld [vmem:[%s4842 + $0x78] sm:$0xff]
        %v4859 = vld [vmem:[%s4842 + $0x80] sm:$0xff]
        %v4860 = vld [vmem:[%s4842 + $0x88] sm:$0xff]
        %v4861 = vld [vmem:[%s4842 + $0x90] sm:$0xff]
        %v4862 = vld [vmem:[%s4842 + $0x98] sm:$0xff]
        %v4863 = vld [vmem:[%s4842 + $0xa0] sm:$0xff]
        %v4864 = vld [vmem:[%s4842 + $0xa8] sm:$0xff]
        %v4865 = vld [vmem:[%s4842 + $0xb0] sm:$0xff]
        %v4866 = vld [vmem:[%s4842 + $0xb8] sm:$0xff]
        %v4867 = vld [vmem:[%s4842 + $0xc0] sm:$0xff]
        %v4868 = vld [vmem:[%s4842 + $0xc8] sm:$0xff]
        %v4869 = vld [vmem:[%s4842 + $0xd0] sm:$0xff]
        %v4870 = vld [vmem:[%s4842 + $0xd8] sm:$0xff]
        %v4871 = vld [vmem:[%s4842 + $0xe0] sm:$0xff]
        %v4872 = vld [vmem:[%s4842 + $0xe8] sm:$0xff]
        %v4873 = vld [vmem:[%s4842 + $0xf0] sm:$0xff]
        %v4874 = vld [vmem:[%s4842 + $0xf8] sm:$0xff]
        %s4875 = scalar_lea.vmem %s33, 4
        %v4876 = vld [vmem:[%s4875] sm:$0xf]
        %v4877 = vpack.c.bf16 %v4841, %v4841
        %v4879 = vperm.slane %v4876, 0
        %v4880 = vperm.slane %v4876, 1
        %v4881 = vperm.slane %v4876, 2
        %v4882 = vperm.slane %v4876, 3
        %v4919 = vunpack.c.l.b16 %v4843
        %v4920 = vunpack.c.h.b16 %v4843
        %v4921 = vunpack.c.l.b16 %v4844
        %v4922 = vunpack.c.h.b16 %v4844
        %v4923 = vunpack.c.l.b16 %v4845
        %v4924 = vunpack.c.h.b16 %v4845
        %v4925 = vunpack.c.l.b16 %v4846
        %v4926 = vunpack.c.h.b16 %v4846
        %v4927 = vunpack.c.l.b16 %v4847
        %v4928 = vunpack.c.h.b16 %v4847
        %v4929 = vunpack.c.l.b16 %v4848
        %v4930 = vunpack.c.h.b16 %v4848
        %v4931 = vunpack.c.l.b16 %v4849
        %v4932 = vunpack.c.h.b16 %v4849
        %v4933 = vunpack.c.l.b16 %v4850
        %v4934 = vunpack.c.h.b16 %v4850
        %v4935 = vunpack.c.l.b16 %v4851
        %v4936 = vunpack.c.h.b16 %v4851
        %v4937 = vunpack.c.l.b16 %v4852
        %v4938 = vunpack.c.h.b16 %v4852
        %v4939 = vunpack.c.l.b16 %v4853
        %v4940 = vunpack.c.h.b16 %v4853
        %v4941 = vunpack.c.l.b16 %v4854
        %v4942 = vunpack.c.h.b16 %v4854
        %v4943 = vunpack.c.l.b16 %v4855
        %v4944 = vunpack.c.h.b16 %v4855
        %v4945 = vunpack.c.l.b16 %v4856
        %v4946 = vunpack.c.h.b16 %v4856
        %v4947 = vunpack.c.l.b16 %v4857
        %v4948 = vunpack.c.h.b16 %v4857
        %v4949 = vunpack.c.l.b16 %v4858
        %v4950 = vunpack.c.h.b16 %v4858
        %v4951 = vunpack.c.l.b16 %v4859
        %v4952 = vunpack.c.h.b16 %v4859
        %v4953 = vunpack.c.l.b16 %v4860
        %v4954 = vunpack.c.h.b16 %v4860
        %v4955 = vunpack.c.l.b16 %v4861
        %v4956 = vunpack.c.h.b16 %v4861
        %v4957 = vunpack.c.l.b16 %v4862
        %v4958 = vunpack.c.h.b16 %v4862
        %v4959 = vunpack.c.l.b16 %v4863
        %v4960 = vunpack.c.h.b16 %v4863
        %v4961 = vunpack.c.l.b16 %v4864
        %v4962 = vunpack.c.h.b16 %v4864
        %v4963 = vunpack.c.l.b16 %v4865
        %v4964 = vunpack.c.h.b16 %v4865
        %v4965 = vunpack.c.l.b16 %v4866
        %v4966 = vunpack.c.h.b16 %v4866
        %v4967 = vunpack.c.l.b16 %v4867
        %v4968 = vunpack.c.h.b16 %v4867
        %v4969 = vunpack.c.l.b16 %v4868
        %v4970 = vunpack.c.h.b16 %v4868
        %v4971 = vunpack.c.l.b16 %v4869
        %v4972 = vunpack.c.h.b16 %v4869
        %v4973 = vunpack.c.l.b16 %v4870
        %v4974 = vunpack.c.h.b16 %v4870
        %v4975 = vunpack.c.l.b16 %v4871
        %v4976 = vunpack.c.h.b16 %v4871
        %v4977 = vunpack.c.l.b16 %v4872
        %v4978 = vunpack.c.h.b16 %v4872
        %v4979 = vunpack.c.l.b16 %v4873
        %v4980 = vunpack.c.h.b16 %v4873
        %v4981 = vunpack.c.l.b16 %v4874
        %v4982 = vunpack.c.h.b16 %v4874
        %v4983 = vpack.c.b16 %v4923, %v4919
        %v4984 = vpack.c.b16 %v4924, %v4920
        %v4985 = vpack.c.b16 %v4925, %v4921
        %v4986 = vpack.c.b16 %v4926, %v4922
        %v4987 = vpack.c.b16 %v4931, %v4927
        %v4988 = vpack.c.b16 %v4932, %v4928
        %v4989 = vpack.c.b16 %v4933, %v4929
        %v4990 = vpack.c.b16 %v4934, %v4930
        %v4991 = vpack.c.b16 %v4939, %v4935
        %v4992 = vpack.c.b16 %v4940, %v4936
        %v4993 = vpack.c.b16 %v4941, %v4937
        %v4994 = vpack.c.b16 %v4942, %v4938
        %v4995 = vpack.c.b16 %v4947, %v4943
        %v4996 = vpack.c.b16 %v4948, %v4944
        %v4997 = vpack.c.b16 %v4949, %v4945
        %v4998 = vpack.c.b16 %v4950, %v4946
        %v4999 = vpack.c.b16 %v4955, %v4951
        %v5000 = vpack.c.b16 %v4956, %v4952
        %v5001 = vpack.c.b16 %v4957, %v4953
        %v5002 = vpack.c.b16 %v4958, %v4954
        %v5003 = vpack.c.b16 %v4963, %v4959
        %v5004 = vpack.c.b16 %v4964, %v4960
        %v5005 = vpack.c.b16 %v4965, %v4961
        %v5006 = vpack.c.b16 %v4966, %v4962
        %v5007 = vpack.c.b16 %v4971, %v4967
        %v5008 = vpack.c.b16 %v4972, %v4968
        %v5009 = vpack.c.b16 %v4973, %v4969
        %v5010 = vpack.c.b16 %v4974, %v4970
        %v5011 = vpack.c.b16 %v4979, %v4975
        %v5012 = vpack.c.b16 %v4980, %v4976
        %v5013 = vpack.c.b16 %v4981, %v4977
        %v5014 = vpack.c.b16 %v4982, %v4978
        %5047 = vmatpush.bf16.msra.mxu0 %v5011
        %5048 = vmatpush.bf16.msra.mxu0 %v5007
        %5049 = vmatpush.bf16.msra.mxu0 %v5003
        %5050 = vmatpush.bf16.msra.mxu0 %v4999
        %5051 = vmatpush.bf16.msra.mxu0 %v4995
        %5052 = vmatpush.bf16.msra.mxu0 %v4991
        %5053 = vmatpush.bf16.msra.mxu0 %v4987
        %5054 = vmatpush.bf16.msra.mxu0 %v4983
        %5055 = vmatmul.bf16.gmra.mxu0 %v4877
        %v5056 = vpop.f32.mrf.mxu0
        %v5057 = vadd.f32 %v4879, %v5056
        %v5058 = vpop.f32.mrf.mxu0
        %5059 = vdwg.mxu0
        %5060 = vmatpush.bf16.msra.mxu0 %v5012
        %5061 = vmatpush.bf16.msra.mxu0 %v5008
        %5062 = vmatpush.bf16.msra.mxu0 %v5004
        %5063 = vmatpush.bf16.msra.mxu0 %v5000
        %5064 = vmatpush.bf16.msra.mxu0 %v4996
        %5065 = vmatpush.bf16.msra.mxu0 %v4992
        %5066 = vmatpush.bf16.msra.mxu0 %v4988
        %5067 = vmatpush.bf16.msra.mxu0 %v4984
        %5068 = vmatmul.bf16.gmra.mxu0 %v4877
        %v5069 = vpop.f32.mrf.mxu0
        %v5070 = vadd.f32 %v4880, %v5069
        %v5071 = vpop.f32.mrf.mxu0
        %5072 = vdwg.mxu0
        %5073 = vmatpush.bf16.msra.mxu0 %v5013
        %5074 = vmatpush.bf16.msra.mxu0 %v5009
        %5075 = vmatpush.bf16.msra.mxu0 %v5005
        %5076 = vmatpush.bf16.msra.mxu0 %v5001
        %5077 = vmatpush.bf16.msra.mxu0 %v4997
        %5078 = vmatpush.bf16.msra.mxu0 %v4993
        %5079 = vmatpush.bf16.msra.mxu0 %v4989
        %5080 = vmatpush.bf16.msra.mxu0 %v4985
        %5081 = vmatmul.bf16.gmra.mxu0 %v4877
        %v5082 = vpop.f32.mrf.mxu0
        %v5083 = vadd.f32 %v4881, %v5082
        %v5084 = vpop.f32.mrf.mxu0
        %5085 = vdwg.mxu0
        %5086 = vmatpush.bf16.msra.mxu0 %v5014
        %5087 = vmatpush.bf16.msra.mxu0 %v5010
        %5088 = vmatpush.bf16.msra.mxu0 %v5006
        %5089 = vmatpush.bf16.msra.mxu0 %v5002
        %5090 = vmatpush.bf16.msra.mxu0 %v4998
        %5091 = vmatpush.bf16.msra.mxu0 %v4994
        %5092 = vmatpush.bf16.msra.mxu0 %v4990
        %5093 = vmatpush.bf16.msra.mxu0 %v4986
        %5094 = vmatmul.bf16.gmra.mxu0 %v4877
        %v5095 = vpop.f32.mrf.mxu0
        %v5096 = vadd.f32 %v4882, %v5095
        %v5097 = vpop.f32.mrf.mxu0
        %5098 = vdwg.mxu0
        %v5099 = vmul.f32 %v5057, 1.702
        %v5100 = vmul.f32 %v5070, 1.702
        %v5101 = vmul.f32 %v5083, 1.702
        %v5102 = vmul.f32 %v5096, 1.702
        %v5103 = vxor.u32 %v5099, 2147483648
        %v5104 = vxor.u32 %v5100, 2147483648
        %v5105 = vxor.u32 %v5101, 2147483648
        %v5106 = vxor.u32 %v5102, 2147483648
        %v5107 = vmul.f32 %v5103, 1.442695
        %v5108 = vpow.pop %v5107
        %v5109 = vmul.f32 %v5104, 1.442695
        %v5110 = vpow.pop %v5109
        %v5111 = vmul.f32 %v5105, 1.442695
        %v5112 = vpow.pop %v5111
        %v5113 = vmul.f32 %v5106, 1.442695
        %v5114 = vpow.pop %v5113
        %v5115 = vadd.f32 %v5108, 1.0
        %v5116 = vadd.f32 %v5110, 1.0
        %v5117 = vadd.f32 %v5112, 1.0
        %v5118 = vadd.f32 %v5114, 1.0
        %v5119 = vrcp.pop %v5115
        %v5120 = vmul.f32 %v5115, %v5119
        %v5121 = vsub.f32 1.0, %v5120
        %v5122 = vmul.f32 %v5119, %v5121
        %v5123 = vadd.f32 %v5119, %v5122
        %vm5124 = vweird.f32 %v5115
        %vm5125 = vweird.f32 %v5119
        %vm5126 = vmor %vm5124, %vm5125
        %v5127 = vsel %vm5126, %v5119, %v5123
        %v5128 = vand.u32 2147483647, %v5115
        %vm5129 = vcmp.eq.f32.partialorder %v5128, 8.507059e+37
        %v5130 = vand.u32 %v5115, 2147483648
        %v5131 = vor.u32 1.1754944e-38, %v5130
        %v5132 = vsel %vm5129, %v5131, %v5127
        %v5133 = vmul.f32 1.0, %v5132
        %v5134 = vrcp.pop %v5116
        %v5135 = vmul.f32 %v5116, %v5134
        %v5136 = vsub.f32 1.0, %v5135
        %v5137 = vmul.f32 %v5134, %v5136
        %v5138 = vadd.f32 %v5134, %v5137
        %vm5139 = vweird.f32 %v5116
        %vm5140 = vweird.f32 %v5134
        %vm5141 = vmor %vm5139, %vm5140
        %v5142 = vsel %vm5141, %v5134, %v5138
        %v5143 = vand.u32 2147483647, %v5116
        %vm5144 = vcmp.eq.f32.partialorder %v5143, 8.507059e+37
        %v5145 = vand.u32 %v5116, 2147483648
        %v5146 = vor.u32 1.1754944e-38, %v5145
        %v5147 = vsel %vm5144, %v5146, %v5142
        %v5148 = vmul.f32 1.0, %v5147
        %v5149 = vrcp.pop %v5117
        %v5150 = vmul.f32 %v5117, %v5149
        %v5151 = vsub.f32 1.0, %v5150
        %v5152 = vmul.f32 %v5149, %v5151
        %v5153 = vadd.f32 %v5149, %v5152
        %vm5154 = vweird.f32 %v5117
        %vm5155 = vweird.f32 %v5149
        %vm5156 = vmor %vm5154, %vm5155
        %v5157 = vsel %vm5156, %v5149, %v5153
        %v5158 = vand.u32 2147483647, %v5117
        %vm5159 = vcmp.eq.f32.partialorder %v5158, 8.507059e+37
        %v5160 = vand.u32 %v5117, 2147483648
        %v5161 = vor.u32 1.1754944e-38, %v5160
        %v5162 = vsel %vm5159, %v5161, %v5157
        %v5163 = vmul.f32 1.0, %v5162
        %v5164 = vrcp.pop %v5118
        %v5165 = vmul.f32 %v5118, %v5164
        %v5166 = vsub.f32 1.0, %v5165
        %v5167 = vmul.f32 %v5164, %v5166
        %v5168 = vadd.f32 %v5164, %v5167
        %vm5169 = vweird.f32 %v5118
        %vm5170 = vweird.f32 %v5164
        %vm5171 = vmor %vm5169, %vm5170
        %v5172 = vsel %vm5171, %v5164, %v5168
        %v5173 = vand.u32 2147483647, %v5118
        %vm5174 = vcmp.eq.f32.partialorder %v5173, 8.507059e+37
        %v5175 = vand.u32 %v5118, 2147483648
        %v5176 = vor.u32 1.1754944e-38, %v5175
        %v5177 = vsel %vm5174, %v5176, %v5172
        %v5178 = vmul.f32 1.0, %v5177
        %v5179 = vmul.f32 %v5057, %v5133
        %v5180 = vmul.f32 %v5070, %v5148
        %v5181 = vmul.f32 %v5083, %v5163
        %v5182 = vmul.f32 %v5096, %v5178
        %s5183 = scalar_lea.vmem %s35, 256
        %v5184 = vld [vmem:[%s5183] sm:$0xf]
        %v5185 = vld [vmem:[%s5183 + $0x4] sm:$0xf]
        %v5186 = vld [vmem:[%s5183 + $0x8] sm:$0xf]
        %v5187 = vld [vmem:[%s5183 + $0xc] sm:$0xf]
        %v5188 = vld [vmem:[%s5183 + $0x10] sm:$0xf]
        %v5189 = vld [vmem:[%s5183 + $0x14] sm:$0xf]
        %v5190 = vld [vmem:[%s5183 + $0x18] sm:$0xf]
        %v5191 = vld [vmem:[%s5183 + $0x1c] sm:$0xf]
        %v5192 = vld [vmem:[%s5183 + $0x20] sm:$0xf]
        %v5193 = vld [vmem:[%s5183 + $0x24] sm:$0xf]
        %v5194 = vld [vmem:[%s5183 + $0x28] sm:$0xf]
        %v5195 = vld [vmem:[%s5183 + $0x2c] sm:$0xf]
        %v5196 = vld [vmem:[%s5183 + $0x30] sm:$0xf]
        %v5197 = vld [vmem:[%s5183 + $0x34] sm:$0xf]
        %v5198 = vld [vmem:[%s5183 + $0x38] sm:$0xf]
        %v5199 = vld [vmem:[%s5183 + $0x3c] sm:$0xf]
        %v5200 = vld [vmem:[%s5183 + $0x40] sm:$0xf]
        %v5201 = vld [vmem:[%s5183 + $0x44] sm:$0xf]
        %v5202 = vld [vmem:[%s5183 + $0x48] sm:$0xf]
        %v5203 = vld [vmem:[%s5183 + $0x4c] sm:$0xf]
        %v5204 = vld [vmem:[%s5183 + $0x50] sm:$0xf]
        %v5205 = vld [vmem:[%s5183 + $0x54] sm:$0xf]
        %v5206 = vld [vmem:[%s5183 + $0x58] sm:$0xf]
        %v5207 = vld [vmem:[%s5183 + $0x5c] sm:$0xf]
        %v5208 = vld [vmem:[%s5183 + $0x60] sm:$0xf]
        %v5209 = vld [vmem:[%s5183 + $0x64] sm:$0xf]
        %v5210 = vld [vmem:[%s5183 + $0x68] sm:$0xf]
        %v5211 = vld [vmem:[%s5183 + $0x6c] sm:$0xf]
        %v5212 = vld [vmem:[%s5183 + $0x70] sm:$0xf]
        %v5213 = vld [vmem:[%s5183 + $0x74] sm:$0xf]
        %v5214 = vld [vmem:[%s5183 + $0x78] sm:$0xf]
        %v5215 = vld [vmem:[%s5183 + $0x7c] sm:$0xf]
        %v5216 = vld [vmem:[%s5183 + $0x80] sm:$0xf]
        %v5217 = vld [vmem:[%s5183 + $0x84] sm:$0xf]
        %v5218 = vld [vmem:[%s5183 + $0x88] sm:$0xf]
        %v5219 = vld [vmem:[%s5183 + $0x8c] sm:$0xf]
        %v5220 = vld [vmem:[%s5183 + $0x90] sm:$0xf]
        %v5221 = vld [vmem:[%s5183 + $0x94] sm:$0xf]
        %v5222 = vld [vmem:[%s5183 + $0x98] sm:$0xf]
        %v5223 = vld [vmem:[%s5183 + $0x9c] sm:$0xf]
        %v5224 = vld [vmem:[%s5183 + $0xa0] sm:$0xf]
        %v5225 = vld [vmem:[%s5183 + $0xa4] sm:$0xf]
        %v5226 = vld [vmem:[%s5183 + $0xa8] sm:$0xf]
        %v5227 = vld [vmem:[%s5183 + $0xac] sm:$0xf]
        %v5228 = vld [vmem:[%s5183 + $0xb0] sm:$0xf]
        %v5229 = vld [vmem:[%s5183 + $0xb4] sm:$0xf]
        %v5230 = vld [vmem:[%s5183 + $0xb8] sm:$0xf]
        %v5231 = vld [vmem:[%s5183 + $0xbc] sm:$0xf]
        %v5232 = vld [vmem:[%s5183 + $0xc0] sm:$0xf]
        %v5233 = vld [vmem:[%s5183 + $0xc4] sm:$0xf]
        %v5234 = vld [vmem:[%s5183 + $0xc8] sm:$0xf]
        %v5235 = vld [vmem:[%s5183 + $0xcc] sm:$0xf]
        %v5236 = vld [vmem:[%s5183 + $0xd0] sm:$0xf]
        %v5237 = vld [vmem:[%s5183 + $0xd4] sm:$0xf]
        %v5238 = vld [vmem:[%s5183 + $0xd8] sm:$0xf]
        %v5239 = vld [vmem:[%s5183 + $0xdc] sm:$0xf]
        %v5240 = vld [vmem:[%s5183 + $0xe0] sm:$0xf]
        %v5241 = vld [vmem:[%s5183 + $0xe4] sm:$0xf]
        %v5242 = vld [vmem:[%s5183 + $0xe8] sm:$0xf]
        %v5243 = vld [vmem:[%s5183 + $0xec] sm:$0xf]
        %v5244 = vld [vmem:[%s5183 + $0xf0] sm:$0xf]
        %v5245 = vld [vmem:[%s5183 + $0xf4] sm:$0xf]
        %v5246 = vld [vmem:[%s5183 + $0xf8] sm:$0xf]
        %v5247 = vld [vmem:[%s5183 + $0xfc] sm:$0xf]
        %s5248 = scalar_lea.vmem %s37, 1
        %v5249 = vld [vmem:[%s5248] sm:$0x1]
        %v5250 = vpack.c.bf16 %v5179, %v5179
        %v5251 = vpack.c.bf16 %v5180, %v5180
        %v5252 = vpack.c.bf16 %v5181, %v5181
        %v5253 = vpack.c.bf16 %v5182, %v5182
        %v5255 = vperm.slane %v5249, 0
        %v5321 = vunpack.c.l.b16 %v5184
        %v5322 = vunpack.c.l.b16 %v5185
        %v5323 = vunpack.c.l.b16 %v5186
        %v5324 = vunpack.c.l.b16 %v5187
        %v5325 = vunpack.c.l.b16 %v5188
        %v5326 = vunpack.c.l.b16 %v5189
        %v5327 = vunpack.c.l.b16 %v5190
        %v5328 = vunpack.c.l.b16 %v5191
        %v5329 = vunpack.c.l.b16 %v5192
        %v5330 = vunpack.c.l.b16 %v5193
        %v5331 = vunpack.c.l.b16 %v5194
        %v5332 = vunpack.c.l.b16 %v5195
        %v5333 = vunpack.c.l.b16 %v5196
        %v5334 = vunpack.c.l.b16 %v5197
        %v5335 = vunpack.c.l.b16 %v5198
        %v5336 = vunpack.c.l.b16 %v5199
        %v5337 = vunpack.c.l.b16 %v5200
        %v5338 = vunpack.c.l.b16 %v5201
        %v5339 = vunpack.c.l.b16 %v5202
        %v5340 = vunpack.c.l.b16 %v5203
        %v5341 = vunpack.c.l.b16 %v5204
        %v5342 = vunpack.c.l.b16 %v5205
        %v5343 = vunpack.c.l.b16 %v5206
        %v5344 = vunpack.c.l.b16 %v5207
        %v5345 = vunpack.c.l.b16 %v5208
        %v5346 = vunpack.c.l.b16 %v5209
        %v5347 = vunpack.c.l.b16 %v5210
        %v5348 = vunpack.c.l.b16 %v5211
        %v5349 = vunpack.c.l.b16 %v5212
        %v5350 = vunpack.c.l.b16 %v5213
        %v5351 = vunpack.c.l.b16 %v5214
        %v5352 = vunpack.c.l.b16 %v5215
        %v5353 = vunpack.c.l.b16 %v5216
        %v5354 = vunpack.c.l.b16 %v5217
        %v5355 = vunpack.c.l.b16 %v5218
        %v5356 = vunpack.c.l.b16 %v5219
        %v5357 = vunpack.c.l.b16 %v5220
        %v5358 = vunpack.c.l.b16 %v5221
        %v5359 = vunpack.c.l.b16 %v5222
        %v5360 = vunpack.c.l.b16 %v5223
        %v5361 = vunpack.c.l.b16 %v5224
        %v5362 = vunpack.c.l.b16 %v5225
        %v5363 = vunpack.c.l.b16 %v5226
        %v5364 = vunpack.c.l.b16 %v5227
        %v5365 = vunpack.c.l.b16 %v5228
        %v5366 = vunpack.c.l.b16 %v5229
        %v5367 = vunpack.c.l.b16 %v5230
        %v5368 = vunpack.c.l.b16 %v5231
        %v5369 = vunpack.c.l.b16 %v5232
        %v5370 = vunpack.c.l.b16 %v5233
        %v5371 = vunpack.c.l.b16 %v5234
        %v5372 = vunpack.c.l.b16 %v5235
        %v5373 = vunpack.c.l.b16 %v5236
        %v5374 = vunpack.c.l.b16 %v5237
        %v5375 = vunpack.c.l.b16 %v5238
        %v5376 = vunpack.c.l.b16 %v5239
        %v5377 = vunpack.c.l.b16 %v5240
        %v5378 = vunpack.c.l.b16 %v5241
        %v5379 = vunpack.c.l.b16 %v5242
        %v5380 = vunpack.c.l.b16 %v5243
        %v5381 = vunpack.c.l.b16 %v5244
        %v5382 = vunpack.c.l.b16 %v5245
        %v5383 = vunpack.c.l.b16 %v5246
        %v5384 = vunpack.c.l.b16 %v5247
        %v5385 = vpack.c.b16 %v5322, %v5321
        %v5386 = vpack.c.b16 %v5324, %v5323
        %v5387 = vpack.c.b16 %v5326, %v5325
        %v5388 = vpack.c.b16 %v5328, %v5327
        %v5389 = vpack.c.b16 %v5330, %v5329
        %v5390 = vpack.c.b16 %v5332, %v5331
        %v5391 = vpack.c.b16 %v5334, %v5333
        %v5392 = vpack.c.b16 %v5336, %v5335
        %v5393 = vpack.c.b16 %v5338, %v5337
        %v5394 = vpack.c.b16 %v5340, %v5339
        %v5395 = vpack.c.b16 %v5342, %v5341
        %v5396 = vpack.c.b16 %v5344, %v5343
        %v5397 = vpack.c.b16 %v5346, %v5345
        %v5398 = vpack.c.b16 %v5348, %v5347
        %v5399 = vpack.c.b16 %v5350, %v5349
        %v5400 = vpack.c.b16 %v5352, %v5351
        %v5401 = vpack.c.b16 %v5354, %v5353
        %v5402 = vpack.c.b16 %v5356, %v5355
        %v5403 = vpack.c.b16 %v5358, %v5357
        %v5404 = vpack.c.b16 %v5360, %v5359
        %v5405 = vpack.c.b16 %v5362, %v5361
        %v5406 = vpack.c.b16 %v5364, %v5363
        %v5407 = vpack.c.b16 %v5366, %v5365
        %v5408 = vpack.c.b16 %v5368, %v5367
        %v5409 = vpack.c.b16 %v5370, %v5369
        %v5410 = vpack.c.b16 %v5372, %v5371
        %v5411 = vpack.c.b16 %v5374, %v5373
        %v5412 = vpack.c.b16 %v5376, %v5375
        %v5413 = vpack.c.b16 %v5378, %v5377
        %v5414 = vpack.c.b16 %v5380, %v5379
        %v5415 = vpack.c.b16 %v5382, %v5381
        %v5416 = vpack.c.b16 %v5384, %v5383
        %5449 = vmatpush.bf16.msra.mxu0 %v5392
        %5450 = vmatpush.bf16.msra.mxu0 %v5391
        %5451 = vmatpush.bf16.msra.mxu0 %v5390
        %5452 = vmatpush.bf16.msra.mxu0 %v5389
        %5453 = vmatpush.bf16.msra.mxu0 %v5388
        %5454 = vmatpush.bf16.msra.mxu0 %v5387
        %5455 = vmatpush.bf16.msra.mxu0 %v5386
        %5456 = vmatpush.bf16.msra.mxu0 %v5385
        %5457 = vmatmul.bf16.gmra.mxu0 %v5250
        %v5458 = vpop.f32.mrf.mxu0
        %v5459 = vadd.f32 %v5255, %v5458
        %v5460 = vpop.f32.mrf.mxu0
        %5461 = vdwg.mxu0
        %5462 = vmatpush.bf16.msra.mxu0 %v5400
        %5463 = vmatpush.bf16.msra.mxu0 %v5399
        %5464 = vmatpush.bf16.msra.mxu0 %v5398
        %5465 = vmatpush.bf16.msra.mxu0 %v5397
        %5466 = vmatpush.bf16.msra.mxu0 %v5396
        %5467 = vmatpush.bf16.msra.mxu0 %v5395
        %5468 = vmatpush.bf16.msra.mxu0 %v5394
        %5469 = vmatpush.bf16.msra.mxu0 %v5393
        %5470 = vmatmul.bf16.gmra.mxu0 %v5251
        %v5471 = vpop.f32.mrf.mxu0
        %v5472 = vadd.f32 %v5459, %v5471
        %v5473 = vpop.f32.mrf.mxu0
        %5474 = vdwg.mxu0
        %5475 = vmatpush.bf16.msra.mxu0 %v5408
        %5476 = vmatpush.bf16.msra.mxu0 %v5407
        %5477 = vmatpush.bf16.msra.mxu0 %v5406
        %5478 = vmatpush.bf16.msra.mxu0 %v5405
        %5479 = vmatpush.bf16.msra.mxu0 %v5404
        %5480 = vmatpush.bf16.msra.mxu0 %v5403
        %5481 = vmatpush.bf16.msra.mxu0 %v5402
        %5482 = vmatpush.bf16.msra.mxu0 %v5401
        %5483 = vmatmul.bf16.gmra.mxu0 %v5252
        %v5484 = vpop.f32.mrf.mxu0
        %v5485 = vadd.f32 %v5472, %v5484
        %v5486 = vpop.f32.mrf.mxu0
        %5487 = vdwg.mxu0
        %5488 = vmatpush.bf16.msra.mxu0 %v5416
        %5489 = vmatpush.bf16.msra.mxu0 %v5415
        %5490 = vmatpush.bf16.msra.mxu0 %v5414
        %5491 = vmatpush.bf16.msra.mxu0 %v5413
        %5492 = vmatpush.bf16.msra.mxu0 %v5412
        %5493 = vmatpush.bf16.msra.mxu0 %v5411
        %5494 = vmatpush.bf16.msra.mxu0 %v5410
        %5495 = vmatpush.bf16.msra.mxu0 %v5409
        %5496 = vmatmul.bf16.gmra.mxu0 %v5253
        %v5497 = vpop.f32.mrf.mxu0
        %v5498 = vadd.f32 %v5485, %v5497
        %v5499 = vpop.f32.mrf.mxu0
        %5500 = vdwg.mxu0
        %v5501 = vadd.f32 %v4807, %v5498
        %v5502 = vld [vmem:[%s11] sm:$0x1]
        %v5503 = vld [vmem:[%s13] sm:$0x1]
        %vm5504 = vcmask 1040384
        %v5505 = vsel %vm5504, %v5501, 0.0
        %5506 = vadd.xlane.f32.xlu0 %v5505
        %v5507 = vpop.xlane.xlu0 %5506
        %v5508 = vmul.f32 %v5507, %v1347
        %v5509 = vsub.f32 %v5501, %v5508
        %v5510 = vmul.f32 %v5509, %v5509
        %v5511 = vsel %vm5504, %v5510, 0.0
        %5512 = vadd.xlane.f32.xlu0 %v5511
        %v5513 = vpop.xlane.xlu0 %5512
        %v5514 = vmul.f32 %v5513, %v1347
        %v5515 = vadd.f32 %v5514, 1e-05
        %v5516 = vrsqrt.pop %v5515
        %v5517 = vmul.f32 %v5516, %v5515
        %v5518 = vmul.f32 %v5517, %v5516
        %v5519 = vmul.f32 0.5, %v5518
        %v5520 = vsub.f32 1.5, %v5519
        %v5521 = vmul.f32 %v5516, %v5520
        %vm5522 = vweird.f32 %v5515
        %vm5523 = vweird.f32 %v5516
        %vm5524 = vmor %vm5522, %vm5523
        %v5525 = vsel %vm5524, %v5516, %v5521
        %v5526 = vmul.f32 %v5509, %v5525
        %v5527 = vmul.f32 %v5526, %v5502
        %v5528 = vadd.f32 %v5527, %v5503
        %v5529 = vld [vmem:[%s39] sm:$0xf]
        %v5530 = vld [vmem:[%s39 + $0x4] sm:$0xf]
        %v5531 = vld [vmem:[%s39 + $0x8] sm:$0xf]
        %v5532 = vld [vmem:[%s39 + $0xc] sm:$0xf]
        %v5533 = vld [vmem:[%s39 + $0x10] sm:$0xf]
        %v5534 = vld [vmem:[%s39 + $0x14] sm:$0xf]
        %v5535 = vld [vmem:[%s39 + $0x18] sm:$0xf]
        %v5536 = vld [vmem:[%s39 + $0x1c] sm:$0xf]
        %v5537 = vld [vmem:[%s39 + $0x20] sm:$0xf]
        %v5538 = vld [vmem:[%s39 + $0x24] sm:$0xf]
        %v5539 = vld [vmem:[%s39 + $0x28] sm:$0xf]
        %v5540 = vld [vmem:[%s39 + $0x2c] sm:$0xf]
        %v5541 = vld [vmem:[%s39 + $0x30] sm:$0xf]
        %v5542 = vld [vmem:[%s39 + $0x34] sm:$0xf]
        %v5543 = vld [vmem:[%s39 + $0x38] sm:$0xf]
        %v5544 = vld [vmem:[%s39 + $0x3c] sm:$0xf]
        %v5545 = vld [vmem:[%s41] sm:$0x1]
        %v5546 = vpack.c.bf16 %v5528, %v5528
        %v5563 = vunpack.c.l.b16 %v5529
        %v5564 = vunpack.c.l.b16 %v5530
        %v5565 = vunpack.c.l.b16 %v5531
        %v5566 = vunpack.c.l.b16 %v5532
        %v5567 = vunpack.c.l.b16 %v5533
        %v5568 = vunpack.c.l.b16 %v5534
        %v5569 = vunpack.c.l.b16 %v5535
        %v5570 = vunpack.c.l.b16 %v5536
        %v5571 = vunpack.c.l.b16 %v5537
        %v5572 = vunpack.c.l.b16 %v5538
        %v5573 = vunpack.c.l.b16 %v5539
        %v5574 = vunpack.c.l.b16 %v5540
        %v5575 = vunpack.c.l.b16 %v5541
        %v5576 = vunpack.c.l.b16 %v5542
        %v5577 = vunpack.c.l.b16 %v5543
        %v5578 = vunpack.c.l.b16 %v5544
        %v5579 = vpack.c.b16 %v5564, %v5563
        %v5580 = vpack.c.b16 %v5566, %v5565
        %v5581 = vpack.c.b16 %v5568, %v5567
        %v5582 = vpack.c.b16 %v5570, %v5569
        %v5583 = vpack.c.b16 %v5572, %v5571
        %v5584 = vpack.c.b16 %v5574, %v5573
        %v5585 = vpack.c.b16 %v5576, %v5575
        %v5586 = vpack.c.b16 %v5578, %v5577
        %5595 = vmatpush.bf16.msra.mxu0 %v5586
        %5596 = vmatpush.bf16.msra.mxu0 %v5585
        %5597 = vmatpush.bf16.msra.mxu0 %v5584
        %5598 = vmatpush.bf16.msra.mxu0 %v5583
        %5599 = vmatpush.bf16.msra.mxu0 %v5582
        %5600 = vmatpush.bf16.msra.mxu0 %v5581
        %5601 = vmatpush.bf16.msra.mxu0 %v5580
        %5602 = vmatpush.bf16.msra.mxu0 %v5579
        %5603 = vmatmul.bf16.gmra.mxu0 %v5546
        %v5604 = vpop.f32.mrf.mxu0
        %v5605 = vadd.f32 %v5545, %v5604
        %v5606 = vpop.f32.mrf.mxu0
        %5607 = vdwg.mxu0
        %v5608 = vmul.f32 %v5605, %v5605
        %v5609 = vmul.f32 %v5605, %v5608
        %v5610 = vmul.f32 %v5609, 0.044715
        %v5611 = vadd.f32 %v5605, %v5610
        %v5612 = vmul.f32 %v5611, 0.7978846
        %v5613 = vtanh.pop %v5612
        %v5614 = vadd.f32 %v5613, 1.0
        %v5615 = vmul.f32 %v5614, 0.5
        %v5616 = vmul.f32 %v5605, %v5615
        %s5617 = scalar_lea.vmem %s39, 64
        %v5618 = vld [vmem:[%s5617] sm:$0xf]
        %v5619 = vld [vmem:[%s5617 + $0x4] sm:$0xf]
        %v5620 = vld [vmem:[%s5617 + $0x8] sm:$0xf]
        %v5621 = vld [vmem:[%s5617 + $0xc] sm:$0xf]
        %v5622 = vld [vmem:[%s5617 + $0x10] sm:$0xf]
        %v5623 = vld [vmem:[%s5617 + $0x14] sm:$0xf]
        %v5624 = vld [vmem:[%s5617 + $0x18] sm:$0xf]
        %v5625 = vld [vmem:[%s5617 + $0x1c] sm:$0xf]
        %v5626 = vld [vmem:[%s5617 + $0x20] sm:$0xf]
        %v5627 = vld [vmem:[%s5617 + $0x24] sm:$0xf]
        %v5628 = vld [vmem:[%s5617 + $0x28] sm:$0xf]
        %v5629 = vld [vmem:[%s5617 + $0x2c] sm:$0xf]
        %v5630 = vld [vmem:[%s5617 + $0x30] sm:$0xf]
        %v5631 = vld [vmem:[%s5617 + $0x34] sm:$0xf]
        %v5632 = vld [vmem:[%s5617 + $0x38] sm:$0xf]
        %v5633 = vld [vmem:[%s5617 + $0x3c] sm:$0xf]
        %s5634 = scalar_lea.vmem %s41, 1
        %v5635 = vld [vmem:[%s5634] sm:$0x1]
        %v5636 = vpack.c.bf16 %v5616, %v5616
        %v5653 = vunpack.c.l.b16 %v5618
        %v5654 = vunpack.c.l.b16 %v5619
        %v5655 = vunpack.c.l.b16 %v5620
        %v5656 = vunpack.c.l.b16 %v5621
        %v5657 = vunpack.c.l.b16 %v5622
        %v5658 = vunpack.c.l.b16 %v5623
        %v5659 = vunpack.c.l.b16 %v5624
        %v5660 = vunpack.c.l.b16 %v5625
        %v5661 = vunpack.c.l.b16 %v5626
        %v5662 = vunpack.c.l.b16 %v5627
        %v5663 = vunpack.c.l.b16 %v5628
        %v5664 = vunpack.c.l.b16 %v5629
        %v5665 = vunpack.c.l.b16 %v5630
        %v5666 = vunpack.c.l.b16 %v5631
        %v5667 = vunpack.c.l.b16 %v5632
        %v5668 = vunpack.c.l.b16 %v5633
        %v5669 = vpack.c.b16 %v5654, %v5653
        %v5670 = vpack.c.b16 %v5656, %v5655
        %v5671 = vpack.c.b16 %v5658, %v5657
        %v5672 = vpack.c.b16 %v5660, %v5659
        %v5673 = vpack.c.b16 %v5662, %v5661
        %v5674 = vpack.c.b16 %v5664, %v5663
        %v5675 = vpack.c.b16 %v5666, %v5665
        %v5676 = vpack.c.b16 %v5668, %v5667
        %5685 = vmatpush.bf16.msra.mxu0 %v5676
        %5686 = vmatpush.bf16.msra.mxu0 %v5675
        %5687 = vmatpush.bf16.msra.mxu0 %v5674
        %5688 = vmatpush.bf16.msra.mxu0 %v5673
        %5689 = vmatpush.bf16.msra.mxu0 %v5672
        %5690 = vmatpush.bf16.msra.mxu0 %v5671
        %5691 = vmatpush.bf16.msra.mxu0 %v5670
        %5692 = vmatpush.bf16.msra.mxu0 %v5669
        %5693 = vmatmul.bf16.gmra.mxu0 %v5636
        %v5694 = vpop.f32.mrf.mxu0
        %v5695 = vadd.f32 %v5635, %v5694
        %v5696 = vpop.f32.mrf.mxu0
        %5697 = vdwg.mxu0
        %v5698 = vmul.f32 %v5695, %v5695
        %v5699 = vmul.f32 %v5695, %v5698
        %v5700 = vmul.f32 %v5699, 0.044715
        %v5701 = vadd.f32 %v5695, %v5700
        %v5702 = vmul.f32 %v5701, 0.7978846
        %v5703 = vtanh.pop %v5702
        %v5704 = vadd.f32 %v5703, 1.0
        %v5705 = vmul.f32 %v5704, 0.5
        %v5706 = vmul.f32 %v5695, %v5705
        %s5707 = scalar_lea.vmem %s39, 128
        %v5708 = vld [vmem:[%s5707] sm:$0xf]
        %v5709 = vld [vmem:[%s5707 + $0x4] sm:$0xf]
        %v5710 = vld [vmem:[%s5707 + $0x8] sm:$0xf]
        %v5711 = vld [vmem:[%s5707 + $0xc] sm:$0xf]
        %v5712 = vld [vmem:[%s5707 + $0x10] sm:$0xf]
        %v5713 = vld [vmem:[%s5707 + $0x14] sm:$0xf]
        %v5714 = vld [vmem:[%s5707 + $0x18] sm:$0xf]
        %v5715 = vld [vmem:[%s5707 + $0x1c] sm:$0xf]
        %v5716 = vld [vmem:[%s5707 + $0x20] sm:$0xf]
        %v5717 = vld [vmem:[%s5707 + $0x24] sm:$0xf]
        %v5718 = vld [vmem:[%s5707 + $0x28] sm:$0xf]
        %v5719 = vld [vmem:[%s5707 + $0x2c] sm:$0xf]
        %v5720 = vld [vmem:[%s5707 + $0x30] sm:$0xf]
        %v5721 = vld [vmem:[%s5707 + $0x34] sm:$0xf]
        %v5722 = vld [vmem:[%s5707 + $0x38] sm:$0xf]
        %v5723 = vld [vmem:[%s5707 + $0x3c] sm:$0xf]
        %s5724 = scalar_lea.vmem %s41, 2
        %v5725 = vld [vmem:[%s5724] sm:$0x1]
        %v5726 = vpack.c.bf16 %v5706, %v5706
        %v5743 = vunpack.c.l.b16 %v5708
        %v5744 = vunpack.c.l.b16 %v5709
        %v5745 = vunpack.c.l.b16 %v5710
        %v5746 = vunpack.c.l.b16 %v5711
        %v5747 = vunpack.c.l.b16 %v5712
        %v5748 = vunpack.c.l.b16 %v5713
        %v5749 = vunpack.c.l.b16 %v5714
        %v5750 = vunpack.c.l.b16 %v5715
        %v5751 = vunpack.c.l.b16 %v5716
        %v5752 = vunpack.c.l.b16 %v5717
        %v5753 = vunpack.c.l.b16 %v5718
        %v5754 = vunpack.c.l.b16 %v5719
        %v5755 = vunpack.c.l.b16 %v5720
        %v5756 = vunpack.c.l.b16 %v5721
        %v5757 = vunpack.c.l.b16 %v5722
        %v5758 = vunpack.c.l.b16 %v5723
        %v5759 = vpack.c.b16 %v5744, %v5743
        %v5760 = vpack.c.b16 %v5746, %v5745
        %v5761 = vpack.c.b16 %v5748, %v5747
        %v5762 = vpack.c.b16 %v5750, %v5749
        %v5763 = vpack.c.b16 %v5752, %v5751
        %v5764 = vpack.c.b16 %v5754, %v5753
        %v5765 = vpack.c.b16 %v5756, %v5755
        %v5766 = vpack.c.b16 %v5758, %v5757
        %5775 = vmatpush.bf16.msra.mxu0 %v5766
        %5776 = vmatpush.bf16.msra.mxu0 %v5765
        %5777 = vmatpush.bf16.msra.mxu0 %v5764
        %5778 = vmatpush.bf16.msra.mxu0 %v5763
        %5779 = vmatpush.bf16.msra.mxu0 %v5762
        %5780 = vmatpush.bf16.msra.mxu0 %v5761
        %5781 = vmatpush.bf16.msra.mxu0 %v5760
        %5782 = vmatpush.bf16.msra.mxu0 %v5759
        %5783 = vmatmul.bf16.gmra.mxu0 %v5726
        %v5784 = vpop.f32.mrf.mxu0
        %v5785 = vadd.f32 %v5725, %v5784
        %v5786 = vpop.f32.mrf.mxu0
        %5787 = vdwg.mxu0
        %v5788 = vmul.f32 %v5785, %v5785
        %v5789 = vmul.f32 %v5785, %v5788
        %v5790 = vmul.f32 %v5789, 0.044715
        %v5791 = vadd.f32 %v5785, %v5790
        %v5792 = vmul.f32 %v5791, 0.7978846
        %v5793 = vtanh.pop %v5792
        %v5794 = vadd.f32 %v5793, 1.0
        %v5795 = vmul.f32 %v5794, 0.5
        %v5796 = vmul.f32 %v5785, %v5795
        %s5797 = scalar_lea.vmem %s39, 192
        %v5798 = vld [vmem:[%s5797] sm:$0xf]
        %v5799 = vld [vmem:[%s5797 + $0x4] sm:$0xf]
        %v5800 = vld [vmem:[%s5797 + $0x8] sm:$0xf]
        %v5801 = vld [vmem:[%s5797 + $0xc] sm:$0xf]
        %v5802 = vld [vmem:[%s5797 + $0x10] sm:$0xf]
        %v5803 = vld [vmem:[%s5797 + $0x14] sm:$0xf]
        %v5804 = vld [vmem:[%s5797 + $0x18] sm:$0xf]
        %v5805 = vld [vmem:[%s5797 + $0x1c] sm:$0xf]
        %v5806 = vld [vmem:[%s5797 + $0x20] sm:$0xf]
        %v5807 = vld [vmem:[%s5797 + $0x24] sm:$0xf]
        %v5808 = vld [vmem:[%s5797 + $0x28] sm:$0xf]
        %v5809 = vld [vmem:[%s5797 + $0x2c] sm:$0xf]
        %v5810 = vld [vmem:[%s5797 + $0x30] sm:$0xf]
        %v5811 = vld [vmem:[%s5797 + $0x34] sm:$0xf]
        %v5812 = vld [vmem:[%s5797 + $0x38] sm:$0xf]
        %v5813 = vld [vmem:[%s5797 + $0x3c] sm:$0xf]
        %s5814 = scalar_lea.vmem %s41, 3
        %v5815 = vld [vmem:[%s5814] sm:$0x1]
        %v5816 = vpack.c.bf16 %v5796, %v5796
        %v5833 = vunpack.c.l.b16 %v5798
        %v5834 = vunpack.c.l.b16 %v5799
        %v5835 = vunpack.c.l.b16 %v5800
        %v5836 = vunpack.c.l.b16 %v5801
        %v5837 = vunpack.c.l.b16 %v5802
        %v5838 = vunpack.c.l.b16 %v5803
        %v5839 = vunpack.c.l.b16 %v5804
        %v5840 = vunpack.c.l.b16 %v5805
        %v5841 = vunpack.c.l.b16 %v5806
        %v5842 = vunpack.c.l.b16 %v5807
        %v5843 = vunpack.c.l.b16 %v5808
        %v5844 = vunpack.c.l.b16 %v5809
        %v5845 = vunpack.c.l.b16 %v5810
        %v5846 = vunpack.c.l.b16 %v5811
        %v5847 = vunpack.c.l.b16 %v5812
        %v5848 = vunpack.c.l.b16 %v5813
        %v5849 = vpack.c.b16 %v5834, %v5833
        %v5850 = vpack.c.b16 %v5836, %v5835
        %v5851 = vpack.c.b16 %v5838, %v5837
        %v5852 = vpack.c.b16 %v5840, %v5839
        %v5853 = vpack.c.b16 %v5842, %v5841
        %v5854 = vpack.c.b16 %v5844, %v5843
        %v5855 = vpack.c.b16 %v5846, %v5845
        %v5856 = vpack.c.b16 %v5848, %v5847
        %5865 = vmatpush.bf16.msra.mxu0 %v5856
        %5866 = vmatpush.bf16.msra.mxu0 %v5855
        %5867 = vmatpush.bf16.msra.mxu0 %v5854
        %5868 = vmatpush.bf16.msra.mxu0 %v5853
        %5869 = vmatpush.bf16.msra.mxu0 %v5852
        %5870 = vmatpush.bf16.msra.mxu0 %v5851
        %5871 = vmatpush.bf16.msra.mxu0 %v5850
        %5872 = vmatpush.bf16.msra.mxu0 %v5849
        %5873 = vmatmul.bf16.gmra.mxu0 %v5816
        %v5874 = vpop.f32.mrf.mxu0
        %v5875 = vadd.f32 %v5815, %v5874
        %v5876 = vpop.f32.mrf.mxu0
        %5877 = vdwg.mxu0
        %v5878 = vmul.f32 %v5875, %v5875
        %v5879 = vmul.f32 %v5875, %v5878
        %v5880 = vmul.f32 %v5879, 0.044715
        %v5881 = vadd.f32 %v5875, %v5880
        %v5882 = vmul.f32 %v5881, 0.7978846
        %v5883 = vtanh.pop %v5882
        %v5884 = vadd.f32 %v5883, 1.0
        %v5885 = vmul.f32 %v5884, 0.5
        %v5886 = vmul.f32 %v5875, %v5885
        %v5887 = vld [vmem:[%s43] sm:$0xf]
        %v5888 = vld [vmem:[%s43 + $0x4] sm:$0xf]
        %v5889 = vld [vmem:[%s43 + $0x8] sm:$0xf]
        %v5890 = vld [vmem:[%s43 + $0xc] sm:$0xf]
        %v5891 = vld [vmem:[%s43 + $0x10] sm:$0xf]
        %v5892 = vld [vmem:[%s43 + $0x14] sm:$0xf]
        %v5893 = vld [vmem:[%s43 + $0x18] sm:$0xf]
        %v5894 = vld [vmem:[%s43 + $0x1c] sm:$0xf]
        %v5895 = vld [vmem:[%s43 + $0x20] sm:$0xf]
        %v5896 = vld [vmem:[%s43 + $0x24] sm:$0xf]
        %v5897 = vld [vmem:[%s43 + $0x28] sm:$0xf]
        %v5898 = vld [vmem:[%s43 + $0x2c] sm:$0xf]
        %v5899 = vld [vmem:[%s43 + $0x30] sm:$0xf]
        %v5900 = vld [vmem:[%s43 + $0x34] sm:$0xf]
        %v5901 = vld [vmem:[%s43 + $0x38] sm:$0xf]
        %v5902 = vld [vmem:[%s43 + $0x3c] sm:$0xf]
        %v5903 = vld [vmem:[%s45] sm:$0x1]
        %v5904 = vpack.c.bf16 %v5886, %v5886
        %v5921 = vunpack.c.l.b16 %v5887
        %v5922 = vunpack.c.l.b16 %v5888
        %v5923 = vunpack.c.l.b16 %v5889
        %v5924 = vunpack.c.l.b16 %v5890
        %v5925 = vunpack.c.l.b16 %v5891
        %v5926 = vunpack.c.l.b16 %v5892
        %v5927 = vunpack.c.l.b16 %v5893
        %v5928 = vunpack.c.l.b16 %v5894
        %v5929 = vunpack.c.l.b16 %v5895
        %v5930 = vunpack.c.l.b16 %v5896
        %v5931 = vunpack.c.l.b16 %v5897
        %v5932 = vunpack.c.l.b16 %v5898
        %v5933 = vunpack.c.l.b16 %v5899
        %v5934 = vunpack.c.l.b16 %v5900
        %v5935 = vunpack.c.l.b16 %v5901
        %v5936 = vunpack.c.l.b16 %v5902
        %v5937 = vpack.c.b16 %v5922, %v5921
        %v5938 = vpack.c.b16 %v5924, %v5923
        %v5939 = vpack.c.b16 %v5926, %v5925
        %v5940 = vpack.c.b16 %v5928, %v5927
        %v5941 = vpack.c.b16 %v5930, %v5929
        %v5942 = vpack.c.b16 %v5932, %v5931
        %v5943 = vpack.c.b16 %v5934, %v5933
        %v5944 = vpack.c.b16 %v5936, %v5935
        %5953 = vmatpush.bf16.msra.mxu0 %v5944
        %5954 = vmatpush.bf16.msra.mxu0 %v5943
        %5955 = vmatpush.bf16.msra.mxu0 %v5942
        %5956 = vmatpush.bf16.msra.mxu0 %v5941
        %5957 = vmatpush.bf16.msra.mxu0 %v5940
        %5958 = vmatpush.bf16.msra.mxu0 %v5939
        %5959 = vmatpush.bf16.msra.mxu0 %v5938
        %5960 = vmatpush.bf16.msra.mxu0 %v5937
        %5961 = vmatmul.bf16.gmra.mxu0 %v5904
        %v5962 = vpop.f32.mrf.mxu0
        %v5963 = vadd.f32 %v5903, %v5962
        %v5964 = vpop.f32.mrf.mxu0
        %5965 = vdwg.mxu0
        %v5966 = vld [vmem:[%s47] sm:$0xf]
        %v5967 = vld [vmem:[%s47 + $0x4] sm:$0xf]
        %v5968 = vld [vmem:[%s47 + $0x8] sm:$0xf]
        %v5969 = vld [vmem:[%s47 + $0xc] sm:$0xf]
        %v5970 = vld [vmem:[%s47 + $0x10] sm:$0xf]
        %v5971 = vld [vmem:[%s47 + $0x14] sm:$0xf]
        %v5972 = vld [vmem:[%s47 + $0x18] sm:$0xf]
        %v5973 = vld [vmem:[%s47 + $0x1c] sm:$0xf]
        %v5974 = vld [vmem:[%s49] sm:$0x1]
        %v5975 = vpack.c.bf16 %v5963, %v5963
        %v5984 = vunpack.c.l.b16 %v5966
        %v5985 = vunpack.c.l.b16 %v5967
        %v5986 = vunpack.c.l.b16 %v5968
        %v5987 = vunpack.c.l.b16 %v5969
        %v5988 = vunpack.c.l.b16 %v5970
        %v5989 = vunpack.c.l.b16 %v5971
        %v5990 = vunpack.c.l.b16 %v5972
        %v5991 = vunpack.c.l.b16 %v5973
        %v5992 = vpack.c.b16 %v5985, %v5984
        %v5993 = vpack.c.b16 %v5987, %v5986
        %v5994 = vpack.c.b16 %v5989, %v5988
        %v5995 = vpack.c.b16 %v5991, %v5990
        %vm6000 = vcmask 523264
        %v6002 = vsel %vm6000, %v5975, 0
        %6004 = vmatpush.bf16.msra.mxu0 0
        %6005 = vmatpush.bf16.msra.mxu0 0
        %6006 = vmatpush.bf16.msra.mxu0 0
        %6007 = vmatpush.bf16.msra.mxu0 0
        %6008 = vmatpush.bf16.msra.mxu0 %v5995
        %6009 = vmatpush.bf16.msra.mxu0 %v5994
        %6010 = vmatpush.bf16.msra.mxu0 %v5993
        %6011 = vmatpush.bf16.msra.mxu0 %v5992
        %6012 = vmatmul.bf16.gmra.mxu0 %v6002
        %v6013 = vpop.f32.mrf.mxu0
        %v6014 = vadd.f32 %v5974, %v6013
        %v6015 = vpop.f32.mrf.mxu0
        %6016 = vdwg.mxu0
        %v6017 = vmul.f32 %v6014, %v6014
        %v6018 = vmul.f32 %v6014, %v6017
        %v6019 = vmul.f32 %v6018, 0.044715
        %v6020 = vadd.f32 %v6014, %v6019
        %v6021 = vmul.f32 %v6020, 0.7978846
        %v6022 = vtanh.pop %v6021
        %v6023 = vadd.f32 %v6022, 1.0
        %v6024 = vmul.f32 %v6023, 0.5
        %v6025 = vmul.f32 %v6014, %v6024
        %v6026 = vld [vmem:[%s51] sm:$0xf]
        %v6027 = vld [vmem:[%s51 + $0x4] sm:$0xf]
        %v6028 = vld [vmem:[%s51 + $0x8] sm:$0xf]
        %v6029 = vld [vmem:[%s51 + $0xc] sm:$0xf]
        %v6030 = vld [vmem:[%s51 + $0x10] sm:$0xf]
        %v6031 = vld [vmem:[%s51 + $0x14] sm:$0xf]
        %v6032 = vld [vmem:[%s51 + $0x18] sm:$0xf]
        %v6033 = vld [vmem:[%s51 + $0x1c] sm:$0xf]
        %v6034 = vld [vmem:[%s51 + $0x20] sm:$0xf]
        %v6035 = vld [vmem:[%s51 + $0x24] sm:$0xf]
        %v6036 = vld [vmem:[%s51 + $0x28] sm:$0xf]
        %v6037 = vld [vmem:[%s51 + $0x2c] sm:$0xf]
        %v6038 = vld [vmem:[%s51 + $0x30] sm:$0xf]
        %v6039 = vld [vmem:[%s51 + $0x34] sm:$0xf]
        %v6040 = vld [vmem:[%s51 + $0x38] sm:$0xf]
        %v6041 = vld [vmem:[%s51 + $0x3c] sm:$0xf]
        %v6042 = vld [vmem:[%s53] sm:$0x1]
        %v6043 = vpack.c.bf16 %v6025, %v6025
        %v6060 = vunpack.c.l.b16 %v6026
        %v6061 = vunpack.c.l.b16 %v6027
        %v6062 = vunpack.c.l.b16 %v6028
        %v6063 = vunpack.c.l.b16 %v6029
        %v6064 = vunpack.c.l.b16 %v6030
        %v6065 = vunpack.c.l.b16 %v6031
        %v6066 = vunpack.c.l.b16 %v6032
        %v6067 = vunpack.c.l.b16 %v6033
        %v6068 = vunpack.c.l.b16 %v6034
        %v6069 = vunpack.c.l.b16 %v6035
        %v6070 = vunpack.c.l.b16 %v6036
        %v6071 = vunpack.c.l.b16 %v6037
        %v6072 = vunpack.c.l.b16 %v6038
        %v6073 = vunpack.c.l.b16 %v6039
        %v6074 = vunpack.c.l.b16 %v6040
        %v6075 = vunpack.c.l.b16 %v6041
        %v6076 = vpack.c.b16 %v6061, %v6060
        %v6077 = vpack.c.b16 %v6063, %v6062
        %v6078 = vpack.c.b16 %v6065, %v6064
        %v6079 = vpack.c.b16 %v6067, %v6066
        %v6080 = vpack.c.b16 %v6069, %v6068
        %v6081 = vpack.c.b16 %v6071, %v6070
        %v6082 = vpack.c.b16 %v6073, %v6072
        %v6083 = vpack.c.b16 %v6075, %v6074
        %6092 = vmatpush.bf16.msra.mxu0 %v6083
        %6093 = vmatpush.bf16.msra.mxu0 %v6082
        %6094 = vmatpush.bf16.msra.mxu0 %v6081
        %6095 = vmatpush.bf16.msra.mxu0 %v6080
        %6096 = vmatpush.bf16.msra.mxu0 %v6079
        %6097 = vmatpush.bf16.msra.mxu0 %v6078
        %6098 = vmatpush.bf16.msra.mxu0 %v6077
        %6099 = vmatpush.bf16.msra.mxu0 %v6076
        %6100 = vmatmul.bf16.gmra.mxu0 %v6043
        %v6101 = vpop.f32.mrf.mxu0
        %v6102 = vadd.f32 %v6042, %v6101
        %v6103 = vpop.f32.mrf.mxu0
        %6104 = vdwg.mxu0
        %v6105 = vmul.f32 %v6102, %v6102
        %v6106 = vmul.f32 %v6102, %v6105
        %v6107 = vmul.f32 %v6106, 0.044715
        %v6108 = vadd.f32 %v6102, %v6107
        %v6109 = vmul.f32 %v6108, 0.7978846
        %v6110 = vtanh.pop %v6109
        %v6111 = vadd.f32 %v6110, 1.0
        %v6112 = vmul.f32 %v6111, 0.5
        %v6113 = vmul.f32 %v6102, %v6112
        %v6114 = vld [vmem:[%s55] sm:$0xf]
        %v6115 = vld [vmem:[%s55 + $0x4] sm:$0xf]
        %v6116 = vld [vmem:[%s55 + $0x8] sm:$0xf]
        %v6117 = vld [vmem:[%s55 + $0xc] sm:$0xf]
        %v6118 = vld [vmem:[%s55 + $0x10] sm:$0xf]
        %v6119 = vld [vmem:[%s55 + $0x14] sm:$0xf]
        %v6120 = vld [vmem:[%s55 + $0x18] sm:$0xf]
        %v6121 = vld [vmem:[%s55 + $0x1c] sm:$0xf]
        %v6122 = vld [vmem:[%s55 + $0x20] sm:$0xf]
        %v6123 = vld [vmem:[%s55 + $0x24] sm:$0xf]
        %v6124 = vld [vmem:[%s55 + $0x28] sm:$0xf]
        %v6125 = vld [vmem:[%s55 + $0x2c] sm:$0xf]
        %v6126 = vld [vmem:[%s55 + $0x30] sm:$0xf]
        %v6127 = vld [vmem:[%s55 + $0x34] sm:$0xf]
        %v6128 = vld [vmem:[%s55 + $0x38] sm:$0xf]
        %v6129 = vld [vmem:[%s55 + $0x3c] sm:$0xf]
        %v6130 = vld [vmem:[%s57] sm:$0x1]
        %v6131 = vpack.c.bf16 %v6113, %v6113
        %v6148 = vunpack.c.l.b16 %v6114
        %v6149 = vunpack.c.l.b16 %v6115
        %v6150 = vunpack.c.l.b16 %v6116
        %v6151 = vunpack.c.l.b16 %v6117
        %v6152 = vunpack.c.l.b16 %v6118
        %v6153 = vunpack.c.l.b16 %v6119
        %v6154 = vunpack.c.l.b16 %v6120
        %v6155 = vunpack.c.l.b16 %v6121
        %v6156 = vunpack.c.l.b16 %v6122
        %v6157 = vunpack.c.l.b16 %v6123
        %v6158 = vunpack.c.l.b16 %v6124
        %v6159 = vunpack.c.l.b16 %v6125
        %v6160 = vunpack.c.l.b16 %v6126
        %v6161 = vunpack.c.l.b16 %v6127
        %v6162 = vunpack.c.l.b16 %v6128
        %v6163 = vunpack.c.l.b16 %v6129
        %v6164 = vpack.c.b16 %v6149, %v6148
        %v6165 = vpack.c.b16 %v6151, %v6150
        %v6166 = vpack.c.b16 %v6153, %v6152
        %v6167 = vpack.c.b16 %v6155, %v6154
        %v6168 = vpack.c.b16 %v6157, %v6156
        %v6169 = vpack.c.b16 %v6159, %v6158
        %v6170 = vpack.c.b16 %v6161, %v6160
        %v6171 = vpack.c.b16 %v6163, %v6162
        %6180 = vmatpush.bf16.msra.mxu0 %v6171
        %6181 = vmatpush.bf16.msra.mxu0 %v6170
        %6182 = vmatpush.bf16.msra.mxu0 %v6169
        %6183 = vmatpush.bf16.msra.mxu0 %v6168
        %6184 = vmatpush.bf16.msra.mxu0 %v6167
        %6185 = vmatpush.bf16.msra.mxu0 %v6166
        %6186 = vmatpush.bf16.msra.mxu0 %v6165
        %6187 = vmatpush.bf16.msra.mxu0 %v6164
        %6188 = vmatmul.bf16.gmra.mxu0 %v6131
        %v6189 = vpop.f32.mrf.mxu0
        %v6190 = vadd.f32 %v6130, %v6189
        %v6191 = vpop.f32.mrf.mxu0
        %6192 = vdwg.mxu0
        %6193 = vst [vmem:[%s926] sm:$0x1] %v5528
        %6194 = vst [vmem:[%s932] sm:$0x1] %v6190
        %s6195 = sand.u32 %s701, 1
        %s6196 = scalar_lea.sflag [#allocation3], %s6195
        %s6197 = sand.u32 %s701, 1
        %s6198 = scalar_lea.vmem [#allocation2], %s6197
        %s6199 = sand.u32 %s727, 1
        %s6200 = scalar_lea.sflag [#allocation5], %s6199
        %s6201 = sand.u32 %s727, 1
        %s6202 = scalar_lea.vmem [#allocation4], %s6201
        // Predicated region
        $region137: #{clipvitl_reduction_forward.1} parent=135 // pred_check
          %p6203 = pneg %p711
        $region138: #{clipvitl_reduction_forward.1} parent=135 // pred_check_branch
          %6205 = sbr.rel (%p6203) target = $region140
        $region139: #{clipvitl_reduction_forward.1} parent=135 // pred_region
          %6207 = vsyncadd %s6196, 0
          %s6208 = scalar_lea.hbm %s59, %s79
          %s6210 = sshll.u32 %s6198, 4
          %s6211 = int_to_ptr.vmem [resolvable:$true] %s6210
          %s6212 = sshll.u32 %s6208, 4
          %s6213 = int_to_ptr.hbm [resolvable:$true] %s6212
          %6215 = dma.vmem_to_hbm [thread:$0]  %s6211, 16, %s6213, %s6196
        $region140: #{clipvitl_reduction_forward.1} parent=135 // pred_fallthru
          _
        // Predicated region
        $region141: #{clipvitl_reduction_forward.1} parent=135 // pred_check
          %p6216 = pneg %p737
        $region142: #{clipvitl_reduction_forward.1} parent=135 // pred_check_branch
          %6218 = sbr.rel (%p6216) target = $region144
        $region143: #{clipvitl_reduction_forward.1} parent=135 // pred_region
          %6220 = vsyncadd %s6200, 0
          %s6221 = scalar_lea.hbm %s61, %s79
          %s6223 = sshll.u32 %s6202, 4
          %s6224 = int_to_ptr.vmem [resolvable:$true] %s6223
          %s6225 = sshll.u32 %s6221, 4
          %s6226 = int_to_ptr.hbm [resolvable:$true] %s6225
          %6228 = dma.vmem_to_hbm [thread:$0]  %s6224, 16, %s6226, %s6200
        $region144: #{clipvitl_reduction_forward.1} parent=135 // pred_fallthru
          _
      $region136: #{clipvitl_reduction_forward.1} parent=5 // pred_fallthru
        _
      %p6229 = scmp.le.s32.totalorder 2, %s74
      // Predicated region
      $region145: #{clipvitl_reduction_forward.1} parent=5 // pred_check
        %p6230 = pneg %p6229
      $region146: #{clipvitl_reduction_forward.1} parent=5 // pred_check_branch
        %6232 = sbr.rel (%p6230) target = $region148
      $region147: #{clipvitl_reduction_forward.1} parent=5 // pred_region
        %s6233 = ssub.s32 %s74, 2
        // Predicated region
        $region149: #{clipvitl_reduction_forward.1} parent=147 // pred_check
          %p6234 = pneg %p717
        $region150: #{clipvitl_reduction_forward.1} parent=147 // pred_check_branch
          %6236 = sbr.rel (%p6234) target = $region152
        $region151: #{clipvitl_reduction_forward.1} parent=147 // pred_region
          %s6237 = sand.u32 %s702, 1
          %s6238 = scalar_lea.sflag [#allocation3], %s6237
          %s6239 = sand.u32 %s702, 1
          %s6240 = scalar_lea.vmem [#allocation2], %s6239
          %6242 = dma.done %s6238, 16
        $region152: #{clipvitl_reduction_forward.1} parent=147 // pred_fallthru
          _
        // Predicated region
        $region153: #{clipvitl_reduction_forward.1} parent=147 // pred_check
          %p6243 = pneg %p743
        $region154: #{clipvitl_reduction_forward.1} parent=147 // pred_check_branch
          %6245 = sbr.rel (%p6243) target = $region156
        $region155: #{clipvitl_reduction_forward.1} parent=147 // pred_region
          %s6246 = sand.u32 %s728, 1
          %s6247 = scalar_lea.sflag [#allocation5], %s6246
          %s6248 = sand.u32 %s728, 1
          %s6249 = scalar_lea.vmem [#allocation4], %s6248
          %6251 = dma.done %s6247, 16
        $region156: #{clipvitl_reduction_forward.1} parent=147 // pred_fallthru
          _
      $region148: #{clipvitl_reduction_forward.1} parent=5 // pred_fallthru
        _
    $region6: #{clipvitl_reduction_forward.1} parent=1 // loop_footer
      %s78 = sadd.s32 1, %s74
    $region7: #{clipvitl_reduction_forward.1} parent=1 // loop_footer_branch
      %73 = sbr.rel target = $region3
    $region8: #{clipvitl_reduction_forward.1} parent=1 // loop_exit
      _
    %6252 = vsyncpa [#allocation3], 1
    %s6253 = scalar_lea.sflag [#allocation3], 1
    %6254 = vsyncpa %s6253, 1
    %6255 = vsyncpa [#allocation5], 1
    %s6256 = scalar_lea.sflag [#allocation5], 1
    %6257 = vsyncpa %s6256, 1

</llo_original>
